<compile_context>
chip_gen: v7x
topology: tpu7x:2x2x1
jax: 0.10.0
libtpu: 0.0.40
codegen_flags: <defaults>
</compile_context>

<pallas_src>
import functools
import math

import jax
import jax.numpy as jnp
from jax import lax
from jax.experimental import pallas as pl
from jax.experimental.pallas import tpu as pltpu

EPS = 1e-5
LANE = 128


def _round_up(x, m):
    return (x + m - 1) // m * m


@functools.lru_cache(maxsize=None)
def _vmem_limit_bytes():
    """Generation-aware VMEM limit: ~3/4 of physical (96 MiB v5e/v6e, 48 MiB v7x)."""
    cap = 64 * 1024 * 1024          # conservative fallback (v7x physical)
    try:
        cap = int(pltpu.get_tpu_info().vmem_capacity_bytes)
    except Exception:
        pass
    return max(32 * 1024 * 1024, min((cap // 4) * 3, 96 * 1024 * 1024))


def _pick_row_tile(m, target=1024):
    if m <= target:
        return m
    t = target - (target % 8)
    for cand in range(t, 7, -8):            # multiples of 8, descending
        if m % cand == 0:
            return cand
    # TODO(synk): ragged last tile; the full extent always satisfies the
    # (8,128) rule but may be large for pathological m.
    return m


# ----------------------------------------------------------------------------
# Kernel 1: 3x3x3 conv (pad=1, stride=1) on one sample, plus per-sample
#           centered BN partial statistics (mean, centered sum of squares).
#           Taps are kw-packed into the matmul contraction dimension.
# ----------------------------------------------------------------------------
def _conv3x3x3_stats_kernel(cin, x_ref, w_ref, y_ref, stats_ref,
                            slab_ref, acc_ref):
    # x_ref:     (D, H, W, Cx)        bf16  unpadded channels-last sample;
    #                                       only the first `cin` channels are real.
    # w_ref:     (9, 3*cin, Cout_p)   bf16  (kd,kh) taps; K packs (kw, cin), kw-major.
    # y_ref:     (D, H, W, Cout_p)    bf16
    # stats_ref: (2, Cout_p)          f32   row0 = per-sample mean, row1 = centered SSQ
    # slab_ref:  (D+2, H+2, W, 3*cin) bf16  VMEM kw-im2col slab (zero D/H halo)
    # acc_ref:   (D*H*W, Cout_p)      f32   VMEM accumulator
    d, h, w, cout = y_ref.shape
    rows = d * h * w
    kpack = 3 * cin

    x = x_ref[:, :, :, 0:cin]                                   # (d, h, w, cin)

    # kw-im2col: slot kw holds the input column (wo + kw - 1); the W halo
    # becomes zero columns inside the slots, the D/H halo is the zeroed border.
    zcol = jnp.zeros((d, h, 1, cin), x.dtype)
    left = jnp.concatenate([zcol, x[:, :, :w - 1, :]], axis=2)  # value at wo-1
    right = jnp.concatenate([x[:, :, 1:, :], zcol], axis=2)     # value at wo+1
    core = jnp.concatenate([left, x, right], axis=-1)           # (d, h, w, 3*cin)

    slab_ref[...] = jnp.zeros_like(slab_ref)
    slab_ref[1:1 + d, 1:1 + h, :, :] = core

    acc_ref[...] = jnp.zeros_like(acc_ref)
    for kd in range(3):
        for kh in range(3):
            win = slab_ref[kd:kd + d, kh:kh + h, :, :]          # leading-dim offsets only
            acc_ref[...] += jnp.dot(win.reshape(rows, kpack),
                                    w_ref[kd * 3 + kh],
                                    preferred_element_type=jnp.float32)

    acc = acc_ref[...]
    y_ref[...] = acc.reshape(d, h, w, cout).astype(y_ref.dtype)
    mu = jnp.sum(acc, axis=0, keepdims=True) * (1.0 / rows)     # (1, Cout_p) f32
    cssq = jnp.sum((acc - mu) * (acc - mu), axis=0, keepdims=True)
    stats_ref[...] = jnp.concatenate([mu, cssq], axis=0)


def conv3x3x3_with_stats(x_cl, w_taps, cin, cout_p):
    n, d, h, w = x_cl.shape[:4]
    cx = x_cl.shape[-1]
    kpack = 3 * cin
    rows = d * h * w
    flops = 2 * n * rows * 27 * cin * cout_p
    bytes_accessed = (x_cl.size * x_cl.dtype.itemsize
                      + w_taps.size * w_taps.dtype.itemsize
                      + n * rows * cout_p * 2            # bf16 y
                      + n * 2 * cout_p * 4)
    return pl.pallas_call(
        functools.partial(_conv3x3x3_stats_kernel, cin),
        out_shape=(jax.ShapeDtypeStruct((n, d, h, w, cout_p), jnp.bfloat16),
                   jax.ShapeDtypeStruct((n, 2, cout_p), jnp.float32)),
        grid=(n,),
        in_specs=[
            pl.BlockSpec((None, d, h, w, cx), lambda i: (i, 0, 0, 0, 0)),
            pl.BlockSpec((9, kpack, cout_p), lambda i: (0, 0, 0)),
        ],
        out_specs=(
            pl.BlockSpec((None, d, h, w, cout_p), lambda i: (i, 0, 0, 0, 0)),
            pl.BlockSpec((None, 2, cout_p), lambda i: (i, 0, 0)),
        ),
        scratch_shapes=[
            pltpu.VMEM((d + 2, h + 2, w, kpack), jnp.bfloat16),
            pltpu.VMEM((rows, cout_p), jnp.float32),
        ],
        compiler_params=pltpu.CompilerParams(
            dimension_semantics=("parallel",),
            vmem_limit_bytes=_vmem_limit_bytes()),
        cost_estimate=pl.CostEstimate(flops=flops, transcendentals=0,
                                      bytes_accessed=bytes_accessed),
    )(x_cl, w_taps)


# ----------------------------------------------------------------------------
# Kernel 2: M-tiled  y*scale + shift  (+ residual)  ->  ReLU
#           (second pass of the two-pass training-mode BatchNorm)
# ----------------------------------------------------------------------------
def _bn_affine_relu_kernel(add_residual, y_ref, scale_ref, shift_ref, *rest):
    if add_residual:
        r_ref, o_ref = rest
    else:
        (o_ref,) = rest
    out = y_ref[...].astype(jnp.float32) * scale_ref[...] + shift_ref[...]
    if add_residual:
        out = out + r_ref[...].astype(jnp.float32)
    o_ref[...] = jnp.maximum(out, 0.0).astype(o_ref.dtype)


def bn_affine_relu(y_rows, scale, shift, residual_rows=None,
                   out_dtype=jnp.bfloat16, row_tile=1024):
    m, c = y_rows.shape
    tm = _pick_row_tile(m, row_tile)
    add_res = residual_rows is not None
    row_spec = pl.BlockSpec((tm, c), lambda i: (i, 0))
    vec_spec = pl.BlockSpec((1, c), lambda i: (0, 0))
    inputs = [y_rows, scale, shift]
    in_specs = [row_spec, vec_spec, vec_spec]
    if add_res:
        inputs.append(residual_rows)
        in_specs.append(row_spec)
    bytes_accessed = (sum(a.size * a.dtype.itemsize for a in inputs)
                      + m * c * jnp.dtype(out_dtype).itemsize)
    return pl.pallas_call(
        functools.partial(_bn_affine_relu_kernel, add_res),
        out_shape=jax.ShapeDtypeStruct((m, c), out_dtype),
        grid=(m // tm,),
        in_specs=in_specs,
        out_specs=row_spec,
        compiler_params=pltpu.CompilerParams(
            dimension_semantics=("parallel",),
            vmem_limit_bytes=_vmem_limit_bytes()),
        cost_estimate=pl.CostEstimate(flops=4 * m * c, transcendentals=0,
                                      bytes_accessed=bytes_accessed),
    )(*inputs)


# ----------------------------------------------------------------------------
# Module
# ----------------------------------------------------------------------------
class BasicBlockPallas:
    expansion = 1

    def __init__(self, inplanes, planes, stride=1, downsample=None, key=None):
        assert stride == 1 and downsample is None, (
            "TODO(synk): stride>1 / downsample branch not implemented")
        assert inplanes == planes * self.expansion, "identity residual only"
        self.inplanes = inplanes
        self.planes = planes
        self.cp = _round_up(max(inplanes, planes), LANE)   # lane-dense out channels

        ks = jax.random.split(key, 6)
        self.w1 = jax.random.normal(ks[0], (planes, inplanes, 3, 3, 3),
                                    jnp.float32) * math.sqrt(2.0 / (inplanes * 27))
        self.w2 = jax.random.normal(ks[1], (planes, planes, 3, 3, 3),
                                    jnp.float32) * math.sqrt(2.0 / (planes * 27))
        # BN affine params (randomized so the affine path is exercised).
        self.g1 = 1.0 + 0.1 * jax.random.normal(ks[2], (planes,), jnp.float32)
        self.b1 = 0.1 * jax.random.normal(ks[3], (planes,), jnp.float32)
        self.g2 = 1.0 + 0.1 * jax.random.normal(ks[4], (planes,), jnp.float32)
        self.b2 = 0.1 * jax.random.normal(ks[5], (planes,), jnp.float32)

        # kernel-side layouts: (9, 3*Cin, Cout_p) bf16, kw packed into K.
        self.w1_taps = self._pack_taps(self.w1)
        self.w2_taps = self._pack_taps(self.w2)
        self.g1p = self._pad_vec(self.g1)
        self.b1p = self._pad_vec(self.b1)
        self.g2p = self._pad_vec(self.g2)
        self.b2p = self._pad_vec(self.b2)

    def _pack_taps(self, w):
        cout, cin = w.shape[:2]
        # (O, I, kd, kh, kw) -> (kd, kh, kw, cin, cout) -> (9, 3*cin, cout_p)
        wt = jnp.transpose(w, (2, 3, 4, 1, 0)).reshape(9, 3 * cin, cout)
        wt = jnp.pad(wt, ((0, 0), (0, 0), (0, self.cp - cout)))
        return wt.astype(jnp.bfloat16)

    def _pad_vec(self, v):
        return jnp.pad(v, (0, self.cp - v.shape[0]))

    def _conv_bn_relu(self, x_cl, w_taps, gamma_p, beta_p, cin,
                      residual_rows=None, out_dtype=jnp.bfloat16):
        n, d, h, w = x_cl.shape[:4]
        rows = d * h * w
        m = n * rows
        y, stats = conv3x3x3_with_stats(x_cl, w_taps, cin, self.cp)
        mu_s = stats[:, 0, :]                    # (n, cp) per-sample means
        cssq_s = stats[:, 1, :]                  # (n, cp) per-sample centered SSQ
        mean = jnp.mean(mu_s, axis=0)
        # parallel-variance merge (equal-size chunks), biased variance.
        var = (jnp.sum(cssq_s, axis=0)
               + rows * jnp.sum((mu_s - mean) ** 2, axis=0)) / m
        var = jnp.maximum(var, 0.0)
        scale = gamma_p * lax.rsqrt(var + EPS)
        shift = beta_p - mean * scale
        return bn_affine_relu(y.reshape(m, self.cp), scale[None, :],
                              shift[None, :], residual_rows=residual_rows,
                              out_dtype=out_dtype)

    def __call__(self, x):
        n, c, d, h, w = x.shape
        assert c == self.inplanes
        m = n * d * h * w
        cp = self.cp

        # channels-last bf16 (MXU operand dtype); channels stay tight for conv1.
        x_cl = jnp.transpose(x, (0, 2, 3, 4, 1)).astype(jnp.bfloat16)
        # residual is lane-padded bf16 so the stage-2 apply kernel is lane-dense.
        residual_rows = jnp.pad(
            x_cl, ((0, 0),) * 4 + ((0, cp - c),)).reshape(m, cp)

        # stage 1: conv1 -> BN1 -> ReLU   (kept bf16 for conv2's MXU)
        h1 = self._conv_bn_relu(x_cl, self.w1_taps, self.g1p, self.b1p,
                                cin=self.inplanes, out_dtype=jnp.bfloat16)
        h1_cl = h1.reshape(n, d, h, w, cp)

        # stage 2: conv2 -> BN2 -> +residual -> ReLU
        out_rows = self._conv_bn_relu(h1_cl, self.w2_taps, self.g2p, self.b2p,
                                      cin=self.planes,
                                      residual_rows=residual_rows,
                                      out_dtype=jnp.float32)
        out = out_rows.reshape(n, d, h, w, cp)[..., :self.planes]
        return jnp.transpose(out, (0, 4, 1, 2, 3))              # back to NCDHW


# ----------------------------------------------------------------------------
# Pure-JAX reference (lax 3D convs with the same bf16 matmul operands,
# training-mode BatchNorm in f32) for a sanity check.
# ----------------------------------------------------------------------------
def reference_forward(x, blk):
    dn = ("NCDHW", "OIDHW", "NCDHW")

    def conv(a, w):
        return lax.conv_general_dilated(
            a.astype(jnp.bfloat16), w.astype(jnp.bfloat16), (1, 1, 1),
            ((1, 1), (1, 1), (1, 1)), dimension_numbers=dn,
            preferred_element_type=jnp.float32)

    def bn(y, gamma, beta):
        mu = y.mean(axis=(0, 2, 3, 4), keepdims=True)
        var = ((y - mu) ** 2).mean(axis=(0, 2, 3, 4), keepdims=True)
        g = gamma[None, :, None, None, None]
        b = beta[None, :, None, None, None]
        return (y - mu) * lax.rsqrt(var + EPS) * g + b

    out = jax.nn.relu(bn(conv(x, blk.w1), blk.g1, blk.b1))
    out = bn(conv(out, blk.w2), blk.g2, blk.b2) + x
    return jax.nn.relu(out)


if __name__ == "__main__":
    key = jax.random.PRNGKey(0)
    k_x, k_m = jax.random.split(key)

    inplanes = planes = 16
    n, d, h, w = 2, 8, 8, 8

    x = jax.random.normal(k_x, (n, inplanes, d, h, w), jnp.float32)
    block = BasicBlockPallas(inplanes, planes, stride=1, key=k_m)

    out = jax.block_until_ready(block(x))
    ref = jax.block_until_ready(reference_forward(x, block))

    assert out.shape == ref.shape == (n, planes, d, h, w)
    max_err = float(jnp.max(jnp.abs(out - ref)))
    # bf16 conv operands + bf16 intermediates/residual vs f32-everything ref.
    assert jnp.allclose(out, ref, rtol=2e-2, atol=2e-2), max_err
    print("KERNEL_OK")
</pallas_src>

<mosaic_0001>
module attributes {stable_mosaic.version = 11 : i64} {
  func.func @_conv3x3x3_stats_kernel(%arg0: i32, %arg1: memref<1x8x8x8x16xbf16, #tpu.memory_space<vmem>>, %arg2: memref<9x48x128xbf16, #tpu.memory_space<vmem>>, %arg3: memref<1x8x8x8x128xbf16, #tpu.memory_space<vmem>>, %arg4: memref<1x2x128xf32, #tpu.memory_space<vmem>>, %arg5: memref<10x10x8x48xbf16, #tpu.memory_space<vmem>>, %arg6: memref<512x128xf32, #tpu.memory_space<vmem>>) attributes {dimension_semantics = [#tpu.dimension_semantics<parallel>], iteration_bounds = array<i64: 2>, scalar_prefetch = 0 : i64, scratch_operands = 2 : i64, tpu.core_type = #tpu.core_type<tc>, window_params = [{transform_indices = @transform_0, window_bounds = array<i64: 1, 8, 8, 8, 16>}, {pipeline_mode = #tpu.pipeline_mode<synchronous>, transform_indices = @transform_1, window_bounds = array<i64: 9, 48, 128>}, {transform_indices = @transform_2, window_bounds = array<i64: 1, 8, 8, 8, 128>}, {transform_indices = @transform_3, window_bounds = array<i64: 1, 2, 128>}]} {
    %c0 = arith.constant 0 : index
    %c0_0 = arith.constant 0 : index
    %c0_1 = arith.constant 0 : index
    %c0_2 = arith.constant 0 : index
    %c0_3 = arith.constant 0 : index
    %0 = vector.load %arg1[%c0, %c0_0, %c0_1, %c0_2, %c0_3] : memref<1x8x8x8x16xbf16, #tpu.memory_space<vmem>>, vector<1x8x8x8x16xbf16>
    %1 = vector.shape_cast %0 : vector<1x8x8x8x16xbf16> to vector<8x8x8x16xbf16>
    %cst = arith.constant 0.000000e+00 : bf16
    %2 = vector.broadcast %cst : bf16 to vector<8x8x1x16xbf16>
    %3 = vector.extract_strided_slice %1 {offsets = [0, 0, 0, 0], sizes = [8, 8, 7, 16], strides = [1, 1, 1, 1]} : vector<8x8x8x16xbf16> to vector<8x8x7x16xbf16>
    %4 = tpu.concatenate %2, %3 in 2 : vector<8x8x1x16xbf16>, vector<8x8x7x16xbf16> -> vector<8x8x8x16xbf16>
    %5 = vector.extract_strided_slice %1 {offsets = [0, 0, 1, 0], sizes = [8, 8, 7, 16], strides = [1, 1, 1, 1]} : vector<8x8x8x16xbf16> to vector<8x8x7x16xbf16>
    %6 = tpu.concatenate %5, %2 in 2 : vector<8x8x7x16xbf16>, vector<8x8x1x16xbf16> -> vector<8x8x8x16xbf16>
    %7 = tpu.concatenate %4, %1, %6 in 3 : vector<8x8x8x16xbf16>, vector<8x8x8x16xbf16>, vector<8x8x8x16xbf16> -> vector<8x8x8x48xbf16>
    %cst_4 = arith.constant 0.000000e+00 : bf16
    %8 = vector.broadcast %cst_4 : bf16 to vector<10x10x8x48xbf16>
    %c0_5 = arith.constant 0 : index
    %c0_6 = arith.constant 0 : index
    %c0_7 = arith.constant 0 : index
    %c0_8 = arith.constant 0 : index
    %9 = vector.load %arg5[%c0_5, %c0_6, %c0_7, %c0_8] : memref<10x10x8x48xbf16, #tpu.memory_space<vmem>>, vector<10x10x8x48xbf16>
    tpu.vector_store %arg5[%c0_5, %c0_6, %c0_7, %c0_8], %8 {strides = array<i32>} : memref<10x10x8x48xbf16, #tpu.memory_space<vmem>>, vector<10x10x8x48xbf16>,
    %c1 = arith.constant 1 : index
    %c1_9 = arith.constant 1 : index
    %c0_10 = arith.constant 0 : index
    %c0_11 = arith.constant 0 : index
    %10 = vector.load %arg5[%c1, %c1_9, %c0_10, %c0_11] : memref<10x10x8x48xbf16, #tpu.memory_space<vmem>>, vector<8x8x8x48xbf16>
    tpu.vector_store %arg5[%c1, %c1_9, %c0_10, %c0_11], %7 {strides = array<i32>} : memref<10x10x8x48xbf16, #tpu.memory_space<vmem>>, vector<8x8x8x48xbf16>,
    %cst_12 = arith.constant 0.000000e+00 : f32
    %11 = vector.broadcast %cst_12 : f32 to vector<512x128xf32>
    %c0_13 = arith.constant 0 : index
    %c0_14 = arith.constant 0 : index
    %12 = vector.load %arg6[%c0_13, %c0_14] : memref<512x128xf32, #tpu.memory_space<vmem>>, vector<512x128xf32>
    tpu.vector_store %arg6[%c0_13, %c0_14], %11 {strides = array<i32>} : memref<512x128xf32, #tpu.memory_space<vmem>>, vector<512x128xf32>,
    %c0_15 = arith.constant 0 : index
    %c0_16 = arith.constant 0 : index
    %c0_17 = arith.constant 0 : index
    %c0_18 = arith.constant 0 : index
    %13 = vector.load %arg5[%c0_15, %c0_16, %c0_17, %c0_18] : memref<10x10x8x48xbf16, #tpu.memory_space<vmem>>, vector<8x8x8x48xbf16>
    %c0_19 = arith.constant 0 : index
    %c0_20 = arith.constant 0 : index
    %14 = vector.load %arg6[%c0_19, %c0_20] : memref<512x128xf32, #tpu.memory_space<vmem>>, vector<512x128xf32>
    %15 = vector.shape_cast %13 : vector<8x8x8x48xbf16> to vector<512x48xbf16>
    %c0_21 = arith.constant 0 : index
    %c0_22 = arith.constant 0 : index
    %c0_23 = arith.constant 0 : index
    %16 = vector.load %arg2[%c0_21, %c0_22, %c0_23] : memref<9x48x128xbf16, #tpu.memory_space<vmem>>, vector<1x48x128xbf16>
    %17 = vector.shape_cast %16 : vector<1x48x128xbf16> to vector<48x128xbf16>
    %cst_24 = arith.constant dense<0.000000e+00> : vector<512x128xf32>
    %18 = tpu.matmul %15, %17, %cst_24 {dimension_numbers = #tpu.dot_dimension_numbers<[1], [0], [0], [1], [0, 0, 1, 1], [], []>} : vector<512x48xbf16>, vector<48x128xbf16>, vector<512x128xf32> -> vector<512x128xf32>
    %19 = arith.addf %14, %18 : vector<512x128xf32>
    %c0_25 = arith.constant 0 : index
    %c0_26 = arith.constant 0 : index
    %20 = vector.load %arg6[%c0_25, %c0_26] : memref<512x128xf32, #tpu.memory_space<vmem>>, vector<512x128xf32>
    tpu.vector_store %arg6[%c0_25, %c0_26], %19 {strides = array<i32>} : memref<512x128xf32, #tpu.memory_space<vmem>>, vector<512x128xf32>,
    %c0_27 = arith.constant 0 : index
    %c1_28 = arith.constant 1 : index
    %c0_29 = arith.constant 0 : index
    %c0_30 = arith.constant 0 : index
    %21 = vector.load %arg5[%c0_27, %c1_28, %c0_29, %c0_30] : memref<10x10x8x48xbf16, #tpu.memory_space<vmem>>, vector<8x8x8x48xbf16>
    %c0_31 = arith.constant 0 : index
    %c0_32 = arith.constant 0 : index
    %22 = vector.load %arg6[%c0_31, %c0_32] : memref<512x128xf32, #tpu.memory_space<vmem>>, vector<512x128xf32>
    %23 = vector.shape_cast %21 : vector<8x8x8x48xbf16> to vector<512x48xbf16>
    %c1_33 = arith.constant 1 : index
    %c0_34 = arith.constant 0 : index
    %c0_35 = arith.constant 0 : index
    %24 = vector.load %arg2[%c1_33, %c0_34, %c0_35] : memref<9x48x128xbf16, #tpu.memory_space<vmem>>, vector<1x48x128xbf16>
    %25 = vector.shape_cast %24 : vector<1x48x128xbf16> to vector<48x128xbf16>
    %cst_36 = arith.constant dense<0.000000e+00> : vector<512x128xf32>
    %26 = tpu.matmul %23, %25, %cst_36 {dimension_numbers = #tpu.dot_dimension_numbers<[1], [0], [0], [1], [0, 0, 1, 1], [], []>} : vector<512x48xbf16>, vector<48x128xbf16>, vector<512x128xf32> -> vector<512x128xf32>
    %27 = arith.addf %22, %26 : vector<512x128xf32>
    %c0_37 = arith.constant 0 : index
    %c0_38 = arith.constant 0 : index
    %28 = vector.load %arg6[%c0_37, %c0_38] : memref<512x128xf32, #tpu.memory_space<vmem>>, vector<512x128xf32>
    tpu.vector_store %arg6[%c0_37, %c0_38], %27 {strides = array<i32>} : memref<512x128xf32, #tpu.memory_space<vmem>>, vector<512x128xf32>,
    %c0_39 = arith.constant 0 : index
    %c2 = arith.constant 2 : index
    %c0_40 = arith.constant 0 : index
    %c0_41 = arith.constant 0 : index
    %29 = vector.load %arg5[%c0_39, %c2, %c0_40, %c0_41] : memref<10x10x8x48xbf16, #tpu.memory_space<vmem>>, vector<8x8x8x48xbf16>
    %c0_42 = arith.constant 0 : index
    %c0_43 = arith.constant 0 : index
    %30 = vector.load %arg6[%c0_42, %c0_43] : memref<512x128xf32, #tpu.memory_space<vmem>>, vector<512x128xf32>
    %31 = vector.shape_cast %29 : vector<8x8x8x48xbf16> to vector<512x48xbf16>
    %c2_44 = arith.constant 2 : index
    %c0_45 = arith.constant 0 : index
    %c0_46 = arith.constant 0 : index
    %32 = vector.load %arg2[%c2_44, %c0_45, %c0_46] : memref<9x48x128xbf16, #tpu.memory_space<vmem>>, vector<1x48x128xbf16>
    %33 = vector.shape_cast %32 : vector<1x48x128xbf16> to vector<48x128xbf16>
    %cst_47 = arith.constant dense<0.000000e+00> : vector<512x128xf32>
    %34 = tpu.matmul %31, %33, %cst_47 {dimension_numbers = #tpu.dot_dimension_numbers<[1], [0], [0], [1], [0, 0, 1, 1], [], []>} : vector<512x48xbf16>, vector<48x128xbf16>, vector<512x128xf32> -> vector<512x128xf32>
    %35 = arith.addf %30, %34 : vector<512x128xf32>
    %c0_48 = arith.constant 0 : index
    %c0_49 = arith.constant 0 : index
    %36 = vector.load %arg6[%c0_48, %c0_49] : memref<512x128xf32, #tpu.memory_space<vmem>>, vector<512x128xf32>
    tpu.vector_store %arg6[%c0_48, %c0_49], %35 {strides = array<i32>} : memref<512x128xf32, #tpu.memory_space<vmem>>, vector<512x128xf32>,
    %c1_50 = arith.constant 1 : index
    %c0_51 = arith.constant 0 : index
    %c0_52 = arith.constant 0 : index
    %c0_53 = arith.constant 0 : index
    %37 = vector.load %arg5[%c1_50, %c0_51, %c0_52, %c0_53] : memref<10x10x8x48xbf16, #tpu.memory_space<vmem>>, vector<8x8x8x48xbf16>
    %c0_54 = arith.constant 0 : index
    %c0_55 = arith.constant 0 : index
    %38 = vector.load %arg6[%c0_54, %c0_55] : memref<512x128xf32, #tpu.memory_space<vmem>>, vector<512x128xf32>
    %39 = vector.shape_cast %37 : vector<8x8x8x48xbf16> to vector<512x48xbf16>
    %c3 = arith.constant 3 : index
    %c0_56 = arith.constant 0 : index
    %c0_57 = arith.constant 0 : index
    %40 = vector.load %arg2[%c3, %c0_56, %c0_57] : memref<9x48x128xbf16, #tpu.memory_space<vmem>>, vector<1x48x128xbf16>
    %41 = vector.shape_cast %40 : vector<1x48x128xbf16> to vector<48x128xbf16>
    %cst_58 = arith.constant dense<0.000000e+00> : vector<512x128xf32>
    %42 = tpu.matmul %39, %41, %cst_58 {dimension_numbers = #tpu.dot_dimension_numbers<[1], [0], [0], [1], [0, 0, 1, 1], [], []>} : vector<512x48xbf16>, vector<48x128xbf16>, vector<512x128xf32> -> vector<512x128xf32>
    %43 = arith.addf %38, %42 : vector<512x128xf32>
    %c0_59 = arith.constant 0 : index
    %c0_60 = arith.constant 0 : index
    %44 = vector.load %arg6[%c0_59, %c0_60] : memref<512x128xf32, #tpu.memory_space<vmem>>, vector<512x128xf32>
    tpu.vector_store %arg6[%c0_59, %c0_60], %43 {strides = array<i32>} : memref<512x128xf32, #tpu.memory_space<vmem>>, vector<512x128xf32>,
    %c1_61 = arith.constant 1 : index
    %c1_62 = arith.constant 1 : index
    %c0_63 = arith.constant 0 : index
    %c0_64 = arith.constant 0 : index
    %45 = vector.load %arg5[%c1_61, %c1_62, %c0_63, %c0_64] : memref<10x10x8x48xbf16, #tpu.memory_space<vmem>>, vector<8x8x8x48xbf16>
    %c0_65 = arith.constant 0 : index
    %c0_66 = arith.constant 0 : index
    %46 = vector.load %arg6[%c0_65, %c0_66] : memref<512x128xf32, #tpu.memory_space<vmem>>, vector<512x128xf32>
    %47 = vector.shape_cast %45 : vector<8x8x8x48xbf16> to vector<512x48xbf16>
    %c4 = arith.constant 4 : index
    %c0_67 = arith.constant 0 : index
    %c0_68 = arith.constant 0 : index
    %48 = vector.load %arg2[%c4, %c0_67, %c0_68] : memref<9x48x128xbf16, #tpu.memory_space<vmem>>, vector<1x48x128xbf16>
    %49 = vector.shape_cast %48 : vector<1x48x128xbf16> to vector<48x128xbf16>
    %cst_69 = arith.constant dense<0.000000e+00> : vector<512x128xf32>
    %50 = tpu.matmul %47, %49, %cst_69 {dimension_numbers = #tpu.dot_dimension_numbers<[1], [0], [0], [1], [0, 0, 1, 1], [], []>} : vector<512x48xbf16>, vector<48x128xbf16>, vector<512x128xf32> -> vector<512x128xf32>
    %51 = arith.addf %46, %50 : vector<512x128xf32>
    %c0_70 = arith.constant 0 : index
    %c0_71 = arith.constant 0 : index
    %52 = vector.load %arg6[%c0_70, %c0_71] : memref<512x128xf32, #tpu.memory_space<vmem>>, vector<512x128xf32>
    tpu.vector_store %arg6[%c0_70, %c0_71], %51 {strides = array<i32>} : memref<512x128xf32, #tpu.memory_space<vmem>>, vector<512x128xf32>,
    %c1_72 = arith.constant 1 : index
    %c2_73 = arith.constant 2 : index
    %c0_74 = arith.constant 0 : index
    %c0_75 = arith.constant 0 : index
    %53 = vector.load %arg5[%c1_72, %c2_73, %c0_74, %c0_75] : memref<10x10x8x48xbf16, #tpu.memory_space<vmem>>, vector<8x8x8x48xbf16>
    %c0_76 = arith.constant 0 : index
    %c0_77 = arith.constant 0 : index
    %54 = vector.load %arg6[%c0_76, %c0_77] : memref<512x128xf32, #tpu.memory_space<vmem>>, vector<512x128xf32>
    %55 = vector.shape_cast %53 : vector<8x8x8x48xbf16> to vector<512x48xbf16>
    %c5 = arith.constant 5 : index
    %c0_78 = arith.constant 0 : index
    %c0_79 = arith.constant 0 : index
    %56 = vector.load %arg2[%c5, %c0_78, %c0_79] : memref<9x48x128xbf16, #tpu.memory_space<vmem>>, vector<1x48x128xbf16>
    %57 = vector.shape_cast %56 : vector<1x48x128xbf16> to vector<48x128xbf16>
    %cst_80 = arith.constant dense<0.000000e+00> : vector<512x128xf32>
    %58 = tpu.matmul %55, %57, %cst_80 {dimension_numbers = #tpu.dot_dimension_numbers<[1], [0], [0], [1], [0, 0, 1, 1], [], []>} : vector<512x48xbf16>, vector<48x128xbf16>, vector<512x128xf32> -> vector<512x128xf32>
    %59 = arith.addf %54, %58 : vector<512x128xf32>
    %c0_81 = arith.constant 0 : index
    %c0_82 = arith.constant 0 : index
    %60 = vector.load %arg6[%c0_81, %c0_82] : memref<512x128xf32, #tpu.memory_space<vmem>>, vector<512x128xf32>
    tpu.vector_store %arg6[%c0_81, %c0_82], %59 {strides = array<i32>} : memref<512x128xf32, #tpu.memory_space<vmem>>, vector<512x128xf32>,
    %c2_83 = arith.constant 2 : index
    %c0_84 = arith.constant 0 : index
    %c0_85 = arith.constant 0 : index
    %c0_86 = arith.constant 0 : index
    %61 = vector.load %arg5[%c2_83, %c0_84, %c0_85, %c0_86] : memref<10x10x8x48xbf16, #tpu.memory_space<vmem>>, vector<8x8x8x48xbf16>
    %c0_87 = arith.constant 0 : index
    %c0_88 = arith.constant 0 : index
    %62 = vector.load %arg6[%c0_87, %c0_88] : memref<512x128xf32, #tpu.memory_space<vmem>>, vector<512x128xf32>
    %63 = vector.shape_cast %61 : vector<8x8x8x48xbf16> to vector<512x48xbf16>
    %c6 = arith.constant 6 : index
    %c0_89 = arith.constant 0 : index
    %c0_90 = arith.constant 0 : index
    %64 = vector.load %arg2[%c6, %c0_89, %c0_90] : memref<9x48x128xbf16, #tpu.memory_space<vmem>>, vector<1x48x128xbf16>
    %65 = vector.shape_cast %64 : vector<1x48x128xbf16> to vector<48x128xbf16>
    %cst_91 = arith.constant dense<0.000000e+00> : vector<512x128xf32>
    %66 = tpu.matmul %63, %65, %cst_91 {dimension_numbers = #tpu.dot_dimension_numbers<[1], [0], [0], [1], [0, 0, 1, 1], [], []>} : vector<512x48xbf16>, vector<48x128xbf16>, vector<512x128xf32> -> vector<512x128xf32>
    %67 = arith.addf %62, %66 : vector<512x128xf32>
    %c0_92 = arith.constant 0 : index
    %c0_93 = arith.constant 0 : index
    %68 = vector.load %arg6[%c0_92, %c0_93] : memref<512x128xf32, #tpu.memory_space<vmem>>, vector<512x128xf32>
    tpu.vector_store %arg6[%c0_92, %c0_93], %67 {strides = array<i32>} : memref<512x128xf32, #tpu.memory_space<vmem>>, vector<512x128xf32>,
    %c2_94 = arith.constant 2 : index
    %c1_95 = arith.constant 1 : index
    %c0_96 = arith.constant 0 : index
    %c0_97 = arith.constant 0 : index
    %69 = vector.load %arg5[%c2_94, %c1_95, %c0_96, %c0_97] : memref<10x10x8x48xbf16, #tpu.memory_space<vmem>>, vector<8x8x8x48xbf16>
    %c0_98 = arith.constant 0 : index
    %c0_99 = arith.constant 0 : index
    %70 = vector.load %arg6[%c0_98, %c0_99] : memref<512x128xf32, #tpu.memory_space<vmem>>, vector<512x128xf32>
    %71 = vector.shape_cast %69 : vector<8x8x8x48xbf16> to vector<512x48xbf16>
    %c7 = arith.constant 7 : index
    %c0_100 = arith.constant 0 : index
    %c0_101 = arith.constant 0 : index
    %72 = vector.load %arg2[%c7, %c0_100, %c0_101] : memref<9x48x128xbf16, #tpu.memory_space<vmem>>, vector<1x48x128xbf16>
    %73 = vector.shape_cast %72 : vector<1x48x128xbf16> to vector<48x128xbf16>
    %cst_102 = arith.constant dense<0.000000e+00> : vector<512x128xf32>
    %74 = tpu.matmul %71, %73, %cst_102 {dimension_numbers = #tpu.dot_dimension_numbers<[1], [0], [0], [1], [0, 0, 1, 1], [], []>} : vector<512x48xbf16>, vector<48x128xbf16>, vector<512x128xf32> -> vector<512x128xf32>
    %75 = arith.addf %70, %74 : vector<512x128xf32>
    %c0_103 = arith.constant 0 : index
    %c0_104 = arith.constant 0 : index
    %76 = vector.load %arg6[%c0_103, %c0_104] : memref<512x128xf32, #tpu.memory_space<vmem>>, vector<512x128xf32>
    tpu.vector_store %arg6[%c0_103, %c0_104], %75 {strides = array<i32>} : memref<512x128xf32, #tpu.memory_space<vmem>>, vector<512x128xf32>,
    %c2_105 = arith.constant 2 : index
    %c2_106 = arith.constant 2 : index
    %c0_107 = arith.constant 0 : index
    %c0_108 = arith.constant 0 : index
    %77 = vector.load %arg5[%c2_105, %c2_106, %c0_107, %c0_108] : memref<10x10x8x48xbf16, #tpu.memory_space<vmem>>, vector<8x8x8x48xbf16>
    %c0_109 = arith.constant 0 : index
    %c0_110 = arith.constant 0 : index
    %78 = vector.load %arg6[%c0_109, %c0_110] : memref<512x128xf32, #tpu.memory_space<vmem>>, vector<512x128xf32>
    %79 = vector.shape_cast %77 : vector<8x8x8x48xbf16> to vector<512x48xbf16>
    %c8 = arith.constant 8 : index
    %c0_111 = arith.constant 0 : index
    %c0_112 = arith.constant 0 : index
    %80 = vector.load %arg2[%c8, %c0_111, %c0_112] : memref<9x48x128xbf16, #tpu.memory_space<vmem>>, vector<1x48x128xbf16>
    %81 = vector.shape_cast %80 : vector<1x48x128xbf16> to vector<48x128xbf16>
    %cst_113 = arith.constant dense<0.000000e+00> : vector<512x128xf32>
    %82 = tpu.matmul %79, %81, %cst_113 {dimension_numbers = #tpu.dot_dimension_numbers<[1], [0], [0], [1], [0, 0, 1, 1], [], []>} : vector<512x48xbf16>, vector<48x128xbf16>, vector<512x128xf32> -> vector<512x128xf32>
    %83 = arith.addf %78, %82 : vector<512x128xf32>
    %c0_114 = arith.constant 0 : index
    %c0_115 = arith.constant 0 : index
    %84 = vector.load %arg6[%c0_114, %c0_115] : memref<512x128xf32, #tpu.memory_space<vmem>>, vector<512x128xf32>
    tpu.vector_store %arg6[%c0_114, %c0_115], %83 {strides = array<i32>} : memref<512x128xf32, #tpu.memory_space<vmem>>, vector<512x128xf32>,
    %c0_116 = arith.constant 0 : index
    %c0_117 = arith.constant 0 : index
    %85 = vector.load %arg6[%c0_116, %c0_117] : memref<512x128xf32, #tpu.memory_space<vmem>>, vector<512x128xf32>
    %86 = vector.shape_cast %85 : vector<512x128xf32> to vector<8x8x8x128xf32>
    %87 = arith.truncf %86 : vector<8x8x8x128xf32> to vector<8x8x8x128xbf16>
    %c0_118 = arith.constant 0 : index
    %c0_119 = arith.constant 0 : index
    %c0_120 = arith.constant 0 : index
    %c0_121 = arith.constant 0 : index
    %c0_122 = arith.constant 0 : index
    %88 = vector.load %arg3[%c0_118, %c0_119, %c0_120, %c0_121, %c0_122] : memref<1x8x8x8x128xbf16, #tpu.memory_space<vmem>>, vector<1x8x8x8x128xbf16>
    %89 = vector.shape_cast %88 : vector<1x8x8x8x128xbf16> to vector<8x8x8x128xbf16>
    %90 = vector.shape_cast %87 : vector<8x8x8x128xbf16> to vector<1x8x8x8x128xbf16>
    tpu.vector_store %arg3[%c0_118, %c0_119, %c0_120, %c0_121, %c0_122], %90 {strides = array<i32>} : memref<1x8x8x8x128xbf16, #tpu.memory_space<vmem>>, vector<1x8x8x8x128xbf16>,
    %cst_123 = arith.constant dense<0.000000e+00> : vector<128xf32>
    %91 = vector.multi_reduction <add>, %85, %cst_123 [0] : vector<512x128xf32> to vector<128xf32>
    %92 = vector.shape_cast %91 : vector<128xf32> to vector<1x128xf32>
    %cst_124 = arith.constant 0.001953125 : f32
    %93 = vector.broadcast %cst_124 : f32 to vector<1x128xf32>
    %94 = arith.mulf %92, %93 : vector<1x128xf32>
    %95 = vector.broadcast %94 : vector<1x128xf32> to vector<512x128xf32>
    %96 = arith.subf %85, %95 : vector<512x128xf32>
    %97 = vector.broadcast %94 : vector<1x128xf32> to vector<512x128xf32>
    %98 = arith.subf %85, %97 : vector<512x128xf32>
    %99 = arith.mulf %96, %98 : vector<512x128xf32>
    %cst_125 = arith.constant dense<0.000000e+00> : vector<128xf32>
    %100 = vector.multi_reduction <add>, %99, %cst_125 [0] : vector<512x128xf32> to vector<128xf32>
    %101 = vector.shape_cast %100 : vector<128xf32> to vector<1x128xf32>
    %102 = tpu.concatenate %94, %101 in 0 : vector<1x128xf32>, vector<1x128xf32> -> vector<2x128xf32>
    %c0_126 = arith.constant 0 : index
    %c0_127 = arith.constant 0 : index
    %c0_128 = arith.constant 0 : index
    %103 = vector.load %arg4[%c0_126, %c0_127, %c0_128] : memref<1x2x128xf32, #tpu.memory_space<vmem>>, vector<1x2x128xf32>
    %104 = vector.shape_cast %103 : vector<1x2x128xf32> to vector<2x128xf32>
    %105 = vector.shape_cast %102 : vector<2x128xf32> to vector<1x2x128xf32>
    tpu.vector_store %arg4[%c0_126, %c0_127, %c0_128], %105 {strides = array<i32>} : memref<1x2x128xf32, #tpu.memory_space<vmem>>, vector<1x2x128xf32>,
    return
  }
  func.func @transform_0(%arg0: i32) -> (i32, i32, i32, i32, i32) {
    %c0_i32 = arith.constant 0 : i32
    %c0_i32_0 = arith.constant 0 : i32
    %c0_i32_1 = arith.constant 0 : i32
    %c0_i32_2 = arith.constant 0 : i32
    %c0_i32_3 = arith.constant 0 : i32
    return %arg0, %c0_i32, %c0_i32_0, %c0_i32_1, %c0_i32_2 : i32, i32, i32, i32, i32
  }
  func.func @transform_1(%arg0: i32) -> (i32, i32, i32) {
    %c0_i32 = arith.constant 0 : i32
    %c0_i32_0 = arith.constant 0 : i32
    %c0_i32_1 = arith.constant 0 : i32
    %c0_i32_2 = arith.constant 0 : i32
    return %c0_i32, %c0_i32_0, %c0_i32_1 : i32, i32, i32
  }
  func.func @transform_2(%arg0: i32) -> (i32, i32, i32, i32, i32) {
    %c0_i32 = arith.constant 0 : i32
    %c0_i32_0 = arith.constant 0 : i32
    %c0_i32_1 = arith.constant 0 : i32
    %c0_i32_2 = arith.constant 0 : i32
    %c0_i32_3 = arith.constant 0 : i32
    return %arg0, %c0_i32, %c0_i32_0, %c0_i32_1, %c0_i32_2 : i32, i32, i32, i32, i32
  }
  func.func @transform_3(%arg0: i32) -> (i32, i32, i32) {
    %c0_i32 = arith.constant 0 : i32
    %c0_i32_0 = arith.constant 0 : i32
    %c0_i32_1 = arith.constant 0 : i32
    return %arg0, %c0_i32, %c0_i32_0 : i32, i32, i32
  }
}

</mosaic_0001>

<llo_original>
// kernel: tpu_custom_call.1
$region0: #{tpu_custom_call.1}
  #allocation0 [shape = 'u32[]', space=smem, size = 0x4, offset = 0x4, fixed_abs, tag = 'smem constant byte address 0x4 - core index']
  #allocation1 [shape = 'u32[144,128]{1,0:T(1,128)}', space=vmem, size = 0x12000, scoped, tag = 'internal scratch']
  #allocation2 [shape = 'bf16[10,10,8,48]{3,2,1,0:T(8,128)(2,1)}', space=vmem, size = 0x32000, scoped, tag = 'scratch operand']
  #allocation3 [shape = 'f32[512,128]{1,0:T(8,128)}', space=vmem, size = 0x40000, scoped, tag = 'scratch operand']
  %s0 = inlined_call_operand.hbm [shape: bf16[2,8,8,8,16], index: 0, kind: input, shape index: {}]
  %s1 = inlined_call_operand.hbm [shape: bf16[9,48,128], index: 1, kind: input, shape index: {}]
  %s2 = inlined_call_operand.hbm [shape: bf16[2,8,8,8,128], index: 2, kind: output, shape index: {0}]
  %s3 = inlined_call_operand.hbm [shape: f32[2,2,128], index: 3, kind: output, shape index: {1}]
  %4 = xla_tuple %s2, %s3
  %s5 = sld [smem:[#allocation0]]
  $region57: #{tpu_custom_call.1} parent=0
    _
  %s7 = ssub.s32 1, %s5
  %s8 = scalar_select 0, %s7, %s5
  $region1: #{tpu_custom_call.1} parent=0
    #allocation4 [shape = 'u8[262144]{0}', space=vmem, size = 0x40000, scoped, tag = 'input window, operand 0']
    #allocation5 [shape = 's32[2]{0}', space=sflag, size = 0x8, scoped, tag = 'scoped memory for tpu_custom_call.1']
    #allocation6 [shape = 's32[2]{0}', space=sflag, size = 0x8, scoped, tag = 'scoped memory for tpu_custom_call.1']
    #allocation7 [shape = 'u8[110592]{0}', space=vmem, size = 0x1b000, scoped, tag = 'input window, operand 1, single buffered']
    #allocation8 [shape = 's32[1]{0}', space=sflag, size = 0x4, scoped, tag = 'scoped memory for tpu_custom_call.1']
    #allocation9 [shape = 'u8[262144]{0}', space=vmem, size = 0x40000, scoped, tag = 'output window, operand 0']
    #allocation10 [shape = 'u8[2048]{0}', space=vmem, size = 0x800, scoped, tag = 'output window, operand 1']
    #allocation11 [shape = 's32[2]{0}', space=sflag, size = 0x8, scoped, tag = 'scoped memory for tpu_custom_call.1']
    %9 = vsyncpa [#allocation5], 0
    %s10 = scalar_lea.sflag [#allocation5], 1
    %11 = vsyncpa %s10, 0
    %12 = vsyncpa [#allocation8], 0
    %13 = vsyncpa [#allocation6], 0
    %s14 = scalar_lea.sflag [#allocation6], 1
    %15 = vsyncpa %s14, 0
    %16 = vsyncpa [#allocation11], 0
    %s17 = scalar_lea.sflag [#allocation11], 1
    %18 = vsyncpa %s17, 0
    loop: start=0, step=1, limit=4
    $region2: #{tpu_custom_call.1} parent=1 // loop_pre_header
      _
    $region3: #{tpu_custom_call.1} parent=1 // loop_header
      %s20 = sphi 0, %s24
      %p21 = scmp.ge.s32.totalorder %s20, 4
      %s30 = sphi 0, %s32
      %s33 = sphi 0, %s30
      %s34 = sphi 0, %s33
      %s50 = sphi 0, %s34
      %s54 = sphi 0, %s54
      %s56 = sphi 0, %s54
      %s57 = sphi 0, %s56
      %s71 = sphi 0, %s57
      %s77 = sphi 0, %s79
      %s80 = sphi 0, %s77
      %s81 = sphi 0, %s80
      %s97 = sphi 0, %s81
      %s103 = sphi 0, %s105
      %s106 = sphi 0, %s103
      %s107 = sphi 0, %s106
      %s123 = sphi 0, %s107
    $region4: #{tpu_custom_call.1} parent=1 // loop_header_branch
      %23 = sbr.rel (%p21) target = $region8
    $region5: #{tpu_custom_call.1} parent=1 // loop_body
      %s25 = ssub.s32 %s20, 1
      %s26 = ssub.s32 %s20, 2
      %s27 = sadd.s32 %s20, 1
      %s28 = ssub.s32 %s20, %s27
      %p29 = scmp.eq.s32.totalorder %s28, 0
      %s31 = sadd.s32 %s30, 1
      %s32 = scalar_select %p29, %s30, %s31
      %p35 = pneg %p29
      %p36 = scmp.eq.s32.totalorder %s20, 1
      %p37 = por %p35, %p36
      %p38 = scmp.ne.s32.totalorder %s30, %s33
      %p39 = scmp.eq.s32.totalorder %s20, 0
      %p40 = por %p38, %p39
      %p41 = scmp.ne.s32.totalorder %s30, %s33
      %p42 = scmp.eq.s32.totalorder %s25, 1
      %p43 = por %p41, %p42
      %p44 = scmp.ne.s32.totalorder %s33, %s34
      %p45 = scmp.eq.s32.totalorder %s25, 0
      %p46 = por %p44, %p45
      %p47 = scmp.ne.s32.totalorder %s33, %s34
      %p48 = scmp.eq.s32.totalorder %s26, 1
      %p49 = por %p47, %p48
      %p51 = scmp.ne.s32.totalorder %s34, %s50
      %p52 = scmp.eq.s32.totalorder %s26, 0
      %p53 = por %p51, %p52
      %s55 = sadd.s32 %s54, 1
      %p58 = scmp.eq.s32.totalorder %s20, 1
      %p59 = scmp.ne.s32.totalorder %s54, %s56
      %p60 = scmp.eq.s32.totalorder %s20, 0
      %p61 = por %p59, %p60
      %p62 = scmp.ne.s32.totalorder %s54, %s56
      %p63 = scmp.eq.s32.totalorder %s25, 1
      %p64 = por %p62, %p63
      %p65 = scmp.ne.s32.totalorder %s56, %s57
      %p66 = scmp.eq.s32.totalorder %s25, 0
      %p67 = por %p65, %p66
      %p68 = scmp.ne.s32.totalorder %s56, %s57
      %p69 = scmp.eq.s32.totalorder %s26, 1
      %p70 = por %p68, %p69
      %p72 = scmp.ne.s32.totalorder %s57, %s71
      %p73 = scmp.eq.s32.totalorder %s26, 0
      %p74 = por %p72, %p73
      %s75 = ssub.s32 %s20, %s27
      %p76 = scmp.eq.s32.totalorder %s75, 0
      %s78 = sadd.s32 %s77, 1
      %s79 = scalar_select %p76, %s77, %s78
      %p82 = pneg %p76
      %p83 = scmp.eq.s32.totalorder %s20, 1
      %p84 = por %p82, %p83
      %p85 = scmp.ne.s32.totalorder %s77, %s80
      %p86 = scmp.eq.s32.totalorder %s20, 0
      %p87 = por %p85, %p86
      %p88 = scmp.ne.s32.totalorder %s77, %s80
      %p89 = scmp.eq.s32.totalorder %s25, 1
      %p90 = por %p88, %p89
      %p91 = scmp.ne.s32.totalorder %s80, %s81
      %p92 = scmp.eq.s32.totalorder %s25, 0
      %p93 = por %p91, %p92
      %p94 = scmp.ne.s32.totalorder %s80, %s81
      %p95 = scmp.eq.s32.totalorder %s26, 1
      %p96 = por %p94, %p95
      %p98 = scmp.ne.s32.totalorder %s81, %s97
      %p99 = scmp.eq.s32.totalorder %s26, 0
      %p100 = por %p98, %p99
      %s101 = ssub.s32 %s20, %s27
      %p102 = scmp.eq.s32.totalorder %s101, 0
      %s104 = sadd.s32 %s103, 1
      %s105 = scalar_select %p102, %s103, %s104
      %p108 = pneg %p102
      %p109 = scmp.eq.s32.totalorder %s20, 1
      %p110 = por %p108, %p109
      %p111 = scmp.ne.s32.totalorder %s103, %s106
      %p112 = scmp.eq.s32.totalorder %s20, 0
      %p113 = por %p111, %p112
      %p114 = scmp.ne.s32.totalorder %s103, %s106
      %p115 = scmp.eq.s32.totalorder %s25, 1
      %p116 = por %p114, %p115
      %p117 = scmp.ne.s32.totalorder %s106, %s107
      %p118 = scmp.eq.s32.totalorder %s25, 0
      %p119 = por %p117, %p118
      %p120 = scmp.ne.s32.totalorder %s106, %s107
      %p121 = scmp.eq.s32.totalorder %s26, 1
      %p122 = por %p120, %p121
      %p124 = scmp.ne.s32.totalorder %s107, %s123
      %p125 = scmp.eq.s32.totalorder %s26, 0
      %p126 = por %p124, %p125
      %p127 = scmp.le.s32.totalorder 1, %s20
      %p128 = scmp.lt.s32.totalorder %s20, 3
      %p129 = pnand %p127, %p128
      %p130 = pneg %p129
      // Predicated region
      $region9: #{tpu_custom_call.1} parent=5 // pred_check
        _
      $region10: #{tpu_custom_call.1} parent=5 // pred_check_branch
        %132 = sbr.rel (%p129) target = $region12
      $region11: #{tpu_custom_call.1} parent=5 // pred_region
        %s133 = ssub.s32 %s20, 1
        // Predicated region
        $region13: #{tpu_custom_call.1} parent=11 // pred_check
          %p134 = pneg %p67
        $region14: #{tpu_custom_call.1} parent=11 // pred_check_branch
          %136 = sbr.rel (%p134) target = $region16
        $region15: #{tpu_custom_call.1} parent=11 // pred_region
          %s138 = ssub.s32 3456, 3456
          %139 = vsyncadd [#allocation8], %s138
          %s140 = sshll.u32 [#allocation7], 4
          %s141 = int_to_ptr.vmem [resolvable:$true] %s140
          %146 = dma.hbm_to_vmem [thread:$0]  %s1, 3456, %s141, [#allocation8], 64, 64, 4
        $region16: #{tpu_custom_call.1} parent=11 // pred_fallthru
          _
      $region12: #{tpu_custom_call.1} parent=5 // pred_fallthru
        _
      %p147 = scmp.lt.s32.totalorder %s20, 2
      // Predicated region
      $region17: #{tpu_custom_call.1} parent=5 // pred_check
        %p148 = pneg %p147
      $region18: #{tpu_custom_call.1} parent=5 // pred_check_branch
        %150 = sbr.rel (%p148) target = $region20
      $region19: #{tpu_custom_call.1} parent=5 // pred_region
        // Predicated region
        $region21: #{tpu_custom_call.1} parent=19 // pred_check
          %p151 = pneg %p40
        $region22: #{tpu_custom_call.1} parent=19 // pred_check_branch
          %153 = sbr.rel (%p151) target = $region24
        $region23: #{tpu_custom_call.1} parent=19 // pred_region
          %s154 = sand.u32 %s30, 1
          %s155 = scalar_lea.sflag [#allocation5], %s154
          %s156 = sand.u32 %s30, 1
          %s157 = smul.addr %s156, 256
          %s158 = scalar_lea.vmem [#allocation4], %s157
          %s160 = ssub.s32 4096, 4096
          %161 = vsyncadd %s155, %s160
          %s162 = smul.addr %s20, 64
          %s163 = smul.addr %s162, 64
          %s164 = scalar_lea.hbm %s0, %s163
          %s165 = sshll.u32 %s158, 4
          %s166 = int_to_ptr.vmem [resolvable:$true] %s165
          %171 = dma.hbm_to_vmem [thread:$0]  %s164, 4096, %s166, %s155, 64, 64, 4
        $region24: #{tpu_custom_call.1} parent=19 // pred_fallthru
          _
      $region20: #{tpu_custom_call.1} parent=5 // pred_fallthru
        _
      %p172 = scmp.le.s32.totalorder 1, %s20
      %p173 = scmp.lt.s32.totalorder %s20, 3
      %p174 = pnand %p172, %p173
      %p175 = pneg %p174
      // Predicated region
      $region25: #{tpu_custom_call.1} parent=5 // pred_check
        _
      $region26: #{tpu_custom_call.1} parent=5 // pred_check_branch
        %177 = sbr.rel (%p174) target = $region28
      $region27: #{tpu_custom_call.1} parent=5 // pred_region
        %s178 = ssub.s32 %s20, 1
        %s179 = sand.u32 %s33, 1
        %s180 = scalar_lea.sflag [#allocation5], %s179
        %s181 = sand.u32 %s33, 1
        %s182 = smul.addr %s181, 256
        %s183 = scalar_lea.vmem [#allocation4], %s182
        // Predicated region
        $region29: #{tpu_custom_call.1} parent=27 // pred_check
          %p184 = pneg %p46
        $region30: #{tpu_custom_call.1} parent=27 // pred_check_branch
          %186 = sbr.rel (%p184) target = $region32
        $region31: #{tpu_custom_call.1} parent=27 // pred_region
          %187 = dma.done %s180, 4096
        $region32: #{tpu_custom_call.1} parent=27 // pred_fallthru
          _
        // Predicated region
        $region33: #{tpu_custom_call.1} parent=27 // pred_check
          %p188 = pneg %p67
        $region34: #{tpu_custom_call.1} parent=27 // pred_check_branch
          %190 = sbr.rel (%p188) target = $region36
        $region35: #{tpu_custom_call.1} parent=27 // pred_region
          %191 = dma.done [#allocation8], 3456
        $region36: #{tpu_custom_call.1} parent=27 // pred_fallthru
          _
        %s192 = sand.u32 %s33, 1
        %s193 = scalar_lea.sflag [#allocation5], %s192
        %s194 = sand.u32 %s33, 1
        %s195 = smul.addr %s194, 256
        %s196 = scalar_lea.vmem [#allocation4], %s195
        %p197 = pneg %p46
        %p198 = pneg %p43
        %p199 = pneg %p67
        %p200 = pneg %p64
        %p201 = pneg %p93
        %p202 = pneg %p90
        %s203 = sand.u32 %s80, 1
        %s204 = scalar_lea.sflag [#allocation6], %s203
        %s205 = sand.u32 %s80, 1
        %s206 = smul.addr %s205, 256
        %s207 = scalar_lea.vmem [#allocation9], %s206
        %p208 = pneg %p119
        %p209 = pneg %p116
        %s210 = sand.u32 %s106, 1
        %s211 = scalar_lea.sflag [#allocation11], %s210
        %s212 = sand.u32 %s106, 1
        %s213 = smul.addr %s212, 2
        %s214 = scalar_lea.vmem [#allocation10], %s213
        %v216 = vld [vmem:[%s183] sm:$0xf]
        %v217 = vld [vmem:[%s183 + $0x4] sm:$0xf]
        %v218 = vld [vmem:[%s183 + $0x8] sm:$0xf]
        %v219 = vld [vmem:[%s183 + $0xc] sm:$0xf]
        %v220 = vld [vmem:[%s183 + $0x10] sm:$0xf]
        %v221 = vld [vmem:[%s183 + $0x14] sm:$0xf]
        %v222 = vld [vmem:[%s183 + $0x18] sm:$0xf]
        %v223 = vld [vmem:[%s183 + $0x1c] sm:$0xf]
        %v224 = vld [vmem:[%s183 + $0x20] sm:$0xf]
        %v225 = vld [vmem:[%s183 + $0x24] sm:$0xf]
        %v226 = vld [vmem:[%s183 + $0x28] sm:$0xf]
        %v227 = vld [vmem:[%s183 + $0x2c] sm:$0xf]
        %v228 = vld [vmem:[%s183 + $0x30] sm:$0xf]
        %v229 = vld [vmem:[%s183 + $0x34] sm:$0xf]
        %v230 = vld [vmem:[%s183 + $0x38] sm:$0xf]
        %v231 = vld [vmem:[%s183 + $0x3c] sm:$0xf]
        %v232 = vld [vmem:[%s183 + $0x40] sm:$0xf]
        %v233 = vld [vmem:[%s183 + $0x44] sm:$0xf]
        %v234 = vld [vmem:[%s183 + $0x48] sm:$0xf]
        %v235 = vld [vmem:[%s183 + $0x4c] sm:$0xf]
        %v236 = vld [vmem:[%s183 + $0x50] sm:$0xf]
        %v237 = vld [vmem:[%s183 + $0x54] sm:$0xf]
        %v238 = vld [vmem:[%s183 + $0x58] sm:$0xf]
        %v239 = vld [vmem:[%s183 + $0x5c] sm:$0xf]
        %v240 = vld [vmem:[%s183 + $0x60] sm:$0xf]
        %v241 = vld [vmem:[%s183 + $0x64] sm:$0xf]
        %v242 = vld [vmem:[%s183 + $0x68] sm:$0xf]
        %v243 = vld [vmem:[%s183 + $0x6c] sm:$0xf]
        %v244 = vld [vmem:[%s183 + $0x70] sm:$0xf]
        %v245 = vld [vmem:[%s183 + $0x74] sm:$0xf]
        %v246 = vld [vmem:[%s183 + $0x78] sm:$0xf]
        %v247 = vld [vmem:[%s183 + $0x7c] sm:$0xf]
        %v248 = vld [vmem:[%s183 + $0x80] sm:$0xf]
        %v249 = vld [vmem:[%s183 + $0x84] sm:$0xf]
        %v250 = vld [vmem:[%s183 + $0x88] sm:$0xf]
        %v251 = vld [vmem:[%s183 + $0x8c] sm:$0xf]
        %v252 = vld [vmem:[%s183 + $0x90] sm:$0xf]
        %v253 = vld [vmem:[%s183 + $0x94] sm:$0xf]
        %v254 = vld [vmem:[%s183 + $0x98] sm:$0xf]
        %v255 = vld [vmem:[%s183 + $0x9c] sm:$0xf]
        %v256 = vld [vmem:[%s183 + $0xa0] sm:$0xf]
        %v257 = vld [vmem:[%s183 + $0xa4] sm:$0xf]
        %v258 = vld [vmem:[%s183 + $0xa8] sm:$0xf]
        %v259 = vld [vmem:[%s183 + $0xac] sm:$0xf]
        %v260 = vld [vmem:[%s183 + $0xb0] sm:$0xf]
        %v261 = vld [vmem:[%s183 + $0xb4] sm:$0xf]
        %v262 = vld [vmem:[%s183 + $0xb8] sm:$0xf]
        %v263 = vld [vmem:[%s183 + $0xbc] sm:$0xf]
        %v264 = vld [vmem:[%s183 + $0xc0] sm:$0xf]
        %v265 = vld [vmem:[%s183 + $0xc4] sm:$0xf]
        %v266 = vld [vmem:[%s183 + $0xc8] sm:$0xf]
        %v267 = vld [vmem:[%s183 + $0xcc] sm:$0xf]
        %v268 = vld [vmem:[%s183 + $0xd0] sm:$0xf]
        %v269 = vld [vmem:[%s183 + $0xd4] sm:$0xf]
        %v270 = vld [vmem:[%s183 + $0xd8] sm:$0xf]
        %v271 = vld [vmem:[%s183 + $0xdc] sm:$0xf]
        %v272 = vld [vmem:[%s183 + $0xe0] sm:$0xf]
        %v273 = vld [vmem:[%s183 + $0xe4] sm:$0xf]
        %v274 = vld [vmem:[%s183 + $0xe8] sm:$0xf]
        %v275 = vld [vmem:[%s183 + $0xec] sm:$0xf]
        %v276 = vld [vmem:[%s183 + $0xf0] sm:$0xf]
        %v277 = vld [vmem:[%s183 + $0xf4] sm:$0xf]
        %v278 = vld [vmem:[%s183 + $0xf8] sm:$0xf]
        %v279 = vld [vmem:[%s183 + $0xfc] sm:$0xf]
        %v344 = vunpack.c.l.b16 %v216
        %v345 = vunpack.c.l.b16 %v217
        %v346 = vunpack.c.l.b16 %v218
        %v347 = vunpack.c.l.b16 %v219
        %v348 = vunpack.c.l.b16 %v220
        %v349 = vunpack.c.l.b16 %v221
        %v350 = vunpack.c.l.b16 %v222
        %v351 = vunpack.c.l.b16 %v223
        %v352 = vunpack.c.l.b16 %v224
        %v353 = vunpack.c.l.b16 %v225
        %v354 = vunpack.c.l.b16 %v226
        %v355 = vunpack.c.l.b16 %v227
        %v356 = vunpack.c.l.b16 %v228
        %v357 = vunpack.c.l.b16 %v229
        %v358 = vunpack.c.l.b16 %v230
        %v359 = vunpack.c.l.b16 %v231
        %v360 = vunpack.c.l.b16 %v232
        %v361 = vunpack.c.l.b16 %v233
        %v362 = vunpack.c.l.b16 %v234
        %v363 = vunpack.c.l.b16 %v235
        %v364 = vunpack.c.l.b16 %v236
        %v365 = vunpack.c.l.b16 %v237
        %v366 = vunpack.c.l.b16 %v238
        %v367 = vunpack.c.l.b16 %v239
        %v368 = vunpack.c.l.b16 %v240
        %v369 = vunpack.c.l.b16 %v241
        %v370 = vunpack.c.l.b16 %v242
        %v371 = vunpack.c.l.b16 %v243
        %v372 = vunpack.c.l.b16 %v244
        %v373 = vunpack.c.l.b16 %v245
        %v374 = vunpack.c.l.b16 %v246
        %v375 = vunpack.c.l.b16 %v247
        %v376 = vunpack.c.l.b16 %v248
        %v377 = vunpack.c.l.b16 %v249
        %v378 = vunpack.c.l.b16 %v250
        %v379 = vunpack.c.l.b16 %v251
        %v380 = vunpack.c.l.b16 %v252
        %v381 = vunpack.c.l.b16 %v253
        %v382 = vunpack.c.l.b16 %v254
        %v383 = vunpack.c.l.b16 %v255
        %v384 = vunpack.c.l.b16 %v256
        %v385 = vunpack.c.l.b16 %v257
        %v386 = vunpack.c.l.b16 %v258
        %v387 = vunpack.c.l.b16 %v259
        %v388 = vunpack.c.l.b16 %v260
        %v389 = vunpack.c.l.b16 %v261
        %v390 = vunpack.c.l.b16 %v262
        %v391 = vunpack.c.l.b16 %v263
        %v392 = vunpack.c.l.b16 %v264
        %v393 = vunpack.c.l.b16 %v265
        %v394 = vunpack.c.l.b16 %v266
        %v395 = vunpack.c.l.b16 %v267
        %v396 = vunpack.c.l.b16 %v268
        %v397 = vunpack.c.l.b16 %v269
        %v398 = vunpack.c.l.b16 %v270
        %v399 = vunpack.c.l.b16 %v271
        %v400 = vunpack.c.l.b16 %v272
        %v401 = vunpack.c.l.b16 %v273
        %v402 = vunpack.c.l.b16 %v274
        %v403 = vunpack.c.l.b16 %v275
        %v404 = vunpack.c.l.b16 %v276
        %v405 = vunpack.c.l.b16 %v277
        %v406 = vunpack.c.l.b16 %v278
        %v407 = vunpack.c.l.b16 %v279
        %v408 = vpack.c.b16 %v344, %v344
        %v409 = vpack.c.b16 %v345, %v345
        %v410 = vpack.c.b16 %v346, %v346
        %v411 = vpack.c.b16 %v347, %v347
        %v412 = vpack.c.b16 %v348, %v348
        %v413 = vpack.c.b16 %v349, %v349
        %v414 = vpack.c.b16 %v350, %v350
        %v415 = vpack.c.b16 %v351, %v351
        %v416 = vpack.c.b16 %v352, %v352
        %v417 = vpack.c.b16 %v353, %v353
        %v418 = vpack.c.b16 %v354, %v354
        %v419 = vpack.c.b16 %v355, %v355
        %v420 = vpack.c.b16 %v356, %v356
        %v421 = vpack.c.b16 %v357, %v357
        %v422 = vpack.c.b16 %v358, %v358
        %v423 = vpack.c.b16 %v359, %v359
        %v424 = vpack.c.b16 %v360, %v360
        %v425 = vpack.c.b16 %v361, %v361
        %v426 = vpack.c.b16 %v362, %v362
        %v427 = vpack.c.b16 %v363, %v363
        %v428 = vpack.c.b16 %v364, %v364
        %v429 = vpack.c.b16 %v365, %v365
        %v430 = vpack.c.b16 %v366, %v366
        %v431 = vpack.c.b16 %v367, %v367
        %v432 = vpack.c.b16 %v368, %v368
        %v433 = vpack.c.b16 %v369, %v369
        %v434 = vpack.c.b16 %v370, %v370
        %v435 = vpack.c.b16 %v371, %v371
        %v436 = vpack.c.b16 %v372, %v372
        %v437 = vpack.c.b16 %v373, %v373
        %v438 = vpack.c.b16 %v374, %v374
        %v439 = vpack.c.b16 %v375, %v375
        %v440 = vpack.c.b16 %v376, %v376
        %v441 = vpack.c.b16 %v377, %v377
        %v442 = vpack.c.b16 %v378, %v378
        %v443 = vpack.c.b16 %v379, %v379
        %v444 = vpack.c.b16 %v380, %v380
        %v445 = vpack.c.b16 %v381, %v381
        %v446 = vpack.c.b16 %v382, %v382
        %v447 = vpack.c.b16 %v383, %v383
        %v448 = vpack.c.b16 %v384, %v384
        %v449 = vpack.c.b16 %v385, %v385
        %v450 = vpack.c.b16 %v386, %v386
        %v451 = vpack.c.b16 %v387, %v387
        %v452 = vpack.c.b16 %v388, %v388
        %v453 = vpack.c.b16 %v389, %v389
        %v454 = vpack.c.b16 %v390, %v390
        %v455 = vpack.c.b16 %v391, %v391
        %v456 = vpack.c.b16 %v392, %v392
        %v457 = vpack.c.b16 %v393, %v393
        %v458 = vpack.c.b16 %v394, %v394
        %v459 = vpack.c.b16 %v395, %v395
        %v460 = vpack.c.b16 %v396, %v396
        %v461 = vpack.c.b16 %v397, %v397
        %v462 = vpack.c.b16 %v398, %v398
        %v463 = vpack.c.b16 %v399, %v399
        %v464 = vpack.c.b16 %v400, %v400
        %v465 = vpack.c.b16 %v401, %v401
        %v466 = vpack.c.b16 %v402, %v402
        %v467 = vpack.c.b16 %v403, %v403
        %v468 = vpack.c.b16 %v404, %v404
        %v469 = vpack.c.b16 %v405, %v405
        %v470 = vpack.c.b16 %v406, %v406
        %v471 = vpack.c.b16 %v407, %v407
        %v473 = vshrl.u32 %v408, 16
        %v475 = vrot.slane %v473, 7
        %v476 = vshll.u32 %v408, 16
        %v478 = vor.u32 %v475, %v476
        %v480 = vshrl.u32 %v409, 16
        %v482 = vrot.slane %v480, 7
        %v483 = vshll.u32 %v409, 16
        %v485 = vor.u32 %v482, %v483
        %v487 = vshrl.u32 %v410, 16
        %v489 = vrot.slane %v487, 7
        %v490 = vshll.u32 %v410, 16
        %v492 = vor.u32 %v489, %v490
        %v494 = vshrl.u32 %v411, 16
        %v496 = vrot.slane %v494, 7
        %v497 = vshll.u32 %v411, 16
        %v499 = vor.u32 %v496, %v497
        %v501 = vshrl.u32 %v412, 16
        %v503 = vrot.slane %v501, 7
        %v504 = vshll.u32 %v412, 16
        %v506 = vor.u32 %v503, %v504
        %v508 = vshrl.u32 %v413, 16
        %v510 = vrot.slane %v508, 7
        %v511 = vshll.u32 %v413, 16
        %v513 = vor.u32 %v510, %v511
        %v515 = vshrl.u32 %v414, 16
        %v517 = vrot.slane %v515, 7
        %v518 = vshll.u32 %v414, 16
        %v520 = vor.u32 %v517, %v518
        %v522 = vshrl.u32 %v415, 16
        %v524 = vrot.slane %v522, 7
        %v525 = vshll.u32 %v415, 16
        %v527 = vor.u32 %v524, %v525
        %v529 = vshrl.u32 %v416, 16
        %v531 = vrot.slane %v529, 7
        %v532 = vshll.u32 %v416, 16
        %v534 = vor.u32 %v531, %v532
        %v536 = vshrl.u32 %v417, 16
        %v538 = vrot.slane %v536, 7
        %v539 = vshll.u32 %v417, 16
        %v541 = vor.u32 %v538, %v539
        %v543 = vshrl.u32 %v418, 16
        %v545 = vrot.slane %v543, 7
        %v546 = vshll.u32 %v418, 16
        %v548 = vor.u32 %v545, %v546
        %v550 = vshrl.u32 %v419, 16
        %v552 = vrot.slane %v550, 7
        %v553 = vshll.u32 %v419, 16
        %v555 = vor.u32 %v552, %v553
        %v557 = vshrl.u32 %v420, 16
        %v559 = vrot.slane %v557, 7
        %v560 = vshll.u32 %v420, 16
        %v562 = vor.u32 %v559, %v560
        %v564 = vshrl.u32 %v421, 16
        %v566 = vrot.slane %v564, 7
        %v567 = vshll.u32 %v421, 16
        %v569 = vor.u32 %v566, %v567
        %v571 = vshrl.u32 %v422, 16
        %v573 = vrot.slane %v571, 7
        %v574 = vshll.u32 %v422, 16
        %v576 = vor.u32 %v573, %v574
        %v578 = vshrl.u32 %v423, 16
        %v580 = vrot.slane %v578, 7
        %v581 = vshll.u32 %v423, 16
        %v583 = vor.u32 %v580, %v581
        %v585 = vshrl.u32 %v424, 16
        %v587 = vrot.slane %v585, 7
        %v588 = vshll.u32 %v424, 16
        %v590 = vor.u32 %v587, %v588
        %v592 = vshrl.u32 %v425, 16
        %v594 = vrot.slane %v592, 7
        %v595 = vshll.u32 %v425, 16
        %v597 = vor.u32 %v594, %v595
        %v599 = vshrl.u32 %v426, 16
        %v601 = vrot.slane %v599, 7
        %v602 = vshll.u32 %v426, 16
        %v604 = vor.u32 %v601, %v602
        %v606 = vshrl.u32 %v427, 16
        %v608 = vrot.slane %v606, 7
        %v609 = vshll.u32 %v427, 16
        %v611 = vor.u32 %v608, %v609
        %v613 = vshrl.u32 %v428, 16
        %v615 = vrot.slane %v613, 7
        %v616 = vshll.u32 %v428, 16
        %v618 = vor.u32 %v615, %v616
        %v620 = vshrl.u32 %v429, 16
        %v622 = vrot.slane %v620, 7
        %v623 = vshll.u32 %v429, 16
        %v625 = vor.u32 %v622, %v623
        %v627 = vshrl.u32 %v430, 16
        %v629 = vrot.slane %v627, 7
        %v630 = vshll.u32 %v430, 16
        %v632 = vor.u32 %v629, %v630
        %v634 = vshrl.u32 %v431, 16
        %v636 = vrot.slane %v634, 7
        %v637 = vshll.u32 %v431, 16
        %v639 = vor.u32 %v636, %v637
        %v641 = vshrl.u32 %v432, 16
        %v643 = vrot.slane %v641, 7
        %v644 = vshll.u32 %v432, 16
        %v646 = vor.u32 %v643, %v644
        %v648 = vshrl.u32 %v433, 16
        %v650 = vrot.slane %v648, 7
        %v651 = vshll.u32 %v433, 16
        %v653 = vor.u32 %v650, %v651
        %v655 = vshrl.u32 %v434, 16
        %v657 = vrot.slane %v655, 7
        %v658 = vshll.u32 %v434, 16
        %v660 = vor.u32 %v657, %v658
        %v662 = vshrl.u32 %v435, 16
        %v664 = vrot.slane %v662, 7
        %v665 = vshll.u32 %v435, 16
        %v667 = vor.u32 %v664, %v665
        %v669 = vshrl.u32 %v436, 16
        %v671 = vrot.slane %v669, 7
        %v672 = vshll.u32 %v436, 16
        %v674 = vor.u32 %v671, %v672
        %v676 = vshrl.u32 %v437, 16
        %v678 = vrot.slane %v676, 7
        %v679 = vshll.u32 %v437, 16
        %v681 = vor.u32 %v678, %v679
        %v683 = vshrl.u32 %v438, 16
        %v685 = vrot.slane %v683, 7
        %v686 = vshll.u32 %v438, 16
        %v688 = vor.u32 %v685, %v686
        %v690 = vshrl.u32 %v439, 16
        %v692 = vrot.slane %v690, 7
        %v693 = vshll.u32 %v439, 16
        %v695 = vor.u32 %v692, %v693
        %v697 = vshrl.u32 %v440, 16
        %v699 = vrot.slane %v697, 7
        %v700 = vshll.u32 %v440, 16
        %v702 = vor.u32 %v699, %v700
        %v704 = vshrl.u32 %v441, 16
        %v706 = vrot.slane %v704, 7
        %v707 = vshll.u32 %v441, 16
        %v709 = vor.u32 %v706, %v707
        %v711 = vshrl.u32 %v442, 16
        %v713 = vrot.slane %v711, 7
        %v714 = vshll.u32 %v442, 16
        %v716 = vor.u32 %v713, %v714
        %v718 = vshrl.u32 %v443, 16
        %v720 = vrot.slane %v718, 7
        %v721 = vshll.u32 %v443, 16
        %v723 = vor.u32 %v720, %v721
        %v725 = vshrl.u32 %v444, 16
        %v727 = vrot.slane %v725, 7
        %v728 = vshll.u32 %v444, 16
        %v730 = vor.u32 %v727, %v728
        %v732 = vshrl.u32 %v445, 16
        %v734 = vrot.slane %v732, 7
        %v735 = vshll.u32 %v445, 16
        %v737 = vor.u32 %v734, %v735
        %v739 = vshrl.u32 %v446, 16
        %v741 = vrot.slane %v739, 7
        %v742 = vshll.u32 %v446, 16
        %v744 = vor.u32 %v741, %v742
        %v746 = vshrl.u32 %v447, 16
        %v748 = vrot.slane %v746, 7
        %v749 = vshll.u32 %v447, 16
        %v751 = vor.u32 %v748, %v749
        %v753 = vshrl.u32 %v448, 16
        %v755 = vrot.slane %v753, 7
        %v756 = vshll.u32 %v448, 16
        %v758 = vor.u32 %v755, %v756
        %v760 = vshrl.u32 %v449, 16
        %v762 = vrot.slane %v760, 7
        %v763 = vshll.u32 %v449, 16
        %v765 = vor.u32 %v762, %v763
        %v767 = vshrl.u32 %v450, 16
        %v769 = vrot.slane %v767, 7
        %v770 = vshll.u32 %v450, 16
        %v772 = vor.u32 %v769, %v770
        %v774 = vshrl.u32 %v451, 16
        %v776 = vrot.slane %v774, 7
        %v777 = vshll.u32 %v451, 16
        %v779 = vor.u32 %v776, %v777
        %v781 = vshrl.u32 %v452, 16
        %v783 = vrot.slane %v781, 7
        %v784 = vshll.u32 %v452, 16
        %v786 = vor.u32 %v783, %v784
        %v788 = vshrl.u32 %v453, 16
        %v790 = vrot.slane %v788, 7
        %v791 = vshll.u32 %v453, 16
        %v793 = vor.u32 %v790, %v791
        %v795 = vshrl.u32 %v454, 16
        %v797 = vrot.slane %v795, 7
        %v798 = vshll.u32 %v454, 16
        %v800 = vor.u32 %v797, %v798
        %v802 = vshrl.u32 %v455, 16
        %v804 = vrot.slane %v802, 7
        %v805 = vshll.u32 %v455, 16
        %v807 = vor.u32 %v804, %v805
        %v809 = vshrl.u32 %v456, 16
        %v811 = vrot.slane %v809, 7
        %v812 = vshll.u32 %v456, 16
        %v814 = vor.u32 %v811, %v812
        %v816 = vshrl.u32 %v457, 16
        %v818 = vrot.slane %v816, 7
        %v819 = vshll.u32 %v457, 16
        %v821 = vor.u32 %v818, %v819
        %v823 = vshrl.u32 %v458, 16
        %v825 = vrot.slane %v823, 7
        %v826 = vshll.u32 %v458, 16
        %v828 = vor.u32 %v825, %v826
        %v830 = vshrl.u32 %v459, 16
        %v832 = vrot.slane %v830, 7
        %v833 = vshll.u32 %v459, 16
        %v835 = vor.u32 %v832, %v833
        %v837 = vshrl.u32 %v460, 16
        %v839 = vrot.slane %v837, 7
        %v840 = vshll.u32 %v460, 16
        %v842 = vor.u32 %v839, %v840
        %v844 = vshrl.u32 %v461, 16
        %v846 = vrot.slane %v844, 7
        %v847 = vshll.u32 %v461, 16
        %v849 = vor.u32 %v846, %v847
        %v851 = vshrl.u32 %v462, 16
        %v853 = vrot.slane %v851, 7
        %v854 = vshll.u32 %v462, 16
        %v856 = vor.u32 %v853, %v854
        %v858 = vshrl.u32 %v463, 16
        %v860 = vrot.slane %v858, 7
        %v861 = vshll.u32 %v463, 16
        %v863 = vor.u32 %v860, %v861
        %v865 = vshrl.u32 %v464, 16
        %v867 = vrot.slane %v865, 7
        %v868 = vshll.u32 %v464, 16
        %v870 = vor.u32 %v867, %v868
        %v872 = vshrl.u32 %v465, 16
        %v874 = vrot.slane %v872, 7
        %v875 = vshll.u32 %v465, 16
        %v877 = vor.u32 %v874, %v875
        %v879 = vshrl.u32 %v466, 16
        %v881 = vrot.slane %v879, 7
        %v882 = vshll.u32 %v466, 16
        %v884 = vor.u32 %v881, %v882
        %v886 = vshrl.u32 %v467, 16
        %v888 = vrot.slane %v886, 7
        %v889 = vshll.u32 %v467, 16
        %v891 = vor.u32 %v888, %v889
        %v893 = vshrl.u32 %v468, 16
        %v895 = vrot.slane %v893, 7
        %v896 = vshll.u32 %v468, 16
        %v898 = vor.u32 %v895, %v896
        %v900 = vshrl.u32 %v469, 16
        %v902 = vrot.slane %v900, 7
        %v903 = vshll.u32 %v469, 16
        %v905 = vor.u32 %v902, %v903
        %v907 = vshrl.u32 %v470, 16
        %v909 = vrot.slane %v907, 7
        %v910 = vshll.u32 %v470, 16
        %v912 = vor.u32 %v909, %v910
        %v914 = vshrl.u32 %v471, 16
        %v916 = vrot.slane %v914, 7
        %v917 = vshll.u32 %v471, 16
        %v919 = vor.u32 %v916, %v917
        %vm984 = vcmask 1040384
        %vm985 = vsmask.f32 256
        %vm986 = vmand %vm984, %vm985
        %v987 = vsel %vm986, 0, %v478
        %v988 = vsel %vm986, 0, %v485
        %v989 = vsel %vm986, 0, %v492
        %v990 = vsel %vm986, 0, %v499
        %v991 = vsel %vm986, 0, %v506
        %v992 = vsel %vm986, 0, %v513
        %v993 = vsel %vm986, 0, %v520
        %v994 = vsel %vm986, 0, %v527
        %v995 = vsel %vm986, 0, %v534
        %v996 = vsel %vm986, 0, %v541
        %v997 = vsel %vm986, 0, %v548
        %v998 = vsel %vm986, 0, %v555
        %v999 = vsel %vm986, 0, %v562
        %v1000 = vsel %vm986, 0, %v569
        %v1001 = vsel %vm986, 0, %v576
        %v1002 = vsel %vm986, 0, %v583
        %v1003 = vsel %vm986, 0, %v590
        %v1004 = vsel %vm986, 0, %v597
        %v1005 = vsel %vm986, 0, %v604
        %v1006 = vsel %vm986, 0, %v611
        %v1007 = vsel %vm986, 0, %v618
        %v1008 = vsel %vm986, 0, %v625
        %v1009 = vsel %vm986, 0, %v632
        %v1010 = vsel %vm986, 0, %v639
        %v1011 = vsel %vm986, 0, %v646
        %v1012 = vsel %vm986, 0, %v653
        %v1013 = vsel %vm986, 0, %v660
        %v1014 = vsel %vm986, 0, %v667
        %v1015 = vsel %vm986, 0, %v674
        %v1016 = vsel %vm986, 0, %v681
        %v1017 = vsel %vm986, 0, %v688
        %v1018 = vsel %vm986, 0, %v695
        %v1019 = vsel %vm986, 0, %v702
        %v1020 = vsel %vm986, 0, %v709
        %v1021 = vsel %vm986, 0, %v716
        %v1022 = vsel %vm986, 0, %v723
        %v1023 = vsel %vm986, 0, %v730
        %v1024 = vsel %vm986, 0, %v737
        %v1025 = vsel %vm986, 0, %v744
        %v1026 = vsel %vm986, 0, %v751
        %v1027 = vsel %vm986, 0, %v758
        %v1028 = vsel %vm986, 0, %v765
        %v1029 = vsel %vm986, 0, %v772
        %v1030 = vsel %vm986, 0, %v779
        %v1031 = vsel %vm986, 0, %v786
        %v1032 = vsel %vm986, 0, %v793
        %v1033 = vsel %vm986, 0, %v800
        %v1034 = vsel %vm986, 0, %v807
        %v1035 = vsel %vm986, 0, %v814
        %v1036 = vsel %vm986, 0, %v821
        %v1037 = vsel %vm986, 0, %v828
        %v1038 = vsel %vm986, 0, %v835
        %v1039 = vsel %vm986, 0, %v842
        %v1040 = vsel %vm986, 0, %v849
        %v1041 = vsel %vm986, 0, %v856
        %v1042 = vsel %vm986, 0, %v863
        %v1043 = vsel %vm986, 0, %v870
        %v1044 = vsel %vm986, 0, %v877
        %v1045 = vsel %vm986, 0, %v884
        %v1046 = vsel %vm986, 0, %v891
        %v1047 = vsel %vm986, 0, %v898
        %v1048 = vsel %vm986, 0, %v905
        %v1049 = vsel %vm986, 0, %v912
        %v1050 = vsel %vm986, 0, %v919
        %v1051 = vrot.slane %v476, 1
        %v1052 = vor.u32 %v473, %v1051
        %v1053 = vrot.slane %v483, 1
        %v1054 = vor.u32 %v480, %v1053
        %v1055 = vrot.slane %v490, 1
        %v1056 = vor.u32 %v487, %v1055
        %v1057 = vrot.slane %v497, 1
        %v1058 = vor.u32 %v494, %v1057
        %v1059 = vrot.slane %v504, 1
        %v1060 = vor.u32 %v501, %v1059
        %v1061 = vrot.slane %v511, 1
        %v1062 = vor.u32 %v508, %v1061
        %v1063 = vrot.slane %v518, 1
        %v1064 = vor.u32 %v515, %v1063
        %v1065 = vrot.slane %v525, 1
        %v1066 = vor.u32 %v522, %v1065
        %v1067 = vrot.slane %v532, 1
        %v1068 = vor.u32 %v529, %v1067
        %v1069 = vrot.slane %v539, 1
        %v1070 = vor.u32 %v536, %v1069
        %v1071 = vrot.slane %v546, 1
        %v1072 = vor.u32 %v543, %v1071
        %v1073 = vrot.slane %v553, 1
        %v1074 = vor.u32 %v550, %v1073
        %v1075 = vrot.slane %v560, 1
        %v1076 = vor.u32 %v557, %v1075
        %v1077 = vrot.slane %v567, 1
        %v1078 = vor.u32 %v564, %v1077
        %v1079 = vrot.slane %v574, 1
        %v1080 = vor.u32 %v571, %v1079
        %v1081 = vrot.slane %v581, 1
        %v1082 = vor.u32 %v578, %v1081
        %v1083 = vrot.slane %v588, 1
        %v1084 = vor.u32 %v585, %v1083
        %v1085 = vrot.slane %v595, 1
        %v1086 = vor.u32 %v592, %v1085
        %v1087 = vrot.slane %v602, 1
        %v1088 = vor.u32 %v599, %v1087
        %v1089 = vrot.slane %v609, 1
        %v1090 = vor.u32 %v606, %v1089
        %v1091 = vrot.slane %v616, 1
        %v1092 = vor.u32 %v613, %v1091
        %v1093 = vrot.slane %v623, 1
        %v1094 = vor.u32 %v620, %v1093
        %v1095 = vrot.slane %v630, 1
        %v1096 = vor.u32 %v627, %v1095
        %v1097 = vrot.slane %v637, 1
        %v1098 = vor.u32 %v634, %v1097
        %v1099 = vrot.slane %v644, 1
        %v1100 = vor.u32 %v641, %v1099
        %v1101 = vrot.slane %v651, 1
        %v1102 = vor.u32 %v648, %v1101
        %v1103 = vrot.slane %v658, 1
        %v1104 = vor.u32 %v655, %v1103
        %v1105 = vrot.slane %v665, 1
        %v1106 = vor.u32 %v662, %v1105
        %v1107 = vrot.slane %v672, 1
        %v1108 = vor.u32 %v669, %v1107
        %v1109 = vrot.slane %v679, 1
        %v1110 = vor.u32 %v676, %v1109
        %v1111 = vrot.slane %v686, 1
        %v1112 = vor.u32 %v683, %v1111
        %v1113 = vrot.slane %v693, 1
        %v1114 = vor.u32 %v690, %v1113
        %v1115 = vrot.slane %v700, 1
        %v1116 = vor.u32 %v697, %v1115
        %v1117 = vrot.slane %v707, 1
        %v1118 = vor.u32 %v704, %v1117
        %v1119 = vrot.slane %v714, 1
        %v1120 = vor.u32 %v711, %v1119
        %v1121 = vrot.slane %v721, 1
        %v1122 = vor.u32 %v718, %v1121
        %v1123 = vrot.slane %v728, 1
        %v1124 = vor.u32 %v725, %v1123
        %v1125 = vrot.slane %v735, 1
        %v1126 = vor.u32 %v732, %v1125
        %v1127 = vrot.slane %v742, 1
        %v1128 = vor.u32 %v739, %v1127
        %v1129 = vrot.slane %v749, 1
        %v1130 = vor.u32 %v746, %v1129
        %v1131 = vrot.slane %v756, 1
        %v1132 = vor.u32 %v753, %v1131
        %v1133 = vrot.slane %v763, 1
        %v1134 = vor.u32 %v760, %v1133
        %v1135 = vrot.slane %v770, 1
        %v1136 = vor.u32 %v767, %v1135
        %v1137 = vrot.slane %v777, 1
        %v1138 = vor.u32 %v774, %v1137
        %v1139 = vrot.slane %v784, 1
        %v1140 = vor.u32 %v781, %v1139
        %v1141 = vrot.slane %v791, 1
        %v1142 = vor.u32 %v788, %v1141
        %v1143 = vrot.slane %v798, 1
        %v1144 = vor.u32 %v795, %v1143
        %v1145 = vrot.slane %v805, 1
        %v1146 = vor.u32 %v802, %v1145
        %v1147 = vrot.slane %v812, 1
        %v1148 = vor.u32 %v809, %v1147
        %v1149 = vrot.slane %v819, 1
        %v1150 = vor.u32 %v816, %v1149
        %v1151 = vrot.slane %v826, 1
        %v1152 = vor.u32 %v823, %v1151
        %v1153 = vrot.slane %v833, 1
        %v1154 = vor.u32 %v830, %v1153
        %v1155 = vrot.slane %v840, 1
        %v1156 = vor.u32 %v837, %v1155
        %v1157 = vrot.slane %v847, 1
        %v1158 = vor.u32 %v844, %v1157
        %v1159 = vrot.slane %v854, 1
        %v1160 = vor.u32 %v851, %v1159
        %v1161 = vrot.slane %v861, 1
        %v1162 = vor.u32 %v858, %v1161
        %v1163 = vrot.slane %v868, 1
        %v1164 = vor.u32 %v865, %v1163
        %v1165 = vrot.slane %v875, 1
        %v1166 = vor.u32 %v872, %v1165
        %v1167 = vrot.slane %v882, 1
        %v1168 = vor.u32 %v879, %v1167
        %v1169 = vrot.slane %v889, 1
        %v1170 = vor.u32 %v886, %v1169
        %v1171 = vrot.slane %v896, 1
        %v1172 = vor.u32 %v893, %v1171
        %v1173 = vrot.slane %v903, 1
        %v1174 = vor.u32 %v900, %v1173
        %v1175 = vrot.slane %v910, 1
        %v1176 = vor.u32 %v907, %v1175
        %v1177 = vrot.slane %v917, 1
        %v1178 = vor.u32 %v914, %v1177
        %vm1243 = vcmask 1043456
        %vm1244 = vsmask.f32 3328
        %vm1245 = vmand %vm1243, %vm1244
        %v1246 = vsel %vm1245, %v1052, 0
        %v1247 = vsel %vm1245, %v1054, 0
        %v1248 = vsel %vm1245, %v1056, 0
        %v1249 = vsel %vm1245, %v1058, 0
        %v1250 = vsel %vm1245, %v1060, 0
        %v1251 = vsel %vm1245, %v1062, 0
        %v1252 = vsel %vm1245, %v1064, 0
        %v1253 = vsel %vm1245, %v1066, 0
        %v1254 = vsel %vm1245, %v1068, 0
        %v1255 = vsel %vm1245, %v1070, 0
        %v1256 = vsel %vm1245, %v1072, 0
        %v1257 = vsel %vm1245, %v1074, 0
        %v1258 = vsel %vm1245, %v1076, 0
        %v1259 = vsel %vm1245, %v1078, 0
        %v1260 = vsel %vm1245, %v1080, 0
        %v1261 = vsel %vm1245, %v1082, 0
        %v1262 = vsel %vm1245, %v1084, 0
        %v1263 = vsel %vm1245, %v1086, 0
        %v1264 = vsel %vm1245, %v1088, 0
        %v1265 = vsel %vm1245, %v1090, 0
        %v1266 = vsel %vm1245, %v1092, 0
        %v1267 = vsel %vm1245, %v1094, 0
        %v1268 = vsel %vm1245, %v1096, 0
        %v1269 = vsel %vm1245, %v1098, 0
        %v1270 = vsel %vm1245, %v1100, 0
        %v1271 = vsel %vm1245, %v1102, 0
        %v1272 = vsel %vm1245, %v1104, 0
        %v1273 = vsel %vm1245, %v1106, 0
        %v1274 = vsel %vm1245, %v1108, 0
        %v1275 = vsel %vm1245, %v1110, 0
        %v1276 = vsel %vm1245, %v1112, 0
        %v1277 = vsel %vm1245, %v1114, 0
        %v1278 = vsel %vm1245, %v1116, 0
        %v1279 = vsel %vm1245, %v1118, 0
        %v1280 = vsel %vm1245, %v1120, 0
        %v1281 = vsel %vm1245, %v1122, 0
        %v1282 = vsel %vm1245, %v1124, 0
        %v1283 = vsel %vm1245, %v1126, 0
        %v1284 = vsel %vm1245, %v1128, 0
        %v1285 = vsel %vm1245, %v1130, 0
        %v1286 = vsel %vm1245, %v1132, 0
        %v1287 = vsel %vm1245, %v1134, 0
        %v1288 = vsel %vm1245, %v1136, 0
        %v1289 = vsel %vm1245, %v1138, 0
        %v1290 = vsel %vm1245, %v1140, 0
        %v1291 = vsel %vm1245, %v1142, 0
        %v1292 = vsel %vm1245, %v1144, 0
        %v1293 = vsel %vm1245, %v1146, 0
        %v1294 = vsel %vm1245, %v1148, 0
        %v1295 = vsel %vm1245, %v1150, 0
        %v1296 = vsel %vm1245, %v1152, 0
        %v1297 = vsel %vm1245, %v1154, 0
        %v1298 = vsel %vm1245, %v1156, 0
        %v1299 = vsel %vm1245, %v1158, 0
        %v1300 = vsel %vm1245, %v1160, 0
        %v1301 = vsel %vm1245, %v1162, 0
        %v1302 = vsel %vm1245, %v1164, 0
        %v1303 = vsel %vm1245, %v1166, 0
        %v1304 = vsel %vm1245, %v1168, 0
        %v1305 = vsel %vm1245, %v1170, 0
        %v1306 = vsel %vm1245, %v1172, 0
        %v1307 = vsel %vm1245, %v1174, 0
        %v1308 = vsel %vm1245, %v1176, 0
        %v1309 = vsel %vm1245, %v1178, 0
        %1310 = vrot.lane.b32.xlu0 %v408, 16
        %v1311 = vpop.permute.xlu0 %1310
        %1312 = vrot.lane.b32.xlu0 %v409, 16
        %v1313 = vpop.permute.xlu0 %1312
        %1314 = vrot.lane.b32.xlu0 %v410, 16
        %v1315 = vpop.permute.xlu0 %1314
        %1316 = vrot.lane.b32.xlu0 %v411, 16
        %v1317 = vpop.permute.xlu0 %1316
        %1318 = vrot.lane.b32.xlu0 %v412, 16
        %v1319 = vpop.permute.xlu0 %1318
        %1320 = vrot.lane.b32.xlu0 %v413, 16
        %v1321 = vpop.permute.xlu0 %1320
        %1322 = vrot.lane.b32.xlu0 %v414, 16
        %v1323 = vpop.permute.xlu0 %1322
        %1324 = vrot.lane.b32.xlu0 %v415, 16
        %v1325 = vpop.permute.xlu0 %1324
        %1326 = vrot.lane.b32.xlu0 %v416, 16
        %v1327 = vpop.permute.xlu0 %1326
        %1328 = vrot.lane.b32.xlu0 %v417, 16
        %v1329 = vpop.permute.xlu0 %1328
        %1330 = vrot.lane.b32.xlu0 %v418, 16
        %v1331 = vpop.permute.xlu0 %1330
        %1332 = vrot.lane.b32.xlu0 %v419, 16
        %v1333 = vpop.permute.xlu0 %1332
        %1334 = vrot.lane.b32.xlu0 %v420, 16
        %v1335 = vpop.permute.xlu0 %1334
        %1336 = vrot.lane.b32.xlu0 %v421, 16
        %v1337 = vpop.permute.xlu0 %1336
        %1338 = vrot.lane.b32.xlu0 %v422, 16
        %v1339 = vpop.permute.xlu0 %1338
        %1340 = vrot.lane.b32.xlu0 %v423, 16
        %v1341 = vpop.permute.xlu0 %1340
        %1342 = vrot.lane.b32.xlu0 %v424, 16
        %v1343 = vpop.permute.xlu0 %1342
        %1344 = vrot.lane.b32.xlu0 %v425, 16
        %v1345 = vpop.permute.xlu0 %1344
        %1346 = vrot.lane.b32.xlu0 %v426, 16
        %v1347 = vpop.permute.xlu0 %1346
        %1348 = vrot.lane.b32.xlu0 %v427, 16
        %v1349 = vpop.permute.xlu0 %1348
        %1350 = vrot.lane.b32.xlu0 %v428, 16
        %v1351 = vpop.permute.xlu0 %1350
        %1352 = vrot.lane.b32.xlu0 %v429, 16
        %v1353 = vpop.permute.xlu0 %1352
        %1354 = vrot.lane.b32.xlu0 %v430, 16
        %v1355 = vpop.permute.xlu0 %1354
        %1356 = vrot.lane.b32.xlu0 %v431, 16
        %v1357 = vpop.permute.xlu0 %1356
        %1358 = vrot.lane.b32.xlu0 %v432, 16
        %v1359 = vpop.permute.xlu0 %1358
        %1360 = vrot.lane.b32.xlu0 %v433, 16
        %v1361 = vpop.permute.xlu0 %1360
        %1362 = vrot.lane.b32.xlu0 %v434, 16
        %v1363 = vpop.permute.xlu0 %1362
        %1364 = vrot.lane.b32.xlu0 %v435, 16
        %v1365 = vpop.permute.xlu0 %1364
        %1366 = vrot.lane.b32.xlu0 %v436, 16
        %v1367 = vpop.permute.xlu0 %1366
        %1368 = vrot.lane.b32.xlu0 %v437, 16
        %v1369 = vpop.permute.xlu0 %1368
        %1370 = vrot.lane.b32.xlu0 %v438, 16
        %v1371 = vpop.permute.xlu0 %1370
        %1372 = vrot.lane.b32.xlu0 %v439, 16
        %v1373 = vpop.permute.xlu0 %1372
        %1374 = vrot.lane.b32.xlu0 %v440, 16
        %v1375 = vpop.permute.xlu0 %1374
        %1376 = vrot.lane.b32.xlu0 %v441, 16
        %v1377 = vpop.permute.xlu0 %1376
        %1378 = vrot.lane.b32.xlu0 %v442, 16
        %v1379 = vpop.permute.xlu0 %1378
        %1380 = vrot.lane.b32.xlu0 %v443, 16
        %v1381 = vpop.permute.xlu0 %1380
        %1382 = vrot.lane.b32.xlu0 %v444, 16
        %v1383 = vpop.permute.xlu0 %1382
        %1384 = vrot.lane.b32.xlu0 %v445, 16
        %v1385 = vpop.permute.xlu0 %1384
        %1386 = vrot.lane.b32.xlu0 %v446, 16
        %v1387 = vpop.permute.xlu0 %1386
        %1388 = vrot.lane.b32.xlu0 %v447, 16
        %v1389 = vpop.permute.xlu0 %1388
        %1390 = vrot.lane.b32.xlu0 %v448, 16
        %v1391 = vpop.permute.xlu0 %1390
        %1392 = vrot.lane.b32.xlu0 %v449, 16
        %v1393 = vpop.permute.xlu0 %1392
        %1394 = vrot.lane.b32.xlu0 %v450, 16
        %v1395 = vpop.permute.xlu0 %1394
        %1396 = vrot.lane.b32.xlu0 %v451, 16
        %v1397 = vpop.permute.xlu0 %1396
        %1398 = vrot.lane.b32.xlu0 %v452, 16
        %v1399 = vpop.permute.xlu0 %1398
        %1400 = vrot.lane.b32.xlu0 %v453, 16
        %v1401 = vpop.permute.xlu0 %1400
        %1402 = vrot.lane.b32.xlu0 %v454, 16
        %v1403 = vpop.permute.xlu0 %1402
        %1404 = vrot.lane.b32.xlu0 %v455, 16
        %v1405 = vpop.permute.xlu0 %1404
        %1406 = vrot.lane.b32.xlu0 %v456, 16
        %v1407 = vpop.permute.xlu0 %1406
        %1408 = vrot.lane.b32.xlu0 %v457, 16
        %v1409 = vpop.permute.xlu0 %1408
        %1410 = vrot.lane.b32.xlu0 %v458, 16
        %v1411 = vpop.permute.xlu0 %1410
        %1412 = vrot.lane.b32.xlu0 %v459, 16
        %v1413 = vpop.permute.xlu0 %1412
        %1414 = vrot.lane.b32.xlu0 %v460, 16
        %v1415 = vpop.permute.xlu0 %1414
        %1416 = vrot.lane.b32.xlu0 %v461, 16
        %v1417 = vpop.permute.xlu0 %1416
        %1418 = vrot.lane.b32.xlu0 %v462, 16
        %v1419 = vpop.permute.xlu0 %1418
        %1420 = vrot.lane.b32.xlu0 %v463, 16
        %v1421 = vpop.permute.xlu0 %1420
        %1422 = vrot.lane.b32.xlu0 %v464, 16
        %v1423 = vpop.permute.xlu0 %1422
        %1424 = vrot.lane.b32.xlu0 %v465, 16
        %v1425 = vpop.permute.xlu0 %1424
        %1426 = vrot.lane.b32.xlu0 %v466, 16
        %v1427 = vpop.permute.xlu0 %1426
        %1428 = vrot.lane.b32.xlu0 %v467, 16
        %v1429 = vpop.permute.xlu0 %1428
        %1430 = vrot.lane.b32.xlu0 %v468, 16
        %v1431 = vpop.permute.xlu0 %1430
        %1432 = vrot.lane.b32.xlu0 %v469, 16
        %v1433 = vpop.permute.xlu0 %1432
        %1434 = vrot.lane.b32.xlu0 %v470, 16
        %v1435 = vpop.permute.xlu0 %1434
        %1436 = vrot.lane.b32.xlu0 %v471, 16
        %v1437 = vpop.permute.xlu0 %1436
        %1502 = vrot.lane.b32.xlu0 %v1246, 32
        %v1503 = vpop.permute.xlu0 %1502
        %1504 = vrot.lane.b32.xlu0 %v1247, 32
        %v1505 = vpop.permute.xlu0 %1504
        %1506 = vrot.lane.b32.xlu0 %v1248, 32
        %v1507 = vpop.permute.xlu0 %1506
        %1508 = vrot.lane.b32.xlu0 %v1249, 32
        %v1509 = vpop.permute.xlu0 %1508
        %1510 = vrot.lane.b32.xlu0 %v1250, 32
        %v1511 = vpop.permute.xlu0 %1510
        %1512 = vrot.lane.b32.xlu0 %v1251, 32
        %v1513 = vpop.permute.xlu0 %1512
        %1514 = vrot.lane.b32.xlu0 %v1252, 32
        %v1515 = vpop.permute.xlu0 %1514
        %1516 = vrot.lane.b32.xlu0 %v1253, 32
        %v1517 = vpop.permute.xlu0 %1516
        %1518 = vrot.lane.b32.xlu0 %v1254, 32
        %v1519 = vpop.permute.xlu0 %1518
        %1520 = vrot.lane.b32.xlu0 %v1255, 32
        %v1521 = vpop.permute.xlu0 %1520
        %1522 = vrot.lane.b32.xlu0 %v1256, 32
        %v1523 = vpop.permute.xlu0 %1522
        %1524 = vrot.lane.b32.xlu0 %v1257, 32
        %v1525 = vpop.permute.xlu0 %1524
        %1526 = vrot.lane.b32.xlu0 %v1258, 32
        %v1527 = vpop.permute.xlu0 %1526
        %1528 = vrot.lane.b32.xlu0 %v1259, 32
        %v1529 = vpop.permute.xlu0 %1528
        %1530 = vrot.lane.b32.xlu0 %v1260, 32
        %v1531 = vpop.permute.xlu0 %1530
        %1532 = vrot.lane.b32.xlu0 %v1261, 32
        %v1533 = vpop.permute.xlu0 %1532
        %1534 = vrot.lane.b32.xlu0 %v1262, 32
        %v1535 = vpop.permute.xlu0 %1534
        %1536 = vrot.lane.b32.xlu0 %v1263, 32
        %v1537 = vpop.permute.xlu0 %1536
        %1538 = vrot.lane.b32.xlu0 %v1264, 32
        %v1539 = vpop.permute.xlu0 %1538
        %1540 = vrot.lane.b32.xlu0 %v1265, 32
        %v1541 = vpop.permute.xlu0 %1540
        %1542 = vrot.lane.b32.xlu0 %v1266, 32
        %v1543 = vpop.permute.xlu0 %1542
        %1544 = vrot.lane.b32.xlu0 %v1267, 32
        %v1545 = vpop.permute.xlu0 %1544
        %1546 = vrot.lane.b32.xlu0 %v1268, 32
        %v1547 = vpop.permute.xlu0 %1546
        %1548 = vrot.lane.b32.xlu0 %v1269, 32
        %v1549 = vpop.permute.xlu0 %1548
        %1550 = vrot.lane.b32.xlu0 %v1270, 32
        %v1551 = vpop.permute.xlu0 %1550
        %1552 = vrot.lane.b32.xlu0 %v1271, 32
        %v1553 = vpop.permute.xlu0 %1552
        %1554 = vrot.lane.b32.xlu0 %v1272, 32
        %v1555 = vpop.permute.xlu0 %1554
        %1556 = vrot.lane.b32.xlu0 %v1273, 32
        %v1557 = vpop.permute.xlu0 %1556
        %1558 = vrot.lane.b32.xlu0 %v1274, 32
        %v1559 = vpop.permute.xlu0 %1558
        %1560 = vrot.lane.b32.xlu0 %v1275, 32
        %v1561 = vpop.permute.xlu0 %1560
        %1562 = vrot.lane.b32.xlu0 %v1276, 32
        %v1563 = vpop.permute.xlu0 %1562
        %1564 = vrot.lane.b32.xlu0 %v1277, 32
        %v1565 = vpop.permute.xlu0 %1564
        %1566 = vrot.lane.b32.xlu0 %v1278, 32
        %v1567 = vpop.permute.xlu0 %1566
        %1568 = vrot.lane.b32.xlu0 %v1279, 32
        %v1569 = vpop.permute.xlu0 %1568
        %1570 = vrot.lane.b32.xlu0 %v1280, 32
        %v1571 = vpop.permute.xlu0 %1570
        %1572 = vrot.lane.b32.xlu0 %v1281, 32
        %v1573 = vpop.permute.xlu0 %1572
        %1574 = vrot.lane.b32.xlu0 %v1282, 32
        %v1575 = vpop.permute.xlu0 %1574
        %1576 = vrot.lane.b32.xlu0 %v1283, 32
        %v1577 = vpop.permute.xlu0 %1576
        %1578 = vrot.lane.b32.xlu0 %v1284, 32
        %v1579 = vpop.permute.xlu0 %1578
        %1580 = vrot.lane.b32.xlu0 %v1285, 32
        %v1581 = vpop.permute.xlu0 %1580
        %1582 = vrot.lane.b32.xlu0 %v1286, 32
        %v1583 = vpop.permute.xlu0 %1582
        %1584 = vrot.lane.b32.xlu0 %v1287, 32
        %v1585 = vpop.permute.xlu0 %1584
        %1586 = vrot.lane.b32.xlu0 %v1288, 32
        %v1587 = vpop.permute.xlu0 %1586
        %1588 = vrot.lane.b32.xlu0 %v1289, 32
        %v1589 = vpop.permute.xlu0 %1588
        %1590 = vrot.lane.b32.xlu0 %v1290, 32
        %v1591 = vpop.permute.xlu0 %1590
        %1592 = vrot.lane.b32.xlu0 %v1291, 32
        %v1593 = vpop.permute.xlu0 %1592
        %1594 = vrot.lane.b32.xlu0 %v1292, 32
        %v1595 = vpop.permute.xlu0 %1594
        %1596 = vrot.lane.b32.xlu0 %v1293, 32
        %v1597 = vpop.permute.xlu0 %1596
        %1598 = vrot.lane.b32.xlu0 %v1294, 32
        %v1599 = vpop.permute.xlu0 %1598
        %1600 = vrot.lane.b32.xlu0 %v1295, 32
        %v1601 = vpop.permute.xlu0 %1600
        %1602 = vrot.lane.b32.xlu0 %v1296, 32
        %v1603 = vpop.permute.xlu0 %1602
        %1604 = vrot.lane.b32.xlu0 %v1297, 32
        %v1605 = vpop.permute.xlu0 %1604
        %1606 = vrot.lane.b32.xlu0 %v1298, 32
        %v1607 = vpop.permute.xlu0 %1606
        %1608 = vrot.lane.b32.xlu0 %v1299, 32
        %v1609 = vpop.permute.xlu0 %1608
        %1610 = vrot.lane.b32.xlu0 %v1300, 32
        %v1611 = vpop.permute.xlu0 %1610
        %1612 = vrot.lane.b32.xlu0 %v1301, 32
        %v1613 = vpop.permute.xlu0 %1612
        %1614 = vrot.lane.b32.xlu0 %v1302, 32
        %v1615 = vpop.permute.xlu0 %1614
        %1616 = vrot.lane.b32.xlu0 %v1303, 32
        %v1617 = vpop.permute.xlu0 %1616
        %1618 = vrot.lane.b32.xlu0 %v1304, 32
        %v1619 = vpop.permute.xlu0 %1618
        %1620 = vrot.lane.b32.xlu0 %v1305, 32
        %v1621 = vpop.permute.xlu0 %1620
        %1622 = vrot.lane.b32.xlu0 %v1306, 32
        %v1623 = vpop.permute.xlu0 %1622
        %1624 = vrot.lane.b32.xlu0 %v1307, 32
        %v1625 = vpop.permute.xlu0 %1624
        %1626 = vrot.lane.b32.xlu0 %v1308, 32
        %v1627 = vpop.permute.xlu0 %1626
        %1628 = vrot.lane.b32.xlu0 %v1309, 32
        %v1629 = vpop.permute.xlu0 %1628
        %vm1630 = vcmask 130048
        %v1633 = vsel %vm1630, %v987, %v1311
        %v1636 = vsel %vm1630, %v988, %v1313
        %v1639 = vsel %vm1630, %v989, %v1315
        %v1642 = vsel %vm1630, %v990, %v1317
        %v1645 = vsel %vm1630, %v991, %v1319
        %v1648 = vsel %vm1630, %v992, %v1321
        %v1651 = vsel %vm1630, %v993, %v1323
        %v1654 = vsel %vm1630, %v994, %v1325
        %v1657 = vsel %vm1630, %v995, %v1327
        %v1660 = vsel %vm1630, %v996, %v1329
        %v1663 = vsel %vm1630, %v997, %v1331
        %v1666 = vsel %vm1630, %v998, %v1333
        %v1669 = vsel %vm1630, %v999, %v1335
        %v1672 = vsel %vm1630, %v1000, %v1337
        %v1675 = vsel %vm1630, %v1001, %v1339
        %v1678 = vsel %vm1630, %v1002, %v1341
        %v1681 = vsel %vm1630, %v1003, %v1343
        %v1684 = vsel %vm1630, %v1004, %v1345
        %v1687 = vsel %vm1630, %v1005, %v1347
        %v1690 = vsel %vm1630, %v1006, %v1349
        %v1693 = vsel %vm1630, %v1007, %v1351
        %v1696 = vsel %vm1630, %v1008, %v1353
        %v1699 = vsel %vm1630, %v1009, %v1355
        %v1702 = vsel %vm1630, %v1010, %v1357
        %v1705 = vsel %vm1630, %v1011, %v1359
        %v1708 = vsel %vm1630, %v1012, %v1361
        %v1711 = vsel %vm1630, %v1013, %v1363
        %v1714 = vsel %vm1630, %v1014, %v1365
        %v1717 = vsel %vm1630, %v1015, %v1367
        %v1720 = vsel %vm1630, %v1016, %v1369
        %v1723 = vsel %vm1630, %v1017, %v1371
        %v1726 = vsel %vm1630, %v1018, %v1373
        %v1729 = vsel %vm1630, %v1019, %v1375
        %v1732 = vsel %vm1630, %v1020, %v1377
        %v1735 = vsel %vm1630, %v1021, %v1379
        %v1738 = vsel %vm1630, %v1022, %v1381
        %v1741 = vsel %vm1630, %v1023, %v1383
        %v1744 = vsel %vm1630, %v1024, %v1385
        %v1747 = vsel %vm1630, %v1025, %v1387
        %v1750 = vsel %vm1630, %v1026, %v1389
        %v1753 = vsel %vm1630, %v1027, %v1391
        %v1756 = vsel %vm1630, %v1028, %v1393
        %v1759 = vsel %vm1630, %v1029, %v1395
        %v1762 = vsel %vm1630, %v1030, %v1397
        %v1765 = vsel %vm1630, %v1031, %v1399
        %v1768 = vsel %vm1630, %v1032, %v1401
        %v1771 = vsel %vm1630, %v1033, %v1403
        %v1774 = vsel %vm1630, %v1034, %v1405
        %v1777 = vsel %vm1630, %v1035, %v1407
        %v1780 = vsel %vm1630, %v1036, %v1409
        %v1783 = vsel %vm1630, %v1037, %v1411
        %v1786 = vsel %vm1630, %v1038, %v1413
        %v1789 = vsel %vm1630, %v1039, %v1415
        %v1792 = vsel %vm1630, %v1040, %v1417
        %v1795 = vsel %vm1630, %v1041, %v1419
        %v1798 = vsel %vm1630, %v1042, %v1421
        %v1801 = vsel %vm1630, %v1043, %v1423
        %v1804 = vsel %vm1630, %v1044, %v1425
        %v1807 = vsel %vm1630, %v1045, %v1427
        %v1810 = vsel %vm1630, %v1046, %v1429
        %v1813 = vsel %vm1630, %v1047, %v1431
        %v1816 = vsel %vm1630, %v1048, %v1433
        %v1819 = vsel %vm1630, %v1049, %v1435
        %v1822 = vsel %vm1630, %v1050, %v1437
        %vm1823 = vcmask 261120
        %v1825 = vsel %vm1823, %v1633, %v1503
        %v1828 = vsel %vm1823, %v1636, %v1505
        %v1831 = vsel %vm1823, %v1639, %v1507
        %v1834 = vsel %vm1823, %v1642, %v1509
        %v1837 = vsel %vm1823, %v1645, %v1511
        %v1840 = vsel %vm1823, %v1648, %v1513
        %v1843 = vsel %vm1823, %v1651, %v1515
        %v1846 = vsel %vm1823, %v1654, %v1517
        %v1849 = vsel %vm1823, %v1657, %v1519
        %v1852 = vsel %vm1823, %v1660, %v1521
        %v1855 = vsel %vm1823, %v1663, %v1523
        %v1858 = vsel %vm1823, %v1666, %v1525
        %v1861 = vsel %vm1823, %v1669, %v1527
        %v1864 = vsel %vm1823, %v1672, %v1529
        %v1867 = vsel %vm1823, %v1675, %v1531
        %v1870 = vsel %vm1823, %v1678, %v1533
        %v1873 = vsel %vm1823, %v1681, %v1535
        %v1876 = vsel %vm1823, %v1684, %v1537
        %v1879 = vsel %vm1823, %v1687, %v1539
        %v1882 = vsel %vm1823, %v1690, %v1541
        %v1885 = vsel %vm1823, %v1693, %v1543
        %v1888 = vsel %vm1823, %v1696, %v1545
        %v1891 = vsel %vm1823, %v1699, %v1547
        %v1894 = vsel %vm1823, %v1702, %v1549
        %v1897 = vsel %vm1823, %v1705, %v1551
        %v1900 = vsel %vm1823, %v1708, %v1553
        %v1903 = vsel %vm1823, %v1711, %v1555
        %v1906 = vsel %vm1823, %v1714, %v1557
        %v1909 = vsel %vm1823, %v1717, %v1559
        %v1912 = vsel %vm1823, %v1720, %v1561
        %v1915 = vsel %vm1823, %v1723, %v1563
        %v1918 = vsel %vm1823, %v1726, %v1565
        %v1921 = vsel %vm1823, %v1729, %v1567
        %v1924 = vsel %vm1823, %v1732, %v1569
        %v1927 = vsel %vm1823, %v1735, %v1571
        %v1930 = vsel %vm1823, %v1738, %v1573
        %v1933 = vsel %vm1823, %v1741, %v1575
        %v1936 = vsel %vm1823, %v1744, %v1577
        %v1939 = vsel %vm1823, %v1747, %v1579
        %v1942 = vsel %vm1823, %v1750, %v1581
        %v1945 = vsel %vm1823, %v1753, %v1583
        %v1948 = vsel %vm1823, %v1756, %v1585
        %v1951 = vsel %vm1823, %v1759, %v1587
        %v1954 = vsel %vm1823, %v1762, %v1589
        %v1957 = vsel %vm1823, %v1765, %v1591
        %v1960 = vsel %vm1823, %v1768, %v1593
        %v1963 = vsel %vm1823, %v1771, %v1595
        %v1966 = vsel %vm1823, %v1774, %v1597
        %v1969 = vsel %vm1823, %v1777, %v1599
        %v1972 = vsel %vm1823, %v1780, %v1601
        %v1975 = vsel %vm1823, %v1783, %v1603
        %v1978 = vsel %vm1823, %v1786, %v1605
        %v1981 = vsel %vm1823, %v1789, %v1607
        %v1984 = vsel %vm1823, %v1792, %v1609
        %v1987 = vsel %vm1823, %v1795, %v1611
        %v1990 = vsel %vm1823, %v1798, %v1613
        %v1993 = vsel %vm1823, %v1801, %v1615
        %v1996 = vsel %vm1823, %v1804, %v1617
        %v1999 = vsel %vm1823, %v1807, %v1619
        %v2002 = vsel %vm1823, %v1810, %v1621
        %v2005 = vsel %vm1823, %v1813, %v1623
        %v2008 = vsel %vm1823, %v1816, %v1625
        %v2011 = vsel %vm1823, %v1819, %v1627
        %v2014 = vsel %vm1823, %v1822, %v1629
        %vm2016 = vcmask 388096
        %2017 = vst.msk [vmem:[#allocation2] sm:$0xf] %vm2016, 0
        %2018 = vst.msk [vmem:[#allocation2 + $0x4] sm:$0xf] %vm2016, 0
        %2019 = vst.msk [vmem:[#allocation2 + $0x8] sm:$0xf] %vm2016, 0
        %2020 = vst.msk [vmem:[#allocation2 + $0xc] sm:$0xf] %vm2016, 0
        %2021 = vst.msk [vmem:[#allocation2 + $0x10] sm:$0xf] %vm2016, 0
        %2022 = vst.msk [vmem:[#allocation2 + $0x14] sm:$0xf] %vm2016, 0
        %2023 = vst.msk [vmem:[#allocation2 + $0x18] sm:$0xf] %vm2016, 0
        %2024 = vst.msk [vmem:[#allocation2 + $0x1c] sm:$0xf] %vm2016, 0
        %2025 = vst.msk [vmem:[#allocation2 + $0x20] sm:$0xf] %vm2016, 0
        %2026 = vst.msk [vmem:[#allocation2 + $0x24] sm:$0xf] %vm2016, 0
        %2027 = vst.msk [vmem:[#allocation2 + $0x28] sm:$0xf] %vm2016, 0
        %2028 = vst.msk [vmem:[#allocation2 + $0x2c] sm:$0xf] %vm2016, 0
        %2029 = vst.msk [vmem:[#allocation2 + $0x30] sm:$0xf] %vm2016, 0
        %2030 = vst.msk [vmem:[#allocation2 + $0x34] sm:$0xf] %vm2016, 0
        %2031 = vst.msk [vmem:[#allocation2 + $0x38] sm:$0xf] %vm2016, 0
        %2032 = vst.msk [vmem:[#allocation2 + $0x3c] sm:$0xf] %vm2016, 0
        %2033 = vst.msk [vmem:[#allocation2 + $0x40] sm:$0xf] %vm2016, 0
        %2034 = vst.msk [vmem:[#allocation2 + $0x44] sm:$0xf] %vm2016, 0
        %2035 = vst.msk [vmem:[#allocation2 + $0x48] sm:$0xf] %vm2016, 0
        %2036 = vst.msk [vmem:[#allocation2 + $0x4c] sm:$0xf] %vm2016, 0
        %2037 = vst.msk [vmem:[#allocation2 + $0x50] sm:$0xf] %vm2016, 0
        %2038 = vst.msk [vmem:[#allocation2 + $0x54] sm:$0xf] %vm2016, 0
        %2039 = vst.msk [vmem:[#allocation2 + $0x58] sm:$0xf] %vm2016, 0
        %2040 = vst.msk [vmem:[#allocation2 + $0x5c] sm:$0xf] %vm2016, 0
        %2041 = vst.msk [vmem:[#allocation2 + $0x60] sm:$0xf] %vm2016, 0
        %2042 = vst.msk [vmem:[#allocation2 + $0x64] sm:$0xf] %vm2016, 0
        %2043 = vst.msk [vmem:[#allocation2 + $0x68] sm:$0xf] %vm2016, 0
        %2044 = vst.msk [vmem:[#allocation2 + $0x6c] sm:$0xf] %vm2016, 0
        %2045 = vst.msk [vmem:[#allocation2 + $0x70] sm:$0xf] %vm2016, 0
        %2046 = vst.msk [vmem:[#allocation2 + $0x74] sm:$0xf] %vm2016, 0
        %2047 = vst.msk [vmem:[#allocation2 + $0x78] sm:$0xf] %vm2016, 0
        %2048 = vst.msk [vmem:[#allocation2 + $0x7c] sm:$0xf] %vm2016, 0
        %2049 = vst.msk [vmem:[#allocation2 + $0x80] sm:$0xf] %vm2016, 0
        %2050 = vst.msk [vmem:[#allocation2 + $0x84] sm:$0xf] %vm2016, 0
        %2051 = vst.msk [vmem:[#allocation2 + $0x88] sm:$0xf] %vm2016, 0
        %2052 = vst.msk [vmem:[#allocation2 + $0x8c] sm:$0xf] %vm2016, 0
        %2053 = vst.msk [vmem:[#allocation2 + $0x90] sm:$0xf] %vm2016, 0
        %2054 = vst.msk [vmem:[#allocation2 + $0x94] sm:$0xf] %vm2016, 0
        %2055 = vst.msk [vmem:[#allocation2 + $0x98] sm:$0xf] %vm2016, 0
        %2056 = vst.msk [vmem:[#allocation2 + $0x9c] sm:$0xf] %vm2016, 0
        %2057 = vst.msk [vmem:[#allocation2 + $0xa0] sm:$0xf] %vm2016, 0
        %2058 = vst.msk [vmem:[#allocation2 + $0xa4] sm:$0xf] %vm2016, 0
        %2059 = vst.msk [vmem:[#allocation2 + $0xa8] sm:$0xf] %vm2016, 0
        %2060 = vst.msk [vmem:[#allocation2 + $0xac] sm:$0xf] %vm2016, 0
        %2061 = vst.msk [vmem:[#allocation2 + $0xb0] sm:$0xf] %vm2016, 0
        %2062 = vst.msk [vmem:[#allocation2 + $0xb4] sm:$0xf] %vm2016, 0
        %2063 = vst.msk [vmem:[#allocation2 + $0xb8] sm:$0xf] %vm2016, 0
        %2064 = vst.msk [vmem:[#allocation2 + $0xbc] sm:$0xf] %vm2016, 0
        %2065 = vst.msk [vmem:[#allocation2 + $0xc0] sm:$0xf] %vm2016, 0
        %2066 = vst.msk [vmem:[#allocation2 + $0xc4] sm:$0xf] %vm2016, 0
        %2067 = vst.msk [vmem:[#allocation2 + $0xc8] sm:$0xf] %vm2016, 0
        %2068 = vst.msk [vmem:[#allocation2 + $0xcc] sm:$0xf] %vm2016, 0
        %2069 = vst.msk [vmem:[#allocation2 + $0xd0] sm:$0xf] %vm2016, 0
        %2070 = vst.msk [vmem:[#allocation2 + $0xd4] sm:$0xf] %vm2016, 0
        %2071 = vst.msk [vmem:[#allocation2 + $0xd8] sm:$0xf] %vm2016, 0
        %2072 = vst.msk [vmem:[#allocation2 + $0xdc] sm:$0xf] %vm2016, 0
        %2073 = vst.msk [vmem:[#allocation2 + $0xe0] sm:$0xf] %vm2016, 0
        %2074 = vst.msk [vmem:[#allocation2 + $0xe4] sm:$0xf] %vm2016, 0
        %2075 = vst.msk [vmem:[#allocation2 + $0xe8] sm:$0xf] %vm2016, 0
        %2076 = vst.msk [vmem:[#allocation2 + $0xec] sm:$0xf] %vm2016, 0
        %2077 = vst.msk [vmem:[#allocation2 + $0xf0] sm:$0xf] %vm2016, 0
        %2078 = vst.msk [vmem:[#allocation2 + $0xf4] sm:$0xf] %vm2016, 0
        %2079 = vst.msk [vmem:[#allocation2 + $0xf8] sm:$0xf] %vm2016, 0
        %2080 = vst.msk [vmem:[#allocation2 + $0xfc] sm:$0xf] %vm2016, 0
        %2081 = vst.msk [vmem:[#allocation2 + $0x100] sm:$0xf] %vm2016, 0
        %2082 = vst.msk [vmem:[#allocation2 + $0x104] sm:$0xf] %vm2016, 0
        %2083 = vst.msk [vmem:[#allocation2 + $0x108] sm:$0xf] %vm2016, 0
        %2084 = vst.msk [vmem:[#allocation2 + $0x10c] sm:$0xf] %vm2016, 0
        %2085 = vst.msk [vmem:[#allocation2 + $0x110] sm:$0xf] %vm2016, 0
        %2086 = vst.msk [vmem:[#allocation2 + $0x114] sm:$0xf] %vm2016, 0
        %2087 = vst.msk [vmem:[#allocation2 + $0x118] sm:$0xf] %vm2016, 0
        %2088 = vst.msk [vmem:[#allocation2 + $0x11c] sm:$0xf] %vm2016, 0
        %2089 = vst.msk [vmem:[#allocation2 + $0x120] sm:$0xf] %vm2016, 0
        %2090 = vst.msk [vmem:[#allocation2 + $0x124] sm:$0xf] %vm2016, 0
        %2091 = vst.msk [vmem:[#allocation2 + $0x128] sm:$0xf] %vm2016, 0
        %2092 = vst.msk [vmem:[#allocation2 + $0x12c] sm:$0xf] %vm2016, 0
        %2093 = vst.msk [vmem:[#allocation2 + $0x130] sm:$0xf] %vm2016, 0
        %2094 = vst.msk [vmem:[#allocation2 + $0x134] sm:$0xf] %vm2016, 0
        %2095 = vst.msk [vmem:[#allocation2 + $0x138] sm:$0xf] %vm2016, 0
        %2096 = vst.msk [vmem:[#allocation2 + $0x13c] sm:$0xf] %vm2016, 0
        %2097 = vst.msk [vmem:[#allocation2 + $0x140] sm:$0xf] %vm2016, 0
        %2098 = vst.msk [vmem:[#allocation2 + $0x144] sm:$0xf] %vm2016, 0
        %2099 = vst.msk [vmem:[#allocation2 + $0x148] sm:$0xf] %vm2016, 0
        %2100 = vst.msk [vmem:[#allocation2 + $0x14c] sm:$0xf] %vm2016, 0
        %2101 = vst.msk [vmem:[#allocation2 + $0x150] sm:$0xf] %vm2016, 0
        %2102 = vst.msk [vmem:[#allocation2 + $0x154] sm:$0xf] %vm2016, 0
        %2103 = vst.msk [vmem:[#allocation2 + $0x158] sm:$0xf] %vm2016, 0
        %2104 = vst.msk [vmem:[#allocation2 + $0x15c] sm:$0xf] %vm2016, 0
        %2105 = vst.msk [vmem:[#allocation2 + $0x160] sm:$0xf] %vm2016, 0
        %2106 = vst.msk [vmem:[#allocation2 + $0x164] sm:$0xf] %vm2016, 0
        %2107 = vst.msk [vmem:[#allocation2 + $0x168] sm:$0xf] %vm2016, 0
        %2108 = vst.msk [vmem:[#allocation2 + $0x16c] sm:$0xf] %vm2016, 0
        %2109 = vst.msk [vmem:[#allocation2 + $0x170] sm:$0xf] %vm2016, 0
        %2110 = vst.msk [vmem:[#allocation2 + $0x174] sm:$0xf] %vm2016, 0
        %2111 = vst.msk [vmem:[#allocation2 + $0x178] sm:$0xf] %vm2016, 0
        %2112 = vst.msk [vmem:[#allocation2 + $0x17c] sm:$0xf] %vm2016, 0
        %2113 = vst.msk [vmem:[#allocation2 + $0x180] sm:$0xf] %vm2016, 0
        %2114 = vst.msk [vmem:[#allocation2 + $0x184] sm:$0xf] %vm2016, 0
        %2115 = vst.msk [vmem:[#allocation2 + $0x188] sm:$0xf] %vm2016, 0
        %2116 = vst.msk [vmem:[#allocation2 + $0x18c] sm:$0xf] %vm2016, 0
        %s2117 = scalar_lea.vmem [#allocation2], 44
        %2118 = vst.msk [vmem:[%s2117] sm:$0xf] %vm2016, %v1825
        %2119 = vst.msk [vmem:[%s2117 + $0x4] sm:$0xf] %vm2016, %v1828
        %2120 = vst.msk [vmem:[%s2117 + $0x8] sm:$0xf] %vm2016, %v1831
        %2121 = vst.msk [vmem:[%s2117 + $0xc] sm:$0xf] %vm2016, %v1834
        %2122 = vst.msk [vmem:[%s2117 + $0x10] sm:$0xf] %vm2016, %v1837
        %2123 = vst.msk [vmem:[%s2117 + $0x14] sm:$0xf] %vm2016, %v1840
        %2124 = vst.msk [vmem:[%s2117 + $0x18] sm:$0xf] %vm2016, %v1843
        %2125 = vst.msk [vmem:[%s2117 + $0x1c] sm:$0xf] %vm2016, %v1846
        %2126 = vst.msk [vmem:[%s2117 + $0x28] sm:$0xf] %vm2016, %v1849
        %2127 = vst.msk [vmem:[%s2117 + $0x2c] sm:$0xf] %vm2016, %v1852
        %2128 = vst.msk [vmem:[%s2117 + $0x30] sm:$0xf] %vm2016, %v1855
        %2129 = vst.msk [vmem:[%s2117 + $0x34] sm:$0xf] %vm2016, %v1858
        %2130 = vst.msk [vmem:[%s2117 + $0x38] sm:$0xf] %vm2016, %v1861
        %2131 = vst.msk [vmem:[%s2117 + $0x3c] sm:$0xf] %vm2016, %v1864
        %2132 = vst.msk [vmem:[%s2117 + $0x40] sm:$0xf] %vm2016, %v1867
        %2133 = vst.msk [vmem:[%s2117 + $0x44] sm:$0xf] %vm2016, %v1870
        %2134 = vst.msk [vmem:[%s2117 + $0x50] sm:$0xf] %vm2016, %v1873
        %2135 = vst.msk [vmem:[%s2117 + $0x54] sm:$0xf] %vm2016, %v1876
        %2136 = vst.msk [vmem:[%s2117 + $0x58] sm:$0xf] %vm2016, %v1879
        %2137 = vst.msk [vmem:[%s2117 + $0x5c] sm:$0xf] %vm2016, %v1882
        %2138 = vst.msk [vmem:[%s2117 + $0x60] sm:$0xf] %vm2016, %v1885
        %2139 = vst.msk [vmem:[%s2117 + $0x64] sm:$0xf] %vm2016, %v1888
        %2140 = vst.msk [vmem:[%s2117 + $0x68] sm:$0xf] %vm2016, %v1891
        %2141 = vst.msk [vmem:[%s2117 + $0x6c] sm:$0xf] %vm2016, %v1894
        %2142 = vst.msk [vmem:[%s2117 + $0x78] sm:$0xf] %vm2016, %v1897
        %2143 = vst.msk [vmem:[%s2117 + $0x7c] sm:$0xf] %vm2016, %v1900
        %2144 = vst.msk [vmem:[%s2117 + $0x80] sm:$0xf] %vm2016, %v1903
        %2145 = vst.msk [vmem:[%s2117 + $0x84] sm:$0xf] %vm2016, %v1906
        %2146 = vst.msk [vmem:[%s2117 + $0x88] sm:$0xf] %vm2016, %v1909
        %2147 = vst.msk [vmem:[%s2117 + $0x8c] sm:$0xf] %vm2016, %v1912
        %2148 = vst.msk [vmem:[%s2117 + $0x90] sm:$0xf] %vm2016, %v1915
        %2149 = vst.msk [vmem:[%s2117 + $0x94] sm:$0xf] %vm2016, %v1918
        %2150 = vst.msk [vmem:[%s2117 + $0xa0] sm:$0xf] %vm2016, %v1921
        %2151 = vst.msk [vmem:[%s2117 + $0xa4] sm:$0xf] %vm2016, %v1924
        %2152 = vst.msk [vmem:[%s2117 + $0xa8] sm:$0xf] %vm2016, %v1927
        %2153 = vst.msk [vmem:[%s2117 + $0xac] sm:$0xf] %vm2016, %v1930
        %2154 = vst.msk [vmem:[%s2117 + $0xb0] sm:$0xf] %vm2016, %v1933
        %2155 = vst.msk [vmem:[%s2117 + $0xb4] sm:$0xf] %vm2016, %v1936
        %2156 = vst.msk [vmem:[%s2117 + $0xb8] sm:$0xf] %vm2016, %v1939
        %2157 = vst.msk [vmem:[%s2117 + $0xbc] sm:$0xf] %vm2016, %v1942
        %2158 = vst.msk [vmem:[%s2117 + $0xc8] sm:$0xf] %vm2016, %v1945
        %2159 = vst.msk [vmem:[%s2117 + $0xcc] sm:$0xf] %vm2016, %v1948
        %2160 = vst.msk [vmem:[%s2117 + $0xd0] sm:$0xf] %vm2016, %v1951
        %2161 = vst.msk [vmem:[%s2117 + $0xd4] sm:$0xf] %vm2016, %v1954
        %2162 = vst.msk [vmem:[%s2117 + $0xd8] sm:$0xf] %vm2016, %v1957
        %2163 = vst.msk [vmem:[%s2117 + $0xdc] sm:$0xf] %vm2016, %v1960
        %2164 = vst.msk [vmem:[%s2117 + $0xe0] sm:$0xf] %vm2016, %v1963
        %2165 = vst.msk [vmem:[%s2117 + $0xe4] sm:$0xf] %vm2016, %v1966
        %2166 = vst.msk [vmem:[%s2117 + $0xf0] sm:$0xf] %vm2016, %v1969
        %2167 = vst.msk [vmem:[%s2117 + $0xf4] sm:$0xf] %vm2016, %v1972
        %2168 = vst.msk [vmem:[%s2117 + $0xf8] sm:$0xf] %vm2016, %v1975
        %2169 = vst.msk [vmem:[%s2117 + $0xfc] sm:$0xf] %vm2016, %v1978
        %2170 = vst.msk [vmem:[%s2117 + $0x100] sm:$0xf] %vm2016, %v1981
        %2171 = vst.msk [vmem:[%s2117 + $0x104] sm:$0xf] %vm2016, %v1984
        %2172 = vst.msk [vmem:[%s2117 + $0x108] sm:$0xf] %vm2016, %v1987
        %2173 = vst.msk [vmem:[%s2117 + $0x10c] sm:$0xf] %vm2016, %v1990
        %2174 = vst.msk [vmem:[%s2117 + $0x118] sm:$0xf] %vm2016, %v1993
        %2175 = vst.msk [vmem:[%s2117 + $0x11c] sm:$0xf] %vm2016, %v1996
        %2176 = vst.msk [vmem:[%s2117 + $0x120] sm:$0xf] %vm2016, %v1999
        %2177 = vst.msk [vmem:[%s2117 + $0x124] sm:$0xf] %vm2016, %v2002
        %2178 = vst.msk [vmem:[%s2117 + $0x128] sm:$0xf] %vm2016, %v2005
        %2179 = vst.msk [vmem:[%s2117 + $0x12c] sm:$0xf] %vm2016, %v2008
        %2180 = vst.msk [vmem:[%s2117 + $0x130] sm:$0xf] %vm2016, %v2011
        %2181 = vst.msk [vmem:[%s2117 + $0x134] sm:$0xf] %vm2016, %v2014
        %2182 = vst [vmem:[#allocation3] sm:$0xff] 0.0
        %2183 = vst [vmem:[#allocation3 + $0x8] sm:$0xff] 0.0
        %2184 = vst [vmem:[#allocation3 + $0x10] sm:$0xff] 0.0
        %2185 = vst [vmem:[#allocation3 + $0x18] sm:$0xff] 0.0
        %2186 = vst [vmem:[#allocation3 + $0x20] sm:$0xff] 0.0
        %2187 = vst [vmem:[#allocation3 + $0x28] sm:$0xff] 0.0
        %2188 = vst [vmem:[#allocation3 + $0x30] sm:$0xff] 0.0
        %2189 = vst [vmem:[#allocation3 + $0x38] sm:$0xff] 0.0
        %2190 = vst [vmem:[#allocation3 + $0x40] sm:$0xff] 0.0
        %2191 = vst [vmem:[#allocation3 + $0x48] sm:$0xff] 0.0
        %2192 = vst [vmem:[#allocation3 + $0x50] sm:$0xff] 0.0
        %2193 = vst [vmem:[#allocation3 + $0x58] sm:$0xff] 0.0
        %2194 = vst [vmem:[#allocation3 + $0x60] sm:$0xff] 0.0
        %2195 = vst [vmem:[#allocation3 + $0x68] sm:$0xff] 0.0
        %2196 = vst [vmem:[#allocation3 + $0x70] sm:$0xff] 0.0
        %2197 = vst [vmem:[#allocation3 + $0x78] sm:$0xff] 0.0
        %2198 = vst [vmem:[#allocation3 + $0x80] sm:$0xff] 0.0
        %2199 = vst [vmem:[#allocation3 + $0x88] sm:$0xff] 0.0
        %2200 = vst [vmem:[#allocation3 + $0x90] sm:$0xff] 0.0
        %2201 = vst [vmem:[#allocation3 + $0x98] sm:$0xff] 0.0
        %2202 = vst [vmem:[#allocation3 + $0xa0] sm:$0xff] 0.0
        %2203 = vst [vmem:[#allocation3 + $0xa8] sm:$0xff] 0.0
        %2204 = vst [vmem:[#allocation3 + $0xb0] sm:$0xff] 0.0
        %2205 = vst [vmem:[#allocation3 + $0xb8] sm:$0xff] 0.0
        %2206 = vst [vmem:[#allocation3 + $0xc0] sm:$0xff] 0.0
        %2207 = vst [vmem:[#allocation3 + $0xc8] sm:$0xff] 0.0
        %2208 = vst [vmem:[#allocation3 + $0xd0] sm:$0xff] 0.0
        %2209 = vst [vmem:[#allocation3 + $0xd8] sm:$0xff] 0.0
        %2210 = vst [vmem:[#allocation3 + $0xe0] sm:$0xff] 0.0
        %2211 = vst [vmem:[#allocation3 + $0xe8] sm:$0xff] 0.0
        %2212 = vst [vmem:[#allocation3 + $0xf0] sm:$0xff] 0.0
        %2213 = vst [vmem:[#allocation3 + $0xf8] sm:$0xff] 0.0
        %2214 = vst [vmem:[#allocation3 + $0x100] sm:$0xff] 0.0
        %2215 = vst [vmem:[#allocation3 + $0x108] sm:$0xff] 0.0
        %2216 = vst [vmem:[#allocation3 + $0x110] sm:$0xff] 0.0
        %2217 = vst [vmem:[#allocation3 + $0x118] sm:$0xff] 0.0
        %2218 = vst [vmem:[#allocation3 + $0x120] sm:$0xff] 0.0
        %2219 = vst [vmem:[#allocation3 + $0x128] sm:$0xff] 0.0
        %2220 = vst [vmem:[#allocation3 + $0x130] sm:$0xff] 0.0
        %2221 = vst [vmem:[#allocation3 + $0x138] sm:$0xff] 0.0
        %2222 = vst [vmem:[#allocation3 + $0x140] sm:$0xff] 0.0
        %2223 = vst [vmem:[#allocation3 + $0x148] sm:$0xff] 0.0
        %2224 = vst [vmem:[#allocation3 + $0x150] sm:$0xff] 0.0
        %2225 = vst [vmem:[#allocation3 + $0x158] sm:$0xff] 0.0
        %2226 = vst [vmem:[#allocation3 + $0x160] sm:$0xff] 0.0
        %2227 = vst [vmem:[#allocation3 + $0x168] sm:$0xff] 0.0
        %2228 = vst [vmem:[#allocation3 + $0x170] sm:$0xff] 0.0
        %2229 = vst [vmem:[#allocation3 + $0x178] sm:$0xff] 0.0
        %2230 = vst [vmem:[#allocation3 + $0x180] sm:$0xff] 0.0
        %2231 = vst [vmem:[#allocation3 + $0x188] sm:$0xff] 0.0
        %2232 = vst [vmem:[#allocation3 + $0x190] sm:$0xff] 0.0
        %2233 = vst [vmem:[#allocation3 + $0x198] sm:$0xff] 0.0
        %2234 = vst [vmem:[#allocation3 + $0x1a0] sm:$0xff] 0.0
        %2235 = vst [vmem:[#allocation3 + $0x1a8] sm:$0xff] 0.0
        %2236 = vst [vmem:[#allocation3 + $0x1b0] sm:$0xff] 0.0
        %2237 = vst [vmem:[#allocation3 + $0x1b8] sm:$0xff] 0.0
        %2238 = vst [vmem:[#allocation3 + $0x1c0] sm:$0xff] 0.0
        %2239 = vst [vmem:[#allocation3 + $0x1c8] sm:$0xff] 0.0
        %2240 = vst [vmem:[#allocation3 + $0x1d0] sm:$0xff] 0.0
        %2241 = vst [vmem:[#allocation3 + $0x1d8] sm:$0xff] 0.0
        %2242 = vst [vmem:[#allocation3 + $0x1e0] sm:$0xff] 0.0
        %2243 = vst [vmem:[#allocation3 + $0x1e8] sm:$0xff] 0.0
        %2244 = vst [vmem:[#allocation3 + $0x1f0] sm:$0xff] 0.0
        %2245 = vst [vmem:[#allocation3 + $0x1f8] sm:$0xff] 0.0
        %v2246 = vld [vmem:[#allocation2] sm:$0xf]
        %v2247 = vld [vmem:[#allocation2 + $0x4] sm:$0xf]
        %v2248 = vld [vmem:[#allocation2 + $0x8] sm:$0xf]
        %v2249 = vld [vmem:[#allocation2 + $0xc] sm:$0xf]
        %v2250 = vld [vmem:[#allocation2 + $0x10] sm:$0xf]
        %v2251 = vld [vmem:[#allocation2 + $0x14] sm:$0xf]
        %v2252 = vld [vmem:[#allocation2 + $0x18] sm:$0xf]
        %v2253 = vld [vmem:[#allocation2 + $0x1c] sm:$0xf]
        %v2254 = vld [vmem:[#allocation2 + $0x28] sm:$0xf]
        %v2255 = vld [vmem:[#allocation2 + $0x2c] sm:$0xf]
        %v2256 = vld [vmem:[#allocation2 + $0x30] sm:$0xf]
        %v2257 = vld [vmem:[#allocation2 + $0x34] sm:$0xf]
        %v2258 = vld [vmem:[#allocation2 + $0x38] sm:$0xf]
        %v2259 = vld [vmem:[#allocation2 + $0x3c] sm:$0xf]
        %v2260 = vld [vmem:[#allocation2 + $0x40] sm:$0xf]
        %v2261 = vld [vmem:[#allocation2 + $0x44] sm:$0xf]
        %v2262 = vld [vmem:[#allocation2 + $0x50] sm:$0xf]
        %v2263 = vld [vmem:[#allocation2 + $0x54] sm:$0xf]
        %v2264 = vld [vmem:[#allocation2 + $0x58] sm:$0xf]
        %v2265 = vld [vmem:[#allocation2 + $0x5c] sm:$0xf]
        %v2266 = vld [vmem:[#allocation2 + $0x60] sm:$0xf]
        %v2267 = vld [vmem:[#allocation2 + $0x64] sm:$0xf]
        %v2268 = vld [vmem:[#allocation2 + $0x68] sm:$0xf]
        %v2269 = vld [vmem:[#allocation2 + $0x6c] sm:$0xf]
        %v2270 = vld [vmem:[#allocation2 + $0x78] sm:$0xf]
        %v2271 = vld [vmem:[#allocation2 + $0x7c] sm:$0xf]
        %v2272 = vld [vmem:[#allocation2 + $0x80] sm:$0xf]
        %v2273 = vld [vmem:[#allocation2 + $0x84] sm:$0xf]
        %v2274 = vld [vmem:[#allocation2 + $0x88] sm:$0xf]
        %v2275 = vld [vmem:[#allocation2 + $0x8c] sm:$0xf]
        %v2276 = vld [vmem:[#allocation2 + $0x90] sm:$0xf]
        %v2277 = vld [vmem:[#allocation2 + $0x94] sm:$0xf]
        %v2278 = vld [vmem:[#allocation2 + $0xa0] sm:$0xf]
        %v2279 = vld [vmem:[#allocation2 + $0xa4] sm:$0xf]
        %v2280 = vld [vmem:[#allocation2 + $0xa8] sm:$0xf]
        %v2281 = vld [vmem:[#allocation2 + $0xac] sm:$0xf]
        %v2282 = vld [vmem:[#allocation2 + $0xb0] sm:$0xf]
        %v2283 = vld [vmem:[#allocation2 + $0xb4] sm:$0xf]
        %v2284 = vld [vmem:[#allocation2 + $0xb8] sm:$0xf]
        %v2285 = vld [vmem:[#allocation2 + $0xbc] sm:$0xf]
        %v2286 = vld [vmem:[#allocation2 + $0xc8] sm:$0xf]
        %v2287 = vld [vmem:[#allocation2 + $0xcc] sm:$0xf]
        %v2288 = vld [vmem:[#allocation2 + $0xd0] sm:$0xf]
        %v2289 = vld [vmem:[#allocation2 + $0xd4] sm:$0xf]
        %v2290 = vld [vmem:[#allocation2 + $0xd8] sm:$0xf]
        %v2291 = vld [vmem:[#allocation2 + $0xdc] sm:$0xf]
        %v2292 = vld [vmem:[#allocation2 + $0xe0] sm:$0xf]
        %v2293 = vld [vmem:[#allocation2 + $0xe4] sm:$0xf]
        %v2294 = vld [vmem:[#allocation2 + $0xf0] sm:$0xf]
        %v2295 = vld [vmem:[#allocation2 + $0xf4] sm:$0xf]
        %v2296 = vld [vmem:[#allocation2 + $0xf8] sm:$0xf]
        %v2297 = vld [vmem:[#allocation2 + $0xfc] sm:$0xf]
        %v2298 = vld [vmem:[#allocation2 + $0x100] sm:$0xf]
        %v2299 = vld [vmem:[#allocation2 + $0x104] sm:$0xf]
        %v2300 = vld [vmem:[#allocation2 + $0x108] sm:$0xf]
        %v2301 = vld [vmem:[#allocation2 + $0x10c] sm:$0xf]
        %v2302 = vld [vmem:[#allocation2 + $0x118] sm:$0xf]
        %v2303 = vld [vmem:[#allocation2 + $0x11c] sm:$0xf]
        %v2304 = vld [vmem:[#allocation2 + $0x120] sm:$0xf]
        %v2305 = vld [vmem:[#allocation2 + $0x124] sm:$0xf]
        %v2306 = vld [vmem:[#allocation2 + $0x128] sm:$0xf]
        %v2307 = vld [vmem:[#allocation2 + $0x12c] sm:$0xf]
        %v2308 = vld [vmem:[#allocation2 + $0x130] sm:$0xf]
        %v2309 = vld [vmem:[#allocation2 + $0x134] sm:$0xf]
        %v2310 = vld [vmem:[#allocation3] sm:$0xff]
        %v2311 = vld [vmem:[#allocation3 + $0x8] sm:$0xff]
        %v2312 = vld [vmem:[#allocation3 + $0x10] sm:$0xff]
        %v2313 = vld [vmem:[#allocation3 + $0x18] sm:$0xff]
        %v2314 = vld [vmem:[#allocation3 + $0x20] sm:$0xff]
        %v2315 = vld [vmem:[#allocation3 + $0x28] sm:$0xff]
        %v2316 = vld [vmem:[#allocation3 + $0x30] sm:$0xff]
        %v2317 = vld [vmem:[#allocation3 + $0x38] sm:$0xff]
        %v2318 = vld [vmem:[#allocation3 + $0x40] sm:$0xff]
        %v2319 = vld [vmem:[#allocation3 + $0x48] sm:$0xff]
        %v2320 = vld [vmem:[#allocation3 + $0x50] sm:$0xff]
        %v2321 = vld [vmem:[#allocation3 + $0x58] sm:$0xff]
        %v2322 = vld [vmem:[#allocation3 + $0x60] sm:$0xff]
        %v2323 = vld [vmem:[#allocation3 + $0x68] sm:$0xff]
        %v2324 = vld [vmem:[#allocation3 + $0x70] sm:$0xff]
        %v2325 = vld [vmem:[#allocation3 + $0x78] sm:$0xff]
        %v2326 = vld [vmem:[#allocation3 + $0x80] sm:$0xff]
        %v2327 = vld [vmem:[#allocation3 + $0x88] sm:$0xff]
        %v2328 = vld [vmem:[#allocation3 + $0x90] sm:$0xff]
        %v2329 = vld [vmem:[#allocation3 + $0x98] sm:$0xff]
        %v2330 = vld [vmem:[#allocation3 + $0xa0] sm:$0xff]
        %v2331 = vld [vmem:[#allocation3 + $0xa8] sm:$0xff]
        %v2332 = vld [vmem:[#allocation3 + $0xb0] sm:$0xff]
        %v2333 = vld [vmem:[#allocation3 + $0xb8] sm:$0xff]
        %v2334 = vld [vmem:[#allocation3 + $0xc0] sm:$0xff]
        %v2335 = vld [vmem:[#allocation3 + $0xc8] sm:$0xff]
        %v2336 = vld [vmem:[#allocation3 + $0xd0] sm:$0xff]
        %v2337 = vld [vmem:[#allocation3 + $0xd8] sm:$0xff]
        %v2338 = vld [vmem:[#allocation3 + $0xe0] sm:$0xff]
        %v2339 = vld [vmem:[#allocation3 + $0xe8] sm:$0xff]
        %v2340 = vld [vmem:[#allocation3 + $0xf0] sm:$0xff]
        %v2341 = vld [vmem:[#allocation3 + $0xf8] sm:$0xff]
        %v2342 = vld [vmem:[#allocation3 + $0x100] sm:$0xff]
        %v2343 = vld [vmem:[#allocation3 + $0x108] sm:$0xff]
        %v2344 = vld [vmem:[#allocation3 + $0x110] sm:$0xff]
        %v2345 = vld [vmem:[#allocation3 + $0x118] sm:$0xff]
        %v2346 = vld [vmem:[#allocation3 + $0x120] sm:$0xff]
        %v2347 = vld [vmem:[#allocation3 + $0x128] sm:$0xff]
        %v2348 = vld [vmem:[#allocation3 + $0x130] sm:$0xff]
        %v2349 = vld [vmem:[#allocation3 + $0x138] sm:$0xff]
        %v2350 = vld [vmem:[#allocation3 + $0x140] sm:$0xff]
        %v2351 = vld [vmem:[#allocation3 + $0x148] sm:$0xff]
        %v2352 = vld [vmem:[#allocation3 + $0x150] sm:$0xff]
        %v2353 = vld [vmem:[#allocation3 + $0x158] sm:$0xff]
        %v2354 = vld [vmem:[#allocation3 + $0x160] sm:$0xff]
        %v2355 = vld [vmem:[#allocation3 + $0x168] sm:$0xff]
        %v2356 = vld [vmem:[#allocation3 + $0x170] sm:$0xff]
        %v2357 = vld [vmem:[#allocation3 + $0x178] sm:$0xff]
        %v2358 = vld [vmem:[#allocation3 + $0x180] sm:$0xff]
        %v2359 = vld [vmem:[#allocation3 + $0x188] sm:$0xff]
        %v2360 = vld [vmem:[#allocation3 + $0x190] sm:$0xff]
        %v2361 = vld [vmem:[#allocation3 + $0x198] sm:$0xff]
        %v2362 = vld [vmem:[#allocation3 + $0x1a0] sm:$0xff]
        %v2363 = vld [vmem:[#allocation3 + $0x1a8] sm:$0xff]
        %v2364 = vld [vmem:[#allocation3 + $0x1b0] sm:$0xff]
        %v2365 = vld [vmem:[#allocation3 + $0x1b8] sm:$0xff]
        %v2366 = vld [vmem:[#allocation3 + $0x1c0] sm:$0xff]
        %v2367 = vld [vmem:[#allocation3 + $0x1c8] sm:$0xff]
        %v2368 = vld [vmem:[#allocation3 + $0x1d0] sm:$0xff]
        %v2369 = vld [vmem:[#allocation3 + $0x1d8] sm:$0xff]
        %v2370 = vld [vmem:[#allocation3 + $0x1e0] sm:$0xff]
        %v2371 = vld [vmem:[#allocation3 + $0x1e8] sm:$0xff]
        %v2372 = vld [vmem:[#allocation3 + $0x1f0] sm:$0xff]
        %v2373 = vld [vmem:[#allocation3 + $0x1f8] sm:$0xff]
        %v2374 = vld [vmem:[#allocation7] sm:$0xf]
        %v2375 = vld [vmem:[#allocation7 + $0x4] sm:$0xf]
        %v2376 = vld [vmem:[#allocation7 + $0x8] sm:$0xf]
        %v2377 = vld [vmem:[#allocation7 + $0xc] sm:$0xf]
        %v2378 = vld [vmem:[#allocation7 + $0x10] sm:$0xf]
        %v2379 = vld [vmem:[#allocation7 + $0x14] sm:$0xf]
        %v2444 = vunpack.c.l.b16 %v2246
        %v2445 = vunpack.c.l.b16 %v2247
        %v2446 = vunpack.c.l.b16 %v2248
        %v2447 = vunpack.c.l.b16 %v2249
        %v2448 = vunpack.c.l.b16 %v2250
        %v2449 = vunpack.c.l.b16 %v2251
        %v2450 = vunpack.c.l.b16 %v2252
        %v2451 = vunpack.c.l.b16 %v2253
        %v2452 = vunpack.c.l.b16 %v2254
        %v2453 = vunpack.c.l.b16 %v2255
        %v2454 = vunpack.c.l.b16 %v2256
        %v2455 = vunpack.c.l.b16 %v2257
        %v2456 = vunpack.c.l.b16 %v2258
        %v2457 = vunpack.c.l.b16 %v2259
        %v2458 = vunpack.c.l.b16 %v2260
        %v2459 = vunpack.c.l.b16 %v2261
        %v2460 = vunpack.c.l.b16 %v2262
        %v2461 = vunpack.c.l.b16 %v2263
        %v2462 = vunpack.c.l.b16 %v2264
        %v2463 = vunpack.c.l.b16 %v2265
        %v2464 = vunpack.c.l.b16 %v2266
        %v2465 = vunpack.c.l.b16 %v2267
        %v2466 = vunpack.c.l.b16 %v2268
        %v2467 = vunpack.c.l.b16 %v2269
        %v2468 = vunpack.c.l.b16 %v2270
        %v2469 = vunpack.c.l.b16 %v2271
        %v2470 = vunpack.c.l.b16 %v2272
        %v2471 = vunpack.c.l.b16 %v2273
        %v2472 = vunpack.c.l.b16 %v2274
        %v2473 = vunpack.c.l.b16 %v2275
        %v2474 = vunpack.c.l.b16 %v2276
        %v2475 = vunpack.c.l.b16 %v2277
        %v2476 = vunpack.c.l.b16 %v2278
        %v2477 = vunpack.c.l.b16 %v2279
        %v2478 = vunpack.c.l.b16 %v2280
        %v2479 = vunpack.c.l.b16 %v2281
        %v2480 = vunpack.c.l.b16 %v2282
        %v2481 = vunpack.c.l.b16 %v2283
        %v2482 = vunpack.c.l.b16 %v2284
        %v2483 = vunpack.c.l.b16 %v2285
        %v2484 = vunpack.c.l.b16 %v2286
        %v2485 = vunpack.c.l.b16 %v2287
        %v2486 = vunpack.c.l.b16 %v2288
        %v2487 = vunpack.c.l.b16 %v2289
        %v2488 = vunpack.c.l.b16 %v2290
        %v2489 = vunpack.c.l.b16 %v2291
        %v2490 = vunpack.c.l.b16 %v2292
        %v2491 = vunpack.c.l.b16 %v2293
        %v2492 = vunpack.c.l.b16 %v2294
        %v2493 = vunpack.c.l.b16 %v2295
        %v2494 = vunpack.c.l.b16 %v2296
        %v2495 = vunpack.c.l.b16 %v2297
        %v2496 = vunpack.c.l.b16 %v2298
        %v2497 = vunpack.c.l.b16 %v2299
        %v2498 = vunpack.c.l.b16 %v2300
        %v2499 = vunpack.c.l.b16 %v2301
        %v2500 = vunpack.c.l.b16 %v2302
        %v2501 = vunpack.c.l.b16 %v2303
        %v2502 = vunpack.c.l.b16 %v2304
        %v2503 = vunpack.c.l.b16 %v2305
        %v2504 = vunpack.c.l.b16 %v2306
        %v2505 = vunpack.c.l.b16 %v2307
        %v2506 = vunpack.c.l.b16 %v2308
        %v2507 = vunpack.c.l.b16 %v2309
        %v2508 = vpack.c.b16 %v2445, %v2444
        %v2509 = vpack.c.b16 %v2447, %v2446
        %v2510 = vpack.c.b16 %v2449, %v2448
        %v2511 = vpack.c.b16 %v2451, %v2450
        %v2512 = vpack.c.b16 %v2453, %v2452
        %v2513 = vpack.c.b16 %v2455, %v2454
        %v2514 = vpack.c.b16 %v2457, %v2456
        %v2515 = vpack.c.b16 %v2459, %v2458
        %v2516 = vpack.c.b16 %v2461, %v2460
        %v2517 = vpack.c.b16 %v2463, %v2462
        %v2518 = vpack.c.b16 %v2465, %v2464
        %v2519 = vpack.c.b16 %v2467, %v2466
        %v2520 = vpack.c.b16 %v2469, %v2468
        %v2521 = vpack.c.b16 %v2471, %v2470
        %v2522 = vpack.c.b16 %v2473, %v2472
        %v2523 = vpack.c.b16 %v2475, %v2474
        %v2524 = vpack.c.b16 %v2477, %v2476
        %v2525 = vpack.c.b16 %v2479, %v2478
        %v2526 = vpack.c.b16 %v2481, %v2480
        %v2527 = vpack.c.b16 %v2483, %v2482
        %v2528 = vpack.c.b16 %v2485, %v2484
        %v2529 = vpack.c.b16 %v2487, %v2486
        %v2530 = vpack.c.b16 %v2489, %v2488
        %v2531 = vpack.c.b16 %v2491, %v2490
        %v2532 = vpack.c.b16 %v2493, %v2492
        %v2533 = vpack.c.b16 %v2495, %v2494
        %v2534 = vpack.c.b16 %v2497, %v2496
        %v2535 = vpack.c.b16 %v2499, %v2498
        %v2536 = vpack.c.b16 %v2501, %v2500
        %v2537 = vpack.c.b16 %v2503, %v2502
        %v2538 = vpack.c.b16 %v2505, %v2504
        %v2539 = vpack.c.b16 %v2507, %v2506
        %v2546 = vunpack.c.l.b16 %v2374
        %v2547 = vunpack.c.l.b16 %v2375
        %v2548 = vunpack.c.l.b16 %v2376
        %v2549 = vunpack.c.l.b16 %v2377
        %v2550 = vunpack.c.l.b16 %v2378
        %v2551 = vunpack.c.l.b16 %v2379
        %v2552 = vpack.c.b16 %v2547, %v2546
        %v2553 = vpack.c.b16 %v2549, %v2548
        %v2554 = vpack.c.b16 %v2551, %v2550
        %vm2558 = vcmask 392192
        %v2560 = vsel %vm2558, %v2508, 0
        %v2563 = vsel %vm2558, %v2509, 0
        %v2566 = vsel %vm2558, %v2510, 0
        %v2569 = vsel %vm2558, %v2511, 0
        %v2572 = vsel %vm2558, %v2512, 0
        %v2575 = vsel %vm2558, %v2513, 0
        %v2578 = vsel %vm2558, %v2514, 0
        %v2581 = vsel %vm2558, %v2515, 0
        %v2584 = vsel %vm2558, %v2516, 0
        %v2587 = vsel %vm2558, %v2517, 0
        %v2590 = vsel %vm2558, %v2518, 0
        %v2593 = vsel %vm2558, %v2519, 0
        %v2596 = vsel %vm2558, %v2520, 0
        %v2599 = vsel %vm2558, %v2521, 0
        %v2602 = vsel %vm2558, %v2522, 0
        %v2605 = vsel %vm2558, %v2523, 0
        %v2608 = vsel %vm2558, %v2524, 0
        %v2611 = vsel %vm2558, %v2525, 0
        %v2614 = vsel %vm2558, %v2526, 0
        %v2617 = vsel %vm2558, %v2527, 0
        %v2620 = vsel %vm2558, %v2528, 0
        %v2623 = vsel %vm2558, %v2529, 0
        %v2626 = vsel %vm2558, %v2530, 0
        %v2629 = vsel %vm2558, %v2531, 0
        %v2632 = vsel %vm2558, %v2532, 0
        %v2635 = vsel %vm2558, %v2533, 0
        %v2638 = vsel %vm2558, %v2534, 0
        %v2641 = vsel %vm2558, %v2535, 0
        %v2644 = vsel %vm2558, %v2536, 0
        %v2647 = vsel %vm2558, %v2537, 0
        %v2650 = vsel %vm2558, %v2538, 0
        %v2653 = vsel %vm2558, %v2539, 0
        %2655 = vmatprep.subr.bf16.mxu0 0
        %2656 = vmatpush1.bf16.msra.mxu0 %v2552
        %2657 = vmatprep.subr.bf16.mxu0 0
        %2658 = vmatpush1.bf16.msra.mxu0 %v2553
        %2659 = vmatprep.subr.bf16.mxu0 0
        %2660 = vmatpush1.bf16.msra.mxu0 %v2554
        %2661 = vmatprep.subr.bf16.mxu0 0
        %2662 = vmatpush1.bf16.msra.mxu0 0
        %2663 = vmatprep.subr.bf16.mxu0 0
        %2664 = vmatpush1.bf16.msra.mxu0 0
        %2665 = vmatprep.subr.bf16.mxu0 0
        %2666 = vmatpush1.bf16.msra.mxu0 0
        %2667 = vmatprep.subr.bf16.mxu0 0
        %2668 = vmatpush1.bf16.msra.mxu0 0
        %2669 = vmatprep.subr.bf16.mxu0 0
        %2670 = vmatpush1.bf16.msra.mxu0 0
        %2671 = vmatprep.subr.bf16.mxu0 0
        %2672 = vmatpush1.bf16.msra.mxu0 0
        %2673 = vmatprep.subr.bf16.mxu0 0
        %2674 = vmatpush1.bf16.msra.mxu0 0
        %2675 = vmatprep.subr.bf16.mxu0 0
        %2676 = vmatpush1.bf16.msra.mxu0 0
        %2677 = vmatprep.subr.bf16.mxu0 0
        %2678 = vmatpush1.bf16.msra.mxu0 0
        %2679 = vmatprep.subr.bf16.mxu0 0
        %2680 = vmatpush1.bf16.msra.mxu0 0
        %2681 = vmatprep.subr.bf16.mxu0 0
        %2682 = vmatpush1.bf16.msra.mxu0 0
        %2683 = vmatprep.subr.bf16.mxu0 0
        %2684 = vmatpush1.bf16.msra.mxu0 0
        %2685 = vmatprep.subr.bf16.mxu0 0
        %2686 = vmatpush1.bf16.msra.mxu0 0
        %2687 = vmatprep.mubr.bf16.mxu0 0
        %2688 = vmatmul.mubr.bf16.gmra.mrb[0].mxu0 %v2560
        %v2689 = vpop.f32.mrb[0].mxu0
        %v2690 = vadd.f32 0.0, %v2689
        %v2691 = vpop.f32.mrb[0].mxu0
        %v2692 = vpop.f32.mrb[0].mxu0
        %v2693 = vadd.f32 0.0, %v2692
        %v2694 = vpop.f32.mrb[0].mxu0
        %2695 = vmatprep.mubr.bf16.mxu0 0
        %2696 = vmatmul.mubr.bf16.gmra.mrb[0].mxu0 %v2563
        %v2697 = vpop.f32.mrb[0].mxu0
        %v2698 = vadd.f32 0.0, %v2697
        %v2699 = vpop.f32.mrb[0].mxu0
        %v2700 = vpop.f32.mrb[0].mxu0
        %v2701 = vadd.f32 0.0, %v2700
        %v2702 = vpop.f32.mrb[0].mxu0
        %2703 = vmatprep.mubr.bf16.mxu0 0
        %2704 = vmatmul.mubr.bf16.gmra.mrb[0].mxu0 %v2566
        %v2705 = vpop.f32.mrb[0].mxu0
        %v2706 = vadd.f32 0.0, %v2705
        %v2707 = vpop.f32.mrb[0].mxu0
        %v2708 = vpop.f32.mrb[0].mxu0
        %v2709 = vadd.f32 0.0, %v2708
        %v2710 = vpop.f32.mrb[0].mxu0
        %2711 = vmatprep.mubr.bf16.mxu0 0
        %2712 = vmatmul.mubr.bf16.gmra.mrb[0].mxu0 %v2569
        %v2713 = vpop.f32.mrb[0].mxu0
        %v2714 = vadd.f32 0.0, %v2713
        %v2715 = vpop.f32.mrb[0].mxu0
        %v2716 = vpop.f32.mrb[0].mxu0
        %v2717 = vadd.f32 0.0, %v2716
        %v2718 = vpop.f32.mrb[0].mxu0
        %2719 = vmatprep.mubr.bf16.mxu0 0
        %2720 = vmatmul.mubr.bf16.gmra.mrb[0].mxu0 %v2572
        %v2721 = vpop.f32.mrb[0].mxu0
        %v2722 = vadd.f32 0.0, %v2721
        %v2723 = vpop.f32.mrb[0].mxu0
        %v2724 = vpop.f32.mrb[0].mxu0
        %v2725 = vadd.f32 0.0, %v2724
        %v2726 = vpop.f32.mrb[0].mxu0
        %2727 = vmatprep.mubr.bf16.mxu0 0
        %2728 = vmatmul.mubr.bf16.gmra.mrb[0].mxu0 %v2575
        %v2729 = vpop.f32.mrb[0].mxu0
        %v2730 = vadd.f32 0.0, %v2729
        %v2731 = vpop.f32.mrb[0].mxu0
        %v2732 = vpop.f32.mrb[0].mxu0
        %v2733 = vadd.f32 0.0, %v2732
        %v2734 = vpop.f32.mrb[0].mxu0
        %2735 = vmatprep.mubr.bf16.mxu0 0
        %2736 = vmatmul.mubr.bf16.gmra.mrb[0].mxu0 %v2578
        %v2737 = vpop.f32.mrb[0].mxu0
        %v2738 = vadd.f32 0.0, %v2737
        %v2739 = vpop.f32.mrb[0].mxu0
        %v2740 = vpop.f32.mrb[0].mxu0
        %v2741 = vadd.f32 0.0, %v2740
        %v2742 = vpop.f32.mrb[0].mxu0
        %2743 = vmatprep.mubr.bf16.mxu0 0
        %2744 = vmatmul.mubr.bf16.gmra.mrb[0].mxu0 %v2581
        %v2745 = vpop.f32.mrb[0].mxu0
        %v2746 = vadd.f32 0.0, %v2745
        %v2747 = vpop.f32.mrb[0].mxu0
        %v2748 = vpop.f32.mrb[0].mxu0
        %v2749 = vadd.f32 0.0, %v2748
        %v2750 = vpop.f32.mrb[0].mxu0
        %2751 = vmatprep.mubr.bf16.mxu0 0
        %2752 = vmatmul.mubr.bf16.gmra.mrb[0].mxu0 %v2584
        %v2753 = vpop.f32.mrb[0].mxu0
        %v2754 = vadd.f32 0.0, %v2753
        %v2755 = vpop.f32.mrb[0].mxu0
        %v2756 = vpop.f32.mrb[0].mxu0
        %v2757 = vadd.f32 0.0, %v2756
        %v2758 = vpop.f32.mrb[0].mxu0
        %2759 = vmatprep.mubr.bf16.mxu0 0
        %2760 = vmatmul.mubr.bf16.gmra.mrb[0].mxu0 %v2587
        %v2761 = vpop.f32.mrb[0].mxu0
        %v2762 = vadd.f32 0.0, %v2761
        %v2763 = vpop.f32.mrb[0].mxu0
        %v2764 = vpop.f32.mrb[0].mxu0
        %v2765 = vadd.f32 0.0, %v2764
        %v2766 = vpop.f32.mrb[0].mxu0
        %2767 = vmatprep.mubr.bf16.mxu0 0
        %2768 = vmatmul.mubr.bf16.gmra.mrb[0].mxu0 %v2590
        %v2769 = vpop.f32.mrb[0].mxu0
        %v2770 = vadd.f32 0.0, %v2769
        %v2771 = vpop.f32.mrb[0].mxu0
        %v2772 = vpop.f32.mrb[0].mxu0
        %v2773 = vadd.f32 0.0, %v2772
        %v2774 = vpop.f32.mrb[0].mxu0
        %2775 = vmatprep.mubr.bf16.mxu0 0
        %2776 = vmatmul.mubr.bf16.gmra.mrb[0].mxu0 %v2593
        %v2777 = vpop.f32.mrb[0].mxu0
        %v2778 = vadd.f32 0.0, %v2777
        %v2779 = vpop.f32.mrb[0].mxu0
        %v2780 = vpop.f32.mrb[0].mxu0
        %v2781 = vadd.f32 0.0, %v2780
        %v2782 = vpop.f32.mrb[0].mxu0
        %2783 = vmatprep.mubr.bf16.mxu0 0
        %2784 = vmatmul.mubr.bf16.gmra.mrb[0].mxu0 %v2596
        %v2785 = vpop.f32.mrb[0].mxu0
        %v2786 = vadd.f32 0.0, %v2785
        %v2787 = vpop.f32.mrb[0].mxu0
        %v2788 = vpop.f32.mrb[0].mxu0
        %v2789 = vadd.f32 0.0, %v2788
        %v2790 = vpop.f32.mrb[0].mxu0
        %2791 = vmatprep.mubr.bf16.mxu0 0
        %2792 = vmatmul.mubr.bf16.gmra.mrb[0].mxu0 %v2599
        %v2793 = vpop.f32.mrb[0].mxu0
        %v2794 = vadd.f32 0.0, %v2793
        %v2795 = vpop.f32.mrb[0].mxu0
        %v2796 = vpop.f32.mrb[0].mxu0
        %v2797 = vadd.f32 0.0, %v2796
        %v2798 = vpop.f32.mrb[0].mxu0
        %2799 = vmatprep.mubr.bf16.mxu0 0
        %2800 = vmatmul.mubr.bf16.gmra.mrb[0].mxu0 %v2602
        %v2801 = vpop.f32.mrb[0].mxu0
        %v2802 = vadd.f32 0.0, %v2801
        %v2803 = vpop.f32.mrb[0].mxu0
        %v2804 = vpop.f32.mrb[0].mxu0
        %v2805 = vadd.f32 0.0, %v2804
        %v2806 = vpop.f32.mrb[0].mxu0
        %2807 = vmatprep.mubr.bf16.mxu0 0
        %2808 = vmatmul.mubr.bf16.gmra.mrb[0].mxu0 %v2605
        %v2809 = vpop.f32.mrb[0].mxu0
        %v2810 = vadd.f32 0.0, %v2809
        %v2811 = vpop.f32.mrb[0].mxu0
        %v2812 = vpop.f32.mrb[0].mxu0
        %v2813 = vadd.f32 0.0, %v2812
        %v2814 = vpop.f32.mrb[0].mxu0
        %2815 = vmatprep.mubr.bf16.mxu0 0
        %2816 = vmatmul.mubr.bf16.gmra.mrb[0].mxu0 %v2608
        %v2817 = vpop.f32.mrb[0].mxu0
        %v2818 = vadd.f32 0.0, %v2817
        %v2819 = vpop.f32.mrb[0].mxu0
        %v2820 = vpop.f32.mrb[0].mxu0
        %v2821 = vadd.f32 0.0, %v2820
        %v2822 = vpop.f32.mrb[0].mxu0
        %2823 = vmatprep.mubr.bf16.mxu0 0
        %2824 = vmatmul.mubr.bf16.gmra.mrb[0].mxu0 %v2611
        %v2825 = vpop.f32.mrb[0].mxu0
        %v2826 = vadd.f32 0.0, %v2825
        %v2827 = vpop.f32.mrb[0].mxu0
        %v2828 = vpop.f32.mrb[0].mxu0
        %v2829 = vadd.f32 0.0, %v2828
        %v2830 = vpop.f32.mrb[0].mxu0
        %2831 = vmatprep.mubr.bf16.mxu0 0
        %2832 = vmatmul.mubr.bf16.gmra.mrb[0].mxu0 %v2614
        %v2833 = vpop.f32.mrb[0].mxu0
        %v2834 = vadd.f32 0.0, %v2833
        %v2835 = vpop.f32.mrb[0].mxu0
        %v2836 = vpop.f32.mrb[0].mxu0
        %v2837 = vadd.f32 0.0, %v2836
        %v2838 = vpop.f32.mrb[0].mxu0
        %2839 = vmatprep.mubr.bf16.mxu0 0
        %2840 = vmatmul.mubr.bf16.gmra.mrb[0].mxu0 %v2617
        %v2841 = vpop.f32.mrb[0].mxu0
        %v2842 = vadd.f32 0.0, %v2841
        %v2843 = vpop.f32.mrb[0].mxu0
        %v2844 = vpop.f32.mrb[0].mxu0
        %v2845 = vadd.f32 0.0, %v2844
        %v2846 = vpop.f32.mrb[0].mxu0
        %2847 = vmatprep.mubr.bf16.mxu0 0
        %2848 = vmatmul.mubr.bf16.gmra.mrb[0].mxu0 %v2620
        %v2849 = vpop.f32.mrb[0].mxu0
        %v2850 = vadd.f32 0.0, %v2849
        %v2851 = vpop.f32.mrb[0].mxu0
        %v2852 = vpop.f32.mrb[0].mxu0
        %v2853 = vadd.f32 0.0, %v2852
        %v2854 = vpop.f32.mrb[0].mxu0
        %2855 = vmatprep.mubr.bf16.mxu0 0
        %2856 = vmatmul.mubr.bf16.gmra.mrb[0].mxu0 %v2623
        %v2857 = vpop.f32.mrb[0].mxu0
        %v2858 = vadd.f32 0.0, %v2857
        %v2859 = vpop.f32.mrb[0].mxu0
        %v2860 = vpop.f32.mrb[0].mxu0
        %v2861 = vadd.f32 0.0, %v2860
        %v2862 = vpop.f32.mrb[0].mxu0
        %2863 = vmatprep.mubr.bf16.mxu0 0
        %2864 = vmatmul.mubr.bf16.gmra.mrb[0].mxu0 %v2626
        %v2865 = vpop.f32.mrb[0].mxu0
        %v2866 = vadd.f32 0.0, %v2865
        %v2867 = vpop.f32.mrb[0].mxu0
        %v2868 = vpop.f32.mrb[0].mxu0
        %v2869 = vadd.f32 0.0, %v2868
        %v2870 = vpop.f32.mrb[0].mxu0
        %2871 = vmatprep.mubr.bf16.mxu0 0
        %2872 = vmatmul.mubr.bf16.gmra.mrb[0].mxu0 %v2629
        %v2873 = vpop.f32.mrb[0].mxu0
        %v2874 = vadd.f32 0.0, %v2873
        %v2875 = vpop.f32.mrb[0].mxu0
        %v2876 = vpop.f32.mrb[0].mxu0
        %v2877 = vadd.f32 0.0, %v2876
        %v2878 = vpop.f32.mrb[0].mxu0
        %2879 = vmatprep.mubr.bf16.mxu0 0
        %2880 = vmatmul.mubr.bf16.gmra.mrb[0].mxu0 %v2632
        %v2881 = vpop.f32.mrb[0].mxu0
        %v2882 = vadd.f32 0.0, %v2881
        %v2883 = vpop.f32.mrb[0].mxu0
        %v2884 = vpop.f32.mrb[0].mxu0
        %v2885 = vadd.f32 0.0, %v2884
        %v2886 = vpop.f32.mrb[0].mxu0
        %2887 = vmatprep.mubr.bf16.mxu0 0
        %2888 = vmatmul.mubr.bf16.gmra.mrb[0].mxu0 %v2635
        %v2889 = vpop.f32.mrb[0].mxu0
        %v2890 = vadd.f32 0.0, %v2889
        %v2891 = vpop.f32.mrb[0].mxu0
        %v2892 = vpop.f32.mrb[0].mxu0
        %v2893 = vadd.f32 0.0, %v2892
        %v2894 = vpop.f32.mrb[0].mxu0
        %2895 = vmatprep.mubr.bf16.mxu0 0
        %2896 = vmatmul.mubr.bf16.gmra.mrb[0].mxu0 %v2638
        %v2897 = vpop.f32.mrb[0].mxu0
        %v2898 = vadd.f32 0.0, %v2897
        %v2899 = vpop.f32.mrb[0].mxu0
        %v2900 = vpop.f32.mrb[0].mxu0
        %v2901 = vadd.f32 0.0, %v2900
        %v2902 = vpop.f32.mrb[0].mxu0
        %2903 = vmatprep.mubr.bf16.mxu0 0
        %2904 = vmatmul.mubr.bf16.gmra.mrb[0].mxu0 %v2641
        %v2905 = vpop.f32.mrb[0].mxu0
        %v2906 = vadd.f32 0.0, %v2905
        %v2907 = vpop.f32.mrb[0].mxu0
        %v2908 = vpop.f32.mrb[0].mxu0
        %v2909 = vadd.f32 0.0, %v2908
        %v2910 = vpop.f32.mrb[0].mxu0
        %2911 = vmatprep.mubr.bf16.mxu0 0
        %2912 = vmatmul.mubr.bf16.gmra.mrb[0].mxu0 %v2644
        %v2913 = vpop.f32.mrb[0].mxu0
        %v2914 = vadd.f32 0.0, %v2913
        %v2915 = vpop.f32.mrb[0].mxu0
        %v2916 = vpop.f32.mrb[0].mxu0
        %v2917 = vadd.f32 0.0, %v2916
        %v2918 = vpop.f32.mrb[0].mxu0
        %2919 = vmatprep.mubr.bf16.mxu0 0
        %2920 = vmatmul.mubr.bf16.gmra.mrb[0].mxu0 %v2647
        %v2921 = vpop.f32.mrb[0].mxu0
        %v2922 = vadd.f32 0.0, %v2921
        %v2923 = vpop.f32.mrb[0].mxu0
        %v2924 = vpop.f32.mrb[0].mxu0
        %v2925 = vadd.f32 0.0, %v2924
        %v2926 = vpop.f32.mrb[0].mxu0
        %2927 = vmatprep.mubr.bf16.mxu0 0
        %2928 = vmatmul.mubr.bf16.gmra.mrb[0].mxu0 %v2650
        %v2929 = vpop.f32.mrb[0].mxu0
        %v2930 = vadd.f32 0.0, %v2929
        %v2931 = vpop.f32.mrb[0].mxu0
        %v2932 = vpop.f32.mrb[0].mxu0
        %v2933 = vadd.f32 0.0, %v2932
        %v2934 = vpop.f32.mrb[0].mxu0
        %2935 = vmatprep.mubr.bf16.mxu0 0
        %2936 = vmatmul.mubr.bf16.gmra.mrb[0].mxu0 %v2653
        %v2937 = vpop.f32.mrb[0].mxu0
        %v2938 = vadd.f32 0.0, %v2937
        %v2939 = vpop.f32.mrb[0].mxu0
        %v2940 = vpop.f32.mrb[0].mxu0
        %v2941 = vadd.f32 0.0, %v2940
        %v2942 = vpop.f32.mrb[0].mxu0
        %2943 = vdwg.mxu0
        %v2944 = vadd.f32 %v2310, %v2690
        %v2945 = vadd.f32 %v2311, %v2693
        %v2946 = vadd.f32 %v2312, %v2698
        %v2947 = vadd.f32 %v2313, %v2701
        %v2948 = vadd.f32 %v2314, %v2706
        %v2949 = vadd.f32 %v2315, %v2709
        %v2950 = vadd.f32 %v2316, %v2714
        %v2951 = vadd.f32 %v2317, %v2717
        %v2952 = vadd.f32 %v2318, %v2722
        %v2953 = vadd.f32 %v2319, %v2725
        %v2954 = vadd.f32 %v2320, %v2730
        %v2955 = vadd.f32 %v2321, %v2733
        %v2956 = vadd.f32 %v2322, %v2738
        %v2957 = vadd.f32 %v2323, %v2741
        %v2958 = vadd.f32 %v2324, %v2746
        %v2959 = vadd.f32 %v2325, %v2749
        %v2960 = vadd.f32 %v2326, %v2754
        %v2961 = vadd.f32 %v2327, %v2757
        %v2962 = vadd.f32 %v2328, %v2762
        %v2963 = vadd.f32 %v2329, %v2765
        %v2964 = vadd.f32 %v2330, %v2770
        %v2965 = vadd.f32 %v2331, %v2773
        %v2966 = vadd.f32 %v2332, %v2778
        %v2967 = vadd.f32 %v2333, %v2781
        %v2968 = vadd.f32 %v2334, %v2786
        %v2969 = vadd.f32 %v2335, %v2789
        %v2970 = vadd.f32 %v2336, %v2794
        %v2971 = vadd.f32 %v2337, %v2797
        %v2972 = vadd.f32 %v2338, %v2802
        %v2973 = vadd.f32 %v2339, %v2805
        %v2974 = vadd.f32 %v2340, %v2810
        %v2975 = vadd.f32 %v2341, %v2813
        %v2976 = vadd.f32 %v2342, %v2818
        %v2977 = vadd.f32 %v2343, %v2821
        %v2978 = vadd.f32 %v2344, %v2826
        %v2979 = vadd.f32 %v2345, %v2829
        %v2980 = vadd.f32 %v2346, %v2834
        %v2981 = vadd.f32 %v2347, %v2837
        %v2982 = vadd.f32 %v2348, %v2842
        %v2983 = vadd.f32 %v2349, %v2845
        %v2984 = vadd.f32 %v2350, %v2850
        %v2985 = vadd.f32 %v2351, %v2853
        %v2986 = vadd.f32 %v2352, %v2858
        %v2987 = vadd.f32 %v2353, %v2861
        %v2988 = vadd.f32 %v2354, %v2866
        %v2989 = vadd.f32 %v2355, %v2869
        %v2990 = vadd.f32 %v2356, %v2874
        %v2991 = vadd.f32 %v2357, %v2877
        %v2992 = vadd.f32 %v2358, %v2882
        %v2993 = vadd.f32 %v2359, %v2885
        %v2994 = vadd.f32 %v2360, %v2890
        %v2995 = vadd.f32 %v2361, %v2893
        %v2996 = vadd.f32 %v2362, %v2898
        %v2997 = vadd.f32 %v2363, %v2901
        %v2998 = vadd.f32 %v2364, %v2906
        %v2999 = vadd.f32 %v2365, %v2909
        %v3000 = vadd.f32 %v2366, %v2914
        %v3001 = vadd.f32 %v2367, %v2917
        %v3002 = vadd.f32 %v2368, %v2922
        %v3003 = vadd.f32 %v2369, %v2925
        %v3004 = vadd.f32 %v2370, %v2930
        %v3005 = vadd.f32 %v2371, %v2933
        %v3006 = vadd.f32 %v2372, %v2938
        %v3007 = vadd.f32 %v2373, %v2941
        %3008 = vst [vmem:[#allocation3] sm:$0xff] %v2944
        %3009 = vst [vmem:[#allocation3 + $0x8] sm:$0xff] %v2945
        %3010 = vst [vmem:[#allocation3 + $0x10] sm:$0xff] %v2946
        %3011 = vst [vmem:[#allocation3 + $0x18] sm:$0xff] %v2947
        %3012 = vst [vmem:[#allocation3 + $0x20] sm:$0xff] %v2948
        %3013 = vst [vmem:[#allocation3 + $0x28] sm:$0xff] %v2949
        %3014 = vst [vmem:[#allocation3 + $0x30] sm:$0xff] %v2950
        %3015 = vst [vmem:[#allocation3 + $0x38] sm:$0xff] %v2951
        %3016 = vst [vmem:[#allocation3 + $0x40] sm:$0xff] %v2952
        %3017 = vst [vmem:[#allocation3 + $0x48] sm:$0xff] %v2953
        %3018 = vst [vmem:[#allocation3 + $0x50] sm:$0xff] %v2954
        %3019 = vst [vmem:[#allocation3 + $0x58] sm:$0xff] %v2955
        %3020 = vst [vmem:[#allocation3 + $0x60] sm:$0xff] %v2956
        %3021 = vst [vmem:[#allocation3 + $0x68] sm:$0xff] %v2957
        %3022 = vst [vmem:[#allocation3 + $0x70] sm:$0xff] %v2958
        %3023 = vst [vmem:[#allocation3 + $0x78] sm:$0xff] %v2959
        %3024 = vst [vmem:[#allocation3 + $0x80] sm:$0xff] %v2960
        %3025 = vst [vmem:[#allocation3 + $0x88] sm:$0xff] %v2961
        %3026 = vst [vmem:[#allocation3 + $0x90] sm:$0xff] %v2962
        %3027 = vst [vmem:[#allocation3 + $0x98] sm:$0xff] %v2963
        %3028 = vst [vmem:[#allocation3 + $0xa0] sm:$0xff] %v2964
        %3029 = vst [vmem:[#allocation3 + $0xa8] sm:$0xff] %v2965
        %3030 = vst [vmem:[#allocation3 + $0xb0] sm:$0xff] %v2966
        %3031 = vst [vmem:[#allocation3 + $0xb8] sm:$0xff] %v2967
        %3032 = vst [vmem:[#allocation3 + $0xc0] sm:$0xff] %v2968
        %3033 = vst [vmem:[#allocation3 + $0xc8] sm:$0xff] %v2969
        %3034 = vst [vmem:[#allocation3 + $0xd0] sm:$0xff] %v2970
        %3035 = vst [vmem:[#allocation3 + $0xd8] sm:$0xff] %v2971
        %3036 = vst [vmem:[#allocation3 + $0xe0] sm:$0xff] %v2972
        %3037 = vst [vmem:[#allocation3 + $0xe8] sm:$0xff] %v2973
        %3038 = vst [vmem:[#allocation3 + $0xf0] sm:$0xff] %v2974
        %3039 = vst [vmem:[#allocation3 + $0xf8] sm:$0xff] %v2975
        %3040 = vst [vmem:[#allocation3 + $0x100] sm:$0xff] %v2976
        %3041 = vst [vmem:[#allocation3 + $0x108] sm:$0xff] %v2977
        %3042 = vst [vmem:[#allocation3 + $0x110] sm:$0xff] %v2978
        %3043 = vst [vmem:[#allocation3 + $0x118] sm:$0xff] %v2979
        %3044 = vst [vmem:[#allocation3 + $0x120] sm:$0xff] %v2980
        %3045 = vst [vmem:[#allocation3 + $0x128] sm:$0xff] %v2981
        %3046 = vst [vmem:[#allocation3 + $0x130] sm:$0xff] %v2982
        %3047 = vst [vmem:[#allocation3 + $0x138] sm:$0xff] %v2983
        %3048 = vst [vmem:[#allocation3 + $0x140] sm:$0xff] %v2984
        %3049 = vst [vmem:[#allocation3 + $0x148] sm:$0xff] %v2985
        %3050 = vst [vmem:[#allocation3 + $0x150] sm:$0xff] %v2986
        %3051 = vst [vmem:[#allocation3 + $0x158] sm:$0xff] %v2987
        %3052 = vst [vmem:[#allocation3 + $0x160] sm:$0xff] %v2988
        %3053 = vst [vmem:[#allocation3 + $0x168] sm:$0xff] %v2989
        %3054 = vst [vmem:[#allocation3 + $0x170] sm:$0xff] %v2990
        %3055 = vst [vmem:[#allocation3 + $0x178] sm:$0xff] %v2991
        %3056 = vst [vmem:[#allocation3 + $0x180] sm:$0xff] %v2992
        %3057 = vst [vmem:[#allocation3 + $0x188] sm:$0xff] %v2993
        %3058 = vst [vmem:[#allocation3 + $0x190] sm:$0xff] %v2994
        %3059 = vst [vmem:[#allocation3 + $0x198] sm:$0xff] %v2995
        %3060 = vst [vmem:[#allocation3 + $0x1a0] sm:$0xff] %v2996
        %3061 = vst [vmem:[#allocation3 + $0x1a8] sm:$0xff] %v2997
        %3062 = vst [vmem:[#allocation3 + $0x1b0] sm:$0xff] %v2998
        %3063 = vst [vmem:[#allocation3 + $0x1b8] sm:$0xff] %v2999
        %3064 = vst [vmem:[#allocation3 + $0x1c0] sm:$0xff] %v3000
        %3065 = vst [vmem:[#allocation3 + $0x1c8] sm:$0xff] %v3001
        %3066 = vst [vmem:[#allocation3 + $0x1d0] sm:$0xff] %v3002
        %3067 = vst [vmem:[#allocation3 + $0x1d8] sm:$0xff] %v3003
        %3068 = vst [vmem:[#allocation3 + $0x1e0] sm:$0xff] %v3004
        %3069 = vst [vmem:[#allocation3 + $0x1e8] sm:$0xff] %v3005
        %3070 = vst [vmem:[#allocation3 + $0x1f0] sm:$0xff] %v3006
        %3071 = vst [vmem:[#allocation3 + $0x1f8] sm:$0xff] %v3007
        %s3072 = scalar_lea.vmem [#allocation2], 4
        %v3073 = vld [vmem:[%s3072] sm:$0xf]
        %v3074 = vld [vmem:[%s3072 + $0x4] sm:$0xf]
        %v3075 = vld [vmem:[%s3072 + $0x8] sm:$0xf]
        %v3076 = vld [vmem:[%s3072 + $0xc] sm:$0xf]
        %v3077 = vld [vmem:[%s3072 + $0x10] sm:$0xf]
        %v3078 = vld [vmem:[%s3072 + $0x14] sm:$0xf]
        %v3079 = vld [vmem:[%s3072 + $0x18] sm:$0xf]
        %v3080 = vld [vmem:[%s3072 + $0x1c] sm:$0xf]
        %v3081 = vld [vmem:[%s3072 + $0x28] sm:$0xf]
        %v3082 = vld [vmem:[%s3072 + $0x2c] sm:$0xf]
        %v3083 = vld [vmem:[%s3072 + $0x30] sm:$0xf]
        %v3084 = vld [vmem:[%s3072 + $0x34] sm:$0xf]
        %v3085 = vld [vmem:[%s3072 + $0x38] sm:$0xf]
        %v3086 = vld [vmem:[%s3072 + $0x3c] sm:$0xf]
        %v3087 = vld [vmem:[%s3072 + $0x40] sm:$0xf]
        %v3088 = vld [vmem:[%s3072 + $0x44] sm:$0xf]
        %v3089 = vld [vmem:[%s3072 + $0x50] sm:$0xf]
        %v3090 = vld [vmem:[%s3072 + $0x54] sm:$0xf]
        %v3091 = vld [vmem:[%s3072 + $0x58] sm:$0xf]
        %v3092 = vld [vmem:[%s3072 + $0x5c] sm:$0xf]
        %v3093 = vld [vmem:[%s3072 + $0x60] sm:$0xf]
        %v3094 = vld [vmem:[%s3072 + $0x64] sm:$0xf]
        %v3095 = vld [vmem:[%s3072 + $0x68] sm:$0xf]
        %v3096 = vld [vmem:[%s3072 + $0x6c] sm:$0xf]
        %v3097 = vld [vmem:[%s3072 + $0x78] sm:$0xf]
        %v3098 = vld [vmem:[%s3072 + $0x7c] sm:$0xf]
        %v3099 = vld [vmem:[%s3072 + $0x80] sm:$0xf]
        %v3100 = vld [vmem:[%s3072 + $0x84] sm:$0xf]
        %v3101 = vld [vmem:[%s3072 + $0x88] sm:$0xf]
        %v3102 = vld [vmem:[%s3072 + $0x8c] sm:$0xf]
        %v3103 = vld [vmem:[%s3072 + $0x90] sm:$0xf]
        %v3104 = vld [vmem:[%s3072 + $0x94] sm:$0xf]
        %v3105 = vld [vmem:[%s3072 + $0xa0] sm:$0xf]
        %v3106 = vld [vmem:[%s3072 + $0xa4] sm:$0xf]
        %v3107 = vld [vmem:[%s3072 + $0xa8] sm:$0xf]
        %v3108 = vld [vmem:[%s3072 + $0xac] sm:$0xf]
        %v3109 = vld [vmem:[%s3072 + $0xb0] sm:$0xf]
        %v3110 = vld [vmem:[%s3072 + $0xb4] sm:$0xf]
        %v3111 = vld [vmem:[%s3072 + $0xb8] sm:$0xf]
        %v3112 = vld [vmem:[%s3072 + $0xbc] sm:$0xf]
        %v3113 = vld [vmem:[%s3072 + $0xc8] sm:$0xf]
        %v3114 = vld [vmem:[%s3072 + $0xcc] sm:$0xf]
        %v3115 = vld [vmem:[%s3072 + $0xd0] sm:$0xf]
        %v3116 = vld [vmem:[%s3072 + $0xd4] sm:$0xf]
        %v3117 = vld [vmem:[%s3072 + $0xd8] sm:$0xf]
        %v3118 = vld [vmem:[%s3072 + $0xdc] sm:$0xf]
        %v3119 = vld [vmem:[%s3072 + $0xe0] sm:$0xf]
        %v3120 = vld [vmem:[%s3072 + $0xe4] sm:$0xf]
        %v3121 = vld [vmem:[%s3072 + $0xf0] sm:$0xf]
        %v3122 = vld [vmem:[%s3072 + $0xf4] sm:$0xf]
        %v3123 = vld [vmem:[%s3072 + $0xf8] sm:$0xf]
        %v3124 = vld [vmem:[%s3072 + $0xfc] sm:$0xf]
        %v3125 = vld [vmem:[%s3072 + $0x100] sm:$0xf]
        %v3126 = vld [vmem:[%s3072 + $0x104] sm:$0xf]
        %v3127 = vld [vmem:[%s3072 + $0x108] sm:$0xf]
        %v3128 = vld [vmem:[%s3072 + $0x10c] sm:$0xf]
        %v3129 = vld [vmem:[%s3072 + $0x118] sm:$0xf]
        %v3130 = vld [vmem:[%s3072 + $0x11c] sm:$0xf]
        %v3131 = vld [vmem:[%s3072 + $0x120] sm:$0xf]
        %v3132 = vld [vmem:[%s3072 + $0x124] sm:$0xf]
        %v3133 = vld [vmem:[%s3072 + $0x128] sm:$0xf]
        %v3134 = vld [vmem:[%s3072 + $0x12c] sm:$0xf]
        %v3135 = vld [vmem:[%s3072 + $0x130] sm:$0xf]
        %v3136 = vld [vmem:[%s3072 + $0x134] sm:$0xf]
        %v3137 = vld [vmem:[#allocation3] sm:$0xff]
        %v3138 = vld [vmem:[#allocation3 + $0x8] sm:$0xff]
        %v3139 = vld [vmem:[#allocation3 + $0x10] sm:$0xff]
        %v3140 = vld [vmem:[#allocation3 + $0x18] sm:$0xff]
        %v3141 = vld [vmem:[#allocation3 + $0x20] sm:$0xff]
        %v3142 = vld [vmem:[#allocation3 + $0x28] sm:$0xff]
        %v3143 = vld [vmem:[#allocation3 + $0x30] sm:$0xff]
        %v3144 = vld [vmem:[#allocation3 + $0x38] sm:$0xff]
        %v3145 = vld [vmem:[#allocation3 + $0x40] sm:$0xff]
        %v3146 = vld [vmem:[#allocation3 + $0x48] sm:$0xff]
        %v3147 = vld [vmem:[#allocation3 + $0x50] sm:$0xff]
        %v3148 = vld [vmem:[#allocation3 + $0x58] sm:$0xff]
        %v3149 = vld [vmem:[#allocation3 + $0x60] sm:$0xff]
        %v3150 = vld [vmem:[#allocation3 + $0x68] sm:$0xff]
        %v3151 = vld [vmem:[#allocation3 + $0x70] sm:$0xff]
        %v3152 = vld [vmem:[#allocation3 + $0x78] sm:$0xff]
        %v3153 = vld [vmem:[#allocation3 + $0x80] sm:$0xff]
        %v3154 = vld [vmem:[#allocation3 + $0x88] sm:$0xff]
        %v3155 = vld [vmem:[#allocation3 + $0x90] sm:$0xff]
        %v3156 = vld [vmem:[#allocation3 + $0x98] sm:$0xff]
        %v3157 = vld [vmem:[#allocation3 + $0xa0] sm:$0xff]
        %v3158 = vld [vmem:[#allocation3 + $0xa8] sm:$0xff]
        %v3159 = vld [vmem:[#allocation3 + $0xb0] sm:$0xff]
        %v3160 = vld [vmem:[#allocation3 + $0xb8] sm:$0xff]
        %v3161 = vld [vmem:[#allocation3 + $0xc0] sm:$0xff]
        %v3162 = vld [vmem:[#allocation3 + $0xc8] sm:$0xff]
        %v3163 = vld [vmem:[#allocation3 + $0xd0] sm:$0xff]
        %v3164 = vld [vmem:[#allocation3 + $0xd8] sm:$0xff]
        %v3165 = vld [vmem:[#allocation3 + $0xe0] sm:$0xff]
        %v3166 = vld [vmem:[#allocation3 + $0xe8] sm:$0xff]
        %v3167 = vld [vmem:[#allocation3 + $0xf0] sm:$0xff]
        %v3168 = vld [vmem:[#allocation3 + $0xf8] sm:$0xff]
        %v3169 = vld [vmem:[#allocation3 + $0x100] sm:$0xff]
        %v3170 = vld [vmem:[#allocation3 + $0x108] sm:$0xff]
        %v3171 = vld [vmem:[#allocation3 + $0x110] sm:$0xff]
        %v3172 = vld [vmem:[#allocation3 + $0x118] sm:$0xff]
        %v3173 = vld [vmem:[#allocation3 + $0x120] sm:$0xff]
        %v3174 = vld [vmem:[#allocation3 + $0x128] sm:$0xff]
        %v3175 = vld [vmem:[#allocation3 + $0x130] sm:$0xff]
        %v3176 = vld [vmem:[#allocation3 + $0x138] sm:$0xff]
        %v3177 = vld [vmem:[#allocation3 + $0x140] sm:$0xff]
        %v3178 = vld [vmem:[#allocation3 + $0x148] sm:$0xff]
        %v3179 = vld [vmem:[#allocation3 + $0x150] sm:$0xff]
        %v3180 = vld [vmem:[#allocation3 + $0x158] sm:$0xff]
        %v3181 = vld [vmem:[#allocation3 + $0x160] sm:$0xff]
        %v3182 = vld [vmem:[#allocation3 + $0x168] sm:$0xff]
        %v3183 = vld [vmem:[#allocation3 + $0x170] sm:$0xff]
        %v3184 = vld [vmem:[#allocation3 + $0x178] sm:$0xff]
        %v3185 = vld [vmem:[#allocation3 + $0x180] sm:$0xff]
        %v3186 = vld [vmem:[#allocation3 + $0x188] sm:$0xff]
        %v3187 = vld [vmem:[#allocation3 + $0x190] sm:$0xff]
        %v3188 = vld [vmem:[#allocation3 + $0x198] sm:$0xff]
        %v3189 = vld [vmem:[#allocation3 + $0x1a0] sm:$0xff]
        %v3190 = vld [vmem:[#allocation3 + $0x1a8] sm:$0xff]
        %v3191 = vld [vmem:[#allocation3 + $0x1b0] sm:$0xff]
        %v3192 = vld [vmem:[#allocation3 + $0x1b8] sm:$0xff]
        %v3193 = vld [vmem:[#allocation3 + $0x1c0] sm:$0xff]
        %v3194 = vld [vmem:[#allocation3 + $0x1c8] sm:$0xff]
        %v3195 = vld [vmem:[#allocation3 + $0x1d0] sm:$0xff]
        %v3196 = vld [vmem:[#allocation3 + $0x1d8] sm:$0xff]
        %v3197 = vld [vmem:[#allocation3 + $0x1e0] sm:$0xff]
        %v3198 = vld [vmem:[#allocation3 + $0x1e8] sm:$0xff]
        %v3199 = vld [vmem:[#allocation3 + $0x1f0] sm:$0xff]
        %v3200 = vld [vmem:[#allocation3 + $0x1f8] sm:$0xff]
        %s3201 = scalar_lea.vmem [#allocation7], 24
        %v3202 = vld [vmem:[%s3201] sm:$0xf]
        %v3203 = vld [vmem:[%s3201 + $0x4] sm:$0xf]
        %v3204 = vld [vmem:[%s3201 + $0x8] sm:$0xf]
        %v3205 = vld [vmem:[%s3201 + $0xc] sm:$0xf]
        %v3206 = vld [vmem:[%s3201 + $0x10] sm:$0xf]
        %v3207 = vld [vmem:[%s3201 + $0x14] sm:$0xf]
        %v3272 = vunpack.c.l.b16 %v3073
        %v3273 = vunpack.c.l.b16 %v3074
        %v3274 = vunpack.c.l.b16 %v3075
        %v3275 = vunpack.c.l.b16 %v3076
        %v3276 = vunpack.c.l.b16 %v3077
        %v3277 = vunpack.c.l.b16 %v3078
        %v3278 = vunpack.c.l.b16 %v3079
        %v3279 = vunpack.c.l.b16 %v3080
        %v3280 = vunpack.c.l.b16 %v3081
        %v3281 = vunpack.c.l.b16 %v3082
        %v3282 = vunpack.c.l.b16 %v3083
        %v3283 = vunpack.c.l.b16 %v3084
        %v3284 = vunpack.c.l.b16 %v3085
        %v3285 = vunpack.c.l.b16 %v3086
        %v3286 = vunpack.c.l.b16 %v3087
        %v3287 = vunpack.c.l.b16 %v3088
        %v3288 = vunpack.c.l.b16 %v3089
        %v3289 = vunpack.c.l.b16 %v3090
        %v3290 = vunpack.c.l.b16 %v3091
        %v3291 = vunpack.c.l.b16 %v3092
        %v3292 = vunpack.c.l.b16 %v3093
        %v3293 = vunpack.c.l.b16 %v3094
        %v3294 = vunpack.c.l.b16 %v3095
        %v3295 = vunpack.c.l.b16 %v3096
        %v3296 = vunpack.c.l.b16 %v3097
        %v3297 = vunpack.c.l.b16 %v3098
        %v3298 = vunpack.c.l.b16 %v3099
        %v3299 = vunpack.c.l.b16 %v3100
        %v3300 = vunpack.c.l.b16 %v3101
        %v3301 = vunpack.c.l.b16 %v3102
        %v3302 = vunpack.c.l.b16 %v3103
        %v3303 = vunpack.c.l.b16 %v3104
        %v3304 = vunpack.c.l.b16 %v3105
        %v3305 = vunpack.c.l.b16 %v3106
        %v3306 = vunpack.c.l.b16 %v3107
        %v3307 = vunpack.c.l.b16 %v3108
        %v3308 = vunpack.c.l.b16 %v3109
        %v3309 = vunpack.c.l.b16 %v3110
        %v3310 = vunpack.c.l.b16 %v3111
        %v3311 = vunpack.c.l.b16 %v3112
        %v3312 = vunpack.c.l.b16 %v3113
        %v3313 = vunpack.c.l.b16 %v3114
        %v3314 = vunpack.c.l.b16 %v3115
        %v3315 = vunpack.c.l.b16 %v3116
        %v3316 = vunpack.c.l.b16 %v3117
        %v3317 = vunpack.c.l.b16 %v3118
        %v3318 = vunpack.c.l.b16 %v3119
        %v3319 = vunpack.c.l.b16 %v3120
        %v3320 = vunpack.c.l.b16 %v3121
        %v3321 = vunpack.c.l.b16 %v3122
        %v3322 = vunpack.c.l.b16 %v3123
        %v3323 = vunpack.c.l.b16 %v3124
        %v3324 = vunpack.c.l.b16 %v3125
        %v3325 = vunpack.c.l.b16 %v3126
        %v3326 = vunpack.c.l.b16 %v3127
        %v3327 = vunpack.c.l.b16 %v3128
        %v3328 = vunpack.c.l.b16 %v3129
        %v3329 = vunpack.c.l.b16 %v3130
        %v3330 = vunpack.c.l.b16 %v3131
        %v3331 = vunpack.c.l.b16 %v3132
        %v3332 = vunpack.c.l.b16 %v3133
        %v3333 = vunpack.c.l.b16 %v3134
        %v3334 = vunpack.c.l.b16 %v3135
        %v3335 = vunpack.c.l.b16 %v3136
        %v3336 = vpack.c.b16 %v3273, %v3272
        %v3337 = vpack.c.b16 %v3275, %v3274
        %v3338 = vpack.c.b16 %v3277, %v3276
        %v3339 = vpack.c.b16 %v3279, %v3278
        %v3340 = vpack.c.b16 %v3281, %v3280
        %v3341 = vpack.c.b16 %v3283, %v3282
        %v3342 = vpack.c.b16 %v3285, %v3284
        %v3343 = vpack.c.b16 %v3287, %v3286
        %v3344 = vpack.c.b16 %v3289, %v3288
        %v3345 = vpack.c.b16 %v3291, %v3290
        %v3346 = vpack.c.b16 %v3293, %v3292
        %v3347 = vpack.c.b16 %v3295, %v3294
        %v3348 = vpack.c.b16 %v3297, %v3296
        %v3349 = vpack.c.b16 %v3299, %v3298
        %v3350 = vpack.c.b16 %v3301, %v3300
        %v3351 = vpack.c.b16 %v3303, %v3302
        %v3352 = vpack.c.b16 %v3305, %v3304
        %v3353 = vpack.c.b16 %v3307, %v3306
        %v3354 = vpack.c.b16 %v3309, %v3308
        %v3355 = vpack.c.b16 %v3311, %v3310
        %v3356 = vpack.c.b16 %v3313, %v3312
        %v3357 = vpack.c.b16 %v3315, %v3314
        %v3358 = vpack.c.b16 %v3317, %v3316
        %v3359 = vpack.c.b16 %v3319, %v3318
        %v3360 = vpack.c.b16 %v3321, %v3320
        %v3361 = vpack.c.b16 %v3323, %v3322
        %v3362 = vpack.c.b16 %v3325, %v3324
        %v3363 = vpack.c.b16 %v3327, %v3326
        %v3364 = vpack.c.b16 %v3329, %v3328
        %v3365 = vpack.c.b16 %v3331, %v3330
        %v3366 = vpack.c.b16 %v3333, %v3332
        %v3367 = vpack.c.b16 %v3335, %v3334
        %v3374 = vunpack.c.l.b16 %v3202
        %v3375 = vunpack.c.l.b16 %v3203
        %v3376 = vunpack.c.l.b16 %v3204
        %v3377 = vunpack.c.l.b16 %v3205
        %v3378 = vunpack.c.l.b16 %v3206
        %v3379 = vunpack.c.l.b16 %v3207
        %v3380 = vpack.c.b16 %v3375, %v3374
        %v3381 = vpack.c.b16 %v3377, %v3376
        %v3382 = vpack.c.b16 %v3379, %v3378
        %v3387 = vsel %vm2558, %v3336, 0
        %v3390 = vsel %vm2558, %v3337, 0
        %v3393 = vsel %vm2558, %v3338, 0
        %v3396 = vsel %vm2558, %v3339, 0
        %v3399 = vsel %vm2558, %v3340, 0
        %v3402 = vsel %vm2558, %v3341, 0
        %v3405 = vsel %vm2558, %v3342, 0
        %v3408 = vsel %vm2558, %v3343, 0
        %v3411 = vsel %vm2558, %v3344, 0
        %v3414 = vsel %vm2558, %v3345, 0
        %v3417 = vsel %vm2558, %v3346, 0
        %v3420 = vsel %vm2558, %v3347, 0
        %v3423 = vsel %vm2558, %v3348, 0
        %v3426 = vsel %vm2558, %v3349, 0
        %v3429 = vsel %vm2558, %v3350, 0
        %v3432 = vsel %vm2558, %v3351, 0
        %v3435 = vsel %vm2558, %v3352, 0
        %v3438 = vsel %vm2558, %v3353, 0
        %v3441 = vsel %vm2558, %v3354, 0
        %v3444 = vsel %vm2558, %v3355, 0
        %v3447 = vsel %vm2558, %v3356, 0
        %v3450 = vsel %vm2558, %v3357, 0
        %v3453 = vsel %vm2558, %v3358, 0
        %v3456 = vsel %vm2558, %v3359, 0
        %v3459 = vsel %vm2558, %v3360, 0
        %v3462 = vsel %vm2558, %v3361, 0
        %v3465 = vsel %vm2558, %v3362, 0
        %v3468 = vsel %vm2558, %v3363, 0
        %v3471 = vsel %vm2558, %v3364, 0
        %v3474 = vsel %vm2558, %v3365, 0
        %v3477 = vsel %vm2558, %v3366, 0
        %v3480 = vsel %vm2558, %v3367, 0
        %3482 = vmatprep.subr.bf16.mxu0 0
        %3483 = vmatpush1.bf16.msra.mxu0 %v3380
        %3484 = vmatprep.subr.bf16.mxu0 0
        %3485 = vmatpush1.bf16.msra.mxu0 %v3381
        %3486 = vmatprep.subr.bf16.mxu0 0
        %3487 = vmatpush1.bf16.msra.mxu0 %v3382
        %3488 = vmatprep.subr.bf16.mxu0 0
        %3489 = vmatpush1.bf16.msra.mxu0 0
        %3490 = vmatprep.subr.bf16.mxu0 0
        %3491 = vmatpush1.bf16.msra.mxu0 0
        %3492 = vmatprep.subr.bf16.mxu0 0
        %3493 = vmatpush1.bf16.msra.mxu0 0
        %3494 = vmatprep.subr.bf16.mxu0 0
        %3495 = vmatpush1.bf16.msra.mxu0 0
        %3496 = vmatprep.subr.bf16.mxu0 0
        %3497 = vmatpush1.bf16.msra.mxu0 0
        %3498 = vmatprep.subr.bf16.mxu0 0
        %3499 = vmatpush1.bf16.msra.mxu0 0
        %3500 = vmatprep.subr.bf16.mxu0 0
        %3501 = vmatpush1.bf16.msra.mxu0 0
        %3502 = vmatprep.subr.bf16.mxu0 0
        %3503 = vmatpush1.bf16.msra.mxu0 0
        %3504 = vmatprep.subr.bf16.mxu0 0
        %3505 = vmatpush1.bf16.msra.mxu0 0
        %3506 = vmatprep.subr.bf16.mxu0 0
        %3507 = vmatpush1.bf16.msra.mxu0 0
        %3508 = vmatprep.subr.bf16.mxu0 0
        %3509 = vmatpush1.bf16.msra.mxu0 0
        %3510 = vmatprep.subr.bf16.mxu0 0
        %3511 = vmatpush1.bf16.msra.mxu0 0
        %3512 = vmatprep.subr.bf16.mxu0 0
        %3513 = vmatpush1.bf16.msra.mxu0 0
        %3514 = vmatprep.mubr.bf16.mxu0 0
        %3515 = vmatmul.mubr.bf16.gmra.mrb[0].mxu0 %v3387
        %v3516 = vpop.f32.mrb[0].mxu0
        %v3517 = vadd.f32 0.0, %v3516
        %v3518 = vpop.f32.mrb[0].mxu0
        %v3519 = vpop.f32.mrb[0].mxu0
        %v3520 = vadd.f32 0.0, %v3519
        %v3521 = vpop.f32.mrb[0].mxu0
        %3522 = vmatprep.mubr.bf16.mxu0 0
        %3523 = vmatmul.mubr.bf16.gmra.mrb[0].mxu0 %v3390
        %v3524 = vpop.f32.mrb[0].mxu0
        %v3525 = vadd.f32 0.0, %v3524
        %v3526 = vpop.f32.mrb[0].mxu0
        %v3527 = vpop.f32.mrb[0].mxu0
        %v3528 = vadd.f32 0.0, %v3527
        %v3529 = vpop.f32.mrb[0].mxu0
        %3530 = vmatprep.mubr.bf16.mxu0 0
        %3531 = vmatmul.mubr.bf16.gmra.mrb[0].mxu0 %v3393
        %v3532 = vpop.f32.mrb[0].mxu0
        %v3533 = vadd.f32 0.0, %v3532
        %v3534 = vpop.f32.mrb[0].mxu0
        %v3535 = vpop.f32.mrb[0].mxu0
        %v3536 = vadd.f32 0.0, %v3535
        %v3537 = vpop.f32.mrb[0].mxu0
        %3538 = vmatprep.mubr.bf16.mxu0 0
        %3539 = vmatmul.mubr.bf16.gmra.mrb[0].mxu0 %v3396
        %v3540 = vpop.f32.mrb[0].mxu0
        %v3541 = vadd.f32 0.0, %v3540
        %v3542 = vpop.f32.mrb[0].mxu0
        %v3543 = vpop.f32.mrb[0].mxu0
        %v3544 = vadd.f32 0.0, %v3543
        %v3545 = vpop.f32.mrb[0].mxu0
        %3546 = vmatprep.mubr.bf16.mxu0 0
        %3547 = vmatmul.mubr.bf16.gmra.mrb[0].mxu0 %v3399
        %v3548 = vpop.f32.mrb[0].mxu0
        %v3549 = vadd.f32 0.0, %v3548
        %v3550 = vpop.f32.mrb[0].mxu0
        %v3551 = vpop.f32.mrb[0].mxu0
        %v3552 = vadd.f32 0.0, %v3551
        %v3553 = vpop.f32.mrb[0].mxu0
        %3554 = vmatprep.mubr.bf16.mxu0 0
        %3555 = vmatmul.mubr.bf16.gmra.mrb[0].mxu0 %v3402
        %v3556 = vpop.f32.mrb[0].mxu0
        %v3557 = vadd.f32 0.0, %v3556
        %v3558 = vpop.f32.mrb[0].mxu0
        %v3559 = vpop.f32.mrb[0].mxu0
        %v3560 = vadd.f32 0.0, %v3559
        %v3561 = vpop.f32.mrb[0].mxu0
        %3562 = vmatprep.mubr.bf16.mxu0 0
        %3563 = vmatmul.mubr.bf16.gmra.mrb[0].mxu0 %v3405
        %v3564 = vpop.f32.mrb[0].mxu0
        %v3565 = vadd.f32 0.0, %v3564
        %v3566 = vpop.f32.mrb[0].mxu0
        %v3567 = vpop.f32.mrb[0].mxu0
        %v3568 = vadd.f32 0.0, %v3567
        %v3569 = vpop.f32.mrb[0].mxu0
        %3570 = vmatprep.mubr.bf16.mxu0 0
        %3571 = vmatmul.mubr.bf16.gmra.mrb[0].mxu0 %v3408
        %v3572 = vpop.f32.mrb[0].mxu0
        %v3573 = vadd.f32 0.0, %v3572
        %v3574 = vpop.f32.mrb[0].mxu0
        %v3575 = vpop.f32.mrb[0].mxu0
        %v3576 = vadd.f32 0.0, %v3575
        %v3577 = vpop.f32.mrb[0].mxu0
        %3578 = vmatprep.mubr.bf16.mxu0 0
        %3579 = vmatmul.mubr.bf16.gmra.mrb[0].mxu0 %v3411
        %v3580 = vpop.f32.mrb[0].mxu0
        %v3581 = vadd.f32 0.0, %v3580
        %v3582 = vpop.f32.mrb[0].mxu0
        %v3583 = vpop.f32.mrb[0].mxu0
        %v3584 = vadd.f32 0.0, %v3583
        %v3585 = vpop.f32.mrb[0].mxu0
        %3586 = vmatprep.mubr.bf16.mxu0 0
        %3587 = vmatmul.mubr.bf16.gmra.mrb[0].mxu0 %v3414
        %v3588 = vpop.f32.mrb[0].mxu0
        %v3589 = vadd.f32 0.0, %v3588
        %v3590 = vpop.f32.mrb[0].mxu0
        %v3591 = vpop.f32.mrb[0].mxu0
        %v3592 = vadd.f32 0.0, %v3591
        %v3593 = vpop.f32.mrb[0].mxu0
        %3594 = vmatprep.mubr.bf16.mxu0 0
        %3595 = vmatmul.mubr.bf16.gmra.mrb[0].mxu0 %v3417
        %v3596 = vpop.f32.mrb[0].mxu0
        %v3597 = vadd.f32 0.0, %v3596
        %v3598 = vpop.f32.mrb[0].mxu0
        %v3599 = vpop.f32.mrb[0].mxu0
        %v3600 = vadd.f32 0.0, %v3599
        %v3601 = vpop.f32.mrb[0].mxu0
        %3602 = vmatprep.mubr.bf16.mxu0 0
        %3603 = vmatmul.mubr.bf16.gmra.mrb[0].mxu0 %v3420
        %v3604 = vpop.f32.mrb[0].mxu0
        %v3605 = vadd.f32 0.0, %v3604
        %v3606 = vpop.f32.mrb[0].mxu0
        %v3607 = vpop.f32.mrb[0].mxu0
        %v3608 = vadd.f32 0.0, %v3607
        %v3609 = vpop.f32.mrb[0].mxu0
        %3610 = vmatprep.mubr.bf16.mxu0 0
        %3611 = vmatmul.mubr.bf16.gmra.mrb[0].mxu0 %v3423
        %v3612 = vpop.f32.mrb[0].mxu0
        %v3613 = vadd.f32 0.0, %v3612
        %v3614 = vpop.f32.mrb[0].mxu0
        %v3615 = vpop.f32.mrb[0].mxu0
        %v3616 = vadd.f32 0.0, %v3615
        %v3617 = vpop.f32.mrb[0].mxu0
        %3618 = vmatprep.mubr.bf16.mxu0 0
        %3619 = vmatmul.mubr.bf16.gmra.mrb[0].mxu0 %v3426
        %v3620 = vpop.f32.mrb[0].mxu0
        %v3621 = vadd.f32 0.0, %v3620
        %v3622 = vpop.f32.mrb[0].mxu0
        %v3623 = vpop.f32.mrb[0].mxu0
        %v3624 = vadd.f32 0.0, %v3623
        %v3625 = vpop.f32.mrb[0].mxu0
        %3626 = vmatprep.mubr.bf16.mxu0 0
        %3627 = vmatmul.mubr.bf16.gmra.mrb[0].mxu0 %v3429
        %v3628 = vpop.f32.mrb[0].mxu0
        %v3629 = vadd.f32 0.0, %v3628
        %v3630 = vpop.f32.mrb[0].mxu0
        %v3631 = vpop.f32.mrb[0].mxu0
        %v3632 = vadd.f32 0.0, %v3631
        %v3633 = vpop.f32.mrb[0].mxu0
        %3634 = vmatprep.mubr.bf16.mxu0 0
        %3635 = vmatmul.mubr.bf16.gmra.mrb[0].mxu0 %v3432
        %v3636 = vpop.f32.mrb[0].mxu0
        %v3637 = vadd.f32 0.0, %v3636
        %v3638 = vpop.f32.mrb[0].mxu0
        %v3639 = vpop.f32.mrb[0].mxu0
        %v3640 = vadd.f32 0.0, %v3639
        %v3641 = vpop.f32.mrb[0].mxu0
        %3642 = vmatprep.mubr.bf16.mxu0 0
        %3643 = vmatmul.mubr.bf16.gmra.mrb[0].mxu0 %v3435
        %v3644 = vpop.f32.mrb[0].mxu0
        %v3645 = vadd.f32 0.0, %v3644
        %v3646 = vpop.f32.mrb[0].mxu0
        %v3647 = vpop.f32.mrb[0].mxu0
        %v3648 = vadd.f32 0.0, %v3647
        %v3649 = vpop.f32.mrb[0].mxu0
        %3650 = vmatprep.mubr.bf16.mxu0 0
        %3651 = vmatmul.mubr.bf16.gmra.mrb[0].mxu0 %v3438
        %v3652 = vpop.f32.mrb[0].mxu0
        %v3653 = vadd.f32 0.0, %v3652
        %v3654 = vpop.f32.mrb[0].mxu0
        %v3655 = vpop.f32.mrb[0].mxu0
        %v3656 = vadd.f32 0.0, %v3655
        %v3657 = vpop.f32.mrb[0].mxu0
        %3658 = vmatprep.mubr.bf16.mxu0 0
        %3659 = vmatmul.mubr.bf16.gmra.mrb[0].mxu0 %v3441
        %v3660 = vpop.f32.mrb[0].mxu0
        %v3661 = vadd.f32 0.0, %v3660
        %v3662 = vpop.f32.mrb[0].mxu0
        %v3663 = vpop.f32.mrb[0].mxu0
        %v3664 = vadd.f32 0.0, %v3663
        %v3665 = vpop.f32.mrb[0].mxu0
        %3666 = vmatprep.mubr.bf16.mxu0 0
        %3667 = vmatmul.mubr.bf16.gmra.mrb[0].mxu0 %v3444
        %v3668 = vpop.f32.mrb[0].mxu0
        %v3669 = vadd.f32 0.0, %v3668
        %v3670 = vpop.f32.mrb[0].mxu0
        %v3671 = vpop.f32.mrb[0].mxu0
        %v3672 = vadd.f32 0.0, %v3671
        %v3673 = vpop.f32.mrb[0].mxu0
        %3674 = vmatprep.mubr.bf16.mxu0 0
        %3675 = vmatmul.mubr.bf16.gmra.mrb[0].mxu0 %v3447
        %v3676 = vpop.f32.mrb[0].mxu0
        %v3677 = vadd.f32 0.0, %v3676
        %v3678 = vpop.f32.mrb[0].mxu0
        %v3679 = vpop.f32.mrb[0].mxu0
        %v3680 = vadd.f32 0.0, %v3679
        %v3681 = vpop.f32.mrb[0].mxu0
        %3682 = vmatprep.mubr.bf16.mxu0 0
        %3683 = vmatmul.mubr.bf16.gmra.mrb[0].mxu0 %v3450
        %v3684 = vpop.f32.mrb[0].mxu0
        %v3685 = vadd.f32 0.0, %v3684
        %v3686 = vpop.f32.mrb[0].mxu0
        %v3687 = vpop.f32.mrb[0].mxu0
        %v3688 = vadd.f32 0.0, %v3687
        %v3689 = vpop.f32.mrb[0].mxu0
        %3690 = vmatprep.mubr.bf16.mxu0 0
        %3691 = vmatmul.mubr.bf16.gmra.mrb[0].mxu0 %v3453
        %v3692 = vpop.f32.mrb[0].mxu0
        %v3693 = vadd.f32 0.0, %v3692
        %v3694 = vpop.f32.mrb[0].mxu0
        %v3695 = vpop.f32.mrb[0].mxu0
        %v3696 = vadd.f32 0.0, %v3695
        %v3697 = vpop.f32.mrb[0].mxu0
        %3698 = vmatprep.mubr.bf16.mxu0 0
        %3699 = vmatmul.mubr.bf16.gmra.mrb[0].mxu0 %v3456
        %v3700 = vpop.f32.mrb[0].mxu0
        %v3701 = vadd.f32 0.0, %v3700
        %v3702 = vpop.f32.mrb[0].mxu0
        %v3703 = vpop.f32.mrb[0].mxu0
        %v3704 = vadd.f32 0.0, %v3703
        %v3705 = vpop.f32.mrb[0].mxu0
        %3706 = vmatprep.mubr.bf16.mxu0 0
        %3707 = vmatmul.mubr.bf16.gmra.mrb[0].mxu0 %v3459
        %v3708 = vpop.f32.mrb[0].mxu0
        %v3709 = vadd.f32 0.0, %v3708
        %v3710 = vpop.f32.mrb[0].mxu0
        %v3711 = vpop.f32.mrb[0].mxu0
        %v3712 = vadd.f32 0.0, %v3711
        %v3713 = vpop.f32.mrb[0].mxu0
        %3714 = vmatprep.mubr.bf16.mxu0 0
        %3715 = vmatmul.mubr.bf16.gmra.mrb[0].mxu0 %v3462
        %v3716 = vpop.f32.mrb[0].mxu0
        %v3717 = vadd.f32 0.0, %v3716
        %v3718 = vpop.f32.mrb[0].mxu0
        %v3719 = vpop.f32.mrb[0].mxu0
        %v3720 = vadd.f32 0.0, %v3719
        %v3721 = vpop.f32.mrb[0].mxu0
        %3722 = vmatprep.mubr.bf16.mxu0 0
        %3723 = vmatmul.mubr.bf16.gmra.mrb[0].mxu0 %v3465
        %v3724 = vpop.f32.mrb[0].mxu0
        %v3725 = vadd.f32 0.0, %v3724
        %v3726 = vpop.f32.mrb[0].mxu0
        %v3727 = vpop.f32.mrb[0].mxu0
        %v3728 = vadd.f32 0.0, %v3727
        %v3729 = vpop.f32.mrb[0].mxu0
        %3730 = vmatprep.mubr.bf16.mxu0 0
        %3731 = vmatmul.mubr.bf16.gmra.mrb[0].mxu0 %v3468
        %v3732 = vpop.f32.mrb[0].mxu0
        %v3733 = vadd.f32 0.0, %v3732
        %v3734 = vpop.f32.mrb[0].mxu0
        %v3735 = vpop.f32.mrb[0].mxu0
        %v3736 = vadd.f32 0.0, %v3735
        %v3737 = vpop.f32.mrb[0].mxu0
        %3738 = vmatprep.mubr.bf16.mxu0 0
        %3739 = vmatmul.mubr.bf16.gmra.mrb[0].mxu0 %v3471
        %v3740 = vpop.f32.mrb[0].mxu0
        %v3741 = vadd.f32 0.0, %v3740
        %v3742 = vpop.f32.mrb[0].mxu0
        %v3743 = vpop.f32.mrb[0].mxu0
        %v3744 = vadd.f32 0.0, %v3743
        %v3745 = vpop.f32.mrb[0].mxu0
        %3746 = vmatprep.mubr.bf16.mxu0 0
        %3747 = vmatmul.mubr.bf16.gmra.mrb[0].mxu0 %v3474
        %v3748 = vpop.f32.mrb[0].mxu0
        %v3749 = vadd.f32 0.0, %v3748
        %v3750 = vpop.f32.mrb[0].mxu0
        %v3751 = vpop.f32.mrb[0].mxu0
        %v3752 = vadd.f32 0.0, %v3751
        %v3753 = vpop.f32.mrb[0].mxu0
        %3754 = vmatprep.mubr.bf16.mxu0 0
        %3755 = vmatmul.mubr.bf16.gmra.mrb[0].mxu0 %v3477
        %v3756 = vpop.f32.mrb[0].mxu0
        %v3757 = vadd.f32 0.0, %v3756
        %v3758 = vpop.f32.mrb[0].mxu0
        %v3759 = vpop.f32.mrb[0].mxu0
        %v3760 = vadd.f32 0.0, %v3759
        %v3761 = vpop.f32.mrb[0].mxu0
        %3762 = vmatprep.mubr.bf16.mxu0 0
        %3763 = vmatmul.mubr.bf16.gmra.mrb[0].mxu0 %v3480
        %v3764 = vpop.f32.mrb[0].mxu0
        %v3765 = vadd.f32 0.0, %v3764
        %v3766 = vpop.f32.mrb[0].mxu0
        %v3767 = vpop.f32.mrb[0].mxu0
        %v3768 = vadd.f32 0.0, %v3767
        %v3769 = vpop.f32.mrb[0].mxu0
        %3770 = vdwg.mxu0
        %v3771 = vadd.f32 %v3137, %v3517
        %v3772 = vadd.f32 %v3138, %v3520
        %v3773 = vadd.f32 %v3139, %v3525
        %v3774 = vadd.f32 %v3140, %v3528
        %v3775 = vadd.f32 %v3141, %v3533
        %v3776 = vadd.f32 %v3142, %v3536
        %v3777 = vadd.f32 %v3143, %v3541
        %v3778 = vadd.f32 %v3144, %v3544
        %v3779 = vadd.f32 %v3145, %v3549
        %v3780 = vadd.f32 %v3146, %v3552
        %v3781 = vadd.f32 %v3147, %v3557
        %v3782 = vadd.f32 %v3148, %v3560
        %v3783 = vadd.f32 %v3149, %v3565
        %v3784 = vadd.f32 %v3150, %v3568
        %v3785 = vadd.f32 %v3151, %v3573
        %v3786 = vadd.f32 %v3152, %v3576
        %v3787 = vadd.f32 %v3153, %v3581
        %v3788 = vadd.f32 %v3154, %v3584
        %v3789 = vadd.f32 %v3155, %v3589
        %v3790 = vadd.f32 %v3156, %v3592
        %v3791 = vadd.f32 %v3157, %v3597
        %v3792 = vadd.f32 %v3158, %v3600
        %v3793 = vadd.f32 %v3159, %v3605
        %v3794 = vadd.f32 %v3160, %v3608
        %v3795 = vadd.f32 %v3161, %v3613
        %v3796 = vadd.f32 %v3162, %v3616
        %v3797 = vadd.f32 %v3163, %v3621
        %v3798 = vadd.f32 %v3164, %v3624
        %v3799 = vadd.f32 %v3165, %v3629
        %v3800 = vadd.f32 %v3166, %v3632
        %v3801 = vadd.f32 %v3167, %v3637
        %v3802 = vadd.f32 %v3168, %v3640
        %v3803 = vadd.f32 %v3169, %v3645
        %v3804 = vadd.f32 %v3170, %v3648
        %v3805 = vadd.f32 %v3171, %v3653
        %v3806 = vadd.f32 %v3172, %v3656
        %v3807 = vadd.f32 %v3173, %v3661
        %v3808 = vadd.f32 %v3174, %v3664
        %v3809 = vadd.f32 %v3175, %v3669
        %v3810 = vadd.f32 %v3176, %v3672
        %v3811 = vadd.f32 %v3177, %v3677
        %v3812 = vadd.f32 %v3178, %v3680
        %v3813 = vadd.f32 %v3179, %v3685
        %v3814 = vadd.f32 %v3180, %v3688
        %v3815 = vadd.f32 %v3181, %v3693
        %v3816 = vadd.f32 %v3182, %v3696
        %v3817 = vadd.f32 %v3183, %v3701
        %v3818 = vadd.f32 %v3184, %v3704
        %v3819 = vadd.f32 %v3185, %v3709
        %v3820 = vadd.f32 %v3186, %v3712
        %v3821 = vadd.f32 %v3187, %v3717
        %v3822 = vadd.f32 %v3188, %v3720
        %v3823 = vadd.f32 %v3189, %v3725
        %v3824 = vadd.f32 %v3190, %v3728
        %v3825 = vadd.f32 %v3191, %v3733
        %v3826 = vadd.f32 %v3192, %v3736
        %v3827 = vadd.f32 %v3193, %v3741
        %v3828 = vadd.f32 %v3194, %v3744
        %v3829 = vadd.f32 %v3195, %v3749
        %v3830 = vadd.f32 %v3196, %v3752
        %v3831 = vadd.f32 %v3197, %v3757
        %v3832 = vadd.f32 %v3198, %v3760
        %v3833 = vadd.f32 %v3199, %v3765
        %v3834 = vadd.f32 %v3200, %v3768
        %3835 = vst [vmem:[#allocation3] sm:$0xff] %v3771
        %3836 = vst [vmem:[#allocation3 + $0x8] sm:$0xff] %v3772
        %3837 = vst [vmem:[#allocation3 + $0x10] sm:$0xff] %v3773
        %3838 = vst [vmem:[#allocation3 + $0x18] sm:$0xff] %v3774
        %3839 = vst [vmem:[#allocation3 + $0x20] sm:$0xff] %v3775
        %3840 = vst [vmem:[#allocation3 + $0x28] sm:$0xff] %v3776
        %3841 = vst [vmem:[#allocation3 + $0x30] sm:$0xff] %v3777
        %3842 = vst [vmem:[#allocation3 + $0x38] sm:$0xff] %v3778
        %3843 = vst [vmem:[#allocation3 + $0x40] sm:$0xff] %v3779
        %3844 = vst [vmem:[#allocation3 + $0x48] sm:$0xff] %v3780
        %3845 = vst [vmem:[#allocation3 + $0x50] sm:$0xff] %v3781
        %3846 = vst [vmem:[#allocation3 + $0x58] sm:$0xff] %v3782
        %3847 = vst [vmem:[#allocation3 + $0x60] sm:$0xff] %v3783
        %3848 = vst [vmem:[#allocation3 + $0x68] sm:$0xff] %v3784
        %3849 = vst [vmem:[#allocation3 + $0x70] sm:$0xff] %v3785
        %3850 = vst [vmem:[#allocation3 + $0x78] sm:$0xff] %v3786
        %3851 = vst [vmem:[#allocation3 + $0x80] sm:$0xff] %v3787
        %3852 = vst [vmem:[#allocation3 + $0x88] sm:$0xff] %v3788
        %3853 = vst [vmem:[#allocation3 + $0x90] sm:$0xff] %v3789
        %3854 = vst [vmem:[#allocation3 + $0x98] sm:$0xff] %v3790
        %3855 = vst [vmem:[#allocation3 + $0xa0] sm:$0xff] %v3791
        %3856 = vst [vmem:[#allocation3 + $0xa8] sm:$0xff] %v3792
        %3857 = vst [vmem:[#allocation3 + $0xb0] sm:$0xff] %v3793
        %3858 = vst [vmem:[#allocation3 + $0xb8] sm:$0xff] %v3794
        %3859 = vst [vmem:[#allocation3 + $0xc0] sm:$0xff] %v3795
        %3860 = vst [vmem:[#allocation3 + $0xc8] sm:$0xff] %v3796
        %3861 = vst [vmem:[#allocation3 + $0xd0] sm:$0xff] %v3797
        %3862 = vst [vmem:[#allocation3 + $0xd8] sm:$0xff] %v3798
        %3863 = vst [vmem:[#allocation3 + $0xe0] sm:$0xff] %v3799
        %3864 = vst [vmem:[#allocation3 + $0xe8] sm:$0xff] %v3800
        %3865 = vst [vmem:[#allocation3 + $0xf0] sm:$0xff] %v3801
        %3866 = vst [vmem:[#allocation3 + $0xf8] sm:$0xff] %v3802
        %3867 = vst [vmem:[#allocation3 + $0x100] sm:$0xff] %v3803
        %3868 = vst [vmem:[#allocation3 + $0x108] sm:$0xff] %v3804
        %3869 = vst [vmem:[#allocation3 + $0x110] sm:$0xff] %v3805
        %3870 = vst [vmem:[#allocation3 + $0x118] sm:$0xff] %v3806
        %3871 = vst [vmem:[#allocation3 + $0x120] sm:$0xff] %v3807
        %3872 = vst [vmem:[#allocation3 + $0x128] sm:$0xff] %v3808
        %3873 = vst [vmem:[#allocation3 + $0x130] sm:$0xff] %v3809
        %3874 = vst [vmem:[#allocation3 + $0x138] sm:$0xff] %v3810
        %3875 = vst [vmem:[#allocation3 + $0x140] sm:$0xff] %v3811
        %3876 = vst [vmem:[#allocation3 + $0x148] sm:$0xff] %v3812
        %3877 = vst [vmem:[#allocation3 + $0x150] sm:$0xff] %v3813
        %3878 = vst [vmem:[#allocation3 + $0x158] sm:$0xff] %v3814
        %3879 = vst [vmem:[#allocation3 + $0x160] sm:$0xff] %v3815
        %3880 = vst [vmem:[#allocation3 + $0x168] sm:$0xff] %v3816
        %3881 = vst [vmem:[#allocation3 + $0x170] sm:$0xff] %v3817
        %3882 = vst [vmem:[#allocation3 + $0x178] sm:$0xff] %v3818
        %3883 = vst [vmem:[#allocation3 + $0x180] sm:$0xff] %v3819
        %3884 = vst [vmem:[#allocation3 + $0x188] sm:$0xff] %v3820
        %3885 = vst [vmem:[#allocation3 + $0x190] sm:$0xff] %v3821
        %3886 = vst [vmem:[#allocation3 + $0x198] sm:$0xff] %v3822
        %3887 = vst [vmem:[#allocation3 + $0x1a0] sm:$0xff] %v3823
        %3888 = vst [vmem:[#allocation3 + $0x1a8] sm:$0xff] %v3824
        %3889 = vst [vmem:[#allocation3 + $0x1b0] sm:$0xff] %v3825
        %3890 = vst [vmem:[#allocation3 + $0x1b8] sm:$0xff] %v3826
        %3891 = vst [vmem:[#allocation3 + $0x1c0] sm:$0xff] %v3827
        %3892 = vst [vmem:[#allocation3 + $0x1c8] sm:$0xff] %v3828
        %3893 = vst [vmem:[#allocation3 + $0x1d0] sm:$0xff] %v3829
        %3894 = vst [vmem:[#allocation3 + $0x1d8] sm:$0xff] %v3830
        %3895 = vst [vmem:[#allocation3 + $0x1e0] sm:$0xff] %v3831
        %3896 = vst [vmem:[#allocation3 + $0x1e8] sm:$0xff] %v3832
        %3897 = vst [vmem:[#allocation3 + $0x1f0] sm:$0xff] %v3833
        %3898 = vst [vmem:[#allocation3 + $0x1f8] sm:$0xff] %v3834
        %s3899 = scalar_lea.vmem [#allocation2], 8
        %v3900 = vld [vmem:[%s3899] sm:$0xf]
        %v3901 = vld [vmem:[%s3899 + $0x4] sm:$0xf]
        %v3902 = vld [vmem:[%s3899 + $0x8] sm:$0xf]
        %v3903 = vld [vmem:[%s3899 + $0xc] sm:$0xf]
        %v3904 = vld [vmem:[%s3899 + $0x10] sm:$0xf]
        %v3905 = vld [vmem:[%s3899 + $0x14] sm:$0xf]
        %v3906 = vld [vmem:[%s3899 + $0x18] sm:$0xf]
        %v3907 = vld [vmem:[%s3899 + $0x1c] sm:$0xf]
        %v3908 = vld [vmem:[%s3899 + $0x28] sm:$0xf]
        %v3909 = vld [vmem:[%s3899 + $0x2c] sm:$0xf]
        %v3910 = vld [vmem:[%s3899 + $0x30] sm:$0xf]
        %v3911 = vld [vmem:[%s3899 + $0x34] sm:$0xf]
        %v3912 = vld [vmem:[%s3899 + $0x38] sm:$0xf]
        %v3913 = vld [vmem:[%s3899 + $0x3c] sm:$0xf]
        %v3914 = vld [vmem:[%s3899 + $0x40] sm:$0xf]
        %v3915 = vld [vmem:[%s3899 + $0x44] sm:$0xf]
        %v3916 = vld [vmem:[%s3899 + $0x50] sm:$0xf]
        %v3917 = vld [vmem:[%s3899 + $0x54] sm:$0xf]
        %v3918 = vld [vmem:[%s3899 + $0x58] sm:$0xf]
        %v3919 = vld [vmem:[%s3899 + $0x5c] sm:$0xf]
        %v3920 = vld [vmem:[%s3899 + $0x60] sm:$0xf]
        %v3921 = vld [vmem:[%s3899 + $0x64] sm:$0xf]
        %v3922 = vld [vmem:[%s3899 + $0x68] sm:$0xf]
        %v3923 = vld [vmem:[%s3899 + $0x6c] sm:$0xf]
        %v3924 = vld [vmem:[%s3899 + $0x78] sm:$0xf]
        %v3925 = vld [vmem:[%s3899 + $0x7c] sm:$0xf]
        %v3926 = vld [vmem:[%s3899 + $0x80] sm:$0xf]
        %v3927 = vld [vmem:[%s3899 + $0x84] sm:$0xf]
        %v3928 = vld [vmem:[%s3899 + $0x88] sm:$0xf]
        %v3929 = vld [vmem:[%s3899 + $0x8c] sm:$0xf]
        %v3930 = vld [vmem:[%s3899 + $0x90] sm:$0xf]
        %v3931 = vld [vmem:[%s3899 + $0x94] sm:$0xf]
        %v3932 = vld [vmem:[%s3899 + $0xa0] sm:$0xf]
        %v3933 = vld [vmem:[%s3899 + $0xa4] sm:$0xf]
        %v3934 = vld [vmem:[%s3899 + $0xa8] sm:$0xf]
        %v3935 = vld [vmem:[%s3899 + $0xac] sm:$0xf]
        %v3936 = vld [vmem:[%s3899 + $0xb0] sm:$0xf]
        %v3937 = vld [vmem:[%s3899 + $0xb4] sm:$0xf]
        %v3938 = vld [vmem:[%s3899 + $0xb8] sm:$0xf]
        %v3939 = vld [vmem:[%s3899 + $0xbc] sm:$0xf]
        %v3940 = vld [vmem:[%s3899 + $0xc8] sm:$0xf]
        %v3941 = vld [vmem:[%s3899 + $0xcc] sm:$0xf]
        %v3942 = vld [vmem:[%s3899 + $0xd0] sm:$0xf]
        %v3943 = vld [vmem:[%s3899 + $0xd4] sm:$0xf]
        %v3944 = vld [vmem:[%s3899 + $0xd8] sm:$0xf]
        %v3945 = vld [vmem:[%s3899 + $0xdc] sm:$0xf]
        %v3946 = vld [vmem:[%s3899 + $0xe0] sm:$0xf]
        %v3947 = vld [vmem:[%s3899 + $0xe4] sm:$0xf]
        %v3948 = vld [vmem:[%s3899 + $0xf0] sm:$0xf]
        %v3949 = vld [vmem:[%s3899 + $0xf4] sm:$0xf]
        %v3950 = vld [vmem:[%s3899 + $0xf8] sm:$0xf]
        %v3951 = vld [vmem:[%s3899 + $0xfc] sm:$0xf]
        %v3952 = vld [vmem:[%s3899 + $0x100] sm:$0xf]
        %v3953 = vld [vmem:[%s3899 + $0x104] sm:$0xf]
        %v3954 = vld [vmem:[%s3899 + $0x108] sm:$0xf]
        %v3955 = vld [vmem:[%s3899 + $0x10c] sm:$0xf]
        %v3956 = vld [vmem:[%s3899 + $0x118] sm:$0xf]
        %v3957 = vld [vmem:[%s3899 + $0x11c] sm:$0xf]
        %v3958 = vld [vmem:[%s3899 + $0x120] sm:$0xf]
        %v3959 = vld [vmem:[%s3899 + $0x124] sm:$0xf]
        %v3960 = vld [vmem:[%s3899 + $0x128] sm:$0xf]
        %v3961 = vld [vmem:[%s3899 + $0x12c] sm:$0xf]
        %v3962 = vld [vmem:[%s3899 + $0x130] sm:$0xf]
        %v3963 = vld [vmem:[%s3899 + $0x134] sm:$0xf]
        %v3964 = vld [vmem:[#allocation3] sm:$0xff]
        %v3965 = vld [vmem:[#allocation3 + $0x8] sm:$0xff]
        %v3966 = vld [vmem:[#allocation3 + $0x10] sm:$0xff]
        %v3967 = vld [vmem:[#allocation3 + $0x18] sm:$0xff]
        %v3968 = vld [vmem:[#allocation3 + $0x20] sm:$0xff]
        %v3969 = vld [vmem:[#allocation3 + $0x28] sm:$0xff]
        %v3970 = vld [vmem:[#allocation3 + $0x30] sm:$0xff]
        %v3971 = vld [vmem:[#allocation3 + $0x38] sm:$0xff]
        %v3972 = vld [vmem:[#allocation3 + $0x40] sm:$0xff]
        %v3973 = vld [vmem:[#allocation3 + $0x48] sm:$0xff]
        %v3974 = vld [vmem:[#allocation3 + $0x50] sm:$0xff]
        %v3975 = vld [vmem:[#allocation3 + $0x58] sm:$0xff]
        %v3976 = vld [vmem:[#allocation3 + $0x60] sm:$0xff]
        %v3977 = vld [vmem:[#allocation3 + $0x68] sm:$0xff]
        %v3978 = vld [vmem:[#allocation3 + $0x70] sm:$0xff]
        %v3979 = vld [vmem:[#allocation3 + $0x78] sm:$0xff]
        %v3980 = vld [vmem:[#allocation3 + $0x80] sm:$0xff]
        %v3981 = vld [vmem:[#allocation3 + $0x88] sm:$0xff]
        %v3982 = vld [vmem:[#allocation3 + $0x90] sm:$0xff]
        %v3983 = vld [vmem:[#allocation3 + $0x98] sm:$0xff]
        %v3984 = vld [vmem:[#allocation3 + $0xa0] sm:$0xff]
        %v3985 = vld [vmem:[#allocation3 + $0xa8] sm:$0xff]
        %v3986 = vld [vmem:[#allocation3 + $0xb0] sm:$0xff]
        %v3987 = vld [vmem:[#allocation3 + $0xb8] sm:$0xff]
        %v3988 = vld [vmem:[#allocation3 + $0xc0] sm:$0xff]
        %v3989 = vld [vmem:[#allocation3 + $0xc8] sm:$0xff]
        %v3990 = vld [vmem:[#allocation3 + $0xd0] sm:$0xff]
        %v3991 = vld [vmem:[#allocation3 + $0xd8] sm:$0xff]
        %v3992 = vld [vmem:[#allocation3 + $0xe0] sm:$0xff]
        %v3993 = vld [vmem:[#allocation3 + $0xe8] sm:$0xff]
        %v3994 = vld [vmem:[#allocation3 + $0xf0] sm:$0xff]
        %v3995 = vld [vmem:[#allocation3 + $0xf8] sm:$0xff]
        %v3996 = vld [vmem:[#allocation3 + $0x100] sm:$0xff]
        %v3997 = vld [vmem:[#allocation3 + $0x108] sm:$0xff]
        %v3998 = vld [vmem:[#allocation3 + $0x110] sm:$0xff]
        %v3999 = vld [vmem:[#allocation3 + $0x118] sm:$0xff]
        %v4000 = vld [vmem:[#allocation3 + $0x120] sm:$0xff]
        %v4001 = vld [vmem:[#allocation3 + $0x128] sm:$0xff]
        %v4002 = vld [vmem:[#allocation3 + $0x130] sm:$0xff]
        %v4003 = vld [vmem:[#allocation3 + $0x138] sm:$0xff]
        %v4004 = vld [vmem:[#allocation3 + $0x140] sm:$0xff]
        %v4005 = vld [vmem:[#allocation3 + $0x148] sm:$0xff]
        %v4006 = vld [vmem:[#allocation3 + $0x150] sm:$0xff]
        %v4007 = vld [vmem:[#allocation3 + $0x158] sm:$0xff]
        %v4008 = vld [vmem:[#allocation3 + $0x160] sm:$0xff]
        %v4009 = vld [vmem:[#allocation3 + $0x168] sm:$0xff]
        %v4010 = vld [vmem:[#allocation3 + $0x170] sm:$0xff]
        %v4011 = vld [vmem:[#allocation3 + $0x178] sm:$0xff]
        %v4012 = vld [vmem:[#allocation3 + $0x180] sm:$0xff]
        %v4013 = vld [vmem:[#allocation3 + $0x188] sm:$0xff]
        %v4014 = vld [vmem:[#allocation3 + $0x190] sm:$0xff]
        %v4015 = vld [vmem:[#allocation3 + $0x198] sm:$0xff]
        %v4016 = vld [vmem:[#allocation3 + $0x1a0] sm:$0xff]
        %v4017 = vld [vmem:[#allocation3 + $0x1a8] sm:$0xff]
        %v4018 = vld [vmem:[#allocation3 + $0x1b0] sm:$0xff]
        %v4019 = vld [vmem:[#allocation3 + $0x1b8] sm:$0xff]
        %v4020 = vld [vmem:[#allocation3 + $0x1c0] sm:$0xff]
        %v4021 = vld [vmem:[#allocation3 + $0x1c8] sm:$0xff]
        %v4022 = vld [vmem:[#allocation3 + $0x1d0] sm:$0xff]
        %v4023 = vld [vmem:[#allocation3 + $0x1d8] sm:$0xff]
        %v4024 = vld [vmem:[#allocation3 + $0x1e0] sm:$0xff]
        %v4025 = vld [vmem:[#allocation3 + $0x1e8] sm:$0xff]
        %v4026 = vld [vmem:[#allocation3 + $0x1f0] sm:$0xff]
        %v4027 = vld [vmem:[#allocation3 + $0x1f8] sm:$0xff]
        %s4028 = scalar_lea.vmem [#allocation7], 48
        %v4029 = vld [vmem:[%s4028] sm:$0xf]
        %v4030 = vld [vmem:[%s4028 + $0x4] sm:$0xf]
        %v4031 = vld [vmem:[%s4028 + $0x8] sm:$0xf]
        %v4032 = vld [vmem:[%s4028 + $0xc] sm:$0xf]
        %v4033 = vld [vmem:[%s4028 + $0x10] sm:$0xf]
        %v4034 = vld [vmem:[%s4028 + $0x14] sm:$0xf]
        %v4099 = vunpack.c.l.b16 %v3900
        %v4100 = vunpack.c.l.b16 %v3901
        %v4101 = vunpack.c.l.b16 %v3902
        %v4102 = vunpack.c.l.b16 %v3903
        %v4103 = vunpack.c.l.b16 %v3904
        %v4104 = vunpack.c.l.b16 %v3905
        %v4105 = vunpack.c.l.b16 %v3906
        %v4106 = vunpack.c.l.b16 %v3907
        %v4107 = vunpack.c.l.b16 %v3908
        %v4108 = vunpack.c.l.b16 %v3909
        %v4109 = vunpack.c.l.b16 %v3910
        %v4110 = vunpack.c.l.b16 %v3911
        %v4111 = vunpack.c.l.b16 %v3912
        %v4112 = vunpack.c.l.b16 %v3913
        %v4113 = vunpack.c.l.b16 %v3914
        %v4114 = vunpack.c.l.b16 %v3915
        %v4115 = vunpack.c.l.b16 %v3916
        %v4116 = vunpack.c.l.b16 %v3917
        %v4117 = vunpack.c.l.b16 %v3918
        %v4118 = vunpack.c.l.b16 %v3919
        %v4119 = vunpack.c.l.b16 %v3920
        %v4120 = vunpack.c.l.b16 %v3921
        %v4121 = vunpack.c.l.b16 %v3922
        %v4122 = vunpack.c.l.b16 %v3923
        %v4123 = vunpack.c.l.b16 %v3924
        %v4124 = vunpack.c.l.b16 %v3925
        %v4125 = vunpack.c.l.b16 %v3926
        %v4126 = vunpack.c.l.b16 %v3927
        %v4127 = vunpack.c.l.b16 %v3928
        %v4128 = vunpack.c.l.b16 %v3929
        %v4129 = vunpack.c.l.b16 %v3930
        %v4130 = vunpack.c.l.b16 %v3931
        %v4131 = vunpack.c.l.b16 %v3932
        %v4132 = vunpack.c.l.b16 %v3933
        %v4133 = vunpack.c.l.b16 %v3934
        %v4134 = vunpack.c.l.b16 %v3935
        %v4135 = vunpack.c.l.b16 %v3936
        %v4136 = vunpack.c.l.b16 %v3937
        %v4137 = vunpack.c.l.b16 %v3938
        %v4138 = vunpack.c.l.b16 %v3939
        %v4139 = vunpack.c.l.b16 %v3940
        %v4140 = vunpack.c.l.b16 %v3941
        %v4141 = vunpack.c.l.b16 %v3942
        %v4142 = vunpack.c.l.b16 %v3943
        %v4143 = vunpack.c.l.b16 %v3944
        %v4144 = vunpack.c.l.b16 %v3945
        %v4145 = vunpack.c.l.b16 %v3946
        %v4146 = vunpack.c.l.b16 %v3947
        %v4147 = vunpack.c.l.b16 %v3948
        %v4148 = vunpack.c.l.b16 %v3949
        %v4149 = vunpack.c.l.b16 %v3950
        %v4150 = vunpack.c.l.b16 %v3951
        %v4151 = vunpack.c.l.b16 %v3952
        %v4152 = vunpack.c.l.b16 %v3953
        %v4153 = vunpack.c.l.b16 %v3954
        %v4154 = vunpack.c.l.b16 %v3955
        %v4155 = vunpack.c.l.b16 %v3956
        %v4156 = vunpack.c.l.b16 %v3957
        %v4157 = vunpack.c.l.b16 %v3958
        %v4158 = vunpack.c.l.b16 %v3959
        %v4159 = vunpack.c.l.b16 %v3960
        %v4160 = vunpack.c.l.b16 %v3961
        %v4161 = vunpack.c.l.b16 %v3962
        %v4162 = vunpack.c.l.b16 %v3963
        %v4163 = vpack.c.b16 %v4100, %v4099
        %v4164 = vpack.c.b16 %v4102, %v4101
        %v4165 = vpack.c.b16 %v4104, %v4103
        %v4166 = vpack.c.b16 %v4106, %v4105
        %v4167 = vpack.c.b16 %v4108, %v4107
        %v4168 = vpack.c.b16 %v4110, %v4109
        %v4169 = vpack.c.b16 %v4112, %v4111
        %v4170 = vpack.c.b16 %v4114, %v4113
        %v4171 = vpack.c.b16 %v4116, %v4115
        %v4172 = vpack.c.b16 %v4118, %v4117
        %v4173 = vpack.c.b16 %v4120, %v4119
        %v4174 = vpack.c.b16 %v4122, %v4121
        %v4175 = vpack.c.b16 %v4124, %v4123
        %v4176 = vpack.c.b16 %v4126, %v4125
        %v4177 = vpack.c.b16 %v4128, %v4127
        %v4178 = vpack.c.b16 %v4130, %v4129
        %v4179 = vpack.c.b16 %v4132, %v4131
        %v4180 = vpack.c.b16 %v4134, %v4133
        %v4181 = vpack.c.b16 %v4136, %v4135
        %v4182 = vpack.c.b16 %v4138, %v4137
        %v4183 = vpack.c.b16 %v4140, %v4139
        %v4184 = vpack.c.b16 %v4142, %v4141
        %v4185 = vpack.c.b16 %v4144, %v4143
        %v4186 = vpack.c.b16 %v4146, %v4145
        %v4187 = vpack.c.b16 %v4148, %v4147
        %v4188 = vpack.c.b16 %v4150, %v4149
        %v4189 = vpack.c.b16 %v4152, %v4151
        %v4190 = vpack.c.b16 %v4154, %v4153
        %v4191 = vpack.c.b16 %v4156, %v4155
        %v4192 = vpack.c.b16 %v4158, %v4157
        %v4193 = vpack.c.b16 %v4160, %v4159
        %v4194 = vpack.c.b16 %v4162, %v4161
        %v4201 = vunpack.c.l.b16 %v4029
        %v4202 = vunpack.c.l.b16 %v4030
        %v4203 = vunpack.c.l.b16 %v4031
        %v4204 = vunpack.c.l.b16 %v4032
        %v4205 = vunpack.c.l.b16 %v4033
        %v4206 = vunpack.c.l.b16 %v4034
        %v4207 = vpack.c.b16 %v4202, %v4201
        %v4208 = vpack.c.b16 %v4204, %v4203
        %v4209 = vpack.c.b16 %v4206, %v4205
        %v4214 = vsel %vm2558, %v4163, 0
        %v4217 = vsel %vm2558, %v4164, 0
        %v4220 = vsel %vm2558, %v4165, 0
        %v4223 = vsel %vm2558, %v4166, 0
        %v4226 = vsel %vm2558, %v4167, 0
        %v4229 = vsel %vm2558, %v4168, 0
        %v4232 = vsel %vm2558, %v4169, 0
        %v4235 = vsel %vm2558, %v4170, 0
        %v4238 = vsel %vm2558, %v4171, 0
        %v4241 = vsel %vm2558, %v4172, 0
        %v4244 = vsel %vm2558, %v4173, 0
        %v4247 = vsel %vm2558, %v4174, 0
        %v4250 = vsel %vm2558, %v4175, 0
        %v4253 = vsel %vm2558, %v4176, 0
        %v4256 = vsel %vm2558, %v4177, 0
        %v4259 = vsel %vm2558, %v4178, 0
        %v4262 = vsel %vm2558, %v4179, 0
        %v4265 = vsel %vm2558, %v4180, 0
        %v4268 = vsel %vm2558, %v4181, 0
        %v4271 = vsel %vm2558, %v4182, 0
        %v4274 = vsel %vm2558, %v4183, 0
        %v4277 = vsel %vm2558, %v4184, 0
        %v4280 = vsel %vm2558, %v4185, 0
        %v4283 = vsel %vm2558, %v4186, 0
        %v4286 = vsel %vm2558, %v4187, 0
        %v4289 = vsel %vm2558, %v4188, 0
        %v4292 = vsel %vm2558, %v4189, 0
        %v4295 = vsel %vm2558, %v4190, 0
        %v4298 = vsel %vm2558, %v4191, 0
        %v4301 = vsel %vm2558, %v4192, 0
        %v4304 = vsel %vm2558, %v4193, 0
        %v4307 = vsel %vm2558, %v4194, 0
        %4309 = vmatprep.subr.bf16.mxu0 0
        %4310 = vmatpush1.bf16.msra.mxu0 %v4207
        %4311 = vmatprep.subr.bf16.mxu0 0
        %4312 = vmatpush1.bf16.msra.mxu0 %v4208
        %4313 = vmatprep.subr.bf16.mxu0 0
        %4314 = vmatpush1.bf16.msra.mxu0 %v4209
        %4315 = vmatprep.subr.bf16.mxu0 0
        %4316 = vmatpush1.bf16.msra.mxu0 0
        %4317 = vmatprep.subr.bf16.mxu0 0
        %4318 = vmatpush1.bf16.msra.mxu0 0
        %4319 = vmatprep.subr.bf16.mxu0 0
        %4320 = vmatpush1.bf16.msra.mxu0 0
        %4321 = vmatprep.subr.bf16.mxu0 0
        %4322 = vmatpush1.bf16.msra.mxu0 0
        %4323 = vmatprep.subr.bf16.mxu0 0
        %4324 = vmatpush1.bf16.msra.mxu0 0
        %4325 = vmatprep.subr.bf16.mxu0 0
        %4326 = vmatpush1.bf16.msra.mxu0 0
        %4327 = vmatprep.subr.bf16.mxu0 0
        %4328 = vmatpush1.bf16.msra.mxu0 0
        %4329 = vmatprep.subr.bf16.mxu0 0
        %4330 = vmatpush1.bf16.msra.mxu0 0
        %4331 = vmatprep.subr.bf16.mxu0 0
        %4332 = vmatpush1.bf16.msra.mxu0 0
        %4333 = vmatprep.subr.bf16.mxu0 0
        %4334 = vmatpush1.bf16.msra.mxu0 0
        %4335 = vmatprep.subr.bf16.mxu0 0
        %4336 = vmatpush1.bf16.msra.mxu0 0
        %4337 = vmatprep.subr.bf16.mxu0 0
        %4338 = vmatpush1.bf16.msra.mxu0 0
        %4339 = vmatprep.subr.bf16.mxu0 0
        %4340 = vmatpush1.bf16.msra.mxu0 0
        %4341 = vmatprep.mubr.bf16.mxu0 0
        %4342 = vmatmul.mubr.bf16.gmra.mrb[0].mxu0 %v4214
        %v4343 = vpop.f32.mrb[0].mxu0
        %v4344 = vadd.f32 0.0, %v4343
        %v4345 = vpop.f32.mrb[0].mxu0
        %v4346 = vpop.f32.mrb[0].mxu0
        %v4347 = vadd.f32 0.0, %v4346
        %v4348 = vpop.f32.mrb[0].mxu0
        %4349 = vmatprep.mubr.bf16.mxu0 0
        %4350 = vmatmul.mubr.bf16.gmra.mrb[0].mxu0 %v4217
        %v4351 = vpop.f32.mrb[0].mxu0
        %v4352 = vadd.f32 0.0, %v4351
        %v4353 = vpop.f32.mrb[0].mxu0
        %v4354 = vpop.f32.mrb[0].mxu0
        %v4355 = vadd.f32 0.0, %v4354
        %v4356 = vpop.f32.mrb[0].mxu0
        %4357 = vmatprep.mubr.bf16.mxu0 0
        %4358 = vmatmul.mubr.bf16.gmra.mrb[0].mxu0 %v4220
        %v4359 = vpop.f32.mrb[0].mxu0
        %v4360 = vadd.f32 0.0, %v4359
        %v4361 = vpop.f32.mrb[0].mxu0
        %v4362 = vpop.f32.mrb[0].mxu0
        %v4363 = vadd.f32 0.0, %v4362
        %v4364 = vpop.f32.mrb[0].mxu0
        %4365 = vmatprep.mubr.bf16.mxu0 0
        %4366 = vmatmul.mubr.bf16.gmra.mrb[0].mxu0 %v4223
        %v4367 = vpop.f32.mrb[0].mxu0
        %v4368 = vadd.f32 0.0, %v4367
        %v4369 = vpop.f32.mrb[0].mxu0
        %v4370 = vpop.f32.mrb[0].mxu0
        %v4371 = vadd.f32 0.0, %v4370
        %v4372 = vpop.f32.mrb[0].mxu0
        %4373 = vmatprep.mubr.bf16.mxu0 0
        %4374 = vmatmul.mubr.bf16.gmra.mrb[0].mxu0 %v4226
        %v4375 = vpop.f32.mrb[0].mxu0
        %v4376 = vadd.f32 0.0, %v4375
        %v4377 = vpop.f32.mrb[0].mxu0
        %v4378 = vpop.f32.mrb[0].mxu0
        %v4379 = vadd.f32 0.0, %v4378
        %v4380 = vpop.f32.mrb[0].mxu0
        %4381 = vmatprep.mubr.bf16.mxu0 0
        %4382 = vmatmul.mubr.bf16.gmra.mrb[0].mxu0 %v4229
        %v4383 = vpop.f32.mrb[0].mxu0
        %v4384 = vadd.f32 0.0, %v4383
        %v4385 = vpop.f32.mrb[0].mxu0
        %v4386 = vpop.f32.mrb[0].mxu0
        %v4387 = vadd.f32 0.0, %v4386
        %v4388 = vpop.f32.mrb[0].mxu0
        %4389 = vmatprep.mubr.bf16.mxu0 0
        %4390 = vmatmul.mubr.bf16.gmra.mrb[0].mxu0 %v4232
        %v4391 = vpop.f32.mrb[0].mxu0
        %v4392 = vadd.f32 0.0, %v4391
        %v4393 = vpop.f32.mrb[0].mxu0
        %v4394 = vpop.f32.mrb[0].mxu0
        %v4395 = vadd.f32 0.0, %v4394
        %v4396 = vpop.f32.mrb[0].mxu0
        %4397 = vmatprep.mubr.bf16.mxu0 0
        %4398 = vmatmul.mubr.bf16.gmra.mrb[0].mxu0 %v4235
        %v4399 = vpop.f32.mrb[0].mxu0
        %v4400 = vadd.f32 0.0, %v4399
        %v4401 = vpop.f32.mrb[0].mxu0
        %v4402 = vpop.f32.mrb[0].mxu0
        %v4403 = vadd.f32 0.0, %v4402
        %v4404 = vpop.f32.mrb[0].mxu0
        %4405 = vmatprep.mubr.bf16.mxu0 0
        %4406 = vmatmul.mubr.bf16.gmra.mrb[0].mxu0 %v4238
        %v4407 = vpop.f32.mrb[0].mxu0
        %v4408 = vadd.f32 0.0, %v4407
        %v4409 = vpop.f32.mrb[0].mxu0
        %v4410 = vpop.f32.mrb[0].mxu0
        %v4411 = vadd.f32 0.0, %v4410
        %v4412 = vpop.f32.mrb[0].mxu0
        %4413 = vmatprep.mubr.bf16.mxu0 0
        %4414 = vmatmul.mubr.bf16.gmra.mrb[0].mxu0 %v4241
        %v4415 = vpop.f32.mrb[0].mxu0
        %v4416 = vadd.f32 0.0, %v4415
        %v4417 = vpop.f32.mrb[0].mxu0
        %v4418 = vpop.f32.mrb[0].mxu0
        %v4419 = vadd.f32 0.0, %v4418
        %v4420 = vpop.f32.mrb[0].mxu0
        %4421 = vmatprep.mubr.bf16.mxu0 0
        %4422 = vmatmul.mubr.bf16.gmra.mrb[0].mxu0 %v4244
        %v4423 = vpop.f32.mrb[0].mxu0
        %v4424 = vadd.f32 0.0, %v4423
        %v4425 = vpop.f32.mrb[0].mxu0
        %v4426 = vpop.f32.mrb[0].mxu0
        %v4427 = vadd.f32 0.0, %v4426
        %v4428 = vpop.f32.mrb[0].mxu0
        %4429 = vmatprep.mubr.bf16.mxu0 0
        %4430 = vmatmul.mubr.bf16.gmra.mrb[0].mxu0 %v4247
        %v4431 = vpop.f32.mrb[0].mxu0
        %v4432 = vadd.f32 0.0, %v4431
        %v4433 = vpop.f32.mrb[0].mxu0
        %v4434 = vpop.f32.mrb[0].mxu0
        %v4435 = vadd.f32 0.0, %v4434
        %v4436 = vpop.f32.mrb[0].mxu0
        %4437 = vmatprep.mubr.bf16.mxu0 0
        %4438 = vmatmul.mubr.bf16.gmra.mrb[0].mxu0 %v4250
        %v4439 = vpop.f32.mrb[0].mxu0
        %v4440 = vadd.f32 0.0, %v4439
        %v4441 = vpop.f32.mrb[0].mxu0
        %v4442 = vpop.f32.mrb[0].mxu0
        %v4443 = vadd.f32 0.0, %v4442
        %v4444 = vpop.f32.mrb[0].mxu0
        %4445 = vmatprep.mubr.bf16.mxu0 0
        %4446 = vmatmul.mubr.bf16.gmra.mrb[0].mxu0 %v4253
        %v4447 = vpop.f32.mrb[0].mxu0
        %v4448 = vadd.f32 0.0, %v4447
        %v4449 = vpop.f32.mrb[0].mxu0
        %v4450 = vpop.f32.mrb[0].mxu0
        %v4451 = vadd.f32 0.0, %v4450
        %v4452 = vpop.f32.mrb[0].mxu0
        %4453 = vmatprep.mubr.bf16.mxu0 0
        %4454 = vmatmul.mubr.bf16.gmra.mrb[0].mxu0 %v4256
        %v4455 = vpop.f32.mrb[0].mxu0
        %v4456 = vadd.f32 0.0, %v4455
        %v4457 = vpop.f32.mrb[0].mxu0
        %v4458 = vpop.f32.mrb[0].mxu0
        %v4459 = vadd.f32 0.0, %v4458
        %v4460 = vpop.f32.mrb[0].mxu0
        %4461 = vmatprep.mubr.bf16.mxu0 0
        %4462 = vmatmul.mubr.bf16.gmra.mrb[0].mxu0 %v4259
        %v4463 = vpop.f32.mrb[0].mxu0
        %v4464 = vadd.f32 0.0, %v4463
        %v4465 = vpop.f32.mrb[0].mxu0
        %v4466 = vpop.f32.mrb[0].mxu0
        %v4467 = vadd.f32 0.0, %v4466
        %v4468 = vpop.f32.mrb[0].mxu0
        %4469 = vmatprep.mubr.bf16.mxu0 0
        %4470 = vmatmul.mubr.bf16.gmra.mrb[0].mxu0 %v4262
        %v4471 = vpop.f32.mrb[0].mxu0
        %v4472 = vadd.f32 0.0, %v4471
        %v4473 = vpop.f32.mrb[0].mxu0
        %v4474 = vpop.f32.mrb[0].mxu0
        %v4475 = vadd.f32 0.0, %v4474
        %v4476 = vpop.f32.mrb[0].mxu0
        %4477 = vmatprep.mubr.bf16.mxu0 0
        %4478 = vmatmul.mubr.bf16.gmra.mrb[0].mxu0 %v4265
        %v4479 = vpop.f32.mrb[0].mxu0
        %v4480 = vadd.f32 0.0, %v4479
        %v4481 = vpop.f32.mrb[0].mxu0
        %v4482 = vpop.f32.mrb[0].mxu0
        %v4483 = vadd.f32 0.0, %v4482
        %v4484 = vpop.f32.mrb[0].mxu0
        %4485 = vmatprep.mubr.bf16.mxu0 0
        %4486 = vmatmul.mubr.bf16.gmra.mrb[0].mxu0 %v4268
        %v4487 = vpop.f32.mrb[0].mxu0
        %v4488 = vadd.f32 0.0, %v4487
        %v4489 = vpop.f32.mrb[0].mxu0
        %v4490 = vpop.f32.mrb[0].mxu0
        %v4491 = vadd.f32 0.0, %v4490
        %v4492 = vpop.f32.mrb[0].mxu0
        %4493 = vmatprep.mubr.bf16.mxu0 0
        %4494 = vmatmul.mubr.bf16.gmra.mrb[0].mxu0 %v4271
        %v4495 = vpop.f32.mrb[0].mxu0
        %v4496 = vadd.f32 0.0, %v4495
        %v4497 = vpop.f32.mrb[0].mxu0
        %v4498 = vpop.f32.mrb[0].mxu0
        %v4499 = vadd.f32 0.0, %v4498
        %v4500 = vpop.f32.mrb[0].mxu0
        %4501 = vmatprep.mubr.bf16.mxu0 0
        %4502 = vmatmul.mubr.bf16.gmra.mrb[0].mxu0 %v4274
        %v4503 = vpop.f32.mrb[0].mxu0
        %v4504 = vadd.f32 0.0, %v4503
        %v4505 = vpop.f32.mrb[0].mxu0
        %v4506 = vpop.f32.mrb[0].mxu0
        %v4507 = vadd.f32 0.0, %v4506
        %v4508 = vpop.f32.mrb[0].mxu0
        %4509 = vmatprep.mubr.bf16.mxu0 0
        %4510 = vmatmul.mubr.bf16.gmra.mrb[0].mxu0 %v4277
        %v4511 = vpop.f32.mrb[0].mxu0
        %v4512 = vadd.f32 0.0, %v4511
        %v4513 = vpop.f32.mrb[0].mxu0
        %v4514 = vpop.f32.mrb[0].mxu0
        %v4515 = vadd.f32 0.0, %v4514
        %v4516 = vpop.f32.mrb[0].mxu0
        %4517 = vmatprep.mubr.bf16.mxu0 0
        %4518 = vmatmul.mubr.bf16.gmra.mrb[0].mxu0 %v4280
        %v4519 = vpop.f32.mrb[0].mxu0
        %v4520 = vadd.f32 0.0, %v4519
        %v4521 = vpop.f32.mrb[0].mxu0
        %v4522 = vpop.f32.mrb[0].mxu0
        %v4523 = vadd.f32 0.0, %v4522
        %v4524 = vpop.f32.mrb[0].mxu0
        %4525 = vmatprep.mubr.bf16.mxu0 0
        %4526 = vmatmul.mubr.bf16.gmra.mrb[0].mxu0 %v4283
        %v4527 = vpop.f32.mrb[0].mxu0
        %v4528 = vadd.f32 0.0, %v4527
        %v4529 = vpop.f32.mrb[0].mxu0
        %v4530 = vpop.f32.mrb[0].mxu0
        %v4531 = vadd.f32 0.0, %v4530
        %v4532 = vpop.f32.mrb[0].mxu0
        %4533 = vmatprep.mubr.bf16.mxu0 0
        %4534 = vmatmul.mubr.bf16.gmra.mrb[0].mxu0 %v4286
        %v4535 = vpop.f32.mrb[0].mxu0
        %v4536 = vadd.f32 0.0, %v4535
        %v4537 = vpop.f32.mrb[0].mxu0
        %v4538 = vpop.f32.mrb[0].mxu0
        %v4539 = vadd.f32 0.0, %v4538
        %v4540 = vpop.f32.mrb[0].mxu0
        %4541 = vmatprep.mubr.bf16.mxu0 0
        %4542 = vmatmul.mubr.bf16.gmra.mrb[0].mxu0 %v4289
        %v4543 = vpop.f32.mrb[0].mxu0
        %v4544 = vadd.f32 0.0, %v4543
        %v4545 = vpop.f32.mrb[0].mxu0
        %v4546 = vpop.f32.mrb[0].mxu0
        %v4547 = vadd.f32 0.0, %v4546
        %v4548 = vpop.f32.mrb[0].mxu0
        %4549 = vmatprep.mubr.bf16.mxu0 0
        %4550 = vmatmul.mubr.bf16.gmra.mrb[0].mxu0 %v4292
        %v4551 = vpop.f32.mrb[0].mxu0
        %v4552 = vadd.f32 0.0, %v4551
        %v4553 = vpop.f32.mrb[0].mxu0
        %v4554 = vpop.f32.mrb[0].mxu0
        %v4555 = vadd.f32 0.0, %v4554
        %v4556 = vpop.f32.mrb[0].mxu0
        %4557 = vmatprep.mubr.bf16.mxu0 0
        %4558 = vmatmul.mubr.bf16.gmra.mrb[0].mxu0 %v4295
        %v4559 = vpop.f32.mrb[0].mxu0
        %v4560 = vadd.f32 0.0, %v4559
        %v4561 = vpop.f32.mrb[0].mxu0
        %v4562 = vpop.f32.mrb[0].mxu0
        %v4563 = vadd.f32 0.0, %v4562
        %v4564 = vpop.f32.mrb[0].mxu0
        %4565 = vmatprep.mubr.bf16.mxu0 0
        %4566 = vmatmul.mubr.bf16.gmra.mrb[0].mxu0 %v4298
        %v4567 = vpop.f32.mrb[0].mxu0
        %v4568 = vadd.f32 0.0, %v4567
        %v4569 = vpop.f32.mrb[0].mxu0
        %v4570 = vpop.f32.mrb[0].mxu0
        %v4571 = vadd.f32 0.0, %v4570
        %v4572 = vpop.f32.mrb[0].mxu0
        %4573 = vmatprep.mubr.bf16.mxu0 0
        %4574 = vmatmul.mubr.bf16.gmra.mrb[0].mxu0 %v4301
        %v4575 = vpop.f32.mrb[0].mxu0
        %v4576 = vadd.f32 0.0, %v4575
        %v4577 = vpop.f32.mrb[0].mxu0
        %v4578 = vpop.f32.mrb[0].mxu0
        %v4579 = vadd.f32 0.0, %v4578
        %v4580 = vpop.f32.mrb[0].mxu0
        %4581 = vmatprep.mubr.bf16.mxu0 0
        %4582 = vmatmul.mubr.bf16.gmra.mrb[0].mxu0 %v4304
        %v4583 = vpop.f32.mrb[0].mxu0
        %v4584 = vadd.f32 0.0, %v4583
        %v4585 = vpop.f32.mrb[0].mxu0
        %v4586 = vpop.f32.mrb[0].mxu0
        %v4587 = vadd.f32 0.0, %v4586
        %v4588 = vpop.f32.mrb[0].mxu0
        %4589 = vmatprep.mubr.bf16.mxu0 0
        %4590 = vmatmul.mubr.bf16.gmra.mrb[0].mxu0 %v4307
        %v4591 = vpop.f32.mrb[0].mxu0
        %v4592 = vadd.f32 0.0, %v4591
        %v4593 = vpop.f32.mrb[0].mxu0
        %v4594 = vpop.f32.mrb[0].mxu0
        %v4595 = vadd.f32 0.0, %v4594
        %v4596 = vpop.f32.mrb[0].mxu0
        %4597 = vdwg.mxu0
        %v4598 = vadd.f32 %v3964, %v4344
        %v4599 = vadd.f32 %v3965, %v4347
        %v4600 = vadd.f32 %v3966, %v4352
        %v4601 = vadd.f32 %v3967, %v4355
        %v4602 = vadd.f32 %v3968, %v4360
        %v4603 = vadd.f32 %v3969, %v4363
        %v4604 = vadd.f32 %v3970, %v4368
        %v4605 = vadd.f32 %v3971, %v4371
        %v4606 = vadd.f32 %v3972, %v4376
        %v4607 = vadd.f32 %v3973, %v4379
        %v4608 = vadd.f32 %v3974, %v4384
        %v4609 = vadd.f32 %v3975, %v4387
        %v4610 = vadd.f32 %v3976, %v4392
        %v4611 = vadd.f32 %v3977, %v4395
        %v4612 = vadd.f32 %v3978, %v4400
        %v4613 = vadd.f32 %v3979, %v4403
        %v4614 = vadd.f32 %v3980, %v4408
        %v4615 = vadd.f32 %v3981, %v4411
        %v4616 = vadd.f32 %v3982, %v4416
        %v4617 = vadd.f32 %v3983, %v4419
        %v4618 = vadd.f32 %v3984, %v4424
        %v4619 = vadd.f32 %v3985, %v4427
        %v4620 = vadd.f32 %v3986, %v4432
        %v4621 = vadd.f32 %v3987, %v4435
        %v4622 = vadd.f32 %v3988, %v4440
        %v4623 = vadd.f32 %v3989, %v4443
        %v4624 = vadd.f32 %v3990, %v4448
        %v4625 = vadd.f32 %v3991, %v4451
        %v4626 = vadd.f32 %v3992, %v4456
        %v4627 = vadd.f32 %v3993, %v4459
        %v4628 = vadd.f32 %v3994, %v4464
        %v4629 = vadd.f32 %v3995, %v4467
        %v4630 = vadd.f32 %v3996, %v4472
        %v4631 = vadd.f32 %v3997, %v4475
        %v4632 = vadd.f32 %v3998, %v4480
        %v4633 = vadd.f32 %v3999, %v4483
        %v4634 = vadd.f32 %v4000, %v4488
        %v4635 = vadd.f32 %v4001, %v4491
        %v4636 = vadd.f32 %v4002, %v4496
        %v4637 = vadd.f32 %v4003, %v4499
        %v4638 = vadd.f32 %v4004, %v4504
        %v4639 = vadd.f32 %v4005, %v4507
        %v4640 = vadd.f32 %v4006, %v4512
        %v4641 = vadd.f32 %v4007, %v4515
        %v4642 = vadd.f32 %v4008, %v4520
        %v4643 = vadd.f32 %v4009, %v4523
        %v4644 = vadd.f32 %v4010, %v4528
        %v4645 = vadd.f32 %v4011, %v4531
        %v4646 = vadd.f32 %v4012, %v4536
        %v4647 = vadd.f32 %v4013, %v4539
        %v4648 = vadd.f32 %v4014, %v4544
        %v4649 = vadd.f32 %v4015, %v4547
        %v4650 = vadd.f32 %v4016, %v4552
        %v4651 = vadd.f32 %v4017, %v4555
        %v4652 = vadd.f32 %v4018, %v4560
        %v4653 = vadd.f32 %v4019, %v4563
        %v4654 = vadd.f32 %v4020, %v4568
        %v4655 = vadd.f32 %v4021, %v4571
        %v4656 = vadd.f32 %v4022, %v4576
        %v4657 = vadd.f32 %v4023, %v4579
        %v4658 = vadd.f32 %v4024, %v4584
        %v4659 = vadd.f32 %v4025, %v4587
        %v4660 = vadd.f32 %v4026, %v4592
        %v4661 = vadd.f32 %v4027, %v4595
        %4662 = vst [vmem:[#allocation3] sm:$0xff] %v4598
        %4663 = vst [vmem:[#allocation3 + $0x8] sm:$0xff] %v4599
        %4664 = vst [vmem:[#allocation3 + $0x10] sm:$0xff] %v4600
        %4665 = vst [vmem:[#allocation3 + $0x18] sm:$0xff] %v4601
        %4666 = vst [vmem:[#allocation3 + $0x20] sm:$0xff] %v4602
        %4667 = vst [vmem:[#allocation3 + $0x28] sm:$0xff] %v4603
        %4668 = vst [vmem:[#allocation3 + $0x30] sm:$0xff] %v4604
        %4669 = vst [vmem:[#allocation3 + $0x38] sm:$0xff] %v4605
        %4670 = vst [vmem:[#allocation3 + $0x40] sm:$0xff] %v4606
        %4671 = vst [vmem:[#allocation3 + $0x48] sm:$0xff] %v4607
        %4672 = vst [vmem:[#allocation3 + $0x50] sm:$0xff] %v4608
        %4673 = vst [vmem:[#allocation3 + $0x58] sm:$0xff] %v4609
        %4674 = vst [vmem:[#allocation3 + $0x60] sm:$0xff] %v4610
        %4675 = vst [vmem:[#allocation3 + $0x68] sm:$0xff] %v4611
        %4676 = vst [vmem:[#allocation3 + $0x70] sm:$0xff] %v4612
        %4677 = vst [vmem:[#allocation3 + $0x78] sm:$0xff] %v4613
        %4678 = vst [vmem:[#allocation3 + $0x80] sm:$0xff] %v4614
        %4679 = vst [vmem:[#allocation3 + $0x88] sm:$0xff] %v4615
        %4680 = vst [vmem:[#allocation3 + $0x90] sm:$0xff] %v4616
        %4681 = vst [vmem:[#allocation3 + $0x98] sm:$0xff] %v4617
        %4682 = vst [vmem:[#allocation3 + $0xa0] sm:$0xff] %v4618
        %4683 = vst [vmem:[#allocation3 + $0xa8] sm:$0xff] %v4619
        %4684 = vst [vmem:[#allocation3 + $0xb0] sm:$0xff] %v4620
        %4685 = vst [vmem:[#allocation3 + $0xb8] sm:$0xff] %v4621
        %4686 = vst [vmem:[#allocation3 + $0xc0] sm:$0xff] %v4622
        %4687 = vst [vmem:[#allocation3 + $0xc8] sm:$0xff] %v4623
        %4688 = vst [vmem:[#allocation3 + $0xd0] sm:$0xff] %v4624
        %4689 = vst [vmem:[#allocation3 + $0xd8] sm:$0xff] %v4625
        %4690 = vst [vmem:[#allocation3 + $0xe0] sm:$0xff] %v4626
        %4691 = vst [vmem:[#allocation3 + $0xe8] sm:$0xff] %v4627
        %4692 = vst [vmem:[#allocation3 + $0xf0] sm:$0xff] %v4628
        %4693 = vst [vmem:[#allocation3 + $0xf8] sm:$0xff] %v4629
        %4694 = vst [vmem:[#allocation3 + $0x100] sm:$0xff] %v4630
        %4695 = vst [vmem:[#allocation3 + $0x108] sm:$0xff] %v4631
        %4696 = vst [vmem:[#allocation3 + $0x110] sm:$0xff] %v4632
        %4697 = vst [vmem:[#allocation3 + $0x118] sm:$0xff] %v4633
        %4698 = vst [vmem:[#allocation3 + $0x120] sm:$0xff] %v4634
        %4699 = vst [vmem:[#allocation3 + $0x128] sm:$0xff] %v4635
        %4700 = vst [vmem:[#allocation3 + $0x130] sm:$0xff] %v4636
        %4701 = vst [vmem:[#allocation3 + $0x138] sm:$0xff] %v4637
        %4702 = vst [vmem:[#allocation3 + $0x140] sm:$0xff] %v4638
        %4703 = vst [vmem:[#allocation3 + $0x148] sm:$0xff] %v4639
        %4704 = vst [vmem:[#allocation3 + $0x150] sm:$0xff] %v4640
        %4705 = vst [vmem:[#allocation3 + $0x158] sm:$0xff] %v4641
        %4706 = vst [vmem:[#allocation3 + $0x160] sm:$0xff] %v4642
        %4707 = vst [vmem:[#allocation3 + $0x168] sm:$0xff] %v4643
        %4708 = vst [vmem:[#allocation3 + $0x170] sm:$0xff] %v4644
        %4709 = vst [vmem:[#allocation3 + $0x178] sm:$0xff] %v4645
        %4710 = vst [vmem:[#allocation3 + $0x180] sm:$0xff] %v4646
        %4711 = vst [vmem:[#allocation3 + $0x188] sm:$0xff] %v4647
        %4712 = vst [vmem:[#allocation3 + $0x190] sm:$0xff] %v4648
        %4713 = vst [vmem:[#allocation3 + $0x198] sm:$0xff] %v4649
        %4714 = vst [vmem:[#allocation3 + $0x1a0] sm:$0xff] %v4650
        %4715 = vst [vmem:[#allocation3 + $0x1a8] sm:$0xff] %v4651
        %4716 = vst [vmem:[#allocation3 + $0x1b0] sm:$0xff] %v4652
        %4717 = vst [vmem:[#allocation3 + $0x1b8] sm:$0xff] %v4653
        %4718 = vst [vmem:[#allocation3 + $0x1c0] sm:$0xff] %v4654
        %4719 = vst [vmem:[#allocation3 + $0x1c8] sm:$0xff] %v4655
        %4720 = vst [vmem:[#allocation3 + $0x1d0] sm:$0xff] %v4656
        %4721 = vst [vmem:[#allocation3 + $0x1d8] sm:$0xff] %v4657
        %4722 = vst [vmem:[#allocation3 + $0x1e0] sm:$0xff] %v4658
        %4723 = vst [vmem:[#allocation3 + $0x1e8] sm:$0xff] %v4659
        %4724 = vst [vmem:[#allocation3 + $0x1f0] sm:$0xff] %v4660
        %4725 = vst [vmem:[#allocation3 + $0x1f8] sm:$0xff] %v4661
        %s4726 = scalar_lea.vmem [#allocation2], 40
        %v4727 = vld [vmem:[%s4726] sm:$0xf]
        %v4728 = vld [vmem:[%s4726 + $0x4] sm:$0xf]
        %v4729 = vld [vmem:[%s4726 + $0x8] sm:$0xf]
        %v4730 = vld [vmem:[%s4726 + $0xc] sm:$0xf]
        %v4731 = vld [vmem:[%s4726 + $0x10] sm:$0xf]
        %v4732 = vld [vmem:[%s4726 + $0x14] sm:$0xf]
        %v4733 = vld [vmem:[%s4726 + $0x18] sm:$0xf]
        %v4734 = vld [vmem:[%s4726 + $0x1c] sm:$0xf]
        %v4735 = vld [vmem:[%s4726 + $0x28] sm:$0xf]
        %v4736 = vld [vmem:[%s4726 + $0x2c] sm:$0xf]
        %v4737 = vld [vmem:[%s4726 + $0x30] sm:$0xf]
        %v4738 = vld [vmem:[%s4726 + $0x34] sm:$0xf]
        %v4739 = vld [vmem:[%s4726 + $0x38] sm:$0xf]
        %v4740 = vld [vmem:[%s4726 + $0x3c] sm:$0xf]
        %v4741 = vld [vmem:[%s4726 + $0x40] sm:$0xf]
        %v4742 = vld [vmem:[%s4726 + $0x44] sm:$0xf]
        %v4743 = vld [vmem:[%s4726 + $0x50] sm:$0xf]
        %v4744 = vld [vmem:[%s4726 + $0x54] sm:$0xf]
        %v4745 = vld [vmem:[%s4726 + $0x58] sm:$0xf]
        %v4746 = vld [vmem:[%s4726 + $0x5c] sm:$0xf]
        %v4747 = vld [vmem:[%s4726 + $0x60] sm:$0xf]
        %v4748 = vld [vmem:[%s4726 + $0x64] sm:$0xf]
        %v4749 = vld [vmem:[%s4726 + $0x68] sm:$0xf]
        %v4750 = vld [vmem:[%s4726 + $0x6c] sm:$0xf]
        %v4751 = vld [vmem:[%s4726 + $0x78] sm:$0xf]
        %v4752 = vld [vmem:[%s4726 + $0x7c] sm:$0xf]
        %v4753 = vld [vmem:[%s4726 + $0x80] sm:$0xf]
        %v4754 = vld [vmem:[%s4726 + $0x84] sm:$0xf]
        %v4755 = vld [vmem:[%s4726 + $0x88] sm:$0xf]
        %v4756 = vld [vmem:[%s4726 + $0x8c] sm:$0xf]
        %v4757 = vld [vmem:[%s4726 + $0x90] sm:$0xf]
        %v4758 = vld [vmem:[%s4726 + $0x94] sm:$0xf]
        %v4759 = vld [vmem:[%s4726 + $0xa0] sm:$0xf]
        %v4760 = vld [vmem:[%s4726 + $0xa4] sm:$0xf]
        %v4761 = vld [vmem:[%s4726 + $0xa8] sm:$0xf]
        %v4762 = vld [vmem:[%s4726 + $0xac] sm:$0xf]
        %v4763 = vld [vmem:[%s4726 + $0xb0] sm:$0xf]
        %v4764 = vld [vmem:[%s4726 + $0xb4] sm:$0xf]
        %v4765 = vld [vmem:[%s4726 + $0xb8] sm:$0xf]
        %v4766 = vld [vmem:[%s4726 + $0xbc] sm:$0xf]
        %v4767 = vld [vmem:[%s4726 + $0xc8] sm:$0xf]
        %v4768 = vld [vmem:[%s4726 + $0xcc] sm:$0xf]
        %v4769 = vld [vmem:[%s4726 + $0xd0] sm:$0xf]
        %v4770 = vld [vmem:[%s4726 + $0xd4] sm:$0xf]
        %v4771 = vld [vmem:[%s4726 + $0xd8] sm:$0xf]
        %v4772 = vld [vmem:[%s4726 + $0xdc] sm:$0xf]
        %v4773 = vld [vmem:[%s4726 + $0xe0] sm:$0xf]
        %v4774 = vld [vmem:[%s4726 + $0xe4] sm:$0xf]
        %v4775 = vld [vmem:[%s4726 + $0xf0] sm:$0xf]
        %v4776 = vld [vmem:[%s4726 + $0xf4] sm:$0xf]
        %v4777 = vld [vmem:[%s4726 + $0xf8] sm:$0xf]
        %v4778 = vld [vmem:[%s4726 + $0xfc] sm:$0xf]
        %v4779 = vld [vmem:[%s4726 + $0x100] sm:$0xf]
        %v4780 = vld [vmem:[%s4726 + $0x104] sm:$0xf]
        %v4781 = vld [vmem:[%s4726 + $0x108] sm:$0xf]
        %v4782 = vld [vmem:[%s4726 + $0x10c] sm:$0xf]
        %v4783 = vld [vmem:[%s4726 + $0x118] sm:$0xf]
        %v4784 = vld [vmem:[%s4726 + $0x11c] sm:$0xf]
        %v4785 = vld [vmem:[%s4726 + $0x120] sm:$0xf]
        %v4786 = vld [vmem:[%s4726 + $0x124] sm:$0xf]
        %v4787 = vld [vmem:[%s4726 + $0x128] sm:$0xf]
        %v4788 = vld [vmem:[%s4726 + $0x12c] sm:$0xf]
        %v4789 = vld [vmem:[%s4726 + $0x130] sm:$0xf]
        %v4790 = vld [vmem:[%s4726 + $0x134] sm:$0xf]
        %v4791 = vld [vmem:[#allocation3] sm:$0xff]
        %v4792 = vld [vmem:[#allocation3 + $0x8] sm:$0xff]
        %v4793 = vld [vmem:[#allocation3 + $0x10] sm:$0xff]
        %v4794 = vld [vmem:[#allocation3 + $0x18] sm:$0xff]
        %v4795 = vld [vmem:[#allocation3 + $0x20] sm:$0xff]
        %v4796 = vld [vmem:[#allocation3 + $0x28] sm:$0xff]
        %v4797 = vld [vmem:[#allocation3 + $0x30] sm:$0xff]
        %v4798 = vld [vmem:[#allocation3 + $0x38] sm:$0xff]
        %v4799 = vld [vmem:[#allocation3 + $0x40] sm:$0xff]
        %v4800 = vld [vmem:[#allocation3 + $0x48] sm:$0xff]
        %v4801 = vld [vmem:[#allocation3 + $0x50] sm:$0xff]
        %v4802 = vld [vmem:[#allocation3 + $0x58] sm:$0xff]
        %v4803 = vld [vmem:[#allocation3 + $0x60] sm:$0xff]
        %v4804 = vld [vmem:[#allocation3 + $0x68] sm:$0xff]
        %v4805 = vld [vmem:[#allocation3 + $0x70] sm:$0xff]
        %v4806 = vld [vmem:[#allocation3 + $0x78] sm:$0xff]
        %v4807 = vld [vmem:[#allocation3 + $0x80] sm:$0xff]
        %v4808 = vld [vmem:[#allocation3 + $0x88] sm:$0xff]
        %v4809 = vld [vmem:[#allocation3 + $0x90] sm:$0xff]
        %v4810 = vld [vmem:[#allocation3 + $0x98] sm:$0xff]
        %v4811 = vld [vmem:[#allocation3 + $0xa0] sm:$0xff]
        %v4812 = vld [vmem:[#allocation3 + $0xa8] sm:$0xff]
        %v4813 = vld [vmem:[#allocation3 + $0xb0] sm:$0xff]
        %v4814 = vld [vmem:[#allocation3 + $0xb8] sm:$0xff]
        %v4815 = vld [vmem:[#allocation3 + $0xc0] sm:$0xff]
        %v4816 = vld [vmem:[#allocation3 + $0xc8] sm:$0xff]
        %v4817 = vld [vmem:[#allocation3 + $0xd0] sm:$0xff]
        %v4818 = vld [vmem:[#allocation3 + $0xd8] sm:$0xff]
        %v4819 = vld [vmem:[#allocation3 + $0xe0] sm:$0xff]
        %v4820 = vld [vmem:[#allocation3 + $0xe8] sm:$0xff]
        %v4821 = vld [vmem:[#allocation3 + $0xf0] sm:$0xff]
        %v4822 = vld [vmem:[#allocation3 + $0xf8] sm:$0xff]
        %v4823 = vld [vmem:[#allocation3 + $0x100] sm:$0xff]
        %v4824 = vld [vmem:[#allocation3 + $0x108] sm:$0xff]
        %v4825 = vld [vmem:[#allocation3 + $0x110] sm:$0xff]
        %v4826 = vld [vmem:[#allocation3 + $0x118] sm:$0xff]
        %v4827 = vld [vmem:[#allocation3 + $0x120] sm:$0xff]
        %v4828 = vld [vmem:[#allocation3 + $0x128] sm:$0xff]
        %v4829 = vld [vmem:[#allocation3 + $0x130] sm:$0xff]
        %v4830 = vld [vmem:[#allocation3 + $0x138] sm:$0xff]
        %v4831 = vld [vmem:[#allocation3 + $0x140] sm:$0xff]
        %v4832 = vld [vmem:[#allocation3 + $0x148] sm:$0xff]
        %v4833 = vld [vmem:[#allocation3 + $0x150] sm:$0xff]
        %v4834 = vld [vmem:[#allocation3 + $0x158] sm:$0xff]
        %v4835 = vld [vmem:[#allocation3 + $0x160] sm:$0xff]
        %v4836 = vld [vmem:[#allocation3 + $0x168] sm:$0xff]
        %v4837 = vld [vmem:[#allocation3 + $0x170] sm:$0xff]
        %v4838 = vld [vmem:[#allocation3 + $0x178] sm:$0xff]
        %v4839 = vld [vmem:[#allocation3 + $0x180] sm:$0xff]
        %v4840 = vld [vmem:[#allocation3 + $0x188] sm:$0xff]
        %v4841 = vld [vmem:[#allocation3 + $0x190] sm:$0xff]
        %v4842 = vld [vmem:[#allocation3 + $0x198] sm:$0xff]
        %v4843 = vld [vmem:[#allocation3 + $0x1a0] sm:$0xff]
        %v4844 = vld [vmem:[#allocation3 + $0x1a8] sm:$0xff]
        %v4845 = vld [vmem:[#allocation3 + $0x1b0] sm:$0xff]
        %v4846 = vld [vmem:[#allocation3 + $0x1b8] sm:$0xff]
        %v4847 = vld [vmem:[#allocation3 + $0x1c0] sm:$0xff]
        %v4848 = vld [vmem:[#allocation3 + $0x1c8] sm:$0xff]
        %v4849 = vld [vmem:[#allocation3 + $0x1d0] sm:$0xff]
        %v4850 = vld [vmem:[#allocation3 + $0x1d8] sm:$0xff]
        %v4851 = vld [vmem:[#allocation3 + $0x1e0] sm:$0xff]
        %v4852 = vld [vmem:[#allocation3 + $0x1e8] sm:$0xff]
        %v4853 = vld [vmem:[#allocation3 + $0x1f0] sm:$0xff]
        %v4854 = vld [vmem:[#allocation3 + $0x1f8] sm:$0xff]
        %s4855 = scalar_lea.vmem [#allocation7], 72
        %v4856 = vld [vmem:[%s4855] sm:$0xf]
        %v4857 = vld [vmem:[%s4855 + $0x4] sm:$0xf]
        %v4858 = vld [vmem:[%s4855 + $0x8] sm:$0xf]
        %v4859 = vld [vmem:[%s4855 + $0xc] sm:$0xf]
        %v4860 = vld [vmem:[%s4855 + $0x10] sm:$0xf]
        %v4861 = vld [vmem:[%s4855 + $0x14] sm:$0xf]
        %v4926 = vunpack.c.l.b16 %v4727
        %v4927 = vunpack.c.l.b16 %v4728
        %v4928 = vunpack.c.l.b16 %v4729
        %v4929 = vunpack.c.l.b16 %v4730
        %v4930 = vunpack.c.l.b16 %v4731
        %v4931 = vunpack.c.l.b16 %v4732
        %v4932 = vunpack.c.l.b16 %v4733
        %v4933 = vunpack.c.l.b16 %v4734
        %v4934 = vunpack.c.l.b16 %v4735
        %v4935 = vunpack.c.l.b16 %v4736
        %v4936 = vunpack.c.l.b16 %v4737
        %v4937 = vunpack.c.l.b16 %v4738
        %v4938 = vunpack.c.l.b16 %v4739
        %v4939 = vunpack.c.l.b16 %v4740
        %v4940 = vunpack.c.l.b16 %v4741
        %v4941 = vunpack.c.l.b16 %v4742
        %v4942 = vunpack.c.l.b16 %v4743
        %v4943 = vunpack.c.l.b16 %v4744
        %v4944 = vunpack.c.l.b16 %v4745
        %v4945 = vunpack.c.l.b16 %v4746
        %v4946 = vunpack.c.l.b16 %v4747
        %v4947 = vunpack.c.l.b16 %v4748
        %v4948 = vunpack.c.l.b16 %v4749
        %v4949 = vunpack.c.l.b16 %v4750
        %v4950 = vunpack.c.l.b16 %v4751
        %v4951 = vunpack.c.l.b16 %v4752
        %v4952 = vunpack.c.l.b16 %v4753
        %v4953 = vunpack.c.l.b16 %v4754
        %v4954 = vunpack.c.l.b16 %v4755
        %v4955 = vunpack.c.l.b16 %v4756
        %v4956 = vunpack.c.l.b16 %v4757
        %v4957 = vunpack.c.l.b16 %v4758
        %v4958 = vunpack.c.l.b16 %v4759
        %v4959 = vunpack.c.l.b16 %v4760
        %v4960 = vunpack.c.l.b16 %v4761
        %v4961 = vunpack.c.l.b16 %v4762
        %v4962 = vunpack.c.l.b16 %v4763
        %v4963 = vunpack.c.l.b16 %v4764
        %v4964 = vunpack.c.l.b16 %v4765
        %v4965 = vunpack.c.l.b16 %v4766
        %v4966 = vunpack.c.l.b16 %v4767
        %v4967 = vunpack.c.l.b16 %v4768
        %v4968 = vunpack.c.l.b16 %v4769
        %v4969 = vunpack.c.l.b16 %v4770
        %v4970 = vunpack.c.l.b16 %v4771
        %v4971 = vunpack.c.l.b16 %v4772
        %v4972 = vunpack.c.l.b16 %v4773
        %v4973 = vunpack.c.l.b16 %v4774
        %v4974 = vunpack.c.l.b16 %v4775
        %v4975 = vunpack.c.l.b16 %v4776
        %v4976 = vunpack.c.l.b16 %v4777
        %v4977 = vunpack.c.l.b16 %v4778
        %v4978 = vunpack.c.l.b16 %v4779
        %v4979 = vunpack.c.l.b16 %v4780
        %v4980 = vunpack.c.l.b16 %v4781
        %v4981 = vunpack.c.l.b16 %v4782
        %v4982 = vunpack.c.l.b16 %v4783
        %v4983 = vunpack.c.l.b16 %v4784
        %v4984 = vunpack.c.l.b16 %v4785
        %v4985 = vunpack.c.l.b16 %v4786
        %v4986 = vunpack.c.l.b16 %v4787
        %v4987 = vunpack.c.l.b16 %v4788
        %v4988 = vunpack.c.l.b16 %v4789
        %v4989 = vunpack.c.l.b16 %v4790
        %v4990 = vpack.c.b16 %v4927, %v4926
        %v4991 = vpack.c.b16 %v4929, %v4928
        %v4992 = vpack.c.b16 %v4931, %v4930
        %v4993 = vpack.c.b16 %v4933, %v4932
        %v4994 = vpack.c.b16 %v4935, %v4934
        %v4995 = vpack.c.b16 %v4937, %v4936
        %v4996 = vpack.c.b16 %v4939, %v4938
        %v4997 = vpack.c.b16 %v4941, %v4940
        %v4998 = vpack.c.b16 %v4943, %v4942
        %v4999 = vpack.c.b16 %v4945, %v4944
        %v5000 = vpack.c.b16 %v4947, %v4946
        %v5001 = vpack.c.b16 %v4949, %v4948
        %v5002 = vpack.c.b16 %v4951, %v4950
        %v5003 = vpack.c.b16 %v4953, %v4952
        %v5004 = vpack.c.b16 %v4955, %v4954
        %v5005 = vpack.c.b16 %v4957, %v4956
        %v5006 = vpack.c.b16 %v4959, %v4958
        %v5007 = vpack.c.b16 %v4961, %v4960
        %v5008 = vpack.c.b16 %v4963, %v4962
        %v5009 = vpack.c.b16 %v4965, %v4964
        %v5010 = vpack.c.b16 %v4967, %v4966
        %v5011 = vpack.c.b16 %v4969, %v4968
        %v5012 = vpack.c.b16 %v4971, %v4970
        %v5013 = vpack.c.b16 %v4973, %v4972
        %v5014 = vpack.c.b16 %v4975, %v4974
        %v5015 = vpack.c.b16 %v4977, %v4976
        %v5016 = vpack.c.b16 %v4979, %v4978
        %v5017 = vpack.c.b16 %v4981, %v4980
        %v5018 = vpack.c.b16 %v4983, %v4982
        %v5019 = vpack.c.b16 %v4985, %v4984
        %v5020 = vpack.c.b16 %v4987, %v4986
        %v5021 = vpack.c.b16 %v4989, %v4988
        %v5028 = vunpack.c.l.b16 %v4856
        %v5029 = vunpack.c.l.b16 %v4857
        %v5030 = vunpack.c.l.b16 %v4858
        %v5031 = vunpack.c.l.b16 %v4859
        %v5032 = vunpack.c.l.b16 %v4860
        %v5033 = vunpack.c.l.b16 %v4861
        %v5034 = vpack.c.b16 %v5029, %v5028
        %v5035 = vpack.c.b16 %v5031, %v5030
        %v5036 = vpack.c.b16 %v5033, %v5032
        %v5041 = vsel %vm2558, %v4990, 0
        %v5044 = vsel %vm2558, %v4991, 0
        %v5047 = vsel %vm2558, %v4992, 0
        %v5050 = vsel %vm2558, %v4993, 0
        %v5053 = vsel %vm2558, %v4994, 0
        %v5056 = vsel %vm2558, %v4995, 0
        %v5059 = vsel %vm2558, %v4996, 0
        %v5062 = vsel %vm2558, %v4997, 0
        %v5065 = vsel %vm2558, %v4998, 0
        %v5068 = vsel %vm2558, %v4999, 0
        %v5071 = vsel %vm2558, %v5000, 0
        %v5074 = vsel %vm2558, %v5001, 0
        %v5077 = vsel %vm2558, %v5002, 0
        %v5080 = vsel %vm2558, %v5003, 0
        %v5083 = vsel %vm2558, %v5004, 0
        %v5086 = vsel %vm2558, %v5005, 0
        %v5089 = vsel %vm2558, %v5006, 0
        %v5092 = vsel %vm2558, %v5007, 0
        %v5095 = vsel %vm2558, %v5008, 0
        %v5098 = vsel %vm2558, %v5009, 0
        %v5101 = vsel %vm2558, %v5010, 0
        %v5104 = vsel %vm2558, %v5011, 0
        %v5107 = vsel %vm2558, %v5012, 0
        %v5110 = vsel %vm2558, %v5013, 0
        %v5113 = vsel %vm2558, %v5014, 0
        %v5116 = vsel %vm2558, %v5015, 0
        %v5119 = vsel %vm2558, %v5016, 0
        %v5122 = vsel %vm2558, %v5017, 0
        %v5125 = vsel %vm2558, %v5018, 0
        %v5128 = vsel %vm2558, %v5019, 0
        %v5131 = vsel %vm2558, %v5020, 0
        %v5134 = vsel %vm2558, %v5021, 0
        %5136 = vmatprep.subr.bf16.mxu0 0
        %5137 = vmatpush1.bf16.msra.mxu0 %v5034
        %5138 = vmatprep.subr.bf16.mxu0 0
        %5139 = vmatpush1.bf16.msra.mxu0 %v5035
        %5140 = vmatprep.subr.bf16.mxu0 0
        %5141 = vmatpush1.bf16.msra.mxu0 %v5036
        %5142 = vmatprep.subr.bf16.mxu0 0
        %5143 = vmatpush1.bf16.msra.mxu0 0
        %5144 = vmatprep.subr.bf16.mxu0 0
        %5145 = vmatpush1.bf16.msra.mxu0 0
        %5146 = vmatprep.subr.bf16.mxu0 0
        %5147 = vmatpush1.bf16.msra.mxu0 0
        %5148 = vmatprep.subr.bf16.mxu0 0
        %5149 = vmatpush1.bf16.msra.mxu0 0
        %5150 = vmatprep.subr.bf16.mxu0 0
        %5151 = vmatpush1.bf16.msra.mxu0 0
        %5152 = vmatprep.subr.bf16.mxu0 0
        %5153 = vmatpush1.bf16.msra.mxu0 0
        %5154 = vmatprep.subr.bf16.mxu0 0
        %5155 = vmatpush1.bf16.msra.mxu0 0
        %5156 = vmatprep.subr.bf16.mxu0 0
        %5157 = vmatpush1.bf16.msra.mxu0 0
        %5158 = vmatprep.subr.bf16.mxu0 0
        %5159 = vmatpush1.bf16.msra.mxu0 0
        %5160 = vmatprep.subr.bf16.mxu0 0
        %5161 = vmatpush1.bf16.msra.mxu0 0
        %5162 = vmatprep.subr.bf16.mxu0 0
        %5163 = vmatpush1.bf16.msra.mxu0 0
        %5164 = vmatprep.subr.bf16.mxu0 0
        %5165 = vmatpush1.bf16.msra.mxu0 0
        %5166 = vmatprep.subr.bf16.mxu0 0
        %5167 = vmatpush1.bf16.msra.mxu0 0
        %5168 = vmatprep.mubr.bf16.mxu0 0
        %5169 = vmatmul.mubr.bf16.gmra.mrb[0].mxu0 %v5041
        %v5170 = vpop.f32.mrb[0].mxu0
        %v5171 = vadd.f32 0.0, %v5170
        %v5172 = vpop.f32.mrb[0].mxu0
        %v5173 = vpop.f32.mrb[0].mxu0
        %v5174 = vadd.f32 0.0, %v5173
        %v5175 = vpop.f32.mrb[0].mxu0
        %5176 = vmatprep.mubr.bf16.mxu0 0
        %5177 = vmatmul.mubr.bf16.gmra.mrb[0].mxu0 %v5044
        %v5178 = vpop.f32.mrb[0].mxu0
        %v5179 = vadd.f32 0.0, %v5178
        %v5180 = vpop.f32.mrb[0].mxu0
        %v5181 = vpop.f32.mrb[0].mxu0
        %v5182 = vadd.f32 0.0, %v5181
        %v5183 = vpop.f32.mrb[0].mxu0
        %5184 = vmatprep.mubr.bf16.mxu0 0
        %5185 = vmatmul.mubr.bf16.gmra.mrb[0].mxu0 %v5047
        %v5186 = vpop.f32.mrb[0].mxu0
        %v5187 = vadd.f32 0.0, %v5186
        %v5188 = vpop.f32.mrb[0].mxu0
        %v5189 = vpop.f32.mrb[0].mxu0
        %v5190 = vadd.f32 0.0, %v5189
        %v5191 = vpop.f32.mrb[0].mxu0
        %5192 = vmatprep.mubr.bf16.mxu0 0
        %5193 = vmatmul.mubr.bf16.gmra.mrb[0].mxu0 %v5050
        %v5194 = vpop.f32.mrb[0].mxu0
        %v5195 = vadd.f32 0.0, %v5194
        %v5196 = vpop.f32.mrb[0].mxu0
        %v5197 = vpop.f32.mrb[0].mxu0
        %v5198 = vadd.f32 0.0, %v5197
        %v5199 = vpop.f32.mrb[0].mxu0
        %5200 = vmatprep.mubr.bf16.mxu0 0
        %5201 = vmatmul.mubr.bf16.gmra.mrb[0].mxu0 %v5053
        %v5202 = vpop.f32.mrb[0].mxu0
        %v5203 = vadd.f32 0.0, %v5202
        %v5204 = vpop.f32.mrb[0].mxu0
        %v5205 = vpop.f32.mrb[0].mxu0
        %v5206 = vadd.f32 0.0, %v5205
        %v5207 = vpop.f32.mrb[0].mxu0
        %5208 = vmatprep.mubr.bf16.mxu0 0
        %5209 = vmatmul.mubr.bf16.gmra.mrb[0].mxu0 %v5056
        %v5210 = vpop.f32.mrb[0].mxu0
        %v5211 = vadd.f32 0.0, %v5210
        %v5212 = vpop.f32.mrb[0].mxu0
        %v5213 = vpop.f32.mrb[0].mxu0
        %v5214 = vadd.f32 0.0, %v5213
        %v5215 = vpop.f32.mrb[0].mxu0
        %5216 = vmatprep.mubr.bf16.mxu0 0
        %5217 = vmatmul.mubr.bf16.gmra.mrb[0].mxu0 %v5059
        %v5218 = vpop.f32.mrb[0].mxu0
        %v5219 = vadd.f32 0.0, %v5218
        %v5220 = vpop.f32.mrb[0].mxu0
        %v5221 = vpop.f32.mrb[0].mxu0
        %v5222 = vadd.f32 0.0, %v5221
        %v5223 = vpop.f32.mrb[0].mxu0
        %5224 = vmatprep.mubr.bf16.mxu0 0
        %5225 = vmatmul.mubr.bf16.gmra.mrb[0].mxu0 %v5062
        %v5226 = vpop.f32.mrb[0].mxu0
        %v5227 = vadd.f32 0.0, %v5226
        %v5228 = vpop.f32.mrb[0].mxu0
        %v5229 = vpop.f32.mrb[0].mxu0
        %v5230 = vadd.f32 0.0, %v5229
        %v5231 = vpop.f32.mrb[0].mxu0
        %5232 = vmatprep.mubr.bf16.mxu0 0
        %5233 = vmatmul.mubr.bf16.gmra.mrb[0].mxu0 %v5065
        %v5234 = vpop.f32.mrb[0].mxu0
        %v5235 = vadd.f32 0.0, %v5234
        %v5236 = vpop.f32.mrb[0].mxu0
        %v5237 = vpop.f32.mrb[0].mxu0
        %v5238 = vadd.f32 0.0, %v5237
        %v5239 = vpop.f32.mrb[0].mxu0
        %5240 = vmatprep.mubr.bf16.mxu0 0
        %5241 = vmatmul.mubr.bf16.gmra.mrb[0].mxu0 %v5068
        %v5242 = vpop.f32.mrb[0].mxu0
        %v5243 = vadd.f32 0.0, %v5242
        %v5244 = vpop.f32.mrb[0].mxu0
        %v5245 = vpop.f32.mrb[0].mxu0
        %v5246 = vadd.f32 0.0, %v5245
        %v5247 = vpop.f32.mrb[0].mxu0
        %5248 = vmatprep.mubr.bf16.mxu0 0
        %5249 = vmatmul.mubr.bf16.gmra.mrb[0].mxu0 %v5071
        %v5250 = vpop.f32.mrb[0].mxu0
        %v5251 = vadd.f32 0.0, %v5250
        %v5252 = vpop.f32.mrb[0].mxu0
        %v5253 = vpop.f32.mrb[0].mxu0
        %v5254 = vadd.f32 0.0, %v5253
        %v5255 = vpop.f32.mrb[0].mxu0
        %5256 = vmatprep.mubr.bf16.mxu0 0
        %5257 = vmatmul.mubr.bf16.gmra.mrb[0].mxu0 %v5074
        %v5258 = vpop.f32.mrb[0].mxu0
        %v5259 = vadd.f32 0.0, %v5258
        %v5260 = vpop.f32.mrb[0].mxu0
        %v5261 = vpop.f32.mrb[0].mxu0
        %v5262 = vadd.f32 0.0, %v5261
        %v5263 = vpop.f32.mrb[0].mxu0
        %5264 = vmatprep.mubr.bf16.mxu0 0
        %5265 = vmatmul.mubr.bf16.gmra.mrb[0].mxu0 %v5077
        %v5266 = vpop.f32.mrb[0].mxu0
        %v5267 = vadd.f32 0.0, %v5266
        %v5268 = vpop.f32.mrb[0].mxu0
        %v5269 = vpop.f32.mrb[0].mxu0
        %v5270 = vadd.f32 0.0, %v5269
        %v5271 = vpop.f32.mrb[0].mxu0
        %5272 = vmatprep.mubr.bf16.mxu0 0
        %5273 = vmatmul.mubr.bf16.gmra.mrb[0].mxu0 %v5080
        %v5274 = vpop.f32.mrb[0].mxu0
        %v5275 = vadd.f32 0.0, %v5274
        %v5276 = vpop.f32.mrb[0].mxu0
        %v5277 = vpop.f32.mrb[0].mxu0
        %v5278 = vadd.f32 0.0, %v5277
        %v5279 = vpop.f32.mrb[0].mxu0
        %5280 = vmatprep.mubr.bf16.mxu0 0
        %5281 = vmatmul.mubr.bf16.gmra.mrb[0].mxu0 %v5083
        %v5282 = vpop.f32.mrb[0].mxu0
        %v5283 = vadd.f32 0.0, %v5282
        %v5284 = vpop.f32.mrb[0].mxu0
        %v5285 = vpop.f32.mrb[0].mxu0
        %v5286 = vadd.f32 0.0, %v5285
        %v5287 = vpop.f32.mrb[0].mxu0
        %5288 = vmatprep.mubr.bf16.mxu0 0
        %5289 = vmatmul.mubr.bf16.gmra.mrb[0].mxu0 %v5086
        %v5290 = vpop.f32.mrb[0].mxu0
        %v5291 = vadd.f32 0.0, %v5290
        %v5292 = vpop.f32.mrb[0].mxu0
        %v5293 = vpop.f32.mrb[0].mxu0
        %v5294 = vadd.f32 0.0, %v5293
        %v5295 = vpop.f32.mrb[0].mxu0
        %5296 = vmatprep.mubr.bf16.mxu0 0
        %5297 = vmatmul.mubr.bf16.gmra.mrb[0].mxu0 %v5089
        %v5298 = vpop.f32.mrb[0].mxu0
        %v5299 = vadd.f32 0.0, %v5298
        %v5300 = vpop.f32.mrb[0].mxu0
        %v5301 = vpop.f32.mrb[0].mxu0
        %v5302 = vadd.f32 0.0, %v5301
        %v5303 = vpop.f32.mrb[0].mxu0
        %5304 = vmatprep.mubr.bf16.mxu0 0
        %5305 = vmatmul.mubr.bf16.gmra.mrb[0].mxu0 %v5092
        %v5306 = vpop.f32.mrb[0].mxu0
        %v5307 = vadd.f32 0.0, %v5306
        %v5308 = vpop.f32.mrb[0].mxu0
        %v5309 = vpop.f32.mrb[0].mxu0
        %v5310 = vadd.f32 0.0, %v5309
        %v5311 = vpop.f32.mrb[0].mxu0
        %5312 = vmatprep.mubr.bf16.mxu0 0
        %5313 = vmatmul.mubr.bf16.gmra.mrb[0].mxu0 %v5095
        %v5314 = vpop.f32.mrb[0].mxu0
        %v5315 = vadd.f32 0.0, %v5314
        %v5316 = vpop.f32.mrb[0].mxu0
        %v5317 = vpop.f32.mrb[0].mxu0
        %v5318 = vadd.f32 0.0, %v5317
        %v5319 = vpop.f32.mrb[0].mxu0
        %5320 = vmatprep.mubr.bf16.mxu0 0
        %5321 = vmatmul.mubr.bf16.gmra.mrb[0].mxu0 %v5098
        %v5322 = vpop.f32.mrb[0].mxu0
        %v5323 = vadd.f32 0.0, %v5322
        %v5324 = vpop.f32.mrb[0].mxu0
        %v5325 = vpop.f32.mrb[0].mxu0
        %v5326 = vadd.f32 0.0, %v5325
        %v5327 = vpop.f32.mrb[0].mxu0
        %5328 = vmatprep.mubr.bf16.mxu0 0
        %5329 = vmatmul.mubr.bf16.gmra.mrb[0].mxu0 %v5101
        %v5330 = vpop.f32.mrb[0].mxu0
        %v5331 = vadd.f32 0.0, %v5330
        %v5332 = vpop.f32.mrb[0].mxu0
        %v5333 = vpop.f32.mrb[0].mxu0
        %v5334 = vadd.f32 0.0, %v5333
        %v5335 = vpop.f32.mrb[0].mxu0
        %5336 = vmatprep.mubr.bf16.mxu0 0
        %5337 = vmatmul.mubr.bf16.gmra.mrb[0].mxu0 %v5104
        %v5338 = vpop.f32.mrb[0].mxu0
        %v5339 = vadd.f32 0.0, %v5338
        %v5340 = vpop.f32.mrb[0].mxu0
        %v5341 = vpop.f32.mrb[0].mxu0
        %v5342 = vadd.f32 0.0, %v5341
        %v5343 = vpop.f32.mrb[0].mxu0
        %5344 = vmatprep.mubr.bf16.mxu0 0
        %5345 = vmatmul.mubr.bf16.gmra.mrb[0].mxu0 %v5107
        %v5346 = vpop.f32.mrb[0].mxu0
        %v5347 = vadd.f32 0.0, %v5346
        %v5348 = vpop.f32.mrb[0].mxu0
        %v5349 = vpop.f32.mrb[0].mxu0
        %v5350 = vadd.f32 0.0, %v5349
        %v5351 = vpop.f32.mrb[0].mxu0
        %5352 = vmatprep.mubr.bf16.mxu0 0
        %5353 = vmatmul.mubr.bf16.gmra.mrb[0].mxu0 %v5110
        %v5354 = vpop.f32.mrb[0].mxu0
        %v5355 = vadd.f32 0.0, %v5354
        %v5356 = vpop.f32.mrb[0].mxu0
        %v5357 = vpop.f32.mrb[0].mxu0
        %v5358 = vadd.f32 0.0, %v5357
        %v5359 = vpop.f32.mrb[0].mxu0
        %5360 = vmatprep.mubr.bf16.mxu0 0
        %5361 = vmatmul.mubr.bf16.gmra.mrb[0].mxu0 %v5113
        %v5362 = vpop.f32.mrb[0].mxu0
        %v5363 = vadd.f32 0.0, %v5362
        %v5364 = vpop.f32.mrb[0].mxu0
        %v5365 = vpop.f32.mrb[0].mxu0
        %v5366 = vadd.f32 0.0, %v5365
        %v5367 = vpop.f32.mrb[0].mxu0
        %5368 = vmatprep.mubr.bf16.mxu0 0
        %5369 = vmatmul.mubr.bf16.gmra.mrb[0].mxu0 %v5116
        %v5370 = vpop.f32.mrb[0].mxu0
        %v5371 = vadd.f32 0.0, %v5370
        %v5372 = vpop.f32.mrb[0].mxu0
        %v5373 = vpop.f32.mrb[0].mxu0
        %v5374 = vadd.f32 0.0, %v5373
        %v5375 = vpop.f32.mrb[0].mxu0
        %5376 = vmatprep.mubr.bf16.mxu0 0
        %5377 = vmatmul.mubr.bf16.gmra.mrb[0].mxu0 %v5119
        %v5378 = vpop.f32.mrb[0].mxu0
        %v5379 = vadd.f32 0.0, %v5378
        %v5380 = vpop.f32.mrb[0].mxu0
        %v5381 = vpop.f32.mrb[0].mxu0
        %v5382 = vadd.f32 0.0, %v5381
        %v5383 = vpop.f32.mrb[0].mxu0
        %5384 = vmatprep.mubr.bf16.mxu0 0
        %5385 = vmatmul.mubr.bf16.gmra.mrb[0].mxu0 %v5122
        %v5386 = vpop.f32.mrb[0].mxu0
        %v5387 = vadd.f32 0.0, %v5386
        %v5388 = vpop.f32.mrb[0].mxu0
        %v5389 = vpop.f32.mrb[0].mxu0
        %v5390 = vadd.f32 0.0, %v5389
        %v5391 = vpop.f32.mrb[0].mxu0
        %5392 = vmatprep.mubr.bf16.mxu0 0
        %5393 = vmatmul.mubr.bf16.gmra.mrb[0].mxu0 %v5125
        %v5394 = vpop.f32.mrb[0].mxu0
        %v5395 = vadd.f32 0.0, %v5394
        %v5396 = vpop.f32.mrb[0].mxu0
        %v5397 = vpop.f32.mrb[0].mxu0
        %v5398 = vadd.f32 0.0, %v5397
        %v5399 = vpop.f32.mrb[0].mxu0
        %5400 = vmatprep.mubr.bf16.mxu0 0
        %5401 = vmatmul.mubr.bf16.gmra.mrb[0].mxu0 %v5128
        %v5402 = vpop.f32.mrb[0].mxu0
        %v5403 = vadd.f32 0.0, %v5402
        %v5404 = vpop.f32.mrb[0].mxu0
        %v5405 = vpop.f32.mrb[0].mxu0
        %v5406 = vadd.f32 0.0, %v5405
        %v5407 = vpop.f32.mrb[0].mxu0
        %5408 = vmatprep.mubr.bf16.mxu0 0
        %5409 = vmatmul.mubr.bf16.gmra.mrb[0].mxu0 %v5131
        %v5410 = vpop.f32.mrb[0].mxu0
        %v5411 = vadd.f32 0.0, %v5410
        %v5412 = vpop.f32.mrb[0].mxu0
        %v5413 = vpop.f32.mrb[0].mxu0
        %v5414 = vadd.f32 0.0, %v5413
        %v5415 = vpop.f32.mrb[0].mxu0
        %5416 = vmatprep.mubr.bf16.mxu0 0
        %5417 = vmatmul.mubr.bf16.gmra.mrb[0].mxu0 %v5134
        %v5418 = vpop.f32.mrb[0].mxu0
        %v5419 = vadd.f32 0.0, %v5418
        %v5420 = vpop.f32.mrb[0].mxu0
        %v5421 = vpop.f32.mrb[0].mxu0
        %v5422 = vadd.f32 0.0, %v5421
        %v5423 = vpop.f32.mrb[0].mxu0
        %5424 = vdwg.mxu0
        %v5425 = vadd.f32 %v4791, %v5171
        %v5426 = vadd.f32 %v4792, %v5174
        %v5427 = vadd.f32 %v4793, %v5179
        %v5428 = vadd.f32 %v4794, %v5182
        %v5429 = vadd.f32 %v4795, %v5187
        %v5430 = vadd.f32 %v4796, %v5190
        %v5431 = vadd.f32 %v4797, %v5195
        %v5432 = vadd.f32 %v4798, %v5198
        %v5433 = vadd.f32 %v4799, %v5203
        %v5434 = vadd.f32 %v4800, %v5206
        %v5435 = vadd.f32 %v4801, %v5211
        %v5436 = vadd.f32 %v4802, %v5214
        %v5437 = vadd.f32 %v4803, %v5219
        %v5438 = vadd.f32 %v4804, %v5222
        %v5439 = vadd.f32 %v4805, %v5227
        %v5440 = vadd.f32 %v4806, %v5230
        %v5441 = vadd.f32 %v4807, %v5235
        %v5442 = vadd.f32 %v4808, %v5238
        %v5443 = vadd.f32 %v4809, %v5243
        %v5444 = vadd.f32 %v4810, %v5246
        %v5445 = vadd.f32 %v4811, %v5251
        %v5446 = vadd.f32 %v4812, %v5254
        %v5447 = vadd.f32 %v4813, %v5259
        %v5448 = vadd.f32 %v4814, %v5262
        %v5449 = vadd.f32 %v4815, %v5267
        %v5450 = vadd.f32 %v4816, %v5270
        %v5451 = vadd.f32 %v4817, %v5275
        %v5452 = vadd.f32 %v4818, %v5278
        %v5453 = vadd.f32 %v4819, %v5283
        %v5454 = vadd.f32 %v4820, %v5286
        %v5455 = vadd.f32 %v4821, %v5291
        %v5456 = vadd.f32 %v4822, %v5294
        %v5457 = vadd.f32 %v4823, %v5299
        %v5458 = vadd.f32 %v4824, %v5302
        %v5459 = vadd.f32 %v4825, %v5307
        %v5460 = vadd.f32 %v4826, %v5310
        %v5461 = vadd.f32 %v4827, %v5315
        %v5462 = vadd.f32 %v4828, %v5318
        %v5463 = vadd.f32 %v4829, %v5323
        %v5464 = vadd.f32 %v4830, %v5326
        %v5465 = vadd.f32 %v4831, %v5331
        %v5466 = vadd.f32 %v4832, %v5334
        %v5467 = vadd.f32 %v4833, %v5339
        %v5468 = vadd.f32 %v4834, %v5342
        %v5469 = vadd.f32 %v4835, %v5347
        %v5470 = vadd.f32 %v4836, %v5350
        %v5471 = vadd.f32 %v4837, %v5355
        %v5472 = vadd.f32 %v4838, %v5358
        %v5473 = vadd.f32 %v4839, %v5363
        %v5474 = vadd.f32 %v4840, %v5366
        %v5475 = vadd.f32 %v4841, %v5371
        %v5476 = vadd.f32 %v4842, %v5374
        %v5477 = vadd.f32 %v4843, %v5379
        %v5478 = vadd.f32 %v4844, %v5382
        %v5479 = vadd.f32 %v4845, %v5387
        %v5480 = vadd.f32 %v4846, %v5390
        %v5481 = vadd.f32 %v4847, %v5395
        %v5482 = vadd.f32 %v4848, %v5398
        %v5483 = vadd.f32 %v4849, %v5403
        %v5484 = vadd.f32 %v4850, %v5406
        %v5485 = vadd.f32 %v4851, %v5411
        %v5486 = vadd.f32 %v4852, %v5414
        %v5487 = vadd.f32 %v4853, %v5419
        %v5488 = vadd.f32 %v4854, %v5422
        %5489 = vst [vmem:[#allocation3] sm:$0xff] %v5425
        %5490 = vst [vmem:[#allocation3 + $0x8] sm:$0xff] %v5426
        %5491 = vst [vmem:[#allocation3 + $0x10] sm:$0xff] %v5427
        %5492 = vst [vmem:[#allocation3 + $0x18] sm:$0xff] %v5428
        %5493 = vst [vmem:[#allocation3 + $0x20] sm:$0xff] %v5429
        %5494 = vst [vmem:[#allocation3 + $0x28] sm:$0xff] %v5430
        %5495 = vst [vmem:[#allocation3 + $0x30] sm:$0xff] %v5431
        %5496 = vst [vmem:[#allocation3 + $0x38] sm:$0xff] %v5432
        %5497 = vst [vmem:[#allocation3 + $0x40] sm:$0xff] %v5433
        %5498 = vst [vmem:[#allocation3 + $0x48] sm:$0xff] %v5434
        %5499 = vst [vmem:[#allocation3 + $0x50] sm:$0xff] %v5435
        %5500 = vst [vmem:[#allocation3 + $0x58] sm:$0xff] %v5436
        %5501 = vst [vmem:[#allocation3 + $0x60] sm:$0xff] %v5437
        %5502 = vst [vmem:[#allocation3 + $0x68] sm:$0xff] %v5438
        %5503 = vst [vmem:[#allocation3 + $0x70] sm:$0xff] %v5439
        %5504 = vst [vmem:[#allocation3 + $0x78] sm:$0xff] %v5440
        %5505 = vst [vmem:[#allocation3 + $0x80] sm:$0xff] %v5441
        %5506 = vst [vmem:[#allocation3 + $0x88] sm:$0xff] %v5442
        %5507 = vst [vmem:[#allocation3 + $0x90] sm:$0xff] %v5443
        %5508 = vst [vmem:[#allocation3 + $0x98] sm:$0xff] %v5444
        %5509 = vst [vmem:[#allocation3 + $0xa0] sm:$0xff] %v5445
        %5510 = vst [vmem:[#allocation3 + $0xa8] sm:$0xff] %v5446
        %5511 = vst [vmem:[#allocation3 + $0xb0] sm:$0xff] %v5447
        %5512 = vst [vmem:[#allocation3 + $0xb8] sm:$0xff] %v5448
        %5513 = vst [vmem:[#allocation3 + $0xc0] sm:$0xff] %v5449
        %5514 = vst [vmem:[#allocation3 + $0xc8] sm:$0xff] %v5450
        %5515 = vst [vmem:[#allocation3 + $0xd0] sm:$0xff] %v5451
        %5516 = vst [vmem:[#allocation3 + $0xd8] sm:$0xff] %v5452
        %5517 = vst [vmem:[#allocation3 + $0xe0] sm:$0xff] %v5453
        %5518 = vst [vmem:[#allocation3 + $0xe8] sm:$0xff] %v5454
        %5519 = vst [vmem:[#allocation3 + $0xf0] sm:$0xff] %v5455
        %5520 = vst [vmem:[#allocation3 + $0xf8] sm:$0xff] %v5456
        %5521 = vst [vmem:[#allocation3 + $0x100] sm:$0xff] %v5457
        %5522 = vst [vmem:[#allocation3 + $0x108] sm:$0xff] %v5458
        %5523 = vst [vmem:[#allocation3 + $0x110] sm:$0xff] %v5459
        %5524 = vst [vmem:[#allocation3 + $0x118] sm:$0xff] %v5460
        %5525 = vst [vmem:[#allocation3 + $0x120] sm:$0xff] %v5461
        %5526 = vst [vmem:[#allocation3 + $0x128] sm:$0xff] %v5462
        %5527 = vst [vmem:[#allocation3 + $0x130] sm:$0xff] %v5463
        %5528 = vst [vmem:[#allocation3 + $0x138] sm:$0xff] %v5464
        %5529 = vst [vmem:[#allocation3 + $0x140] sm:$0xff] %v5465
        %5530 = vst [vmem:[#allocation3 + $0x148] sm:$0xff] %v5466
        %5531 = vst [vmem:[#allocation3 + $0x150] sm:$0xff] %v5467
        %5532 = vst [vmem:[#allocation3 + $0x158] sm:$0xff] %v5468
        %5533 = vst [vmem:[#allocation3 + $0x160] sm:$0xff] %v5469
        %5534 = vst [vmem:[#allocation3 + $0x168] sm:$0xff] %v5470
        %5535 = vst [vmem:[#allocation3 + $0x170] sm:$0xff] %v5471
        %5536 = vst [vmem:[#allocation3 + $0x178] sm:$0xff] %v5472
        %5537 = vst [vmem:[#allocation3 + $0x180] sm:$0xff] %v5473
        %5538 = vst [vmem:[#allocation3 + $0x188] sm:$0xff] %v5474
        %5539 = vst [vmem:[#allocation3 + $0x190] sm:$0xff] %v5475
        %5540 = vst [vmem:[#allocation3 + $0x198] sm:$0xff] %v5476
        %5541 = vst [vmem:[#allocation3 + $0x1a0] sm:$0xff] %v5477
        %5542 = vst [vmem:[#allocation3 + $0x1a8] sm:$0xff] %v5478
        %5543 = vst [vmem:[#allocation3 + $0x1b0] sm:$0xff] %v5479
        %5544 = vst [vmem:[#allocation3 + $0x1b8] sm:$0xff] %v5480
        %5545 = vst [vmem:[#allocation3 + $0x1c0] sm:$0xff] %v5481
        %5546 = vst [vmem:[#allocation3 + $0x1c8] sm:$0xff] %v5482
        %5547 = vst [vmem:[#allocation3 + $0x1d0] sm:$0xff] %v5483
        %5548 = vst [vmem:[#allocation3 + $0x1d8] sm:$0xff] %v5484
        %5549 = vst [vmem:[#allocation3 + $0x1e0] sm:$0xff] %v5485
        %5550 = vst [vmem:[#allocation3 + $0x1e8] sm:$0xff] %v5486
        %5551 = vst [vmem:[#allocation3 + $0x1f0] sm:$0xff] %v5487
        %5552 = vst [vmem:[#allocation3 + $0x1f8] sm:$0xff] %v5488
        %v5553 = vld [vmem:[%s2117] sm:$0xf]
        %v5554 = vld [vmem:[%s2117 + $0x4] sm:$0xf]
        %v5555 = vld [vmem:[%s2117 + $0x8] sm:$0xf]
        %v5556 = vld [vmem:[%s2117 + $0xc] sm:$0xf]
        %v5557 = vld [vmem:[%s2117 + $0x10] sm:$0xf]
        %v5558 = vld [vmem:[%s2117 + $0x14] sm:$0xf]
        %v5559 = vld [vmem:[%s2117 + $0x18] sm:$0xf]
        %v5560 = vld [vmem:[%s2117 + $0x1c] sm:$0xf]
        %v5561 = vld [vmem:[%s2117 + $0x28] sm:$0xf]
        %v5562 = vld [vmem:[%s2117 + $0x2c] sm:$0xf]
        %v5563 = vld [vmem:[%s2117 + $0x30] sm:$0xf]
        %v5564 = vld [vmem:[%s2117 + $0x34] sm:$0xf]
        %v5565 = vld [vmem:[%s2117 + $0x38] sm:$0xf]
        %v5566 = vld [vmem:[%s2117 + $0x3c] sm:$0xf]
        %v5567 = vld [vmem:[%s2117 + $0x40] sm:$0xf]
        %v5568 = vld [vmem:[%s2117 + $0x44] sm:$0xf]
        %v5569 = vld [vmem:[%s2117 + $0x50] sm:$0xf]
        %v5570 = vld [vmem:[%s2117 + $0x54] sm:$0xf]
        %v5571 = vld [vmem:[%s2117 + $0x58] sm:$0xf]
        %v5572 = vld [vmem:[%s2117 + $0x5c] sm:$0xf]
        %v5573 = vld [vmem:[%s2117 + $0x60] sm:$0xf]
        %v5574 = vld [vmem:[%s2117 + $0x64] sm:$0xf]
        %v5575 = vld [vmem:[%s2117 + $0x68] sm:$0xf]
        %v5576 = vld [vmem:[%s2117 + $0x6c] sm:$0xf]
        %v5577 = vld [vmem:[%s2117 + $0x78] sm:$0xf]
        %v5578 = vld [vmem:[%s2117 + $0x7c] sm:$0xf]
        %v5579 = vld [vmem:[%s2117 + $0x80] sm:$0xf]
        %v5580 = vld [vmem:[%s2117 + $0x84] sm:$0xf]
        %v5581 = vld [vmem:[%s2117 + $0x88] sm:$0xf]
        %v5582 = vld [vmem:[%s2117 + $0x8c] sm:$0xf]
        %v5583 = vld [vmem:[%s2117 + $0x90] sm:$0xf]
        %v5584 = vld [vmem:[%s2117 + $0x94] sm:$0xf]
        %v5585 = vld [vmem:[%s2117 + $0xa0] sm:$0xf]
        %v5586 = vld [vmem:[%s2117 + $0xa4] sm:$0xf]
        %v5587 = vld [vmem:[%s2117 + $0xa8] sm:$0xf]
        %v5588 = vld [vmem:[%s2117 + $0xac] sm:$0xf]
        %v5589 = vld [vmem:[%s2117 + $0xb0] sm:$0xf]
        %v5590 = vld [vmem:[%s2117 + $0xb4] sm:$0xf]
        %v5591 = vld [vmem:[%s2117 + $0xb8] sm:$0xf]
        %v5592 = vld [vmem:[%s2117 + $0xbc] sm:$0xf]
        %v5593 = vld [vmem:[%s2117 + $0xc8] sm:$0xf]
        %v5594 = vld [vmem:[%s2117 + $0xcc] sm:$0xf]
        %v5595 = vld [vmem:[%s2117 + $0xd0] sm:$0xf]
        %v5596 = vld [vmem:[%s2117 + $0xd4] sm:$0xf]
        %v5597 = vld [vmem:[%s2117 + $0xd8] sm:$0xf]
        %v5598 = vld [vmem:[%s2117 + $0xdc] sm:$0xf]
        %v5599 = vld [vmem:[%s2117 + $0xe0] sm:$0xf]
        %v5600 = vld [vmem:[%s2117 + $0xe4] sm:$0xf]
        %v5601 = vld [vmem:[%s2117 + $0xf0] sm:$0xf]
        %v5602 = vld [vmem:[%s2117 + $0xf4] sm:$0xf]
        %v5603 = vld [vmem:[%s2117 + $0xf8] sm:$0xf]
        %v5604 = vld [vmem:[%s2117 + $0xfc] sm:$0xf]
        %v5605 = vld [vmem:[%s2117 + $0x100] sm:$0xf]
        %v5606 = vld [vmem:[%s2117 + $0x104] sm:$0xf]
        %v5607 = vld [vmem:[%s2117 + $0x108] sm:$0xf]
        %v5608 = vld [vmem:[%s2117 + $0x10c] sm:$0xf]
        %v5609 = vld [vmem:[%s2117 + $0x118] sm:$0xf]
        %v5610 = vld [vmem:[%s2117 + $0x11c] sm:$0xf]
        %v5611 = vld [vmem:[%s2117 + $0x120] sm:$0xf]
        %v5612 = vld [vmem:[%s2117 + $0x124] sm:$0xf]
        %v5613 = vld [vmem:[%s2117 + $0x128] sm:$0xf]
        %v5614 = vld [vmem:[%s2117 + $0x12c] sm:$0xf]
        %v5615 = vld [vmem:[%s2117 + $0x130] sm:$0xf]
        %v5616 = vld [vmem:[%s2117 + $0x134] sm:$0xf]
        %v5617 = vld [vmem:[#allocation3] sm:$0xff]
        %v5618 = vld [vmem:[#allocation3 + $0x8] sm:$0xff]
        %v5619 = vld [vmem:[#allocation3 + $0x10] sm:$0xff]
        %v5620 = vld [vmem:[#allocation3 + $0x18] sm:$0xff]
        %v5621 = vld [vmem:[#allocation3 + $0x20] sm:$0xff]
        %v5622 = vld [vmem:[#allocation3 + $0x28] sm:$0xff]
        %v5623 = vld [vmem:[#allocation3 + $0x30] sm:$0xff]
        %v5624 = vld [vmem:[#allocation3 + $0x38] sm:$0xff]
        %v5625 = vld [vmem:[#allocation3 + $0x40] sm:$0xff]
        %v5626 = vld [vmem:[#allocation3 + $0x48] sm:$0xff]
        %v5627 = vld [vmem:[#allocation3 + $0x50] sm:$0xff]
        %v5628 = vld [vmem:[#allocation3 + $0x58] sm:$0xff]
        %v5629 = vld [vmem:[#allocation3 + $0x60] sm:$0xff]
        %v5630 = vld [vmem:[#allocation3 + $0x68] sm:$0xff]
        %v5631 = vld [vmem:[#allocation3 + $0x70] sm:$0xff]
        %v5632 = vld [vmem:[#allocation3 + $0x78] sm:$0xff]
        %v5633 = vld [vmem:[#allocation3 + $0x80] sm:$0xff]
        %v5634 = vld [vmem:[#allocation3 + $0x88] sm:$0xff]
        %v5635 = vld [vmem:[#allocation3 + $0x90] sm:$0xff]
        %v5636 = vld [vmem:[#allocation3 + $0x98] sm:$0xff]
        %v5637 = vld [vmem:[#allocation3 + $0xa0] sm:$0xff]
        %v5638 = vld [vmem:[#allocation3 + $0xa8] sm:$0xff]
        %v5639 = vld [vmem:[#allocation3 + $0xb0] sm:$0xff]
        %v5640 = vld [vmem:[#allocation3 + $0xb8] sm:$0xff]
        %v5641 = vld [vmem:[#allocation3 + $0xc0] sm:$0xff]
        %v5642 = vld [vmem:[#allocation3 + $0xc8] sm:$0xff]
        %v5643 = vld [vmem:[#allocation3 + $0xd0] sm:$0xff]
        %v5644 = vld [vmem:[#allocation3 + $0xd8] sm:$0xff]
        %v5645 = vld [vmem:[#allocation3 + $0xe0] sm:$0xff]
        %v5646 = vld [vmem:[#allocation3 + $0xe8] sm:$0xff]
        %v5647 = vld [vmem:[#allocation3 + $0xf0] sm:$0xff]
        %v5648 = vld [vmem:[#allocation3 + $0xf8] sm:$0xff]
        %v5649 = vld [vmem:[#allocation3 + $0x100] sm:$0xff]
        %v5650 = vld [vmem:[#allocation3 + $0x108] sm:$0xff]
        %v5651 = vld [vmem:[#allocation3 + $0x110] sm:$0xff]
        %v5652 = vld [vmem:[#allocation3 + $0x118] sm:$0xff]
        %v5653 = vld [vmem:[#allocation3 + $0x120] sm:$0xff]
        %v5654 = vld [vmem:[#allocation3 + $0x128] sm:$0xff]
        %v5655 = vld [vmem:[#allocation3 + $0x130] sm:$0xff]
        %v5656 = vld [vmem:[#allocation3 + $0x138] sm:$0xff]
        %v5657 = vld [vmem:[#allocation3 + $0x140] sm:$0xff]
        %v5658 = vld [vmem:[#allocation3 + $0x148] sm:$0xff]
        %v5659 = vld [vmem:[#allocation3 + $0x150] sm:$0xff]
        %v5660 = vld [vmem:[#allocation3 + $0x158] sm:$0xff]
        %v5661 = vld [vmem:[#allocation3 + $0x160] sm:$0xff]
        %v5662 = vld [vmem:[#allocation3 + $0x168] sm:$0xff]
        %v5663 = vld [vmem:[#allocation3 + $0x170] sm:$0xff]
        %v5664 = vld [vmem:[#allocation3 + $0x178] sm:$0xff]
        %v5665 = vld [vmem:[#allocation3 + $0x180] sm:$0xff]
        %v5666 = vld [vmem:[#allocation3 + $0x188] sm:$0xff]
        %v5667 = vld [vmem:[#allocation3 + $0x190] sm:$0xff]
        %v5668 = vld [vmem:[#allocation3 + $0x198] sm:$0xff]
        %v5669 = vld [vmem:[#allocation3 + $0x1a0] sm:$0xff]
        %v5670 = vld [vmem:[#allocation3 + $0x1a8] sm:$0xff]
        %v5671 = vld [vmem:[#allocation3 + $0x1b0] sm:$0xff]
        %v5672 = vld [vmem:[#allocation3 + $0x1b8] sm:$0xff]
        %v5673 = vld [vmem:[#allocation3 + $0x1c0] sm:$0xff]
        %v5674 = vld [vmem:[#allocation3 + $0x1c8] sm:$0xff]
        %v5675 = vld [vmem:[#allocation3 + $0x1d0] sm:$0xff]
        %v5676 = vld [vmem:[#allocation3 + $0x1d8] sm:$0xff]
        %v5677 = vld [vmem:[#allocation3 + $0x1e0] sm:$0xff]
        %v5678 = vld [vmem:[#allocation3 + $0x1e8] sm:$0xff]
        %v5679 = vld [vmem:[#allocation3 + $0x1f0] sm:$0xff]
        %v5680 = vld [vmem:[#allocation3 + $0x1f8] sm:$0xff]
        %s5681 = scalar_lea.vmem [#allocation7], 96
        %v5682 = vld [vmem:[%s5681] sm:$0xf]
        %v5683 = vld [vmem:[%s5681 + $0x4] sm:$0xf]
        %v5684 = vld [vmem:[%s5681 + $0x8] sm:$0xf]
        %v5685 = vld [vmem:[%s5681 + $0xc] sm:$0xf]
        %v5686 = vld [vmem:[%s5681 + $0x10] sm:$0xf]
        %v5687 = vld [vmem:[%s5681 + $0x14] sm:$0xf]
        %v5752 = vunpack.c.l.b16 %v5553
        %v5753 = vunpack.c.l.b16 %v5554
        %v5754 = vunpack.c.l.b16 %v5555
        %v5755 = vunpack.c.l.b16 %v5556
        %v5756 = vunpack.c.l.b16 %v5557
        %v5757 = vunpack.c.l.b16 %v5558
        %v5758 = vunpack.c.l.b16 %v5559
        %v5759 = vunpack.c.l.b16 %v5560
        %v5760 = vunpack.c.l.b16 %v5561
        %v5761 = vunpack.c.l.b16 %v5562
        %v5762 = vunpack.c.l.b16 %v5563
        %v5763 = vunpack.c.l.b16 %v5564
        %v5764 = vunpack.c.l.b16 %v5565
        %v5765 = vunpack.c.l.b16 %v5566
        %v5766 = vunpack.c.l.b16 %v5567
        %v5767 = vunpack.c.l.b16 %v5568
        %v5768 = vunpack.c.l.b16 %v5569
        %v5769 = vunpack.c.l.b16 %v5570
        %v5770 = vunpack.c.l.b16 %v5571
        %v5771 = vunpack.c.l.b16 %v5572
        %v5772 = vunpack.c.l.b16 %v5573
        %v5773 = vunpack.c.l.b16 %v5574
        %v5774 = vunpack.c.l.b16 %v5575
        %v5775 = vunpack.c.l.b16 %v5576
        %v5776 = vunpack.c.l.b16 %v5577
        %v5777 = vunpack.c.l.b16 %v5578
        %v5778 = vunpack.c.l.b16 %v5579
        %v5779 = vunpack.c.l.b16 %v5580
        %v5780 = vunpack.c.l.b16 %v5581
        %v5781 = vunpack.c.l.b16 %v5582
        %v5782 = vunpack.c.l.b16 %v5583
        %v5783 = vunpack.c.l.b16 %v5584
        %v5784 = vunpack.c.l.b16 %v5585
        %v5785 = vunpack.c.l.b16 %v5586
        %v5786 = vunpack.c.l.b16 %v5587
        %v5787 = vunpack.c.l.b16 %v5588
        %v5788 = vunpack.c.l.b16 %v5589
        %v5789 = vunpack.c.l.b16 %v5590
        %v5790 = vunpack.c.l.b16 %v5591
        %v5791 = vunpack.c.l.b16 %v5592
        %v5792 = vunpack.c.l.b16 %v5593
        %v5793 = vunpack.c.l.b16 %v5594
        %v5794 = vunpack.c.l.b16 %v5595
        %v5795 = vunpack.c.l.b16 %v5596
        %v5796 = vunpack.c.l.b16 %v5597
        %v5797 = vunpack.c.l.b16 %v5598
        %v5798 = vunpack.c.l.b16 %v5599
        %v5799 = vunpack.c.l.b16 %v5600
        %v5800 = vunpack.c.l.b16 %v5601
        %v5801 = vunpack.c.l.b16 %v5602
        %v5802 = vunpack.c.l.b16 %v5603
        %v5803 = vunpack.c.l.b16 %v5604
        %v5804 = vunpack.c.l.b16 %v5605
        %v5805 = vunpack.c.l.b16 %v5606
        %v5806 = vunpack.c.l.b16 %v5607
        %v5807 = vunpack.c.l.b16 %v5608
        %v5808 = vunpack.c.l.b16 %v5609
        %v5809 = vunpack.c.l.b16 %v5610
        %v5810 = vunpack.c.l.b16 %v5611
        %v5811 = vunpack.c.l.b16 %v5612
        %v5812 = vunpack.c.l.b16 %v5613
        %v5813 = vunpack.c.l.b16 %v5614
        %v5814 = vunpack.c.l.b16 %v5615
        %v5815 = vunpack.c.l.b16 %v5616
        %v5816 = vpack.c.b16 %v5753, %v5752
        %v5817 = vpack.c.b16 %v5755, %v5754
        %v5818 = vpack.c.b16 %v5757, %v5756
        %v5819 = vpack.c.b16 %v5759, %v5758
        %v5820 = vpack.c.b16 %v5761, %v5760
        %v5821 = vpack.c.b16 %v5763, %v5762
        %v5822 = vpack.c.b16 %v5765, %v5764
        %v5823 = vpack.c.b16 %v5767, %v5766
        %v5824 = vpack.c.b16 %v5769, %v5768
        %v5825 = vpack.c.b16 %v5771, %v5770
        %v5826 = vpack.c.b16 %v5773, %v5772
        %v5827 = vpack.c.b16 %v5775, %v5774
        %v5828 = vpack.c.b16 %v5777, %v5776
        %v5829 = vpack.c.b16 %v5779, %v5778
        %v5830 = vpack.c.b16 %v5781, %v5780
        %v5831 = vpack.c.b16 %v5783, %v5782
        %v5832 = vpack.c.b16 %v5785, %v5784
        %v5833 = vpack.c.b16 %v5787, %v5786
        %v5834 = vpack.c.b16 %v5789, %v5788
        %v5835 = vpack.c.b16 %v5791, %v5790
        %v5836 = vpack.c.b16 %v5793, %v5792
        %v5837 = vpack.c.b16 %v5795, %v5794
        %v5838 = vpack.c.b16 %v5797, %v5796
        %v5839 = vpack.c.b16 %v5799, %v5798
        %v5840 = vpack.c.b16 %v5801, %v5800
        %v5841 = vpack.c.b16 %v5803, %v5802
        %v5842 = vpack.c.b16 %v5805, %v5804
        %v5843 = vpack.c.b16 %v5807, %v5806
        %v5844 = vpack.c.b16 %v5809, %v5808
        %v5845 = vpack.c.b16 %v5811, %v5810
        %v5846 = vpack.c.b16 %v5813, %v5812
        %v5847 = vpack.c.b16 %v5815, %v5814
        %v5854 = vunpack.c.l.b16 %v5682
        %v5855 = vunpack.c.l.b16 %v5683
        %v5856 = vunpack.c.l.b16 %v5684
        %v5857 = vunpack.c.l.b16 %v5685
        %v5858 = vunpack.c.l.b16 %v5686
        %v5859 = vunpack.c.l.b16 %v5687
        %v5860 = vpack.c.b16 %v5855, %v5854
        %v5861 = vpack.c.b16 %v5857, %v5856
        %v5862 = vpack.c.b16 %v5859, %v5858
        %v5867 = vsel %vm2558, %v5816, 0
        %v5870 = vsel %vm2558, %v5817, 0
        %v5873 = vsel %vm2558, %v5818, 0
        %v5876 = vsel %vm2558, %v5819, 0
        %v5879 = vsel %vm2558, %v5820, 0
        %v5882 = vsel %vm2558, %v5821, 0
        %v5885 = vsel %vm2558, %v5822, 0
        %v5888 = vsel %vm2558, %v5823, 0
        %v5891 = vsel %vm2558, %v5824, 0
        %v5894 = vsel %vm2558, %v5825, 0
        %v5897 = vsel %vm2558, %v5826, 0
        %v5900 = vsel %vm2558, %v5827, 0
        %v5903 = vsel %vm2558, %v5828, 0
        %v5906 = vsel %vm2558, %v5829, 0
        %v5909 = vsel %vm2558, %v5830, 0
        %v5912 = vsel %vm2558, %v5831, 0
        %v5915 = vsel %vm2558, %v5832, 0
        %v5918 = vsel %vm2558, %v5833, 0
        %v5921 = vsel %vm2558, %v5834, 0
        %v5924 = vsel %vm2558, %v5835, 0
        %v5927 = vsel %vm2558, %v5836, 0
        %v5930 = vsel %vm2558, %v5837, 0
        %v5933 = vsel %vm2558, %v5838, 0
        %v5936 = vsel %vm2558, %v5839, 0
        %v5939 = vsel %vm2558, %v5840, 0
        %v5942 = vsel %vm2558, %v5841, 0
        %v5945 = vsel %vm2558, %v5842, 0
        %v5948 = vsel %vm2558, %v5843, 0
        %v5951 = vsel %vm2558, %v5844, 0
        %v5954 = vsel %vm2558, %v5845, 0
        %v5957 = vsel %vm2558, %v5846, 0
        %v5960 = vsel %vm2558, %v5847, 0
        %5962 = vmatprep.subr.bf16.mxu0 0
        %5963 = vmatpush1.bf16.msra.mxu0 %v5860
        %5964 = vmatprep.subr.bf16.mxu0 0
        %5965 = vmatpush1.bf16.msra.mxu0 %v5861
        %5966 = vmatprep.subr.bf16.mxu0 0
        %5967 = vmatpush1.bf16.msra.mxu0 %v5862
        %5968 = vmatprep.subr.bf16.mxu0 0
        %5969 = vmatpush1.bf16.msra.mxu0 0
        %5970 = vmatprep.subr.bf16.mxu0 0
        %5971 = vmatpush1.bf16.msra.mxu0 0
        %5972 = vmatprep.subr.bf16.mxu0 0
        %5973 = vmatpush1.bf16.msra.mxu0 0
        %5974 = vmatprep.subr.bf16.mxu0 0
        %5975 = vmatpush1.bf16.msra.mxu0 0
        %5976 = vmatprep.subr.bf16.mxu0 0
        %5977 = vmatpush1.bf16.msra.mxu0 0
        %5978 = vmatprep.subr.bf16.mxu0 0
        %5979 = vmatpush1.bf16.msra.mxu0 0
        %5980 = vmatprep.subr.bf16.mxu0 0
        %5981 = vmatpush1.bf16.msra.mxu0 0
        %5982 = vmatprep.subr.bf16.mxu0 0
        %5983 = vmatpush1.bf16.msra.mxu0 0
        %5984 = vmatprep.subr.bf16.mxu0 0
        %5985 = vmatpush1.bf16.msra.mxu0 0
        %5986 = vmatprep.subr.bf16.mxu0 0
        %5987 = vmatpush1.bf16.msra.mxu0 0
        %5988 = vmatprep.subr.bf16.mxu0 0
        %5989 = vmatpush1.bf16.msra.mxu0 0
        %5990 = vmatprep.subr.bf16.mxu0 0
        %5991 = vmatpush1.bf16.msra.mxu0 0
        %5992 = vmatprep.subr.bf16.mxu0 0
        %5993 = vmatpush1.bf16.msra.mxu0 0
        %5994 = vmatprep.mubr.bf16.mxu0 0
        %5995 = vmatmul.mubr.bf16.gmra.mrb[0].mxu0 %v5867
        %v5996 = vpop.f32.mrb[0].mxu0
        %v5997 = vadd.f32 0.0, %v5996
        %v5998 = vpop.f32.mrb[0].mxu0
        %v5999 = vpop.f32.mrb[0].mxu0
        %v6000 = vadd.f32 0.0, %v5999
        %v6001 = vpop.f32.mrb[0].mxu0
        %6002 = vmatprep.mubr.bf16.mxu0 0
        %6003 = vmatmul.mubr.bf16.gmra.mrb[0].mxu0 %v5870
        %v6004 = vpop.f32.mrb[0].mxu0
        %v6005 = vadd.f32 0.0, %v6004
        %v6006 = vpop.f32.mrb[0].mxu0
        %v6007 = vpop.f32.mrb[0].mxu0
        %v6008 = vadd.f32 0.0, %v6007
        %v6009 = vpop.f32.mrb[0].mxu0
        %6010 = vmatprep.mubr.bf16.mxu0 0
        %6011 = vmatmul.mubr.bf16.gmra.mrb[0].mxu0 %v5873
        %v6012 = vpop.f32.mrb[0].mxu0
        %v6013 = vadd.f32 0.0, %v6012
        %v6014 = vpop.f32.mrb[0].mxu0
        %v6015 = vpop.f32.mrb[0].mxu0
        %v6016 = vadd.f32 0.0, %v6015
        %v6017 = vpop.f32.mrb[0].mxu0
        %6018 = vmatprep.mubr.bf16.mxu0 0
        %6019 = vmatmul.mubr.bf16.gmra.mrb[0].mxu0 %v5876
        %v6020 = vpop.f32.mrb[0].mxu0
        %v6021 = vadd.f32 0.0, %v6020
        %v6022 = vpop.f32.mrb[0].mxu0
        %v6023 = vpop.f32.mrb[0].mxu0
        %v6024 = vadd.f32 0.0, %v6023
        %v6025 = vpop.f32.mrb[0].mxu0
        %6026 = vmatprep.mubr.bf16.mxu0 0
        %6027 = vmatmul.mubr.bf16.gmra.mrb[0].mxu0 %v5879
        %v6028 = vpop.f32.mrb[0].mxu0
        %v6029 = vadd.f32 0.0, %v6028
        %v6030 = vpop.f32.mrb[0].mxu0
        %v6031 = vpop.f32.mrb[0].mxu0
        %v6032 = vadd.f32 0.0, %v6031
        %v6033 = vpop.f32.mrb[0].mxu0
        %6034 = vmatprep.mubr.bf16.mxu0 0
        %6035 = vmatmul.mubr.bf16.gmra.mrb[0].mxu0 %v5882
        %v6036 = vpop.f32.mrb[0].mxu0
        %v6037 = vadd.f32 0.0, %v6036
        %v6038 = vpop.f32.mrb[0].mxu0
        %v6039 = vpop.f32.mrb[0].mxu0
        %v6040 = vadd.f32 0.0, %v6039
        %v6041 = vpop.f32.mrb[0].mxu0
        %6042 = vmatprep.mubr.bf16.mxu0 0
        %6043 = vmatmul.mubr.bf16.gmra.mrb[0].mxu0 %v5885
        %v6044 = vpop.f32.mrb[0].mxu0
        %v6045 = vadd.f32 0.0, %v6044
        %v6046 = vpop.f32.mrb[0].mxu0
        %v6047 = vpop.f32.mrb[0].mxu0
        %v6048 = vadd.f32 0.0, %v6047
        %v6049 = vpop.f32.mrb[0].mxu0
        %6050 = vmatprep.mubr.bf16.mxu0 0
        %6051 = vmatmul.mubr.bf16.gmra.mrb[0].mxu0 %v5888
        %v6052 = vpop.f32.mrb[0].mxu0
        %v6053 = vadd.f32 0.0, %v6052
        %v6054 = vpop.f32.mrb[0].mxu0
        %v6055 = vpop.f32.mrb[0].mxu0
        %v6056 = vadd.f32 0.0, %v6055
        %v6057 = vpop.f32.mrb[0].mxu0
        %6058 = vmatprep.mubr.bf16.mxu0 0
        %6059 = vmatmul.mubr.bf16.gmra.mrb[0].mxu0 %v5891
        %v6060 = vpop.f32.mrb[0].mxu0
        %v6061 = vadd.f32 0.0, %v6060
        %v6062 = vpop.f32.mrb[0].mxu0
        %v6063 = vpop.f32.mrb[0].mxu0
        %v6064 = vadd.f32 0.0, %v6063
        %v6065 = vpop.f32.mrb[0].mxu0
        %6066 = vmatprep.mubr.bf16.mxu0 0
        %6067 = vmatmul.mubr.bf16.gmra.mrb[0].mxu0 %v5894
        %v6068 = vpop.f32.mrb[0].mxu0
        %v6069 = vadd.f32 0.0, %v6068
        %v6070 = vpop.f32.mrb[0].mxu0
        %v6071 = vpop.f32.mrb[0].mxu0
        %v6072 = vadd.f32 0.0, %v6071
        %v6073 = vpop.f32.mrb[0].mxu0
        %6074 = vmatprep.mubr.bf16.mxu0 0
        %6075 = vmatmul.mubr.bf16.gmra.mrb[0].mxu0 %v5897
        %v6076 = vpop.f32.mrb[0].mxu0
        %v6077 = vadd.f32 0.0, %v6076
        %v6078 = vpop.f32.mrb[0].mxu0
        %v6079 = vpop.f32.mrb[0].mxu0
        %v6080 = vadd.f32 0.0, %v6079
        %v6081 = vpop.f32.mrb[0].mxu0
        %6082 = vmatprep.mubr.bf16.mxu0 0
        %6083 = vmatmul.mubr.bf16.gmra.mrb[0].mxu0 %v5900
        %v6084 = vpop.f32.mrb[0].mxu0
        %v6085 = vadd.f32 0.0, %v6084
        %v6086 = vpop.f32.mrb[0].mxu0
        %v6087 = vpop.f32.mrb[0].mxu0
        %v6088 = vadd.f32 0.0, %v6087
        %v6089 = vpop.f32.mrb[0].mxu0
        %6090 = vmatprep.mubr.bf16.mxu0 0
        %6091 = vmatmul.mubr.bf16.gmra.mrb[0].mxu0 %v5903
        %v6092 = vpop.f32.mrb[0].mxu0
        %v6093 = vadd.f32 0.0, %v6092
        %v6094 = vpop.f32.mrb[0].mxu0
        %v6095 = vpop.f32.mrb[0].mxu0
        %v6096 = vadd.f32 0.0, %v6095
        %v6097 = vpop.f32.mrb[0].mxu0
        %6098 = vmatprep.mubr.bf16.mxu0 0
        %6099 = vmatmul.mubr.bf16.gmra.mrb[0].mxu0 %v5906
        %v6100 = vpop.f32.mrb[0].mxu0
        %v6101 = vadd.f32 0.0, %v6100
        %v6102 = vpop.f32.mrb[0].mxu0
        %v6103 = vpop.f32.mrb[0].mxu0
        %v6104 = vadd.f32 0.0, %v6103
        %v6105 = vpop.f32.mrb[0].mxu0
        %6106 = vmatprep.mubr.bf16.mxu0 0
        %6107 = vmatmul.mubr.bf16.gmra.mrb[0].mxu0 %v5909
        %v6108 = vpop.f32.mrb[0].mxu0
        %v6109 = vadd.f32 0.0, %v6108
        %v6110 = vpop.f32.mrb[0].mxu0
        %v6111 = vpop.f32.mrb[0].mxu0
        %v6112 = vadd.f32 0.0, %v6111
        %v6113 = vpop.f32.mrb[0].mxu0
        %6114 = vmatprep.mubr.bf16.mxu0 0
        %6115 = vmatmul.mubr.bf16.gmra.mrb[0].mxu0 %v5912
        %v6116 = vpop.f32.mrb[0].mxu0
        %v6117 = vadd.f32 0.0, %v6116
        %v6118 = vpop.f32.mrb[0].mxu0
        %v6119 = vpop.f32.mrb[0].mxu0
        %v6120 = vadd.f32 0.0, %v6119
        %v6121 = vpop.f32.mrb[0].mxu0
        %6122 = vmatprep.mubr.bf16.mxu0 0
        %6123 = vmatmul.mubr.bf16.gmra.mrb[0].mxu0 %v5915
        %v6124 = vpop.f32.mrb[0].mxu0
        %v6125 = vadd.f32 0.0, %v6124
        %v6126 = vpop.f32.mrb[0].mxu0
        %v6127 = vpop.f32.mrb[0].mxu0
        %v6128 = vadd.f32 0.0, %v6127
        %v6129 = vpop.f32.mrb[0].mxu0
        %6130 = vmatprep.mubr.bf16.mxu0 0
        %6131 = vmatmul.mubr.bf16.gmra.mrb[0].mxu0 %v5918
        %v6132 = vpop.f32.mrb[0].mxu0
        %v6133 = vadd.f32 0.0, %v6132
        %v6134 = vpop.f32.mrb[0].mxu0
        %v6135 = vpop.f32.mrb[0].mxu0
        %v6136 = vadd.f32 0.0, %v6135
        %v6137 = vpop.f32.mrb[0].mxu0
        %6138 = vmatprep.mubr.bf16.mxu0 0
        %6139 = vmatmul.mubr.bf16.gmra.mrb[0].mxu0 %v5921
        %v6140 = vpop.f32.mrb[0].mxu0
        %v6141 = vadd.f32 0.0, %v6140
        %v6142 = vpop.f32.mrb[0].mxu0
        %v6143 = vpop.f32.mrb[0].mxu0
        %v6144 = vadd.f32 0.0, %v6143
        %v6145 = vpop.f32.mrb[0].mxu0
        %6146 = vmatprep.mubr.bf16.mxu0 0
        %6147 = vmatmul.mubr.bf16.gmra.mrb[0].mxu0 %v5924
        %v6148 = vpop.f32.mrb[0].mxu0
        %v6149 = vadd.f32 0.0, %v6148
        %v6150 = vpop.f32.mrb[0].mxu0
        %v6151 = vpop.f32.mrb[0].mxu0
        %v6152 = vadd.f32 0.0, %v6151
        %v6153 = vpop.f32.mrb[0].mxu0
        %6154 = vmatprep.mubr.bf16.mxu0 0
        %6155 = vmatmul.mubr.bf16.gmra.mrb[0].mxu0 %v5927
        %v6156 = vpop.f32.mrb[0].mxu0
        %v6157 = vadd.f32 0.0, %v6156
        %v6158 = vpop.f32.mrb[0].mxu0
        %v6159 = vpop.f32.mrb[0].mxu0
        %v6160 = vadd.f32 0.0, %v6159
        %v6161 = vpop.f32.mrb[0].mxu0
        %6162 = vmatprep.mubr.bf16.mxu0 0
        %6163 = vmatmul.mubr.bf16.gmra.mrb[0].mxu0 %v5930
        %v6164 = vpop.f32.mrb[0].mxu0
        %v6165 = vadd.f32 0.0, %v6164
        %v6166 = vpop.f32.mrb[0].mxu0
        %v6167 = vpop.f32.mrb[0].mxu0
        %v6168 = vadd.f32 0.0, %v6167
        %v6169 = vpop.f32.mrb[0].mxu0
        %6170 = vmatprep.mubr.bf16.mxu0 0
        %6171 = vmatmul.mubr.bf16.gmra.mrb[0].mxu0 %v5933
        %v6172 = vpop.f32.mrb[0].mxu0
        %v6173 = vadd.f32 0.0, %v6172
        %v6174 = vpop.f32.mrb[0].mxu0
        %v6175 = vpop.f32.mrb[0].mxu0
        %v6176 = vadd.f32 0.0, %v6175
        %v6177 = vpop.f32.mrb[0].mxu0
        %6178 = vmatprep.mubr.bf16.mxu0 0
        %6179 = vmatmul.mubr.bf16.gmra.mrb[0].mxu0 %v5936
        %v6180 = vpop.f32.mrb[0].mxu0
        %v6181 = vadd.f32 0.0, %v6180
        %v6182 = vpop.f32.mrb[0].mxu0
        %v6183 = vpop.f32.mrb[0].mxu0
        %v6184 = vadd.f32 0.0, %v6183
        %v6185 = vpop.f32.mrb[0].mxu0
        %6186 = vmatprep.mubr.bf16.mxu0 0
        %6187 = vmatmul.mubr.bf16.gmra.mrb[0].mxu0 %v5939
        %v6188 = vpop.f32.mrb[0].mxu0
        %v6189 = vadd.f32 0.0, %v6188
        %v6190 = vpop.f32.mrb[0].mxu0
        %v6191 = vpop.f32.mrb[0].mxu0
        %v6192 = vadd.f32 0.0, %v6191
        %v6193 = vpop.f32.mrb[0].mxu0
        %6194 = vmatprep.mubr.bf16.mxu0 0
        %6195 = vmatmul.mubr.bf16.gmra.mrb[0].mxu0 %v5942
        %v6196 = vpop.f32.mrb[0].mxu0
        %v6197 = vadd.f32 0.0, %v6196
        %v6198 = vpop.f32.mrb[0].mxu0
        %v6199 = vpop.f32.mrb[0].mxu0
        %v6200 = vadd.f32 0.0, %v6199
        %v6201 = vpop.f32.mrb[0].mxu0
        %6202 = vmatprep.mubr.bf16.mxu0 0
        %6203 = vmatmul.mubr.bf16.gmra.mrb[0].mxu0 %v5945
        %v6204 = vpop.f32.mrb[0].mxu0
        %v6205 = vadd.f32 0.0, %v6204
        %v6206 = vpop.f32.mrb[0].mxu0
        %v6207 = vpop.f32.mrb[0].mxu0
        %v6208 = vadd.f32 0.0, %v6207
        %v6209 = vpop.f32.mrb[0].mxu0
        %6210 = vmatprep.mubr.bf16.mxu0 0
        %6211 = vmatmul.mubr.bf16.gmra.mrb[0].mxu0 %v5948
        %v6212 = vpop.f32.mrb[0].mxu0
        %v6213 = vadd.f32 0.0, %v6212
        %v6214 = vpop.f32.mrb[0].mxu0
        %v6215 = vpop.f32.mrb[0].mxu0
        %v6216 = vadd.f32 0.0, %v6215
        %v6217 = vpop.f32.mrb[0].mxu0
        %6218 = vmatprep.mubr.bf16.mxu0 0
        %6219 = vmatmul.mubr.bf16.gmra.mrb[0].mxu0 %v5951
        %v6220 = vpop.f32.mrb[0].mxu0
        %v6221 = vadd.f32 0.0, %v6220
        %v6222 = vpop.f32.mrb[0].mxu0
        %v6223 = vpop.f32.mrb[0].mxu0
        %v6224 = vadd.f32 0.0, %v6223
        %v6225 = vpop.f32.mrb[0].mxu0
        %6226 = vmatprep.mubr.bf16.mxu0 0
        %6227 = vmatmul.mubr.bf16.gmra.mrb[0].mxu0 %v5954
        %v6228 = vpop.f32.mrb[0].mxu0
        %v6229 = vadd.f32 0.0, %v6228
        %v6230 = vpop.f32.mrb[0].mxu0
        %v6231 = vpop.f32.mrb[0].mxu0
        %v6232 = vadd.f32 0.0, %v6231
        %v6233 = vpop.f32.mrb[0].mxu0
        %6234 = vmatprep.mubr.bf16.mxu0 0
        %6235 = vmatmul.mubr.bf16.gmra.mrb[0].mxu0 %v5957
        %v6236 = vpop.f32.mrb[0].mxu0
        %v6237 = vadd.f32 0.0, %v6236
        %v6238 = vpop.f32.mrb[0].mxu0
        %v6239 = vpop.f32.mrb[0].mxu0
        %v6240 = vadd.f32 0.0, %v6239
        %v6241 = vpop.f32.mrb[0].mxu0
        %6242 = vmatprep.mubr.bf16.mxu0 0
        %6243 = vmatmul.mubr.bf16.gmra.mrb[0].mxu0 %v5960
        %v6244 = vpop.f32.mrb[0].mxu0
        %v6245 = vadd.f32 0.0, %v6244
        %v6246 = vpop.f32.mrb[0].mxu0
        %v6247 = vpop.f32.mrb[0].mxu0
        %v6248 = vadd.f32 0.0, %v6247
        %v6249 = vpop.f32.mrb[0].mxu0
        %6250 = vdwg.mxu0
        %v6251 = vadd.f32 %v5617, %v5997
        %v6252 = vadd.f32 %v5618, %v6000
        %v6253 = vadd.f32 %v5619, %v6005
        %v6254 = vadd.f32 %v5620, %v6008
        %v6255 = vadd.f32 %v5621, %v6013
        %v6256 = vadd.f32 %v5622, %v6016
        %v6257 = vadd.f32 %v5623, %v6021
        %v6258 = vadd.f32 %v5624, %v6024
        %v6259 = vadd.f32 %v5625, %v6029
        %v6260 = vadd.f32 %v5626, %v6032
        %v6261 = vadd.f32 %v5627, %v6037
        %v6262 = vadd.f32 %v5628, %v6040
        %v6263 = vadd.f32 %v5629, %v6045
        %v6264 = vadd.f32 %v5630, %v6048
        %v6265 = vadd.f32 %v5631, %v6053
        %v6266 = vadd.f32 %v5632, %v6056
        %v6267 = vadd.f32 %v5633, %v6061
        %v6268 = vadd.f32 %v5634, %v6064
        %v6269 = vadd.f32 %v5635, %v6069
        %v6270 = vadd.f32 %v5636, %v6072
        %v6271 = vadd.f32 %v5637, %v6077
        %v6272 = vadd.f32 %v5638, %v6080
        %v6273 = vadd.f32 %v5639, %v6085
        %v6274 = vadd.f32 %v5640, %v6088
        %v6275 = vadd.f32 %v5641, %v6093
        %v6276 = vadd.f32 %v5642, %v6096
        %v6277 = vadd.f32 %v5643, %v6101
        %v6278 = vadd.f32 %v5644, %v6104
        %v6279 = vadd.f32 %v5645, %v6109
        %v6280 = vadd.f32 %v5646, %v6112
        %v6281 = vadd.f32 %v5647, %v6117
        %v6282 = vadd.f32 %v5648, %v6120
        %v6283 = vadd.f32 %v5649, %v6125
        %v6284 = vadd.f32 %v5650, %v6128
        %v6285 = vadd.f32 %v5651, %v6133
        %v6286 = vadd.f32 %v5652, %v6136
        %v6287 = vadd.f32 %v5653, %v6141
        %v6288 = vadd.f32 %v5654, %v6144
        %v6289 = vadd.f32 %v5655, %v6149
        %v6290 = vadd.f32 %v5656, %v6152
        %v6291 = vadd.f32 %v5657, %v6157
        %v6292 = vadd.f32 %v5658, %v6160
        %v6293 = vadd.f32 %v5659, %v6165
        %v6294 = vadd.f32 %v5660, %v6168
        %v6295 = vadd.f32 %v5661, %v6173
        %v6296 = vadd.f32 %v5662, %v6176
        %v6297 = vadd.f32 %v5663, %v6181
        %v6298 = vadd.f32 %v5664, %v6184
        %v6299 = vadd.f32 %v5665, %v6189
        %v6300 = vadd.f32 %v5666, %v6192
        %v6301 = vadd.f32 %v5667, %v6197
        %v6302 = vadd.f32 %v5668, %v6200
        %v6303 = vadd.f32 %v5669, %v6205
        %v6304 = vadd.f32 %v5670, %v6208
        %v6305 = vadd.f32 %v5671, %v6213
        %v6306 = vadd.f32 %v5672, %v6216
        %v6307 = vadd.f32 %v5673, %v6221
        %v6308 = vadd.f32 %v5674, %v6224
        %v6309 = vadd.f32 %v5675, %v6229
        %v6310 = vadd.f32 %v5676, %v6232
        %v6311 = vadd.f32 %v5677, %v6237
        %v6312 = vadd.f32 %v5678, %v6240
        %v6313 = vadd.f32 %v5679, %v6245
        %v6314 = vadd.f32 %v5680, %v6248
        %6315 = vst [vmem:[#allocation3] sm:$0xff] %v6251
        %6316 = vst [vmem:[#allocation3 + $0x8] sm:$0xff] %v6252
        %6317 = vst [vmem:[#allocation3 + $0x10] sm:$0xff] %v6253
        %6318 = vst [vmem:[#allocation3 + $0x18] sm:$0xff] %v6254
        %6319 = vst [vmem:[#allocation3 + $0x20] sm:$0xff] %v6255
        %6320 = vst [vmem:[#allocation3 + $0x28] sm:$0xff] %v6256
        %6321 = vst [vmem:[#allocation3 + $0x30] sm:$0xff] %v6257
        %6322 = vst [vmem:[#allocation3 + $0x38] sm:$0xff] %v6258
        %6323 = vst [vmem:[#allocation3 + $0x40] sm:$0xff] %v6259
        %6324 = vst [vmem:[#allocation3 + $0x48] sm:$0xff] %v6260
        %6325 = vst [vmem:[#allocation3 + $0x50] sm:$0xff] %v6261
        %6326 = vst [vmem:[#allocation3 + $0x58] sm:$0xff] %v6262
        %6327 = vst [vmem:[#allocation3 + $0x60] sm:$0xff] %v6263
        %6328 = vst [vmem:[#allocation3 + $0x68] sm:$0xff] %v6264
        %6329 = vst [vmem:[#allocation3 + $0x70] sm:$0xff] %v6265
        %6330 = vst [vmem:[#allocation3 + $0x78] sm:$0xff] %v6266
        %6331 = vst [vmem:[#allocation3 + $0x80] sm:$0xff] %v6267
        %6332 = vst [vmem:[#allocation3 + $0x88] sm:$0xff] %v6268
        %6333 = vst [vmem:[#allocation3 + $0x90] sm:$0xff] %v6269
        %6334 = vst [vmem:[#allocation3 + $0x98] sm:$0xff] %v6270
        %6335 = vst [vmem:[#allocation3 + $0xa0] sm:$0xff] %v6271
        %6336 = vst [vmem:[#allocation3 + $0xa8] sm:$0xff] %v6272
        %6337 = vst [vmem:[#allocation3 + $0xb0] sm:$0xff] %v6273
        %6338 = vst [vmem:[#allocation3 + $0xb8] sm:$0xff] %v6274
        %6339 = vst [vmem:[#allocation3 + $0xc0] sm:$0xff] %v6275
        %6340 = vst [vmem:[#allocation3 + $0xc8] sm:$0xff] %v6276
        %6341 = vst [vmem:[#allocation3 + $0xd0] sm:$0xff] %v6277
        %6342 = vst [vmem:[#allocation3 + $0xd8] sm:$0xff] %v6278
        %6343 = vst [vmem:[#allocation3 + $0xe0] sm:$0xff] %v6279
        %6344 = vst [vmem:[#allocation3 + $0xe8] sm:$0xff] %v6280
        %6345 = vst [vmem:[#allocation3 + $0xf0] sm:$0xff] %v6281
        %6346 = vst [vmem:[#allocation3 + $0xf8] sm:$0xff] %v6282
        %6347 = vst [vmem:[#allocation3 + $0x100] sm:$0xff] %v6283
        %6348 = vst [vmem:[#allocation3 + $0x108] sm:$0xff] %v6284
        %6349 = vst [vmem:[#allocation3 + $0x110] sm:$0xff] %v6285
        %6350 = vst [vmem:[#allocation3 + $0x118] sm:$0xff] %v6286
        %6351 = vst [vmem:[#allocation3 + $0x120] sm:$0xff] %v6287
        %6352 = vst [vmem:[#allocation3 + $0x128] sm:$0xff] %v6288
        %6353 = vst [vmem:[#allocation3 + $0x130] sm:$0xff] %v6289
        %6354 = vst [vmem:[#allocation3 + $0x138] sm:$0xff] %v6290
        %6355 = vst [vmem:[#allocation3 + $0x140] sm:$0xff] %v6291
        %6356 = vst [vmem:[#allocation3 + $0x148] sm:$0xff] %v6292
        %6357 = vst [vmem:[#allocation3 + $0x150] sm:$0xff] %v6293
        %6358 = vst [vmem:[#allocation3 + $0x158] sm:$0xff] %v6294
        %6359 = vst [vmem:[#allocation3 + $0x160] sm:$0xff] %v6295
        %6360 = vst [vmem:[#allocation3 + $0x168] sm:$0xff] %v6296
        %6361 = vst [vmem:[#allocation3 + $0x170] sm:$0xff] %v6297
        %6362 = vst [vmem:[#allocation3 + $0x178] sm:$0xff] %v6298
        %6363 = vst [vmem:[#allocation3 + $0x180] sm:$0xff] %v6299
        %6364 = vst [vmem:[#allocation3 + $0x188] sm:$0xff] %v6300
        %6365 = vst [vmem:[#allocation3 + $0x190] sm:$0xff] %v6301
        %6366 = vst [vmem:[#allocation3 + $0x198] sm:$0xff] %v6302
        %6367 = vst [vmem:[#allocation3 + $0x1a0] sm:$0xff] %v6303
        %6368 = vst [vmem:[#allocation3 + $0x1a8] sm:$0xff] %v6304
        %6369 = vst [vmem:[#allocation3 + $0x1b0] sm:$0xff] %v6305
        %6370 = vst [vmem:[#allocation3 + $0x1b8] sm:$0xff] %v6306
        %6371 = vst [vmem:[#allocation3 + $0x1c0] sm:$0xff] %v6307
        %6372 = vst [vmem:[#allocation3 + $0x1c8] sm:$0xff] %v6308
        %6373 = vst [vmem:[#allocation3 + $0x1d0] sm:$0xff] %v6309
        %6374 = vst [vmem:[#allocation3 + $0x1d8] sm:$0xff] %v6310
        %6375 = vst [vmem:[#allocation3 + $0x1e0] sm:$0xff] %v6311
        %6376 = vst [vmem:[#allocation3 + $0x1e8] sm:$0xff] %v6312
        %6377 = vst [vmem:[#allocation3 + $0x1f0] sm:$0xff] %v6313
        %6378 = vst [vmem:[#allocation3 + $0x1f8] sm:$0xff] %v6314
        %s6379 = scalar_lea.vmem [#allocation2], 48
        %v6380 = vld [vmem:[%s6379] sm:$0xf]
        %v6381 = vld [vmem:[%s6379 + $0x4] sm:$0xf]
        %v6382 = vld [vmem:[%s6379 + $0x8] sm:$0xf]
        %v6383 = vld [vmem:[%s6379 + $0xc] sm:$0xf]
        %v6384 = vld [vmem:[%s6379 + $0x10] sm:$0xf]
        %v6385 = vld [vmem:[%s6379 + $0x14] sm:$0xf]
        %v6386 = vld [vmem:[%s6379 + $0x18] sm:$0xf]
        %v6387 = vld [vmem:[%s6379 + $0x1c] sm:$0xf]
        %v6388 = vld [vmem:[%s6379 + $0x28] sm:$0xf]
        %v6389 = vld [vmem:[%s6379 + $0x2c] sm:$0xf]
        %v6390 = vld [vmem:[%s6379 + $0x30] sm:$0xf]
        %v6391 = vld [vmem:[%s6379 + $0x34] sm:$0xf]
        %v6392 = vld [vmem:[%s6379 + $0x38] sm:$0xf]
        %v6393 = vld [vmem:[%s6379 + $0x3c] sm:$0xf]
        %v6394 = vld [vmem:[%s6379 + $0x40] sm:$0xf]
        %v6395 = vld [vmem:[%s6379 + $0x44] sm:$0xf]
        %v6396 = vld [vmem:[%s6379 + $0x50] sm:$0xf]
        %v6397 = vld [vmem:[%s6379 + $0x54] sm:$0xf]
        %v6398 = vld [vmem:[%s6379 + $0x58] sm:$0xf]
        %v6399 = vld [vmem:[%s6379 + $0x5c] sm:$0xf]
        %v6400 = vld [vmem:[%s6379 + $0x60] sm:$0xf]
        %v6401 = vld [vmem:[%s6379 + $0x64] sm:$0xf]
        %v6402 = vld [vmem:[%s6379 + $0x68] sm:$0xf]
        %v6403 = vld [vmem:[%s6379 + $0x6c] sm:$0xf]
        %v6404 = vld [vmem:[%s6379 + $0x78] sm:$0xf]
        %v6405 = vld [vmem:[%s6379 + $0x7c] sm:$0xf]
        %v6406 = vld [vmem:[%s6379 + $0x80] sm:$0xf]
        %v6407 = vld [vmem:[%s6379 + $0x84] sm:$0xf]
        %v6408 = vld [vmem:[%s6379 + $0x88] sm:$0xf]
        %v6409 = vld [vmem:[%s6379 + $0x8c] sm:$0xf]
        %v6410 = vld [vmem:[%s6379 + $0x90] sm:$0xf]
        %v6411 = vld [vmem:[%s6379 + $0x94] sm:$0xf]
        %v6412 = vld [vmem:[%s6379 + $0xa0] sm:$0xf]
        %v6413 = vld [vmem:[%s6379 + $0xa4] sm:$0xf]
        %v6414 = vld [vmem:[%s6379 + $0xa8] sm:$0xf]
        %v6415 = vld [vmem:[%s6379 + $0xac] sm:$0xf]
        %v6416 = vld [vmem:[%s6379 + $0xb0] sm:$0xf]
        %v6417 = vld [vmem:[%s6379 + $0xb4] sm:$0xf]
        %v6418 = vld [vmem:[%s6379 + $0xb8] sm:$0xf]
        %v6419 = vld [vmem:[%s6379 + $0xbc] sm:$0xf]
        %v6420 = vld [vmem:[%s6379 + $0xc8] sm:$0xf]
        %v6421 = vld [vmem:[%s6379 + $0xcc] sm:$0xf]
        %v6422 = vld [vmem:[%s6379 + $0xd0] sm:$0xf]
        %v6423 = vld [vmem:[%s6379 + $0xd4] sm:$0xf]
        %v6424 = vld [vmem:[%s6379 + $0xd8] sm:$0xf]
        %v6425 = vld [vmem:[%s6379 + $0xdc] sm:$0xf]
        %v6426 = vld [vmem:[%s6379 + $0xe0] sm:$0xf]
        %v6427 = vld [vmem:[%s6379 + $0xe4] sm:$0xf]
        %v6428 = vld [vmem:[%s6379 + $0xf0] sm:$0xf]
        %v6429 = vld [vmem:[%s6379 + $0xf4] sm:$0xf]
        %v6430 = vld [vmem:[%s6379 + $0xf8] sm:$0xf]
        %v6431 = vld [vmem:[%s6379 + $0xfc] sm:$0xf]
        %v6432 = vld [vmem:[%s6379 + $0x100] sm:$0xf]
        %v6433 = vld [vmem:[%s6379 + $0x104] sm:$0xf]
        %v6434 = vld [vmem:[%s6379 + $0x108] sm:$0xf]
        %v6435 = vld [vmem:[%s6379 + $0x10c] sm:$0xf]
        %v6436 = vld [vmem:[%s6379 + $0x118] sm:$0xf]
        %v6437 = vld [vmem:[%s6379 + $0x11c] sm:$0xf]
        %v6438 = vld [vmem:[%s6379 + $0x120] sm:$0xf]
        %v6439 = vld [vmem:[%s6379 + $0x124] sm:$0xf]
        %v6440 = vld [vmem:[%s6379 + $0x128] sm:$0xf]
        %v6441 = vld [vmem:[%s6379 + $0x12c] sm:$0xf]
        %v6442 = vld [vmem:[%s6379 + $0x130] sm:$0xf]
        %v6443 = vld [vmem:[%s6379 + $0x134] sm:$0xf]
        %v6444 = vld [vmem:[#allocation3] sm:$0xff]
        %v6445 = vld [vmem:[#allocation3 + $0x8] sm:$0xff]
        %v6446 = vld [vmem:[#allocation3 + $0x10] sm:$0xff]
        %v6447 = vld [vmem:[#allocation3 + $0x18] sm:$0xff]
        %v6448 = vld [vmem:[#allocation3 + $0x20] sm:$0xff]
        %v6449 = vld [vmem:[#allocation3 + $0x28] sm:$0xff]
        %v6450 = vld [vmem:[#allocation3 + $0x30] sm:$0xff]
        %v6451 = vld [vmem:[#allocation3 + $0x38] sm:$0xff]
        %v6452 = vld [vmem:[#allocation3 + $0x40] sm:$0xff]
        %v6453 = vld [vmem:[#allocation3 + $0x48] sm:$0xff]
        %v6454 = vld [vmem:[#allocation3 + $0x50] sm:$0xff]
        %v6455 = vld [vmem:[#allocation3 + $0x58] sm:$0xff]
        %v6456 = vld [vmem:[#allocation3 + $0x60] sm:$0xff]
        %v6457 = vld [vmem:[#allocation3 + $0x68] sm:$0xff]
        %v6458 = vld [vmem:[#allocation3 + $0x70] sm:$0xff]
        %v6459 = vld [vmem:[#allocation3 + $0x78] sm:$0xff]
        %v6460 = vld [vmem:[#allocation3 + $0x80] sm:$0xff]
        %v6461 = vld [vmem:[#allocation3 + $0x88] sm:$0xff]
        %v6462 = vld [vmem:[#allocation3 + $0x90] sm:$0xff]
        %v6463 = vld [vmem:[#allocation3 + $0x98] sm:$0xff]
        %v6464 = vld [vmem:[#allocation3 + $0xa0] sm:$0xff]
        %v6465 = vld [vmem:[#allocation3 + $0xa8] sm:$0xff]
        %v6466 = vld [vmem:[#allocation3 + $0xb0] sm:$0xff]
        %v6467 = vld [vmem:[#allocation3 + $0xb8] sm:$0xff]
        %v6468 = vld [vmem:[#allocation3 + $0xc0] sm:$0xff]
        %v6469 = vld [vmem:[#allocation3 + $0xc8] sm:$0xff]
        %v6470 = vld [vmem:[#allocation3 + $0xd0] sm:$0xff]
        %v6471 = vld [vmem:[#allocation3 + $0xd8] sm:$0xff]
        %v6472 = vld [vmem:[#allocation3 + $0xe0] sm:$0xff]
        %v6473 = vld [vmem:[#allocation3 + $0xe8] sm:$0xff]
        %v6474 = vld [vmem:[#allocation3 + $0xf0] sm:$0xff]
        %v6475 = vld [vmem:[#allocation3 + $0xf8] sm:$0xff]
        %v6476 = vld [vmem:[#allocation3 + $0x100] sm:$0xff]
        %v6477 = vld [vmem:[#allocation3 + $0x108] sm:$0xff]
        %v6478 = vld [vmem:[#allocation3 + $0x110] sm:$0xff]
        %v6479 = vld [vmem:[#allocation3 + $0x118] sm:$0xff]
        %v6480 = vld [vmem:[#allocation3 + $0x120] sm:$0xff]
        %v6481 = vld [vmem:[#allocation3 + $0x128] sm:$0xff]
        %v6482 = vld [vmem:[#allocation3 + $0x130] sm:$0xff]
        %v6483 = vld [vmem:[#allocation3 + $0x138] sm:$0xff]
        %v6484 = vld [vmem:[#allocation3 + $0x140] sm:$0xff]
        %v6485 = vld [vmem:[#allocation3 + $0x148] sm:$0xff]
        %v6486 = vld [vmem:[#allocation3 + $0x150] sm:$0xff]
        %v6487 = vld [vmem:[#allocation3 + $0x158] sm:$0xff]
        %v6488 = vld [vmem:[#allocation3 + $0x160] sm:$0xff]
        %v6489 = vld [vmem:[#allocation3 + $0x168] sm:$0xff]
        %v6490 = vld [vmem:[#allocation3 + $0x170] sm:$0xff]
        %v6491 = vld [vmem:[#allocation3 + $0x178] sm:$0xff]
        %v6492 = vld [vmem:[#allocation3 + $0x180] sm:$0xff]
        %v6493 = vld [vmem:[#allocation3 + $0x188] sm:$0xff]
        %v6494 = vld [vmem:[#allocation3 + $0x190] sm:$0xff]
        %v6495 = vld [vmem:[#allocation3 + $0x198] sm:$0xff]
        %v6496 = vld [vmem:[#allocation3 + $0x1a0] sm:$0xff]
        %v6497 = vld [vmem:[#allocation3 + $0x1a8] sm:$0xff]
        %v6498 = vld [vmem:[#allocation3 + $0x1b0] sm:$0xff]
        %v6499 = vld [vmem:[#allocation3 + $0x1b8] sm:$0xff]
        %v6500 = vld [vmem:[#allocation3 + $0x1c0] sm:$0xff]
        %v6501 = vld [vmem:[#allocation3 + $0x1c8] sm:$0xff]
        %v6502 = vld [vmem:[#allocation3 + $0x1d0] sm:$0xff]
        %v6503 = vld [vmem:[#allocation3 + $0x1d8] sm:$0xff]
        %v6504 = vld [vmem:[#allocation3 + $0x1e0] sm:$0xff]
        %v6505 = vld [vmem:[#allocation3 + $0x1e8] sm:$0xff]
        %v6506 = vld [vmem:[#allocation3 + $0x1f0] sm:$0xff]
        %v6507 = vld [vmem:[#allocation3 + $0x1f8] sm:$0xff]
        %s6508 = scalar_lea.vmem [#allocation7], 120
        %v6509 = vld [vmem:[%s6508] sm:$0xf]
        %v6510 = vld [vmem:[%s6508 + $0x4] sm:$0xf]
        %v6511 = vld [vmem:[%s6508 + $0x8] sm:$0xf]
        %v6512 = vld [vmem:[%s6508 + $0xc] sm:$0xf]
        %v6513 = vld [vmem:[%s6508 + $0x10] sm:$0xf]
        %v6514 = vld [vmem:[%s6508 + $0x14] sm:$0xf]
        %v6579 = vunpack.c.l.b16 %v6380
        %v6580 = vunpack.c.l.b16 %v6381
        %v6581 = vunpack.c.l.b16 %v6382
        %v6582 = vunpack.c.l.b16 %v6383
        %v6583 = vunpack.c.l.b16 %v6384
        %v6584 = vunpack.c.l.b16 %v6385
        %v6585 = vunpack.c.l.b16 %v6386
        %v6586 = vunpack.c.l.b16 %v6387
        %v6587 = vunpack.c.l.b16 %v6388
        %v6588 = vunpack.c.l.b16 %v6389
        %v6589 = vunpack.c.l.b16 %v6390
        %v6590 = vunpack.c.l.b16 %v6391
        %v6591 = vunpack.c.l.b16 %v6392
        %v6592 = vunpack.c.l.b16 %v6393
        %v6593 = vunpack.c.l.b16 %v6394
        %v6594 = vunpack.c.l.b16 %v6395
        %v6595 = vunpack.c.l.b16 %v6396
        %v6596 = vunpack.c.l.b16 %v6397
        %v6597 = vunpack.c.l.b16 %v6398
        %v6598 = vunpack.c.l.b16 %v6399
        %v6599 = vunpack.c.l.b16 %v6400
        %v6600 = vunpack.c.l.b16 %v6401
        %v6601 = vunpack.c.l.b16 %v6402
        %v6602 = vunpack.c.l.b16 %v6403
        %v6603 = vunpack.c.l.b16 %v6404
        %v6604 = vunpack.c.l.b16 %v6405
        %v6605 = vunpack.c.l.b16 %v6406
        %v6606 = vunpack.c.l.b16 %v6407
        %v6607 = vunpack.c.l.b16 %v6408
        %v6608 = vunpack.c.l.b16 %v6409
        %v6609 = vunpack.c.l.b16 %v6410
        %v6610 = vunpack.c.l.b16 %v6411
        %v6611 = vunpack.c.l.b16 %v6412
        %v6612 = vunpack.c.l.b16 %v6413
        %v6613 = vunpack.c.l.b16 %v6414
        %v6614 = vunpack.c.l.b16 %v6415
        %v6615 = vunpack.c.l.b16 %v6416
        %v6616 = vunpack.c.l.b16 %v6417
        %v6617 = vunpack.c.l.b16 %v6418
        %v6618 = vunpack.c.l.b16 %v6419
        %v6619 = vunpack.c.l.b16 %v6420
        %v6620 = vunpack.c.l.b16 %v6421
        %v6621 = vunpack.c.l.b16 %v6422
        %v6622 = vunpack.c.l.b16 %v6423
        %v6623 = vunpack.c.l.b16 %v6424
        %v6624 = vunpack.c.l.b16 %v6425
        %v6625 = vunpack.c.l.b16 %v6426
        %v6626 = vunpack.c.l.b16 %v6427
        %v6627 = vunpack.c.l.b16 %v6428
        %v6628 = vunpack.c.l.b16 %v6429
        %v6629 = vunpack.c.l.b16 %v6430
        %v6630 = vunpack.c.l.b16 %v6431
        %v6631 = vunpack.c.l.b16 %v6432
        %v6632 = vunpack.c.l.b16 %v6433
        %v6633 = vunpack.c.l.b16 %v6434
        %v6634 = vunpack.c.l.b16 %v6435
        %v6635 = vunpack.c.l.b16 %v6436
        %v6636 = vunpack.c.l.b16 %v6437
        %v6637 = vunpack.c.l.b16 %v6438
        %v6638 = vunpack.c.l.b16 %v6439
        %v6639 = vunpack.c.l.b16 %v6440
        %v6640 = vunpack.c.l.b16 %v6441
        %v6641 = vunpack.c.l.b16 %v6442
        %v6642 = vunpack.c.l.b16 %v6443
        %v6643 = vpack.c.b16 %v6580, %v6579
        %v6644 = vpack.c.b16 %v6582, %v6581
        %v6645 = vpack.c.b16 %v6584, %v6583
        %v6646 = vpack.c.b16 %v6586, %v6585
        %v6647 = vpack.c.b16 %v6588, %v6587
        %v6648 = vpack.c.b16 %v6590, %v6589
        %v6649 = vpack.c.b16 %v6592, %v6591
        %v6650 = vpack.c.b16 %v6594, %v6593
        %v6651 = vpack.c.b16 %v6596, %v6595
        %v6652 = vpack.c.b16 %v6598, %v6597
        %v6653 = vpack.c.b16 %v6600, %v6599
        %v6654 = vpack.c.b16 %v6602, %v6601
        %v6655 = vpack.c.b16 %v6604, %v6603
        %v6656 = vpack.c.b16 %v6606, %v6605
        %v6657 = vpack.c.b16 %v6608, %v6607
        %v6658 = vpack.c.b16 %v6610, %v6609
        %v6659 = vpack.c.b16 %v6612, %v6611
        %v6660 = vpack.c.b16 %v6614, %v6613
        %v6661 = vpack.c.b16 %v6616, %v6615
        %v6662 = vpack.c.b16 %v6618, %v6617
        %v6663 = vpack.c.b16 %v6620, %v6619
        %v6664 = vpack.c.b16 %v6622, %v6621
        %v6665 = vpack.c.b16 %v6624, %v6623
        %v6666 = vpack.c.b16 %v6626, %v6625
        %v6667 = vpack.c.b16 %v6628, %v6627
        %v6668 = vpack.c.b16 %v6630, %v6629
        %v6669 = vpack.c.b16 %v6632, %v6631
        %v6670 = vpack.c.b16 %v6634, %v6633
        %v6671 = vpack.c.b16 %v6636, %v6635
        %v6672 = vpack.c.b16 %v6638, %v6637
        %v6673 = vpack.c.b16 %v6640, %v6639
        %v6674 = vpack.c.b16 %v6642, %v6641
        %v6681 = vunpack.c.l.b16 %v6509
        %v6682 = vunpack.c.l.b16 %v6510
        %v6683 = vunpack.c.l.b16 %v6511
        %v6684 = vunpack.c.l.b16 %v6512
        %v6685 = vunpack.c.l.b16 %v6513
        %v6686 = vunpack.c.l.b16 %v6514
        %v6687 = vpack.c.b16 %v6682, %v6681
        %v6688 = vpack.c.b16 %v6684, %v6683
        %v6689 = vpack.c.b16 %v6686, %v6685
        %v6694 = vsel %vm2558, %v6643, 0
        %v6697 = vsel %vm2558, %v6644, 0
        %v6700 = vsel %vm2558, %v6645, 0
        %v6703 = vsel %vm2558, %v6646, 0
        %v6706 = vsel %vm2558, %v6647, 0
        %v6709 = vsel %vm2558, %v6648, 0
        %v6712 = vsel %vm2558, %v6649, 0
        %v6715 = vsel %vm2558, %v6650, 0
        %v6718 = vsel %vm2558, %v6651, 0
        %v6721 = vsel %vm2558, %v6652, 0
        %v6724 = vsel %vm2558, %v6653, 0
        %v6727 = vsel %vm2558, %v6654, 0
        %v6730 = vsel %vm2558, %v6655, 0
        %v6733 = vsel %vm2558, %v6656, 0
        %v6736 = vsel %vm2558, %v6657, 0
        %v6739 = vsel %vm2558, %v6658, 0
        %v6742 = vsel %vm2558, %v6659, 0
        %v6745 = vsel %vm2558, %v6660, 0
        %v6748 = vsel %vm2558, %v6661, 0
        %v6751 = vsel %vm2558, %v6662, 0
        %v6754 = vsel %vm2558, %v6663, 0
        %v6757 = vsel %vm2558, %v6664, 0
        %v6760 = vsel %vm2558, %v6665, 0
        %v6763 = vsel %vm2558, %v6666, 0
        %v6766 = vsel %vm2558, %v6667, 0
        %v6769 = vsel %vm2558, %v6668, 0
        %v6772 = vsel %vm2558, %v6669, 0
        %v6775 = vsel %vm2558, %v6670, 0
        %v6778 = vsel %vm2558, %v6671, 0
        %v6781 = vsel %vm2558, %v6672, 0
        %v6784 = vsel %vm2558, %v6673, 0
        %v6787 = vsel %vm2558, %v6674, 0
        %6789 = vmatprep.subr.bf16.mxu0 0
        %6790 = vmatpush1.bf16.msra.mxu0 %v6687
        %6791 = vmatprep.subr.bf16.mxu0 0
        %6792 = vmatpush1.bf16.msra.mxu0 %v6688
        %6793 = vmatprep.subr.bf16.mxu0 0
        %6794 = vmatpush1.bf16.msra.mxu0 %v6689
        %6795 = vmatprep.subr.bf16.mxu0 0
        %6796 = vmatpush1.bf16.msra.mxu0 0
        %6797 = vmatprep.subr.bf16.mxu0 0
        %6798 = vmatpush1.bf16.msra.mxu0 0
        %6799 = vmatprep.subr.bf16.mxu0 0
        %6800 = vmatpush1.bf16.msra.mxu0 0
        %6801 = vmatprep.subr.bf16.mxu0 0
        %6802 = vmatpush1.bf16.msra.mxu0 0
        %6803 = vmatprep.subr.bf16.mxu0 0
        %6804 = vmatpush1.bf16.msra.mxu0 0
        %6805 = vmatprep.subr.bf16.mxu0 0
        %6806 = vmatpush1.bf16.msra.mxu0 0
        %6807 = vmatprep.subr.bf16.mxu0 0
        %6808 = vmatpush1.bf16.msra.mxu0 0
        %6809 = vmatprep.subr.bf16.mxu0 0
        %6810 = vmatpush1.bf16.msra.mxu0 0
        %6811 = vmatprep.subr.bf16.mxu0 0
        %6812 = vmatpush1.bf16.msra.mxu0 0
        %6813 = vmatprep.subr.bf16.mxu0 0
        %6814 = vmatpush1.bf16.msra.mxu0 0
        %6815 = vmatprep.subr.bf16.mxu0 0
        %6816 = vmatpush1.bf16.msra.mxu0 0
        %6817 = vmatprep.subr.bf16.mxu0 0
        %6818 = vmatpush1.bf16.msra.mxu0 0
        %6819 = vmatprep.subr.bf16.mxu0 0
        %6820 = vmatpush1.bf16.msra.mxu0 0
        %6821 = vmatprep.mubr.bf16.mxu0 0
        %6822 = vmatmul.mubr.bf16.gmra.mrb[0].mxu0 %v6694
        %v6823 = vpop.f32.mrb[0].mxu0
        %v6824 = vadd.f32 0.0, %v6823
        %v6825 = vpop.f32.mrb[0].mxu0
        %v6826 = vpop.f32.mrb[0].mxu0
        %v6827 = vadd.f32 0.0, %v6826
        %v6828 = vpop.f32.mrb[0].mxu0
        %6829 = vmatprep.mubr.bf16.mxu0 0
        %6830 = vmatmul.mubr.bf16.gmra.mrb[0].mxu0 %v6697
        %v6831 = vpop.f32.mrb[0].mxu0
        %v6832 = vadd.f32 0.0, %v6831
        %v6833 = vpop.f32.mrb[0].mxu0
        %v6834 = vpop.f32.mrb[0].mxu0
        %v6835 = vadd.f32 0.0, %v6834
        %v6836 = vpop.f32.mrb[0].mxu0
        %6837 = vmatprep.mubr.bf16.mxu0 0
        %6838 = vmatmul.mubr.bf16.gmra.mrb[0].mxu0 %v6700
        %v6839 = vpop.f32.mrb[0].mxu0
        %v6840 = vadd.f32 0.0, %v6839
        %v6841 = vpop.f32.mrb[0].mxu0
        %v6842 = vpop.f32.mrb[0].mxu0
        %v6843 = vadd.f32 0.0, %v6842
        %v6844 = vpop.f32.mrb[0].mxu0
        %6845 = vmatprep.mubr.bf16.mxu0 0
        %6846 = vmatmul.mubr.bf16.gmra.mrb[0].mxu0 %v6703
        %v6847 = vpop.f32.mrb[0].mxu0
        %v6848 = vadd.f32 0.0, %v6847
        %v6849 = vpop.f32.mrb[0].mxu0
        %v6850 = vpop.f32.mrb[0].mxu0
        %v6851 = vadd.f32 0.0, %v6850
        %v6852 = vpop.f32.mrb[0].mxu0
        %6853 = vmatprep.mubr.bf16.mxu0 0
        %6854 = vmatmul.mubr.bf16.gmra.mrb[0].mxu0 %v6706
        %v6855 = vpop.f32.mrb[0].mxu0
        %v6856 = vadd.f32 0.0, %v6855
        %v6857 = vpop.f32.mrb[0].mxu0
        %v6858 = vpop.f32.mrb[0].mxu0
        %v6859 = vadd.f32 0.0, %v6858
        %v6860 = vpop.f32.mrb[0].mxu0
        %6861 = vmatprep.mubr.bf16.mxu0 0
        %6862 = vmatmul.mubr.bf16.gmra.mrb[0].mxu0 %v6709
        %v6863 = vpop.f32.mrb[0].mxu0
        %v6864 = vadd.f32 0.0, %v6863
        %v6865 = vpop.f32.mrb[0].mxu0
        %v6866 = vpop.f32.mrb[0].mxu0
        %v6867 = vadd.f32 0.0, %v6866
        %v6868 = vpop.f32.mrb[0].mxu0
        %6869 = vmatprep.mubr.bf16.mxu0 0
        %6870 = vmatmul.mubr.bf16.gmra.mrb[0].mxu0 %v6712
        %v6871 = vpop.f32.mrb[0].mxu0
        %v6872 = vadd.f32 0.0, %v6871
        %v6873 = vpop.f32.mrb[0].mxu0
        %v6874 = vpop.f32.mrb[0].mxu0
        %v6875 = vadd.f32 0.0, %v6874
        %v6876 = vpop.f32.mrb[0].mxu0
        %6877 = vmatprep.mubr.bf16.mxu0 0
        %6878 = vmatmul.mubr.bf16.gmra.mrb[0].mxu0 %v6715
        %v6879 = vpop.f32.mrb[0].mxu0
        %v6880 = vadd.f32 0.0, %v6879
        %v6881 = vpop.f32.mrb[0].mxu0
        %v6882 = vpop.f32.mrb[0].mxu0
        %v6883 = vadd.f32 0.0, %v6882
        %v6884 = vpop.f32.mrb[0].mxu0
        %6885 = vmatprep.mubr.bf16.mxu0 0
        %6886 = vmatmul.mubr.bf16.gmra.mrb[0].mxu0 %v6718
        %v6887 = vpop.f32.mrb[0].mxu0
        %v6888 = vadd.f32 0.0, %v6887
        %v6889 = vpop.f32.mrb[0].mxu0
        %v6890 = vpop.f32.mrb[0].mxu0
        %v6891 = vadd.f32 0.0, %v6890
        %v6892 = vpop.f32.mrb[0].mxu0
        %6893 = vmatprep.mubr.bf16.mxu0 0
        %6894 = vmatmul.mubr.bf16.gmra.mrb[0].mxu0 %v6721
        %v6895 = vpop.f32.mrb[0].mxu0
        %v6896 = vadd.f32 0.0, %v6895
        %v6897 = vpop.f32.mrb[0].mxu0
        %v6898 = vpop.f32.mrb[0].mxu0
        %v6899 = vadd.f32 0.0, %v6898
        %v6900 = vpop.f32.mrb[0].mxu0
        %6901 = vmatprep.mubr.bf16.mxu0 0
        %6902 = vmatmul.mubr.bf16.gmra.mrb[0].mxu0 %v6724
        %v6903 = vpop.f32.mrb[0].mxu0
        %v6904 = vadd.f32 0.0, %v6903
        %v6905 = vpop.f32.mrb[0].mxu0
        %v6906 = vpop.f32.mrb[0].mxu0
        %v6907 = vadd.f32 0.0, %v6906
        %v6908 = vpop.f32.mrb[0].mxu0
        %6909 = vmatprep.mubr.bf16.mxu0 0
        %6910 = vmatmul.mubr.bf16.gmra.mrb[0].mxu0 %v6727
        %v6911 = vpop.f32.mrb[0].mxu0
        %v6912 = vadd.f32 0.0, %v6911
        %v6913 = vpop.f32.mrb[0].mxu0
        %v6914 = vpop.f32.mrb[0].mxu0
        %v6915 = vadd.f32 0.0, %v6914
        %v6916 = vpop.f32.mrb[0].mxu0
        %6917 = vmatprep.mubr.bf16.mxu0 0
        %6918 = vmatmul.mubr.bf16.gmra.mrb[0].mxu0 %v6730
        %v6919 = vpop.f32.mrb[0].mxu0
        %v6920 = vadd.f32 0.0, %v6919
        %v6921 = vpop.f32.mrb[0].mxu0
        %v6922 = vpop.f32.mrb[0].mxu0
        %v6923 = vadd.f32 0.0, %v6922
        %v6924 = vpop.f32.mrb[0].mxu0
        %6925 = vmatprep.mubr.bf16.mxu0 0
        %6926 = vmatmul.mubr.bf16.gmra.mrb[0].mxu0 %v6733
        %v6927 = vpop.f32.mrb[0].mxu0
        %v6928 = vadd.f32 0.0, %v6927
        %v6929 = vpop.f32.mrb[0].mxu0
        %v6930 = vpop.f32.mrb[0].mxu0
        %v6931 = vadd.f32 0.0, %v6930
        %v6932 = vpop.f32.mrb[0].mxu0
        %6933 = vmatprep.mubr.bf16.mxu0 0
        %6934 = vmatmul.mubr.bf16.gmra.mrb[0].mxu0 %v6736
        %v6935 = vpop.f32.mrb[0].mxu0
        %v6936 = vadd.f32 0.0, %v6935
        %v6937 = vpop.f32.mrb[0].mxu0
        %v6938 = vpop.f32.mrb[0].mxu0
        %v6939 = vadd.f32 0.0, %v6938
        %v6940 = vpop.f32.mrb[0].mxu0
        %6941 = vmatprep.mubr.bf16.mxu0 0
        %6942 = vmatmul.mubr.bf16.gmra.mrb[0].mxu0 %v6739
        %v6943 = vpop.f32.mrb[0].mxu0
        %v6944 = vadd.f32 0.0, %v6943
        %v6945 = vpop.f32.mrb[0].mxu0
        %v6946 = vpop.f32.mrb[0].mxu0
        %v6947 = vadd.f32 0.0, %v6946
        %v6948 = vpop.f32.mrb[0].mxu0
        %6949 = vmatprep.mubr.bf16.mxu0 0
        %6950 = vmatmul.mubr.bf16.gmra.mrb[0].mxu0 %v6742
        %v6951 = vpop.f32.mrb[0].mxu0
        %v6952 = vadd.f32 0.0, %v6951
        %v6953 = vpop.f32.mrb[0].mxu0
        %v6954 = vpop.f32.mrb[0].mxu0
        %v6955 = vadd.f32 0.0, %v6954
        %v6956 = vpop.f32.mrb[0].mxu0
        %6957 = vmatprep.mubr.bf16.mxu0 0
        %6958 = vmatmul.mubr.bf16.gmra.mrb[0].mxu0 %v6745
        %v6959 = vpop.f32.mrb[0].mxu0
        %v6960 = vadd.f32 0.0, %v6959
        %v6961 = vpop.f32.mrb[0].mxu0
        %v6962 = vpop.f32.mrb[0].mxu0
        %v6963 = vadd.f32 0.0, %v6962
        %v6964 = vpop.f32.mrb[0].mxu0
        %6965 = vmatprep.mubr.bf16.mxu0 0
        %6966 = vmatmul.mubr.bf16.gmra.mrb[0].mxu0 %v6748
        %v6967 = vpop.f32.mrb[0].mxu0
        %v6968 = vadd.f32 0.0, %v6967
        %v6969 = vpop.f32.mrb[0].mxu0
        %v6970 = vpop.f32.mrb[0].mxu0
        %v6971 = vadd.f32 0.0, %v6970
        %v6972 = vpop.f32.mrb[0].mxu0
        %6973 = vmatprep.mubr.bf16.mxu0 0
        %6974 = vmatmul.mubr.bf16.gmra.mrb[0].mxu0 %v6751
        %v6975 = vpop.f32.mrb[0].mxu0
        %v6976 = vadd.f32 0.0, %v6975
        %v6977 = vpop.f32.mrb[0].mxu0
        %v6978 = vpop.f32.mrb[0].mxu0
        %v6979 = vadd.f32 0.0, %v6978
        %v6980 = vpop.f32.mrb[0].mxu0
        %6981 = vmatprep.mubr.bf16.mxu0 0
        %6982 = vmatmul.mubr.bf16.gmra.mrb[0].mxu0 %v6754
        %v6983 = vpop.f32.mrb[0].mxu0
        %v6984 = vadd.f32 0.0, %v6983
        %v6985 = vpop.f32.mrb[0].mxu0
        %v6986 = vpop.f32.mrb[0].mxu0
        %v6987 = vadd.f32 0.0, %v6986
        %v6988 = vpop.f32.mrb[0].mxu0
        %6989 = vmatprep.mubr.bf16.mxu0 0
        %6990 = vmatmul.mubr.bf16.gmra.mrb[0].mxu0 %v6757
        %v6991 = vpop.f32.mrb[0].mxu0
        %v6992 = vadd.f32 0.0, %v6991
        %v6993 = vpop.f32.mrb[0].mxu0
        %v6994 = vpop.f32.mrb[0].mxu0
        %v6995 = vadd.f32 0.0, %v6994
        %v6996 = vpop.f32.mrb[0].mxu0
        %6997 = vmatprep.mubr.bf16.mxu0 0
        %6998 = vmatmul.mubr.bf16.gmra.mrb[0].mxu0 %v6760
        %v6999 = vpop.f32.mrb[0].mxu0
        %v7000 = vadd.f32 0.0, %v6999
        %v7001 = vpop.f32.mrb[0].mxu0
        %v7002 = vpop.f32.mrb[0].mxu0
        %v7003 = vadd.f32 0.0, %v7002
        %v7004 = vpop.f32.mrb[0].mxu0
        %7005 = vmatprep.mubr.bf16.mxu0 0
        %7006 = vmatmul.mubr.bf16.gmra.mrb[0].mxu0 %v6763
        %v7007 = vpop.f32.mrb[0].mxu0
        %v7008 = vadd.f32 0.0, %v7007
        %v7009 = vpop.f32.mrb[0].mxu0
        %v7010 = vpop.f32.mrb[0].mxu0
        %v7011 = vadd.f32 0.0, %v7010
        %v7012 = vpop.f32.mrb[0].mxu0
        %7013 = vmatprep.mubr.bf16.mxu0 0
        %7014 = vmatmul.mubr.bf16.gmra.mrb[0].mxu0 %v6766
        %v7015 = vpop.f32.mrb[0].mxu0
        %v7016 = vadd.f32 0.0, %v7015
        %v7017 = vpop.f32.mrb[0].mxu0
        %v7018 = vpop.f32.mrb[0].mxu0
        %v7019 = vadd.f32 0.0, %v7018
        %v7020 = vpop.f32.mrb[0].mxu0
        %7021 = vmatprep.mubr.bf16.mxu0 0
        %7022 = vmatmul.mubr.bf16.gmra.mrb[0].mxu0 %v6769
        %v7023 = vpop.f32.mrb[0].mxu0
        %v7024 = vadd.f32 0.0, %v7023
        %v7025 = vpop.f32.mrb[0].mxu0
        %v7026 = vpop.f32.mrb[0].mxu0
        %v7027 = vadd.f32 0.0, %v7026
        %v7028 = vpop.f32.mrb[0].mxu0
        %7029 = vmatprep.mubr.bf16.mxu0 0
        %7030 = vmatmul.mubr.bf16.gmra.mrb[0].mxu0 %v6772
        %v7031 = vpop.f32.mrb[0].mxu0
        %v7032 = vadd.f32 0.0, %v7031
        %v7033 = vpop.f32.mrb[0].mxu0
        %v7034 = vpop.f32.mrb[0].mxu0
        %v7035 = vadd.f32 0.0, %v7034
        %v7036 = vpop.f32.mrb[0].mxu0
        %7037 = vmatprep.mubr.bf16.mxu0 0
        %7038 = vmatmul.mubr.bf16.gmra.mrb[0].mxu0 %v6775
        %v7039 = vpop.f32.mrb[0].mxu0
        %v7040 = vadd.f32 0.0, %v7039
        %v7041 = vpop.f32.mrb[0].mxu0
        %v7042 = vpop.f32.mrb[0].mxu0
        %v7043 = vadd.f32 0.0, %v7042
        %v7044 = vpop.f32.mrb[0].mxu0
        %7045 = vmatprep.mubr.bf16.mxu0 0
        %7046 = vmatmul.mubr.bf16.gmra.mrb[0].mxu0 %v6778
        %v7047 = vpop.f32.mrb[0].mxu0
        %v7048 = vadd.f32 0.0, %v7047
        %v7049 = vpop.f32.mrb[0].mxu0
        %v7050 = vpop.f32.mrb[0].mxu0
        %v7051 = vadd.f32 0.0, %v7050
        %v7052 = vpop.f32.mrb[0].mxu0
        %7053 = vmatprep.mubr.bf16.mxu0 0
        %7054 = vmatmul.mubr.bf16.gmra.mrb[0].mxu0 %v6781
        %v7055 = vpop.f32.mrb[0].mxu0
        %v7056 = vadd.f32 0.0, %v7055
        %v7057 = vpop.f32.mrb[0].mxu0
        %v7058 = vpop.f32.mrb[0].mxu0
        %v7059 = vadd.f32 0.0, %v7058
        %v7060 = vpop.f32.mrb[0].mxu0
        %7061 = vmatprep.mubr.bf16.mxu0 0
        %7062 = vmatmul.mubr.bf16.gmra.mrb[0].mxu0 %v6784
        %v7063 = vpop.f32.mrb[0].mxu0
        %v7064 = vadd.f32 0.0, %v7063
        %v7065 = vpop.f32.mrb[0].mxu0
        %v7066 = vpop.f32.mrb[0].mxu0
        %v7067 = vadd.f32 0.0, %v7066
        %v7068 = vpop.f32.mrb[0].mxu0
        %7069 = vmatprep.mubr.bf16.mxu0 0
        %7070 = vmatmul.mubr.bf16.gmra.mrb[0].mxu0 %v6787
        %v7071 = vpop.f32.mrb[0].mxu0
        %v7072 = vadd.f32 0.0, %v7071
        %v7073 = vpop.f32.mrb[0].mxu0
        %v7074 = vpop.f32.mrb[0].mxu0
        %v7075 = vadd.f32 0.0, %v7074
        %v7076 = vpop.f32.mrb[0].mxu0
        %7077 = vdwg.mxu0
        %v7078 = vadd.f32 %v6444, %v6824
        %v7079 = vadd.f32 %v6445, %v6827
        %v7080 = vadd.f32 %v6446, %v6832
        %v7081 = vadd.f32 %v6447, %v6835
        %v7082 = vadd.f32 %v6448, %v6840
        %v7083 = vadd.f32 %v6449, %v6843
        %v7084 = vadd.f32 %v6450, %v6848
        %v7085 = vadd.f32 %v6451, %v6851
        %v7086 = vadd.f32 %v6452, %v6856
        %v7087 = vadd.f32 %v6453, %v6859
        %v7088 = vadd.f32 %v6454, %v6864
        %v7089 = vadd.f32 %v6455, %v6867
        %v7090 = vadd.f32 %v6456, %v6872
        %v7091 = vadd.f32 %v6457, %v6875
        %v7092 = vadd.f32 %v6458, %v6880
        %v7093 = vadd.f32 %v6459, %v6883
        %v7094 = vadd.f32 %v6460, %v6888
        %v7095 = vadd.f32 %v6461, %v6891
        %v7096 = vadd.f32 %v6462, %v6896
        %v7097 = vadd.f32 %v6463, %v6899
        %v7098 = vadd.f32 %v6464, %v6904
        %v7099 = vadd.f32 %v6465, %v6907
        %v7100 = vadd.f32 %v6466, %v6912
        %v7101 = vadd.f32 %v6467, %v6915
        %v7102 = vadd.f32 %v6468, %v6920
        %v7103 = vadd.f32 %v6469, %v6923
        %v7104 = vadd.f32 %v6470, %v6928
        %v7105 = vadd.f32 %v6471, %v6931
        %v7106 = vadd.f32 %v6472, %v6936
        %v7107 = vadd.f32 %v6473, %v6939
        %v7108 = vadd.f32 %v6474, %v6944
        %v7109 = vadd.f32 %v6475, %v6947
        %v7110 = vadd.f32 %v6476, %v6952
        %v7111 = vadd.f32 %v6477, %v6955
        %v7112 = vadd.f32 %v6478, %v6960
        %v7113 = vadd.f32 %v6479, %v6963
        %v7114 = vadd.f32 %v6480, %v6968
        %v7115 = vadd.f32 %v6481, %v6971
        %v7116 = vadd.f32 %v6482, %v6976
        %v7117 = vadd.f32 %v6483, %v6979
        %v7118 = vadd.f32 %v6484, %v6984
        %v7119 = vadd.f32 %v6485, %v6987
        %v7120 = vadd.f32 %v6486, %v6992
        %v7121 = vadd.f32 %v6487, %v6995
        %v7122 = vadd.f32 %v6488, %v7000
        %v7123 = vadd.f32 %v6489, %v7003
        %v7124 = vadd.f32 %v6490, %v7008
        %v7125 = vadd.f32 %v6491, %v7011
        %v7126 = vadd.f32 %v6492, %v7016
        %v7127 = vadd.f32 %v6493, %v7019
        %v7128 = vadd.f32 %v6494, %v7024
        %v7129 = vadd.f32 %v6495, %v7027
        %v7130 = vadd.f32 %v6496, %v7032
        %v7131 = vadd.f32 %v6497, %v7035
        %v7132 = vadd.f32 %v6498, %v7040
        %v7133 = vadd.f32 %v6499, %v7043
        %v7134 = vadd.f32 %v6500, %v7048
        %v7135 = vadd.f32 %v6501, %v7051
        %v7136 = vadd.f32 %v6502, %v7056
        %v7137 = vadd.f32 %v6503, %v7059
        %v7138 = vadd.f32 %v6504, %v7064
        %v7139 = vadd.f32 %v6505, %v7067
        %v7140 = vadd.f32 %v6506, %v7072
        %v7141 = vadd.f32 %v6507, %v7075
        %7142 = vst [vmem:[#allocation3] sm:$0xff] %v7078
        %7143 = vst [vmem:[#allocation3 + $0x8] sm:$0xff] %v7079
        %7144 = vst [vmem:[#allocation3 + $0x10] sm:$0xff] %v7080
        %7145 = vst [vmem:[#allocation3 + $0x18] sm:$0xff] %v7081
        %7146 = vst [vmem:[#allocation3 + $0x20] sm:$0xff] %v7082
        %7147 = vst [vmem:[#allocation3 + $0x28] sm:$0xff] %v7083
        %7148 = vst [vmem:[#allocation3 + $0x30] sm:$0xff] %v7084
        %7149 = vst [vmem:[#allocation3 + $0x38] sm:$0xff] %v7085
        %7150 = vst [vmem:[#allocation3 + $0x40] sm:$0xff] %v7086
        %7151 = vst [vmem:[#allocation3 + $0x48] sm:$0xff] %v7087
        %7152 = vst [vmem:[#allocation3 + $0x50] sm:$0xff] %v7088
        %7153 = vst [vmem:[#allocation3 + $0x58] sm:$0xff] %v7089
        %7154 = vst [vmem:[#allocation3 + $0x60] sm:$0xff] %v7090
        %7155 = vst [vmem:[#allocation3 + $0x68] sm:$0xff] %v7091
        %7156 = vst [vmem:[#allocation3 + $0x70] sm:$0xff] %v7092
        %7157 = vst [vmem:[#allocation3 + $0x78] sm:$0xff] %v7093
        %7158 = vst [vmem:[#allocation3 + $0x80] sm:$0xff] %v7094
        %7159 = vst [vmem:[#allocation3 + $0x88] sm:$0xff] %v7095
        %7160 = vst [vmem:[#allocation3 + $0x90] sm:$0xff] %v7096
        %7161 = vst [vmem:[#allocation3 + $0x98] sm:$0xff] %v7097
        %7162 = vst [vmem:[#allocation3 + $0xa0] sm:$0xff] %v7098
        %7163 = vst [vmem:[#allocation3 + $0xa8] sm:$0xff] %v7099
        %7164 = vst [vmem:[#allocation3 + $0xb0] sm:$0xff] %v7100
        %7165 = vst [vmem:[#allocation3 + $0xb8] sm:$0xff] %v7101
        %7166 = vst [vmem:[#allocation3 + $0xc0] sm:$0xff] %v7102
        %7167 = vst [vmem:[#allocation3 + $0xc8] sm:$0xff] %v7103
        %7168 = vst [vmem:[#allocation3 + $0xd0] sm:$0xff] %v7104
        %7169 = vst [vmem:[#allocation3 + $0xd8] sm:$0xff] %v7105
        %7170 = vst [vmem:[#allocation3 + $0xe0] sm:$0xff] %v7106
        %7171 = vst [vmem:[#allocation3 + $0xe8] sm:$0xff] %v7107
        %7172 = vst [vmem:[#allocation3 + $0xf0] sm:$0xff] %v7108
        %7173 = vst [vmem:[#allocation3 + $0xf8] sm:$0xff] %v7109
        %7174 = vst [vmem:[#allocation3 + $0x100] sm:$0xff] %v7110
        %7175 = vst [vmem:[#allocation3 + $0x108] sm:$0xff] %v7111
        %7176 = vst [vmem:[#allocation3 + $0x110] sm:$0xff] %v7112
        %7177 = vst [vmem:[#allocation3 + $0x118] sm:$0xff] %v7113
        %7178 = vst [vmem:[#allocation3 + $0x120] sm:$0xff] %v7114
        %7179 = vst [vmem:[#allocation3 + $0x128] sm:$0xff] %v7115
        %7180 = vst [vmem:[#allocation3 + $0x130] sm:$0xff] %v7116
        %7181 = vst [vmem:[#allocation3 + $0x138] sm:$0xff] %v7117
        %7182 = vst [vmem:[#allocation3 + $0x140] sm:$0xff] %v7118
        %7183 = vst [vmem:[#allocation3 + $0x148] sm:$0xff] %v7119
        %7184 = vst [vmem:[#allocation3 + $0x150] sm:$0xff] %v7120
        %7185 = vst [vmem:[#allocation3 + $0x158] sm:$0xff] %v7121
        %7186 = vst [vmem:[#allocation3 + $0x160] sm:$0xff] %v7122
        %7187 = vst [vmem:[#allocation3 + $0x168] sm:$0xff] %v7123
        %7188 = vst [vmem:[#allocation3 + $0x170] sm:$0xff] %v7124
        %7189 = vst [vmem:[#allocation3 + $0x178] sm:$0xff] %v7125
        %7190 = vst [vmem:[#allocation3 + $0x180] sm:$0xff] %v7126
        %7191 = vst [vmem:[#allocation3 + $0x188] sm:$0xff] %v7127
        %7192 = vst [vmem:[#allocation3 + $0x190] sm:$0xff] %v7128
        %7193 = vst [vmem:[#allocation3 + $0x198] sm:$0xff] %v7129
        %7194 = vst [vmem:[#allocation3 + $0x1a0] sm:$0xff] %v7130
        %7195 = vst [vmem:[#allocation3 + $0x1a8] sm:$0xff] %v7131
        %7196 = vst [vmem:[#allocation3 + $0x1b0] sm:$0xff] %v7132
        %7197 = vst [vmem:[#allocation3 + $0x1b8] sm:$0xff] %v7133
        %7198 = vst [vmem:[#allocation3 + $0x1c0] sm:$0xff] %v7134
        %7199 = vst [vmem:[#allocation3 + $0x1c8] sm:$0xff] %v7135
        %7200 = vst [vmem:[#allocation3 + $0x1d0] sm:$0xff] %v7136
        %7201 = vst [vmem:[#allocation3 + $0x1d8] sm:$0xff] %v7137
        %7202 = vst [vmem:[#allocation3 + $0x1e0] sm:$0xff] %v7138
        %7203 = vst [vmem:[#allocation3 + $0x1e8] sm:$0xff] %v7139
        %7204 = vst [vmem:[#allocation3 + $0x1f0] sm:$0xff] %v7140
        %7205 = vst [vmem:[#allocation3 + $0x1f8] sm:$0xff] %v7141
        %s7206 = scalar_lea.vmem [#allocation2], 80
        %v7207 = vld [vmem:[%s7206] sm:$0xf]
        %v7208 = vld [vmem:[%s7206 + $0x4] sm:$0xf]
        %v7209 = vld [vmem:[%s7206 + $0x8] sm:$0xf]
        %v7210 = vld [vmem:[%s7206 + $0xc] sm:$0xf]
        %v7211 = vld [vmem:[%s7206 + $0x10] sm:$0xf]
        %v7212 = vld [vmem:[%s7206 + $0x14] sm:$0xf]
        %v7213 = vld [vmem:[%s7206 + $0x18] sm:$0xf]
        %v7214 = vld [vmem:[%s7206 + $0x1c] sm:$0xf]
        %v7215 = vld [vmem:[%s7206 + $0x28] sm:$0xf]
        %v7216 = vld [vmem:[%s7206 + $0x2c] sm:$0xf]
        %v7217 = vld [vmem:[%s7206 + $0x30] sm:$0xf]
        %v7218 = vld [vmem:[%s7206 + $0x34] sm:$0xf]
        %v7219 = vld [vmem:[%s7206 + $0x38] sm:$0xf]
        %v7220 = vld [vmem:[%s7206 + $0x3c] sm:$0xf]
        %v7221 = vld [vmem:[%s7206 + $0x40] sm:$0xf]
        %v7222 = vld [vmem:[%s7206 + $0x44] sm:$0xf]
        %v7223 = vld [vmem:[%s7206 + $0x50] sm:$0xf]
        %v7224 = vld [vmem:[%s7206 + $0x54] sm:$0xf]
        %v7225 = vld [vmem:[%s7206 + $0x58] sm:$0xf]
        %v7226 = vld [vmem:[%s7206 + $0x5c] sm:$0xf]
        %v7227 = vld [vmem:[%s7206 + $0x60] sm:$0xf]
        %v7228 = vld [vmem:[%s7206 + $0x64] sm:$0xf]
        %v7229 = vld [vmem:[%s7206 + $0x68] sm:$0xf]
        %v7230 = vld [vmem:[%s7206 + $0x6c] sm:$0xf]
        %v7231 = vld [vmem:[%s7206 + $0x78] sm:$0xf]
        %v7232 = vld [vmem:[%s7206 + $0x7c] sm:$0xf]
        %v7233 = vld [vmem:[%s7206 + $0x80] sm:$0xf]
        %v7234 = vld [vmem:[%s7206 + $0x84] sm:$0xf]
        %v7235 = vld [vmem:[%s7206 + $0x88] sm:$0xf]
        %v7236 = vld [vmem:[%s7206 + $0x8c] sm:$0xf]
        %v7237 = vld [vmem:[%s7206 + $0x90] sm:$0xf]
        %v7238 = vld [vmem:[%s7206 + $0x94] sm:$0xf]
        %v7239 = vld [vmem:[%s7206 + $0xa0] sm:$0xf]
        %v7240 = vld [vmem:[%s7206 + $0xa4] sm:$0xf]
        %v7241 = vld [vmem:[%s7206 + $0xa8] sm:$0xf]
        %v7242 = vld [vmem:[%s7206 + $0xac] sm:$0xf]
        %v7243 = vld [vmem:[%s7206 + $0xb0] sm:$0xf]
        %v7244 = vld [vmem:[%s7206 + $0xb4] sm:$0xf]
        %v7245 = vld [vmem:[%s7206 + $0xb8] sm:$0xf]
        %v7246 = vld [vmem:[%s7206 + $0xbc] sm:$0xf]
        %v7247 = vld [vmem:[%s7206 + $0xc8] sm:$0xf]
        %v7248 = vld [vmem:[%s7206 + $0xcc] sm:$0xf]
        %v7249 = vld [vmem:[%s7206 + $0xd0] sm:$0xf]
        %v7250 = vld [vmem:[%s7206 + $0xd4] sm:$0xf]
        %v7251 = vld [vmem:[%s7206 + $0xd8] sm:$0xf]
        %v7252 = vld [vmem:[%s7206 + $0xdc] sm:$0xf]
        %v7253 = vld [vmem:[%s7206 + $0xe0] sm:$0xf]
        %v7254 = vld [vmem:[%s7206 + $0xe4] sm:$0xf]
        %v7255 = vld [vmem:[%s7206 + $0xf0] sm:$0xf]
        %v7256 = vld [vmem:[%s7206 + $0xf4] sm:$0xf]
        %v7257 = vld [vmem:[%s7206 + $0xf8] sm:$0xf]
        %v7258 = vld [vmem:[%s7206 + $0xfc] sm:$0xf]
        %v7259 = vld [vmem:[%s7206 + $0x100] sm:$0xf]
        %v7260 = vld [vmem:[%s7206 + $0x104] sm:$0xf]
        %v7261 = vld [vmem:[%s7206 + $0x108] sm:$0xf]
        %v7262 = vld [vmem:[%s7206 + $0x10c] sm:$0xf]
        %v7263 = vld [vmem:[%s7206 + $0x118] sm:$0xf]
        %v7264 = vld [vmem:[%s7206 + $0x11c] sm:$0xf]
        %v7265 = vld [vmem:[%s7206 + $0x120] sm:$0xf]
        %v7266 = vld [vmem:[%s7206 + $0x124] sm:$0xf]
        %v7267 = vld [vmem:[%s7206 + $0x128] sm:$0xf]
        %v7268 = vld [vmem:[%s7206 + $0x12c] sm:$0xf]
        %v7269 = vld [vmem:[%s7206 + $0x130] sm:$0xf]
        %v7270 = vld [vmem:[%s7206 + $0x134] sm:$0xf]
        %v7271 = vld [vmem:[#allocation3] sm:$0xff]
        %v7272 = vld [vmem:[#allocation3 + $0x8] sm:$0xff]
        %v7273 = vld [vmem:[#allocation3 + $0x10] sm:$0xff]
        %v7274 = vld [vmem:[#allocation3 + $0x18] sm:$0xff]
        %v7275 = vld [vmem:[#allocation3 + $0x20] sm:$0xff]
        %v7276 = vld [vmem:[#allocation3 + $0x28] sm:$0xff]
        %v7277 = vld [vmem:[#allocation3 + $0x30] sm:$0xff]
        %v7278 = vld [vmem:[#allocation3 + $0x38] sm:$0xff]
        %v7279 = vld [vmem:[#allocation3 + $0x40] sm:$0xff]
        %v7280 = vld [vmem:[#allocation3 + $0x48] sm:$0xff]
        %v7281 = vld [vmem:[#allocation3 + $0x50] sm:$0xff]
        %v7282 = vld [vmem:[#allocation3 + $0x58] sm:$0xff]
        %v7283 = vld [vmem:[#allocation3 + $0x60] sm:$0xff]
        %v7284 = vld [vmem:[#allocation3 + $0x68] sm:$0xff]
        %v7285 = vld [vmem:[#allocation3 + $0x70] sm:$0xff]
        %v7286 = vld [vmem:[#allocation3 + $0x78] sm:$0xff]
        %v7287 = vld [vmem:[#allocation3 + $0x80] sm:$0xff]
        %v7288 = vld [vmem:[#allocation3 + $0x88] sm:$0xff]
        %v7289 = vld [vmem:[#allocation3 + $0x90] sm:$0xff]
        %v7290 = vld [vmem:[#allocation3 + $0x98] sm:$0xff]
        %v7291 = vld [vmem:[#allocation3 + $0xa0] sm:$0xff]
        %v7292 = vld [vmem:[#allocation3 + $0xa8] sm:$0xff]
        %v7293 = vld [vmem:[#allocation3 + $0xb0] sm:$0xff]
        %v7294 = vld [vmem:[#allocation3 + $0xb8] sm:$0xff]
        %v7295 = vld [vmem:[#allocation3 + $0xc0] sm:$0xff]
        %v7296 = vld [vmem:[#allocation3 + $0xc8] sm:$0xff]
        %v7297 = vld [vmem:[#allocation3 + $0xd0] sm:$0xff]
        %v7298 = vld [vmem:[#allocation3 + $0xd8] sm:$0xff]
        %v7299 = vld [vmem:[#allocation3 + $0xe0] sm:$0xff]
        %v7300 = vld [vmem:[#allocation3 + $0xe8] sm:$0xff]
        %v7301 = vld [vmem:[#allocation3 + $0xf0] sm:$0xff]
        %v7302 = vld [vmem:[#allocation3 + $0xf8] sm:$0xff]
        %v7303 = vld [vmem:[#allocation3 + $0x100] sm:$0xff]
        %v7304 = vld [vmem:[#allocation3 + $0x108] sm:$0xff]
        %v7305 = vld [vmem:[#allocation3 + $0x110] sm:$0xff]
        %v7306 = vld [vmem:[#allocation3 + $0x118] sm:$0xff]
        %v7307 = vld [vmem:[#allocation3 + $0x120] sm:$0xff]
        %v7308 = vld [vmem:[#allocation3 + $0x128] sm:$0xff]
        %v7309 = vld [vmem:[#allocation3 + $0x130] sm:$0xff]
        %v7310 = vld [vmem:[#allocation3 + $0x138] sm:$0xff]
        %v7311 = vld [vmem:[#allocation3 + $0x140] sm:$0xff]
        %v7312 = vld [vmem:[#allocation3 + $0x148] sm:$0xff]
        %v7313 = vld [vmem:[#allocation3 + $0x150] sm:$0xff]
        %v7314 = vld [vmem:[#allocation3 + $0x158] sm:$0xff]
        %v7315 = vld [vmem:[#allocation3 + $0x160] sm:$0xff]
        %v7316 = vld [vmem:[#allocation3 + $0x168] sm:$0xff]
        %v7317 = vld [vmem:[#allocation3 + $0x170] sm:$0xff]
        %v7318 = vld [vmem:[#allocation3 + $0x178] sm:$0xff]
        %v7319 = vld [vmem:[#allocation3 + $0x180] sm:$0xff]
        %v7320 = vld [vmem:[#allocation3 + $0x188] sm:$0xff]
        %v7321 = vld [vmem:[#allocation3 + $0x190] sm:$0xff]
        %v7322 = vld [vmem:[#allocation3 + $0x198] sm:$0xff]
        %v7323 = vld [vmem:[#allocation3 + $0x1a0] sm:$0xff]
        %v7324 = vld [vmem:[#allocation3 + $0x1a8] sm:$0xff]
        %v7325 = vld [vmem:[#allocation3 + $0x1b0] sm:$0xff]
        %v7326 = vld [vmem:[#allocation3 + $0x1b8] sm:$0xff]
        %v7327 = vld [vmem:[#allocation3 + $0x1c0] sm:$0xff]
        %v7328 = vld [vmem:[#allocation3 + $0x1c8] sm:$0xff]
        %v7329 = vld [vmem:[#allocation3 + $0x1d0] sm:$0xff]
        %v7330 = vld [vmem:[#allocation3 + $0x1d8] sm:$0xff]
        %v7331 = vld [vmem:[#allocation3 + $0x1e0] sm:$0xff]
        %v7332 = vld [vmem:[#allocation3 + $0x1e8] sm:$0xff]
        %v7333 = vld [vmem:[#allocation3 + $0x1f0] sm:$0xff]
        %v7334 = vld [vmem:[#allocation3 + $0x1f8] sm:$0xff]
        %s7335 = scalar_lea.vmem [#allocation7], 144
        %v7336 = vld [vmem:[%s7335] sm:$0xf]
        %v7337 = vld [vmem:[%s7335 + $0x4] sm:$0xf]
        %v7338 = vld [vmem:[%s7335 + $0x8] sm:$0xf]
        %v7339 = vld [vmem:[%s7335 + $0xc] sm:$0xf]
        %v7340 = vld [vmem:[%s7335 + $0x10] sm:$0xf]
        %v7341 = vld [vmem:[%s7335 + $0x14] sm:$0xf]
        %v7406 = vunpack.c.l.b16 %v7207
        %v7407 = vunpack.c.l.b16 %v7208
        %v7408 = vunpack.c.l.b16 %v7209
        %v7409 = vunpack.c.l.b16 %v7210
        %v7410 = vunpack.c.l.b16 %v7211
        %v7411 = vunpack.c.l.b16 %v7212
        %v7412 = vunpack.c.l.b16 %v7213
        %v7413 = vunpack.c.l.b16 %v7214
        %v7414 = vunpack.c.l.b16 %v7215
        %v7415 = vunpack.c.l.b16 %v7216
        %v7416 = vunpack.c.l.b16 %v7217
        %v7417 = vunpack.c.l.b16 %v7218
        %v7418 = vunpack.c.l.b16 %v7219
        %v7419 = vunpack.c.l.b16 %v7220
        %v7420 = vunpack.c.l.b16 %v7221
        %v7421 = vunpack.c.l.b16 %v7222
        %v7422 = vunpack.c.l.b16 %v7223
        %v7423 = vunpack.c.l.b16 %v7224
        %v7424 = vunpack.c.l.b16 %v7225
        %v7425 = vunpack.c.l.b16 %v7226
        %v7426 = vunpack.c.l.b16 %v7227
        %v7427 = vunpack.c.l.b16 %v7228
        %v7428 = vunpack.c.l.b16 %v7229
        %v7429 = vunpack.c.l.b16 %v7230
        %v7430 = vunpack.c.l.b16 %v7231
        %v7431 = vunpack.c.l.b16 %v7232
        %v7432 = vunpack.c.l.b16 %v7233
        %v7433 = vunpack.c.l.b16 %v7234
        %v7434 = vunpack.c.l.b16 %v7235
        %v7435 = vunpack.c.l.b16 %v7236
        %v7436 = vunpack.c.l.b16 %v7237
        %v7437 = vunpack.c.l.b16 %v7238
        %v7438 = vunpack.c.l.b16 %v7239
        %v7439 = vunpack.c.l.b16 %v7240
        %v7440 = vunpack.c.l.b16 %v7241
        %v7441 = vunpack.c.l.b16 %v7242
        %v7442 = vunpack.c.l.b16 %v7243
        %v7443 = vunpack.c.l.b16 %v7244
        %v7444 = vunpack.c.l.b16 %v7245
        %v7445 = vunpack.c.l.b16 %v7246
        %v7446 = vunpack.c.l.b16 %v7247
        %v7447 = vunpack.c.l.b16 %v7248
        %v7448 = vunpack.c.l.b16 %v7249
        %v7449 = vunpack.c.l.b16 %v7250
        %v7450 = vunpack.c.l.b16 %v7251
        %v7451 = vunpack.c.l.b16 %v7252
        %v7452 = vunpack.c.l.b16 %v7253
        %v7453 = vunpack.c.l.b16 %v7254
        %v7454 = vunpack.c.l.b16 %v7255
        %v7455 = vunpack.c.l.b16 %v7256
        %v7456 = vunpack.c.l.b16 %v7257
        %v7457 = vunpack.c.l.b16 %v7258
        %v7458 = vunpack.c.l.b16 %v7259
        %v7459 = vunpack.c.l.b16 %v7260
        %v7460 = vunpack.c.l.b16 %v7261
        %v7461 = vunpack.c.l.b16 %v7262
        %v7462 = vunpack.c.l.b16 %v7263
        %v7463 = vunpack.c.l.b16 %v7264
        %v7464 = vunpack.c.l.b16 %v7265
        %v7465 = vunpack.c.l.b16 %v7266
        %v7466 = vunpack.c.l.b16 %v7267
        %v7467 = vunpack.c.l.b16 %v7268
        %v7468 = vunpack.c.l.b16 %v7269
        %v7469 = vunpack.c.l.b16 %v7270
        %v7470 = vpack.c.b16 %v7407, %v7406
        %v7471 = vpack.c.b16 %v7409, %v7408
        %v7472 = vpack.c.b16 %v7411, %v7410
        %v7473 = vpack.c.b16 %v7413, %v7412
        %v7474 = vpack.c.b16 %v7415, %v7414
        %v7475 = vpack.c.b16 %v7417, %v7416
        %v7476 = vpack.c.b16 %v7419, %v7418
        %v7477 = vpack.c.b16 %v7421, %v7420
        %v7478 = vpack.c.b16 %v7423, %v7422
        %v7479 = vpack.c.b16 %v7425, %v7424
        %v7480 = vpack.c.b16 %v7427, %v7426
        %v7481 = vpack.c.b16 %v7429, %v7428
        %v7482 = vpack.c.b16 %v7431, %v7430
        %v7483 = vpack.c.b16 %v7433, %v7432
        %v7484 = vpack.c.b16 %v7435, %v7434
        %v7485 = vpack.c.b16 %v7437, %v7436
        %v7486 = vpack.c.b16 %v7439, %v7438
        %v7487 = vpack.c.b16 %v7441, %v7440
        %v7488 = vpack.c.b16 %v7443, %v7442
        %v7489 = vpack.c.b16 %v7445, %v7444
        %v7490 = vpack.c.b16 %v7447, %v7446
        %v7491 = vpack.c.b16 %v7449, %v7448
        %v7492 = vpack.c.b16 %v7451, %v7450
        %v7493 = vpack.c.b16 %v7453, %v7452
        %v7494 = vpack.c.b16 %v7455, %v7454
        %v7495 = vpack.c.b16 %v7457, %v7456
        %v7496 = vpack.c.b16 %v7459, %v7458
        %v7497 = vpack.c.b16 %v7461, %v7460
        %v7498 = vpack.c.b16 %v7463, %v7462
        %v7499 = vpack.c.b16 %v7465, %v7464
        %v7500 = vpack.c.b16 %v7467, %v7466
        %v7501 = vpack.c.b16 %v7469, %v7468
        %v7508 = vunpack.c.l.b16 %v7336
        %v7509 = vunpack.c.l.b16 %v7337
        %v7510 = vunpack.c.l.b16 %v7338
        %v7511 = vunpack.c.l.b16 %v7339
        %v7512 = vunpack.c.l.b16 %v7340
        %v7513 = vunpack.c.l.b16 %v7341
        %v7514 = vpack.c.b16 %v7509, %v7508
        %v7515 = vpack.c.b16 %v7511, %v7510
        %v7516 = vpack.c.b16 %v7513, %v7512
        %v7521 = vsel %vm2558, %v7470, 0
        %v7524 = vsel %vm2558, %v7471, 0
        %v7527 = vsel %vm2558, %v7472, 0
        %v7530 = vsel %vm2558, %v7473, 0
        %v7533 = vsel %vm2558, %v7474, 0
        %v7536 = vsel %vm2558, %v7475, 0
        %v7539 = vsel %vm2558, %v7476, 0
        %v7542 = vsel %vm2558, %v7477, 0
        %v7545 = vsel %vm2558, %v7478, 0
        %v7548 = vsel %vm2558, %v7479, 0
        %v7551 = vsel %vm2558, %v7480, 0
        %v7554 = vsel %vm2558, %v7481, 0
        %v7557 = vsel %vm2558, %v7482, 0
        %v7560 = vsel %vm2558, %v7483, 0
        %v7563 = vsel %vm2558, %v7484, 0
        %v7566 = vsel %vm2558, %v7485, 0
        %v7569 = vsel %vm2558, %v7486, 0
        %v7572 = vsel %vm2558, %v7487, 0
        %v7575 = vsel %vm2558, %v7488, 0
        %v7578 = vsel %vm2558, %v7489, 0
        %v7581 = vsel %vm2558, %v7490, 0
        %v7584 = vsel %vm2558, %v7491, 0
        %v7587 = vsel %vm2558, %v7492, 0
        %v7590 = vsel %vm2558, %v7493, 0
        %v7593 = vsel %vm2558, %v7494, 0
        %v7596 = vsel %vm2558, %v7495, 0
        %v7599 = vsel %vm2558, %v7496, 0
        %v7602 = vsel %vm2558, %v7497, 0
        %v7605 = vsel %vm2558, %v7498, 0
        %v7608 = vsel %vm2558, %v7499, 0
        %v7611 = vsel %vm2558, %v7500, 0
        %v7614 = vsel %vm2558, %v7501, 0
        %7616 = vmatprep.subr.bf16.mxu0 0
        %7617 = vmatpush1.bf16.msra.mxu0 %v7514
        %7618 = vmatprep.subr.bf16.mxu0 0
        %7619 = vmatpush1.bf16.msra.mxu0 %v7515
        %7620 = vmatprep.subr.bf16.mxu0 0
        %7621 = vmatpush1.bf16.msra.mxu0 %v7516
        %7622 = vmatprep.subr.bf16.mxu0 0
        %7623 = vmatpush1.bf16.msra.mxu0 0
        %7624 = vmatprep.subr.bf16.mxu0 0
        %7625 = vmatpush1.bf16.msra.mxu0 0
        %7626 = vmatprep.subr.bf16.mxu0 0
        %7627 = vmatpush1.bf16.msra.mxu0 0
        %7628 = vmatprep.subr.bf16.mxu0 0
        %7629 = vmatpush1.bf16.msra.mxu0 0
        %7630 = vmatprep.subr.bf16.mxu0 0
        %7631 = vmatpush1.bf16.msra.mxu0 0
        %7632 = vmatprep.subr.bf16.mxu0 0
        %7633 = vmatpush1.bf16.msra.mxu0 0
        %7634 = vmatprep.subr.bf16.mxu0 0
        %7635 = vmatpush1.bf16.msra.mxu0 0
        %7636 = vmatprep.subr.bf16.mxu0 0
        %7637 = vmatpush1.bf16.msra.mxu0 0
        %7638 = vmatprep.subr.bf16.mxu0 0
        %7639 = vmatpush1.bf16.msra.mxu0 0
        %7640 = vmatprep.subr.bf16.mxu0 0
        %7641 = vmatpush1.bf16.msra.mxu0 0
        %7642 = vmatprep.subr.bf16.mxu0 0
        %7643 = vmatpush1.bf16.msra.mxu0 0
        %7644 = vmatprep.subr.bf16.mxu0 0
        %7645 = vmatpush1.bf16.msra.mxu0 0
        %7646 = vmatprep.subr.bf16.mxu0 0
        %7647 = vmatpush1.bf16.msra.mxu0 0
        %7648 = vmatprep.mubr.bf16.mxu0 0
        %7649 = vmatmul.mubr.bf16.gmra.mrb[0].mxu0 %v7521
        %v7650 = vpop.f32.mrb[0].mxu0
        %v7651 = vadd.f32 0.0, %v7650
        %v7652 = vpop.f32.mrb[0].mxu0
        %v7653 = vpop.f32.mrb[0].mxu0
        %v7654 = vadd.f32 0.0, %v7653
        %v7655 = vpop.f32.mrb[0].mxu0
        %7656 = vmatprep.mubr.bf16.mxu0 0
        %7657 = vmatmul.mubr.bf16.gmra.mrb[0].mxu0 %v7524
        %v7658 = vpop.f32.mrb[0].mxu0
        %v7659 = vadd.f32 0.0, %v7658
        %v7660 = vpop.f32.mrb[0].mxu0
        %v7661 = vpop.f32.mrb[0].mxu0
        %v7662 = vadd.f32 0.0, %v7661
        %v7663 = vpop.f32.mrb[0].mxu0
        %7664 = vmatprep.mubr.bf16.mxu0 0
        %7665 = vmatmul.mubr.bf16.gmra.mrb[0].mxu0 %v7527
        %v7666 = vpop.f32.mrb[0].mxu0
        %v7667 = vadd.f32 0.0, %v7666
        %v7668 = vpop.f32.mrb[0].mxu0
        %v7669 = vpop.f32.mrb[0].mxu0
        %v7670 = vadd.f32 0.0, %v7669
        %v7671 = vpop.f32.mrb[0].mxu0
        %7672 = vmatprep.mubr.bf16.mxu0 0
        %7673 = vmatmul.mubr.bf16.gmra.mrb[0].mxu0 %v7530
        %v7674 = vpop.f32.mrb[0].mxu0
        %v7675 = vadd.f32 0.0, %v7674
        %v7676 = vpop.f32.mrb[0].mxu0
        %v7677 = vpop.f32.mrb[0].mxu0
        %v7678 = vadd.f32 0.0, %v7677
        %v7679 = vpop.f32.mrb[0].mxu0
        %7680 = vmatprep.mubr.bf16.mxu0 0
        %7681 = vmatmul.mubr.bf16.gmra.mrb[0].mxu0 %v7533
        %v7682 = vpop.f32.mrb[0].mxu0
        %v7683 = vadd.f32 0.0, %v7682
        %v7684 = vpop.f32.mrb[0].mxu0
        %v7685 = vpop.f32.mrb[0].mxu0
        %v7686 = vadd.f32 0.0, %v7685
        %v7687 = vpop.f32.mrb[0].mxu0
        %7688 = vmatprep.mubr.bf16.mxu0 0
        %7689 = vmatmul.mubr.bf16.gmra.mrb[0].mxu0 %v7536
        %v7690 = vpop.f32.mrb[0].mxu0
        %v7691 = vadd.f32 0.0, %v7690
        %v7692 = vpop.f32.mrb[0].mxu0
        %v7693 = vpop.f32.mrb[0].mxu0
        %v7694 = vadd.f32 0.0, %v7693
        %v7695 = vpop.f32.mrb[0].mxu0
        %7696 = vmatprep.mubr.bf16.mxu0 0
        %7697 = vmatmul.mubr.bf16.gmra.mrb[0].mxu0 %v7539
        %v7698 = vpop.f32.mrb[0].mxu0
        %v7699 = vadd.f32 0.0, %v7698
        %v7700 = vpop.f32.mrb[0].mxu0
        %v7701 = vpop.f32.mrb[0].mxu0
        %v7702 = vadd.f32 0.0, %v7701
        %v7703 = vpop.f32.mrb[0].mxu0
        %7704 = vmatprep.mubr.bf16.mxu0 0
        %7705 = vmatmul.mubr.bf16.gmra.mrb[0].mxu0 %v7542
        %v7706 = vpop.f32.mrb[0].mxu0
        %v7707 = vadd.f32 0.0, %v7706
        %v7708 = vpop.f32.mrb[0].mxu0
        %v7709 = vpop.f32.mrb[0].mxu0
        %v7710 = vadd.f32 0.0, %v7709
        %v7711 = vpop.f32.mrb[0].mxu0
        %7712 = vmatprep.mubr.bf16.mxu0 0
        %7713 = vmatmul.mubr.bf16.gmra.mrb[0].mxu0 %v7545
        %v7714 = vpop.f32.mrb[0].mxu0
        %v7715 = vadd.f32 0.0, %v7714
        %v7716 = vpop.f32.mrb[0].mxu0
        %v7717 = vpop.f32.mrb[0].mxu0
        %v7718 = vadd.f32 0.0, %v7717
        %v7719 = vpop.f32.mrb[0].mxu0
        %7720 = vmatprep.mubr.bf16.mxu0 0
        %7721 = vmatmul.mubr.bf16.gmra.mrb[0].mxu0 %v7548
        %v7722 = vpop.f32.mrb[0].mxu0
        %v7723 = vadd.f32 0.0, %v7722
        %v7724 = vpop.f32.mrb[0].mxu0
        %v7725 = vpop.f32.mrb[0].mxu0
        %v7726 = vadd.f32 0.0, %v7725
        %v7727 = vpop.f32.mrb[0].mxu0
        %7728 = vmatprep.mubr.bf16.mxu0 0
        %7729 = vmatmul.mubr.bf16.gmra.mrb[0].mxu0 %v7551
        %v7730 = vpop.f32.mrb[0].mxu0
        %v7731 = vadd.f32 0.0, %v7730
        %v7732 = vpop.f32.mrb[0].mxu0
        %v7733 = vpop.f32.mrb[0].mxu0
        %v7734 = vadd.f32 0.0, %v7733
        %v7735 = vpop.f32.mrb[0].mxu0
        %7736 = vmatprep.mubr.bf16.mxu0 0
        %7737 = vmatmul.mubr.bf16.gmra.mrb[0].mxu0 %v7554
        %v7738 = vpop.f32.mrb[0].mxu0
        %v7739 = vadd.f32 0.0, %v7738
        %v7740 = vpop.f32.mrb[0].mxu0
        %v7741 = vpop.f32.mrb[0].mxu0
        %v7742 = vadd.f32 0.0, %v7741
        %v7743 = vpop.f32.mrb[0].mxu0
        %7744 = vmatprep.mubr.bf16.mxu0 0
        %7745 = vmatmul.mubr.bf16.gmra.mrb[0].mxu0 %v7557
        %v7746 = vpop.f32.mrb[0].mxu0
        %v7747 = vadd.f32 0.0, %v7746
        %v7748 = vpop.f32.mrb[0].mxu0
        %v7749 = vpop.f32.mrb[0].mxu0
        %v7750 = vadd.f32 0.0, %v7749
        %v7751 = vpop.f32.mrb[0].mxu0
        %7752 = vmatprep.mubr.bf16.mxu0 0
        %7753 = vmatmul.mubr.bf16.gmra.mrb[0].mxu0 %v7560
        %v7754 = vpop.f32.mrb[0].mxu0
        %v7755 = vadd.f32 0.0, %v7754
        %v7756 = vpop.f32.mrb[0].mxu0
        %v7757 = vpop.f32.mrb[0].mxu0
        %v7758 = vadd.f32 0.0, %v7757
        %v7759 = vpop.f32.mrb[0].mxu0
        %7760 = vmatprep.mubr.bf16.mxu0 0
        %7761 = vmatmul.mubr.bf16.gmra.mrb[0].mxu0 %v7563
        %v7762 = vpop.f32.mrb[0].mxu0
        %v7763 = vadd.f32 0.0, %v7762
        %v7764 = vpop.f32.mrb[0].mxu0
        %v7765 = vpop.f32.mrb[0].mxu0
        %v7766 = vadd.f32 0.0, %v7765
        %v7767 = vpop.f32.mrb[0].mxu0
        %7768 = vmatprep.mubr.bf16.mxu0 0
        %7769 = vmatmul.mubr.bf16.gmra.mrb[0].mxu0 %v7566
        %v7770 = vpop.f32.mrb[0].mxu0
        %v7771 = vadd.f32 0.0, %v7770
        %v7772 = vpop.f32.mrb[0].mxu0
        %v7773 = vpop.f32.mrb[0].mxu0
        %v7774 = vadd.f32 0.0, %v7773
        %v7775 = vpop.f32.mrb[0].mxu0
        %7776 = vmatprep.mubr.bf16.mxu0 0
        %7777 = vmatmul.mubr.bf16.gmra.mrb[0].mxu0 %v7569
        %v7778 = vpop.f32.mrb[0].mxu0
        %v7779 = vadd.f32 0.0, %v7778
        %v7780 = vpop.f32.mrb[0].mxu0
        %v7781 = vpop.f32.mrb[0].mxu0
        %v7782 = vadd.f32 0.0, %v7781
        %v7783 = vpop.f32.mrb[0].mxu0
        %7784 = vmatprep.mubr.bf16.mxu0 0
        %7785 = vmatmul.mubr.bf16.gmra.mrb[0].mxu0 %v7572
        %v7786 = vpop.f32.mrb[0].mxu0
        %v7787 = vadd.f32 0.0, %v7786
        %v7788 = vpop.f32.mrb[0].mxu0
        %v7789 = vpop.f32.mrb[0].mxu0
        %v7790 = vadd.f32 0.0, %v7789
        %v7791 = vpop.f32.mrb[0].mxu0
        %7792 = vmatprep.mubr.bf16.mxu0 0
        %7793 = vmatmul.mubr.bf16.gmra.mrb[0].mxu0 %v7575
        %v7794 = vpop.f32.mrb[0].mxu0
        %v7795 = vadd.f32 0.0, %v7794
        %v7796 = vpop.f32.mrb[0].mxu0
        %v7797 = vpop.f32.mrb[0].mxu0
        %v7798 = vadd.f32 0.0, %v7797
        %v7799 = vpop.f32.mrb[0].mxu0
        %7800 = vmatprep.mubr.bf16.mxu0 0
        %7801 = vmatmul.mubr.bf16.gmra.mrb[0].mxu0 %v7578
        %v7802 = vpop.f32.mrb[0].mxu0
        %v7803 = vadd.f32 0.0, %v7802
        %v7804 = vpop.f32.mrb[0].mxu0
        %v7805 = vpop.f32.mrb[0].mxu0
        %v7806 = vadd.f32 0.0, %v7805
        %v7807 = vpop.f32.mrb[0].mxu0
        %7808 = vmatprep.mubr.bf16.mxu0 0
        %7809 = vmatmul.mubr.bf16.gmra.mrb[0].mxu0 %v7581
        %v7810 = vpop.f32.mrb[0].mxu0
        %v7811 = vadd.f32 0.0, %v7810
        %v7812 = vpop.f32.mrb[0].mxu0
        %v7813 = vpop.f32.mrb[0].mxu0
        %v7814 = vadd.f32 0.0, %v7813
        %v7815 = vpop.f32.mrb[0].mxu0
        %7816 = vmatprep.mubr.bf16.mxu0 0
        %7817 = vmatmul.mubr.bf16.gmra.mrb[0].mxu0 %v7584
        %v7818 = vpop.f32.mrb[0].mxu0
        %v7819 = vadd.f32 0.0, %v7818
        %v7820 = vpop.f32.mrb[0].mxu0
        %v7821 = vpop.f32.mrb[0].mxu0
        %v7822 = vadd.f32 0.0, %v7821
        %v7823 = vpop.f32.mrb[0].mxu0
        %7824 = vmatprep.mubr.bf16.mxu0 0
        %7825 = vmatmul.mubr.bf16.gmra.mrb[0].mxu0 %v7587
        %v7826 = vpop.f32.mrb[0].mxu0
        %v7827 = vadd.f32 0.0, %v7826
        %v7828 = vpop.f32.mrb[0].mxu0
        %v7829 = vpop.f32.mrb[0].mxu0
        %v7830 = vadd.f32 0.0, %v7829
        %v7831 = vpop.f32.mrb[0].mxu0
        %7832 = vmatprep.mubr.bf16.mxu0 0
        %7833 = vmatmul.mubr.bf16.gmra.mrb[0].mxu0 %v7590
        %v7834 = vpop.f32.mrb[0].mxu0
        %v7835 = vadd.f32 0.0, %v7834
        %v7836 = vpop.f32.mrb[0].mxu0
        %v7837 = vpop.f32.mrb[0].mxu0
        %v7838 = vadd.f32 0.0, %v7837
        %v7839 = vpop.f32.mrb[0].mxu0
        %7840 = vmatprep.mubr.bf16.mxu0 0
        %7841 = vmatmul.mubr.bf16.gmra.mrb[0].mxu0 %v7593
        %v7842 = vpop.f32.mrb[0].mxu0
        %v7843 = vadd.f32 0.0, %v7842
        %v7844 = vpop.f32.mrb[0].mxu0
        %v7845 = vpop.f32.mrb[0].mxu0
        %v7846 = vadd.f32 0.0, %v7845
        %v7847 = vpop.f32.mrb[0].mxu0
        %7848 = vmatprep.mubr.bf16.mxu0 0
        %7849 = vmatmul.mubr.bf16.gmra.mrb[0].mxu0 %v7596
        %v7850 = vpop.f32.mrb[0].mxu0
        %v7851 = vadd.f32 0.0, %v7850
        %v7852 = vpop.f32.mrb[0].mxu0
        %v7853 = vpop.f32.mrb[0].mxu0
        %v7854 = vadd.f32 0.0, %v7853
        %v7855 = vpop.f32.mrb[0].mxu0
        %7856 = vmatprep.mubr.bf16.mxu0 0
        %7857 = vmatmul.mubr.bf16.gmra.mrb[0].mxu0 %v7599
        %v7858 = vpop.f32.mrb[0].mxu0
        %v7859 = vadd.f32 0.0, %v7858
        %v7860 = vpop.f32.mrb[0].mxu0
        %v7861 = vpop.f32.mrb[0].mxu0
        %v7862 = vadd.f32 0.0, %v7861
        %v7863 = vpop.f32.mrb[0].mxu0
        %7864 = vmatprep.mubr.bf16.mxu0 0
        %7865 = vmatmul.mubr.bf16.gmra.mrb[0].mxu0 %v7602
        %v7866 = vpop.f32.mrb[0].mxu0
        %v7867 = vadd.f32 0.0, %v7866
        %v7868 = vpop.f32.mrb[0].mxu0
        %v7869 = vpop.f32.mrb[0].mxu0
        %v7870 = vadd.f32 0.0, %v7869
        %v7871 = vpop.f32.mrb[0].mxu0
        %7872 = vmatprep.mubr.bf16.mxu0 0
        %7873 = vmatmul.mubr.bf16.gmra.mrb[0].mxu0 %v7605
        %v7874 = vpop.f32.mrb[0].mxu0
        %v7875 = vadd.f32 0.0, %v7874
        %v7876 = vpop.f32.mrb[0].mxu0
        %v7877 = vpop.f32.mrb[0].mxu0
        %v7878 = vadd.f32 0.0, %v7877
        %v7879 = vpop.f32.mrb[0].mxu0
        %7880 = vmatprep.mubr.bf16.mxu0 0
        %7881 = vmatmul.mubr.bf16.gmra.mrb[0].mxu0 %v7608
        %v7882 = vpop.f32.mrb[0].mxu0
        %v7883 = vadd.f32 0.0, %v7882
        %v7884 = vpop.f32.mrb[0].mxu0
        %v7885 = vpop.f32.mrb[0].mxu0
        %v7886 = vadd.f32 0.0, %v7885
        %v7887 = vpop.f32.mrb[0].mxu0
        %7888 = vmatprep.mubr.bf16.mxu0 0
        %7889 = vmatmul.mubr.bf16.gmra.mrb[0].mxu0 %v7611
        %v7890 = vpop.f32.mrb[0].mxu0
        %v7891 = vadd.f32 0.0, %v7890
        %v7892 = vpop.f32.mrb[0].mxu0
        %v7893 = vpop.f32.mrb[0].mxu0
        %v7894 = vadd.f32 0.0, %v7893
        %v7895 = vpop.f32.mrb[0].mxu0
        %7896 = vmatprep.mubr.bf16.mxu0 0
        %7897 = vmatmul.mubr.bf16.gmra.mrb[0].mxu0 %v7614
        %v7898 = vpop.f32.mrb[0].mxu0
        %v7899 = vadd.f32 0.0, %v7898
        %v7900 = vpop.f32.mrb[0].mxu0
        %v7901 = vpop.f32.mrb[0].mxu0
        %v7902 = vadd.f32 0.0, %v7901
        %v7903 = vpop.f32.mrb[0].mxu0
        %7904 = vdwg.mxu0
        %v7905 = vadd.f32 %v7271, %v7651
        %v7906 = vadd.f32 %v7272, %v7654
        %v7907 = vadd.f32 %v7273, %v7659
        %v7908 = vadd.f32 %v7274, %v7662
        %v7909 = vadd.f32 %v7275, %v7667
        %v7910 = vadd.f32 %v7276, %v7670
        %v7911 = vadd.f32 %v7277, %v7675
        %v7912 = vadd.f32 %v7278, %v7678
        %v7913 = vadd.f32 %v7279, %v7683
        %v7914 = vadd.f32 %v7280, %v7686
        %v7915 = vadd.f32 %v7281, %v7691
        %v7916 = vadd.f32 %v7282, %v7694
        %v7917 = vadd.f32 %v7283, %v7699
        %v7918 = vadd.f32 %v7284, %v7702
        %v7919 = vadd.f32 %v7285, %v7707
        %v7920 = vadd.f32 %v7286, %v7710
        %v7921 = vadd.f32 %v7287, %v7715
        %v7922 = vadd.f32 %v7288, %v7718
        %v7923 = vadd.f32 %v7289, %v7723
        %v7924 = vadd.f32 %v7290, %v7726
        %v7925 = vadd.f32 %v7291, %v7731
        %v7926 = vadd.f32 %v7292, %v7734
        %v7927 = vadd.f32 %v7293, %v7739
        %v7928 = vadd.f32 %v7294, %v7742
        %v7929 = vadd.f32 %v7295, %v7747
        %v7930 = vadd.f32 %v7296, %v7750
        %v7931 = vadd.f32 %v7297, %v7755
        %v7932 = vadd.f32 %v7298, %v7758
        %v7933 = vadd.f32 %v7299, %v7763
        %v7934 = vadd.f32 %v7300, %v7766
        %v7935 = vadd.f32 %v7301, %v7771
        %v7936 = vadd.f32 %v7302, %v7774
        %v7937 = vadd.f32 %v7303, %v7779
        %v7938 = vadd.f32 %v7304, %v7782
        %v7939 = vadd.f32 %v7305, %v7787
        %v7940 = vadd.f32 %v7306, %v7790
        %v7941 = vadd.f32 %v7307, %v7795
        %v7942 = vadd.f32 %v7308, %v7798
        %v7943 = vadd.f32 %v7309, %v7803
        %v7944 = vadd.f32 %v7310, %v7806
        %v7945 = vadd.f32 %v7311, %v7811
        %v7946 = vadd.f32 %v7312, %v7814
        %v7947 = vadd.f32 %v7313, %v7819
        %v7948 = vadd.f32 %v7314, %v7822
        %v7949 = vadd.f32 %v7315, %v7827
        %v7950 = vadd.f32 %v7316, %v7830
        %v7951 = vadd.f32 %v7317, %v7835
        %v7952 = vadd.f32 %v7318, %v7838
        %v7953 = vadd.f32 %v7319, %v7843
        %v7954 = vadd.f32 %v7320, %v7846
        %v7955 = vadd.f32 %v7321, %v7851
        %v7956 = vadd.f32 %v7322, %v7854
        %v7957 = vadd.f32 %v7323, %v7859
        %v7958 = vadd.f32 %v7324, %v7862
        %v7959 = vadd.f32 %v7325, %v7867
        %v7960 = vadd.f32 %v7326, %v7870
        %v7961 = vadd.f32 %v7327, %v7875
        %v7962 = vadd.f32 %v7328, %v7878
        %v7963 = vadd.f32 %v7329, %v7883
        %v7964 = vadd.f32 %v7330, %v7886
        %v7965 = vadd.f32 %v7331, %v7891
        %v7966 = vadd.f32 %v7332, %v7894
        %v7967 = vadd.f32 %v7333, %v7899
        %v7968 = vadd.f32 %v7334, %v7902
        %7969 = vst [vmem:[#allocation3] sm:$0xff] %v7905
        %7970 = vst [vmem:[#allocation3 + $0x8] sm:$0xff] %v7906
        %7971 = vst [vmem:[#allocation3 + $0x10] sm:$0xff] %v7907
        %7972 = vst [vmem:[#allocation3 + $0x18] sm:$0xff] %v7908
        %7973 = vst [vmem:[#allocation3 + $0x20] sm:$0xff] %v7909
        %7974 = vst [vmem:[#allocation3 + $0x28] sm:$0xff] %v7910
        %7975 = vst [vmem:[#allocation3 + $0x30] sm:$0xff] %v7911
        %7976 = vst [vmem:[#allocation3 + $0x38] sm:$0xff] %v7912
        %7977 = vst [vmem:[#allocation3 + $0x40] sm:$0xff] %v7913
        %7978 = vst [vmem:[#allocation3 + $0x48] sm:$0xff] %v7914
        %7979 = vst [vmem:[#allocation3 + $0x50] sm:$0xff] %v7915
        %7980 = vst [vmem:[#allocation3 + $0x58] sm:$0xff] %v7916
        %7981 = vst [vmem:[#allocation3 + $0x60] sm:$0xff] %v7917
        %7982 = vst [vmem:[#allocation3 + $0x68] sm:$0xff] %v7918
        %7983 = vst [vmem:[#allocation3 + $0x70] sm:$0xff] %v7919
        %7984 = vst [vmem:[#allocation3 + $0x78] sm:$0xff] %v7920
        %7985 = vst [vmem:[#allocation3 + $0x80] sm:$0xff] %v7921
        %7986 = vst [vmem:[#allocation3 + $0x88] sm:$0xff] %v7922
        %7987 = vst [vmem:[#allocation3 + $0x90] sm:$0xff] %v7923
        %7988 = vst [vmem:[#allocation3 + $0x98] sm:$0xff] %v7924
        %7989 = vst [vmem:[#allocation3 + $0xa0] sm:$0xff] %v7925
        %7990 = vst [vmem:[#allocation3 + $0xa8] sm:$0xff] %v7926
        %7991 = vst [vmem:[#allocation3 + $0xb0] sm:$0xff] %v7927
        %7992 = vst [vmem:[#allocation3 + $0xb8] sm:$0xff] %v7928
        %7993 = vst [vmem:[#allocation3 + $0xc0] sm:$0xff] %v7929
        %7994 = vst [vmem:[#allocation3 + $0xc8] sm:$0xff] %v7930
        %7995 = vst [vmem:[#allocation3 + $0xd0] sm:$0xff] %v7931
        %7996 = vst [vmem:[#allocation3 + $0xd8] sm:$0xff] %v7932
        %7997 = vst [vmem:[#allocation3 + $0xe0] sm:$0xff] %v7933
        %7998 = vst [vmem:[#allocation3 + $0xe8] sm:$0xff] %v7934
        %7999 = vst [vmem:[#allocation3 + $0xf0] sm:$0xff] %v7935
        %8000 = vst [vmem:[#allocation3 + $0xf8] sm:$0xff] %v7936
        %8001 = vst [vmem:[#allocation3 + $0x100] sm:$0xff] %v7937
        %8002 = vst [vmem:[#allocation3 + $0x108] sm:$0xff] %v7938
        %8003 = vst [vmem:[#allocation3 + $0x110] sm:$0xff] %v7939
        %8004 = vst [vmem:[#allocation3 + $0x118] sm:$0xff] %v7940
        %8005 = vst [vmem:[#allocation3 + $0x120] sm:$0xff] %v7941
        %8006 = vst [vmem:[#allocation3 + $0x128] sm:$0xff] %v7942
        %8007 = vst [vmem:[#allocation3 + $0x130] sm:$0xff] %v7943
        %8008 = vst [vmem:[#allocation3 + $0x138] sm:$0xff] %v7944
        %8009 = vst [vmem:[#allocation3 + $0x140] sm:$0xff] %v7945
        %8010 = vst [vmem:[#allocation3 + $0x148] sm:$0xff] %v7946
        %8011 = vst [vmem:[#allocation3 + $0x150] sm:$0xff] %v7947
        %8012 = vst [vmem:[#allocation3 + $0x158] sm:$0xff] %v7948
        %8013 = vst [vmem:[#allocation3 + $0x160] sm:$0xff] %v7949
        %8014 = vst [vmem:[#allocation3 + $0x168] sm:$0xff] %v7950
        %8015 = vst [vmem:[#allocation3 + $0x170] sm:$0xff] %v7951
        %8016 = vst [vmem:[#allocation3 + $0x178] sm:$0xff] %v7952
        %8017 = vst [vmem:[#allocation3 + $0x180] sm:$0xff] %v7953
        %8018 = vst [vmem:[#allocation3 + $0x188] sm:$0xff] %v7954
        %8019 = vst [vmem:[#allocation3 + $0x190] sm:$0xff] %v7955
        %8020 = vst [vmem:[#allocation3 + $0x198] sm:$0xff] %v7956
        %8021 = vst [vmem:[#allocation3 + $0x1a0] sm:$0xff] %v7957
        %8022 = vst [vmem:[#allocation3 + $0x1a8] sm:$0xff] %v7958
        %8023 = vst [vmem:[#allocation3 + $0x1b0] sm:$0xff] %v7959
        %8024 = vst [vmem:[#allocation3 + $0x1b8] sm:$0xff] %v7960
        %8025 = vst [vmem:[#allocation3 + $0x1c0] sm:$0xff] %v7961
        %8026 = vst [vmem:[#allocation3 + $0x1c8] sm:$0xff] %v7962
        %8027 = vst [vmem:[#allocation3 + $0x1d0] sm:$0xff] %v7963
        %8028 = vst [vmem:[#allocation3 + $0x1d8] sm:$0xff] %v7964
        %8029 = vst [vmem:[#allocation3 + $0x1e0] sm:$0xff] %v7965
        %8030 = vst [vmem:[#allocation3 + $0x1e8] sm:$0xff] %v7966
        %8031 = vst [vmem:[#allocation3 + $0x1f0] sm:$0xff] %v7967
        %8032 = vst [vmem:[#allocation3 + $0x1f8] sm:$0xff] %v7968
        %s8033 = scalar_lea.vmem [#allocation2], 84
        %v8034 = vld [vmem:[%s8033] sm:$0xf]
        %v8035 = vld [vmem:[%s8033 + $0x4] sm:$0xf]
        %v8036 = vld [vmem:[%s8033 + $0x8] sm:$0xf]
        %v8037 = vld [vmem:[%s8033 + $0xc] sm:$0xf]
        %v8038 = vld [vmem:[%s8033 + $0x10] sm:$0xf]
        %v8039 = vld [vmem:[%s8033 + $0x14] sm:$0xf]
        %v8040 = vld [vmem:[%s8033 + $0x18] sm:$0xf]
        %v8041 = vld [vmem:[%s8033 + $0x1c] sm:$0xf]
        %v8042 = vld [vmem:[%s8033 + $0x28] sm:$0xf]
        %v8043 = vld [vmem:[%s8033 + $0x2c] sm:$0xf]
        %v8044 = vld [vmem:[%s8033 + $0x30] sm:$0xf]
        %v8045 = vld [vmem:[%s8033 + $0x34] sm:$0xf]
        %v8046 = vld [vmem:[%s8033 + $0x38] sm:$0xf]
        %v8047 = vld [vmem:[%s8033 + $0x3c] sm:$0xf]
        %v8048 = vld [vmem:[%s8033 + $0x40] sm:$0xf]
        %v8049 = vld [vmem:[%s8033 + $0x44] sm:$0xf]
        %v8050 = vld [vmem:[%s8033 + $0x50] sm:$0xf]
        %v8051 = vld [vmem:[%s8033 + $0x54] sm:$0xf]
        %v8052 = vld [vmem:[%s8033 + $0x58] sm:$0xf]
        %v8053 = vld [vmem:[%s8033 + $0x5c] sm:$0xf]
        %v8054 = vld [vmem:[%s8033 + $0x60] sm:$0xf]
        %v8055 = vld [vmem:[%s8033 + $0x64] sm:$0xf]
        %v8056 = vld [vmem:[%s8033 + $0x68] sm:$0xf]
        %v8057 = vld [vmem:[%s8033 + $0x6c] sm:$0xf]
        %v8058 = vld [vmem:[%s8033 + $0x78] sm:$0xf]
        %v8059 = vld [vmem:[%s8033 + $0x7c] sm:$0xf]
        %v8060 = vld [vmem:[%s8033 + $0x80] sm:$0xf]
        %v8061 = vld [vmem:[%s8033 + $0x84] sm:$0xf]
        %v8062 = vld [vmem:[%s8033 + $0x88] sm:$0xf]
        %v8063 = vld [vmem:[%s8033 + $0x8c] sm:$0xf]
        %v8064 = vld [vmem:[%s8033 + $0x90] sm:$0xf]
        %v8065 = vld [vmem:[%s8033 + $0x94] sm:$0xf]
        %v8066 = vld [vmem:[%s8033 + $0xa0] sm:$0xf]
        %v8067 = vld [vmem:[%s8033 + $0xa4] sm:$0xf]
        %v8068 = vld [vmem:[%s8033 + $0xa8] sm:$0xf]
        %v8069 = vld [vmem:[%s8033 + $0xac] sm:$0xf]
        %v8070 = vld [vmem:[%s8033 + $0xb0] sm:$0xf]
        %v8071 = vld [vmem:[%s8033 + $0xb4] sm:$0xf]
        %v8072 = vld [vmem:[%s8033 + $0xb8] sm:$0xf]
        %v8073 = vld [vmem:[%s8033 + $0xbc] sm:$0xf]
        %v8074 = vld [vmem:[%s8033 + $0xc8] sm:$0xf]
        %v8075 = vld [vmem:[%s8033 + $0xcc] sm:$0xf]
        %v8076 = vld [vmem:[%s8033 + $0xd0] sm:$0xf]
        %v8077 = vld [vmem:[%s8033 + $0xd4] sm:$0xf]
        %v8078 = vld [vmem:[%s8033 + $0xd8] sm:$0xf]
        %v8079 = vld [vmem:[%s8033 + $0xdc] sm:$0xf]
        %v8080 = vld [vmem:[%s8033 + $0xe0] sm:$0xf]
        %v8081 = vld [vmem:[%s8033 + $0xe4] sm:$0xf]
        %v8082 = vld [vmem:[%s8033 + $0xf0] sm:$0xf]
        %v8083 = vld [vmem:[%s8033 + $0xf4] sm:$0xf]
        %v8084 = vld [vmem:[%s8033 + $0xf8] sm:$0xf]
        %v8085 = vld [vmem:[%s8033 + $0xfc] sm:$0xf]
        %v8086 = vld [vmem:[%s8033 + $0x100] sm:$0xf]
        %v8087 = vld [vmem:[%s8033 + $0x104] sm:$0xf]
        %v8088 = vld [vmem:[%s8033 + $0x108] sm:$0xf]
        %v8089 = vld [vmem:[%s8033 + $0x10c] sm:$0xf]
        %v8090 = vld [vmem:[%s8033 + $0x118] sm:$0xf]
        %v8091 = vld [vmem:[%s8033 + $0x11c] sm:$0xf]
        %v8092 = vld [vmem:[%s8033 + $0x120] sm:$0xf]
        %v8093 = vld [vmem:[%s8033 + $0x124] sm:$0xf]
        %v8094 = vld [vmem:[%s8033 + $0x128] sm:$0xf]
        %v8095 = vld [vmem:[%s8033 + $0x12c] sm:$0xf]
        %v8096 = vld [vmem:[%s8033 + $0x130] sm:$0xf]
        %v8097 = vld [vmem:[%s8033 + $0x134] sm:$0xf]
        %v8098 = vld [vmem:[#allocation3] sm:$0xff]
        %v8099 = vld [vmem:[#allocation3 + $0x8] sm:$0xff]
        %v8100 = vld [vmem:[#allocation3 + $0x10] sm:$0xff]
        %v8101 = vld [vmem:[#allocation3 + $0x18] sm:$0xff]
        %v8102 = vld [vmem:[#allocation3 + $0x20] sm:$0xff]
        %v8103 = vld [vmem:[#allocation3 + $0x28] sm:$0xff]
        %v8104 = vld [vmem:[#allocation3 + $0x30] sm:$0xff]
        %v8105 = vld [vmem:[#allocation3 + $0x38] sm:$0xff]
        %v8106 = vld [vmem:[#allocation3 + $0x40] sm:$0xff]
        %v8107 = vld [vmem:[#allocation3 + $0x48] sm:$0xff]
        %v8108 = vld [vmem:[#allocation3 + $0x50] sm:$0xff]
        %v8109 = vld [vmem:[#allocation3 + $0x58] sm:$0xff]
        %v8110 = vld [vmem:[#allocation3 + $0x60] sm:$0xff]
        %v8111 = vld [vmem:[#allocation3 + $0x68] sm:$0xff]
        %v8112 = vld [vmem:[#allocation3 + $0x70] sm:$0xff]
        %v8113 = vld [vmem:[#allocation3 + $0x78] sm:$0xff]
        %v8114 = vld [vmem:[#allocation3 + $0x80] sm:$0xff]
        %v8115 = vld [vmem:[#allocation3 + $0x88] sm:$0xff]
        %v8116 = vld [vmem:[#allocation3 + $0x90] sm:$0xff]
        %v8117 = vld [vmem:[#allocation3 + $0x98] sm:$0xff]
        %v8118 = vld [vmem:[#allocation3 + $0xa0] sm:$0xff]
        %v8119 = vld [vmem:[#allocation3 + $0xa8] sm:$0xff]
        %v8120 = vld [vmem:[#allocation3 + $0xb0] sm:$0xff]
        %v8121 = vld [vmem:[#allocation3 + $0xb8] sm:$0xff]
        %v8122 = vld [vmem:[#allocation3 + $0xc0] sm:$0xff]
        %v8123 = vld [vmem:[#allocation3 + $0xc8] sm:$0xff]
        %v8124 = vld [vmem:[#allocation3 + $0xd0] sm:$0xff]
        %v8125 = vld [vmem:[#allocation3 + $0xd8] sm:$0xff]
        %v8126 = vld [vmem:[#allocation3 + $0xe0] sm:$0xff]
        %v8127 = vld [vmem:[#allocation3 + $0xe8] sm:$0xff]
        %v8128 = vld [vmem:[#allocation3 + $0xf0] sm:$0xff]
        %v8129 = vld [vmem:[#allocation3 + $0xf8] sm:$0xff]
        %v8130 = vld [vmem:[#allocation3 + $0x100] sm:$0xff]
        %v8131 = vld [vmem:[#allocation3 + $0x108] sm:$0xff]
        %v8132 = vld [vmem:[#allocation3 + $0x110] sm:$0xff]
        %v8133 = vld [vmem:[#allocation3 + $0x118] sm:$0xff]
        %v8134 = vld [vmem:[#allocation3 + $0x120] sm:$0xff]
        %v8135 = vld [vmem:[#allocation3 + $0x128] sm:$0xff]
        %v8136 = vld [vmem:[#allocation3 + $0x130] sm:$0xff]
        %v8137 = vld [vmem:[#allocation3 + $0x138] sm:$0xff]
        %v8138 = vld [vmem:[#allocation3 + $0x140] sm:$0xff]
        %v8139 = vld [vmem:[#allocation3 + $0x148] sm:$0xff]
        %v8140 = vld [vmem:[#allocation3 + $0x150] sm:$0xff]
        %v8141 = vld [vmem:[#allocation3 + $0x158] sm:$0xff]
        %v8142 = vld [vmem:[#allocation3 + $0x160] sm:$0xff]
        %v8143 = vld [vmem:[#allocation3 + $0x168] sm:$0xff]
        %v8144 = vld [vmem:[#allocation3 + $0x170] sm:$0xff]
        %v8145 = vld [vmem:[#allocation3 + $0x178] sm:$0xff]
        %v8146 = vld [vmem:[#allocation3 + $0x180] sm:$0xff]
        %v8147 = vld [vmem:[#allocation3 + $0x188] sm:$0xff]
        %v8148 = vld [vmem:[#allocation3 + $0x190] sm:$0xff]
        %v8149 = vld [vmem:[#allocation3 + $0x198] sm:$0xff]
        %v8150 = vld [vmem:[#allocation3 + $0x1a0] sm:$0xff]
        %v8151 = vld [vmem:[#allocation3 + $0x1a8] sm:$0xff]
        %v8152 = vld [vmem:[#allocation3 + $0x1b0] sm:$0xff]
        %v8153 = vld [vmem:[#allocation3 + $0x1b8] sm:$0xff]
        %v8154 = vld [vmem:[#allocation3 + $0x1c0] sm:$0xff]
        %v8155 = vld [vmem:[#allocation3 + $0x1c8] sm:$0xff]
        %v8156 = vld [vmem:[#allocation3 + $0x1d0] sm:$0xff]
        %v8157 = vld [vmem:[#allocation3 + $0x1d8] sm:$0xff]
        %v8158 = vld [vmem:[#allocation3 + $0x1e0] sm:$0xff]
        %v8159 = vld [vmem:[#allocation3 + $0x1e8] sm:$0xff]
        %v8160 = vld [vmem:[#allocation3 + $0x1f0] sm:$0xff]
        %v8161 = vld [vmem:[#allocation3 + $0x1f8] sm:$0xff]
        %s8162 = scalar_lea.vmem [#allocation7], 168
        %v8163 = vld [vmem:[%s8162] sm:$0xf]
        %v8164 = vld [vmem:[%s8162 + $0x4] sm:$0xf]
        %v8165 = vld [vmem:[%s8162 + $0x8] sm:$0xf]
        %v8166 = vld [vmem:[%s8162 + $0xc] sm:$0xf]
        %v8167 = vld [vmem:[%s8162 + $0x10] sm:$0xf]
        %v8168 = vld [vmem:[%s8162 + $0x14] sm:$0xf]
        %v8233 = vunpack.c.l.b16 %v8034
        %v8234 = vunpack.c.l.b16 %v8035
        %v8235 = vunpack.c.l.b16 %v8036
        %v8236 = vunpack.c.l.b16 %v8037
        %v8237 = vunpack.c.l.b16 %v8038
        %v8238 = vunpack.c.l.b16 %v8039
        %v8239 = vunpack.c.l.b16 %v8040
        %v8240 = vunpack.c.l.b16 %v8041
        %v8241 = vunpack.c.l.b16 %v8042
        %v8242 = vunpack.c.l.b16 %v8043
        %v8243 = vunpack.c.l.b16 %v8044
        %v8244 = vunpack.c.l.b16 %v8045
        %v8245 = vunpack.c.l.b16 %v8046
        %v8246 = vunpack.c.l.b16 %v8047
        %v8247 = vunpack.c.l.b16 %v8048
        %v8248 = vunpack.c.l.b16 %v8049
        %v8249 = vunpack.c.l.b16 %v8050
        %v8250 = vunpack.c.l.b16 %v8051
        %v8251 = vunpack.c.l.b16 %v8052
        %v8252 = vunpack.c.l.b16 %v8053
        %v8253 = vunpack.c.l.b16 %v8054
        %v8254 = vunpack.c.l.b16 %v8055
        %v8255 = vunpack.c.l.b16 %v8056
        %v8256 = vunpack.c.l.b16 %v8057
        %v8257 = vunpack.c.l.b16 %v8058
        %v8258 = vunpack.c.l.b16 %v8059
        %v8259 = vunpack.c.l.b16 %v8060
        %v8260 = vunpack.c.l.b16 %v8061
        %v8261 = vunpack.c.l.b16 %v8062
        %v8262 = vunpack.c.l.b16 %v8063
        %v8263 = vunpack.c.l.b16 %v8064
        %v8264 = vunpack.c.l.b16 %v8065
        %v8265 = vunpack.c.l.b16 %v8066
        %v8266 = vunpack.c.l.b16 %v8067
        %v8267 = vunpack.c.l.b16 %v8068
        %v8268 = vunpack.c.l.b16 %v8069
        %v8269 = vunpack.c.l.b16 %v8070
        %v8270 = vunpack.c.l.b16 %v8071
        %v8271 = vunpack.c.l.b16 %v8072
        %v8272 = vunpack.c.l.b16 %v8073
        %v8273 = vunpack.c.l.b16 %v8074
        %v8274 = vunpack.c.l.b16 %v8075
        %v8275 = vunpack.c.l.b16 %v8076
        %v8276 = vunpack.c.l.b16 %v8077
        %v8277 = vunpack.c.l.b16 %v8078
        %v8278 = vunpack.c.l.b16 %v8079
        %v8279 = vunpack.c.l.b16 %v8080
        %v8280 = vunpack.c.l.b16 %v8081
        %v8281 = vunpack.c.l.b16 %v8082
        %v8282 = vunpack.c.l.b16 %v8083
        %v8283 = vunpack.c.l.b16 %v8084
        %v8284 = vunpack.c.l.b16 %v8085
        %v8285 = vunpack.c.l.b16 %v8086
        %v8286 = vunpack.c.l.b16 %v8087
        %v8287 = vunpack.c.l.b16 %v8088
        %v8288 = vunpack.c.l.b16 %v8089
        %v8289 = vunpack.c.l.b16 %v8090
        %v8290 = vunpack.c.l.b16 %v8091
        %v8291 = vunpack.c.l.b16 %v8092
        %v8292 = vunpack.c.l.b16 %v8093
        %v8293 = vunpack.c.l.b16 %v8094
        %v8294 = vunpack.c.l.b16 %v8095
        %v8295 = vunpack.c.l.b16 %v8096
        %v8296 = vunpack.c.l.b16 %v8097
        %v8297 = vpack.c.b16 %v8234, %v8233
        %v8298 = vpack.c.b16 %v8236, %v8235
        %v8299 = vpack.c.b16 %v8238, %v8237
        %v8300 = vpack.c.b16 %v8240, %v8239
        %v8301 = vpack.c.b16 %v8242, %v8241
        %v8302 = vpack.c.b16 %v8244, %v8243
        %v8303 = vpack.c.b16 %v8246, %v8245
        %v8304 = vpack.c.b16 %v8248, %v8247
        %v8305 = vpack.c.b16 %v8250, %v8249
        %v8306 = vpack.c.b16 %v8252, %v8251
        %v8307 = vpack.c.b16 %v8254, %v8253
        %v8308 = vpack.c.b16 %v8256, %v8255
        %v8309 = vpack.c.b16 %v8258, %v8257
        %v8310 = vpack.c.b16 %v8260, %v8259
        %v8311 = vpack.c.b16 %v8262, %v8261
        %v8312 = vpack.c.b16 %v8264, %v8263
        %v8313 = vpack.c.b16 %v8266, %v8265
        %v8314 = vpack.c.b16 %v8268, %v8267
        %v8315 = vpack.c.b16 %v8270, %v8269
        %v8316 = vpack.c.b16 %v8272, %v8271
        %v8317 = vpack.c.b16 %v8274, %v8273
        %v8318 = vpack.c.b16 %v8276, %v8275
        %v8319 = vpack.c.b16 %v8278, %v8277
        %v8320 = vpack.c.b16 %v8280, %v8279
        %v8321 = vpack.c.b16 %v8282, %v8281
        %v8322 = vpack.c.b16 %v8284, %v8283
        %v8323 = vpack.c.b16 %v8286, %v8285
        %v8324 = vpack.c.b16 %v8288, %v8287
        %v8325 = vpack.c.b16 %v8290, %v8289
        %v8326 = vpack.c.b16 %v8292, %v8291
        %v8327 = vpack.c.b16 %v8294, %v8293
        %v8328 = vpack.c.b16 %v8296, %v8295
        %v8335 = vunpack.c.l.b16 %v8163
        %v8336 = vunpack.c.l.b16 %v8164
        %v8337 = vunpack.c.l.b16 %v8165
        %v8338 = vunpack.c.l.b16 %v8166
        %v8339 = vunpack.c.l.b16 %v8167
        %v8340 = vunpack.c.l.b16 %v8168
        %v8341 = vpack.c.b16 %v8336, %v8335
        %v8342 = vpack.c.b16 %v8338, %v8337
        %v8343 = vpack.c.b16 %v8340, %v8339
        %v8348 = vsel %vm2558, %v8297, 0
        %v8351 = vsel %vm2558, %v8298, 0
        %v8354 = vsel %vm2558, %v8299, 0
        %v8357 = vsel %vm2558, %v8300, 0
        %v8360 = vsel %vm2558, %v8301, 0
        %v8363 = vsel %vm2558, %v8302, 0
        %v8366 = vsel %vm2558, %v8303, 0
        %v8369 = vsel %vm2558, %v8304, 0
        %v8372 = vsel %vm2558, %v8305, 0
        %v8375 = vsel %vm2558, %v8306, 0
        %v8378 = vsel %vm2558, %v8307, 0
        %v8381 = vsel %vm2558, %v8308, 0
        %v8384 = vsel %vm2558, %v8309, 0
        %v8387 = vsel %vm2558, %v8310, 0
        %v8390 = vsel %vm2558, %v8311, 0
        %v8393 = vsel %vm2558, %v8312, 0
        %v8396 = vsel %vm2558, %v8313, 0
        %v8399 = vsel %vm2558, %v8314, 0
        %v8402 = vsel %vm2558, %v8315, 0
        %v8405 = vsel %vm2558, %v8316, 0
        %v8408 = vsel %vm2558, %v8317, 0
        %v8411 = vsel %vm2558, %v8318, 0
        %v8414 = vsel %vm2558, %v8319, 0
        %v8417 = vsel %vm2558, %v8320, 0
        %v8420 = vsel %vm2558, %v8321, 0
        %v8423 = vsel %vm2558, %v8322, 0
        %v8426 = vsel %vm2558, %v8323, 0
        %v8429 = vsel %vm2558, %v8324, 0
        %v8432 = vsel %vm2558, %v8325, 0
        %v8435 = vsel %vm2558, %v8326, 0
        %v8438 = vsel %vm2558, %v8327, 0
        %v8441 = vsel %vm2558, %v8328, 0
        %8443 = vmatprep.subr.bf16.mxu0 0
        %8444 = vmatpush1.bf16.msra.mxu0 %v8341
        %8445 = vmatprep.subr.bf16.mxu0 0
        %8446 = vmatpush1.bf16.msra.mxu0 %v8342
        %8447 = vmatprep.subr.bf16.mxu0 0
        %8448 = vmatpush1.bf16.msra.mxu0 %v8343
        %8449 = vmatprep.subr.bf16.mxu0 0
        %8450 = vmatpush1.bf16.msra.mxu0 0
        %8451 = vmatprep.subr.bf16.mxu0 0
        %8452 = vmatpush1.bf16.msra.mxu0 0
        %8453 = vmatprep.subr.bf16.mxu0 0
        %8454 = vmatpush1.bf16.msra.mxu0 0
        %8455 = vmatprep.subr.bf16.mxu0 0
        %8456 = vmatpush1.bf16.msra.mxu0 0
        %8457 = vmatprep.subr.bf16.mxu0 0
        %8458 = vmatpush1.bf16.msra.mxu0 0
        %8459 = vmatprep.subr.bf16.mxu0 0
        %8460 = vmatpush1.bf16.msra.mxu0 0
        %8461 = vmatprep.subr.bf16.mxu0 0
        %8462 = vmatpush1.bf16.msra.mxu0 0
        %8463 = vmatprep.subr.bf16.mxu0 0
        %8464 = vmatpush1.bf16.msra.mxu0 0
        %8465 = vmatprep.subr.bf16.mxu0 0
        %8466 = vmatpush1.bf16.msra.mxu0 0
        %8467 = vmatprep.subr.bf16.mxu0 0
        %8468 = vmatpush1.bf16.msra.mxu0 0
        %8469 = vmatprep.subr.bf16.mxu0 0
        %8470 = vmatpush1.bf16.msra.mxu0 0
        %8471 = vmatprep.subr.bf16.mxu0 0
        %8472 = vmatpush1.bf16.msra.mxu0 0
        %8473 = vmatprep.subr.bf16.mxu0 0
        %8474 = vmatpush1.bf16.msra.mxu0 0
        %8475 = vmatprep.mubr.bf16.mxu0 0
        %8476 = vmatmul.mubr.bf16.gmra.mrb[0].mxu0 %v8348
        %v8477 = vpop.f32.mrb[0].mxu0
        %v8478 = vadd.f32 0.0, %v8477
        %v8479 = vpop.f32.mrb[0].mxu0
        %v8480 = vpop.f32.mrb[0].mxu0
        %v8481 = vadd.f32 0.0, %v8480
        %v8482 = vpop.f32.mrb[0].mxu0
        %8483 = vmatprep.mubr.bf16.mxu0 0
        %8484 = vmatmul.mubr.bf16.gmra.mrb[0].mxu0 %v8351
        %v8485 = vpop.f32.mrb[0].mxu0
        %v8486 = vadd.f32 0.0, %v8485
        %v8487 = vpop.f32.mrb[0].mxu0
        %v8488 = vpop.f32.mrb[0].mxu0
        %v8489 = vadd.f32 0.0, %v8488
        %v8490 = vpop.f32.mrb[0].mxu0
        %8491 = vmatprep.mubr.bf16.mxu0 0
        %8492 = vmatmul.mubr.bf16.gmra.mrb[0].mxu0 %v8354
        %v8493 = vpop.f32.mrb[0].mxu0
        %v8494 = vadd.f32 0.0, %v8493
        %v8495 = vpop.f32.mrb[0].mxu0
        %v8496 = vpop.f32.mrb[0].mxu0
        %v8497 = vadd.f32 0.0, %v8496
        %v8498 = vpop.f32.mrb[0].mxu0
        %8499 = vmatprep.mubr.bf16.mxu0 0
        %8500 = vmatmul.mubr.bf16.gmra.mrb[0].mxu0 %v8357
        %v8501 = vpop.f32.mrb[0].mxu0
        %v8502 = vadd.f32 0.0, %v8501
        %v8503 = vpop.f32.mrb[0].mxu0
        %v8504 = vpop.f32.mrb[0].mxu0
        %v8505 = vadd.f32 0.0, %v8504
        %v8506 = vpop.f32.mrb[0].mxu0
        %8507 = vmatprep.mubr.bf16.mxu0 0
        %8508 = vmatmul.mubr.bf16.gmra.mrb[0].mxu0 %v8360
        %v8509 = vpop.f32.mrb[0].mxu0
        %v8510 = vadd.f32 0.0, %v8509
        %v8511 = vpop.f32.mrb[0].mxu0
        %v8512 = vpop.f32.mrb[0].mxu0
        %v8513 = vadd.f32 0.0, %v8512
        %v8514 = vpop.f32.mrb[0].mxu0
        %8515 = vmatprep.mubr.bf16.mxu0 0
        %8516 = vmatmul.mubr.bf16.gmra.mrb[0].mxu0 %v8363
        %v8517 = vpop.f32.mrb[0].mxu0
        %v8518 = vadd.f32 0.0, %v8517
        %v8519 = vpop.f32.mrb[0].mxu0
        %v8520 = vpop.f32.mrb[0].mxu0
        %v8521 = vadd.f32 0.0, %v8520
        %v8522 = vpop.f32.mrb[0].mxu0
        %8523 = vmatprep.mubr.bf16.mxu0 0
        %8524 = vmatmul.mubr.bf16.gmra.mrb[0].mxu0 %v8366
        %v8525 = vpop.f32.mrb[0].mxu0
        %v8526 = vadd.f32 0.0, %v8525
        %v8527 = vpop.f32.mrb[0].mxu0
        %v8528 = vpop.f32.mrb[0].mxu0
        %v8529 = vadd.f32 0.0, %v8528
        %v8530 = vpop.f32.mrb[0].mxu0
        %8531 = vmatprep.mubr.bf16.mxu0 0
        %8532 = vmatmul.mubr.bf16.gmra.mrb[0].mxu0 %v8369
        %v8533 = vpop.f32.mrb[0].mxu0
        %v8534 = vadd.f32 0.0, %v8533
        %v8535 = vpop.f32.mrb[0].mxu0
        %v8536 = vpop.f32.mrb[0].mxu0
        %v8537 = vadd.f32 0.0, %v8536
        %v8538 = vpop.f32.mrb[0].mxu0
        %8539 = vmatprep.mubr.bf16.mxu0 0
        %8540 = vmatmul.mubr.bf16.gmra.mrb[0].mxu0 %v8372
        %v8541 = vpop.f32.mrb[0].mxu0
        %v8542 = vadd.f32 0.0, %v8541
        %v8543 = vpop.f32.mrb[0].mxu0
        %v8544 = vpop.f32.mrb[0].mxu0
        %v8545 = vadd.f32 0.0, %v8544
        %v8546 = vpop.f32.mrb[0].mxu0
        %8547 = vmatprep.mubr.bf16.mxu0 0
        %8548 = vmatmul.mubr.bf16.gmra.mrb[0].mxu0 %v8375
        %v8549 = vpop.f32.mrb[0].mxu0
        %v8550 = vadd.f32 0.0, %v8549
        %v8551 = vpop.f32.mrb[0].mxu0
        %v8552 = vpop.f32.mrb[0].mxu0
        %v8553 = vadd.f32 0.0, %v8552
        %v8554 = vpop.f32.mrb[0].mxu0
        %8555 = vmatprep.mubr.bf16.mxu0 0
        %8556 = vmatmul.mubr.bf16.gmra.mrb[0].mxu0 %v8378
        %v8557 = vpop.f32.mrb[0].mxu0
        %v8558 = vadd.f32 0.0, %v8557
        %v8559 = vpop.f32.mrb[0].mxu0
        %v8560 = vpop.f32.mrb[0].mxu0
        %v8561 = vadd.f32 0.0, %v8560
        %v8562 = vpop.f32.mrb[0].mxu0
        %8563 = vmatprep.mubr.bf16.mxu0 0
        %8564 = vmatmul.mubr.bf16.gmra.mrb[0].mxu0 %v8381
        %v8565 = vpop.f32.mrb[0].mxu0
        %v8566 = vadd.f32 0.0, %v8565
        %v8567 = vpop.f32.mrb[0].mxu0
        %v8568 = vpop.f32.mrb[0].mxu0
        %v8569 = vadd.f32 0.0, %v8568
        %v8570 = vpop.f32.mrb[0].mxu0
        %8571 = vmatprep.mubr.bf16.mxu0 0
        %8572 = vmatmul.mubr.bf16.gmra.mrb[0].mxu0 %v8384
        %v8573 = vpop.f32.mrb[0].mxu0
        %v8574 = vadd.f32 0.0, %v8573
        %v8575 = vpop.f32.mrb[0].mxu0
        %v8576 = vpop.f32.mrb[0].mxu0
        %v8577 = vadd.f32 0.0, %v8576
        %v8578 = vpop.f32.mrb[0].mxu0
        %8579 = vmatprep.mubr.bf16.mxu0 0
        %8580 = vmatmul.mubr.bf16.gmra.mrb[0].mxu0 %v8387
        %v8581 = vpop.f32.mrb[0].mxu0
        %v8582 = vadd.f32 0.0, %v8581
        %v8583 = vpop.f32.mrb[0].mxu0
        %v8584 = vpop.f32.mrb[0].mxu0
        %v8585 = vadd.f32 0.0, %v8584
        %v8586 = vpop.f32.mrb[0].mxu0
        %8587 = vmatprep.mubr.bf16.mxu0 0
        %8588 = vmatmul.mubr.bf16.gmra.mrb[0].mxu0 %v8390
        %v8589 = vpop.f32.mrb[0].mxu0
        %v8590 = vadd.f32 0.0, %v8589
        %v8591 = vpop.f32.mrb[0].mxu0
        %v8592 = vpop.f32.mrb[0].mxu0
        %v8593 = vadd.f32 0.0, %v8592
        %v8594 = vpop.f32.mrb[0].mxu0
        %8595 = vmatprep.mubr.bf16.mxu0 0
        %8596 = vmatmul.mubr.bf16.gmra.mrb[0].mxu0 %v8393
        %v8597 = vpop.f32.mrb[0].mxu0
        %v8598 = vadd.f32 0.0, %v8597
        %v8599 = vpop.f32.mrb[0].mxu0
        %v8600 = vpop.f32.mrb[0].mxu0
        %v8601 = vadd.f32 0.0, %v8600
        %v8602 = vpop.f32.mrb[0].mxu0
        %8603 = vmatprep.mubr.bf16.mxu0 0
        %8604 = vmatmul.mubr.bf16.gmra.mrb[0].mxu0 %v8396
        %v8605 = vpop.f32.mrb[0].mxu0
        %v8606 = vadd.f32 0.0, %v8605
        %v8607 = vpop.f32.mrb[0].mxu0
        %v8608 = vpop.f32.mrb[0].mxu0
        %v8609 = vadd.f32 0.0, %v8608
        %v8610 = vpop.f32.mrb[0].mxu0
        %8611 = vmatprep.mubr.bf16.mxu0 0
        %8612 = vmatmul.mubr.bf16.gmra.mrb[0].mxu0 %v8399
        %v8613 = vpop.f32.mrb[0].mxu0
        %v8614 = vadd.f32 0.0, %v8613
        %v8615 = vpop.f32.mrb[0].mxu0
        %v8616 = vpop.f32.mrb[0].mxu0
        %v8617 = vadd.f32 0.0, %v8616
        %v8618 = vpop.f32.mrb[0].mxu0
        %8619 = vmatprep.mubr.bf16.mxu0 0
        %8620 = vmatmul.mubr.bf16.gmra.mrb[0].mxu0 %v8402
        %v8621 = vpop.f32.mrb[0].mxu0
        %v8622 = vadd.f32 0.0, %v8621
        %v8623 = vpop.f32.mrb[0].mxu0
        %v8624 = vpop.f32.mrb[0].mxu0
        %v8625 = vadd.f32 0.0, %v8624
        %v8626 = vpop.f32.mrb[0].mxu0
        %8627 = vmatprep.mubr.bf16.mxu0 0
        %8628 = vmatmul.mubr.bf16.gmra.mrb[0].mxu0 %v8405
        %v8629 = vpop.f32.mrb[0].mxu0
        %v8630 = vadd.f32 0.0, %v8629
        %v8631 = vpop.f32.mrb[0].mxu0
        %v8632 = vpop.f32.mrb[0].mxu0
        %v8633 = vadd.f32 0.0, %v8632
        %v8634 = vpop.f32.mrb[0].mxu0
        %8635 = vmatprep.mubr.bf16.mxu0 0
        %8636 = vmatmul.mubr.bf16.gmra.mrb[0].mxu0 %v8408
        %v8637 = vpop.f32.mrb[0].mxu0
        %v8638 = vadd.f32 0.0, %v8637
        %v8639 = vpop.f32.mrb[0].mxu0
        %v8640 = vpop.f32.mrb[0].mxu0
        %v8641 = vadd.f32 0.0, %v8640
        %v8642 = vpop.f32.mrb[0].mxu0
        %8643 = vmatprep.mubr.bf16.mxu0 0
        %8644 = vmatmul.mubr.bf16.gmra.mrb[0].mxu0 %v8411
        %v8645 = vpop.f32.mrb[0].mxu0
        %v8646 = vadd.f32 0.0, %v8645
        %v8647 = vpop.f32.mrb[0].mxu0
        %v8648 = vpop.f32.mrb[0].mxu0
        %v8649 = vadd.f32 0.0, %v8648
        %v8650 = vpop.f32.mrb[0].mxu0
        %8651 = vmatprep.mubr.bf16.mxu0 0
        %8652 = vmatmul.mubr.bf16.gmra.mrb[0].mxu0 %v8414
        %v8653 = vpop.f32.mrb[0].mxu0
        %v8654 = vadd.f32 0.0, %v8653
        %v8655 = vpop.f32.mrb[0].mxu0
        %v8656 = vpop.f32.mrb[0].mxu0
        %v8657 = vadd.f32 0.0, %v8656
        %v8658 = vpop.f32.mrb[0].mxu0
        %8659 = vmatprep.mubr.bf16.mxu0 0
        %8660 = vmatmul.mubr.bf16.gmra.mrb[0].mxu0 %v8417
        %v8661 = vpop.f32.mrb[0].mxu0
        %v8662 = vadd.f32 0.0, %v8661
        %v8663 = vpop.f32.mrb[0].mxu0
        %v8664 = vpop.f32.mrb[0].mxu0
        %v8665 = vadd.f32 0.0, %v8664
        %v8666 = vpop.f32.mrb[0].mxu0
        %8667 = vmatprep.mubr.bf16.mxu0 0
        %8668 = vmatmul.mubr.bf16.gmra.mrb[0].mxu0 %v8420
        %v8669 = vpop.f32.mrb[0].mxu0
        %v8670 = vadd.f32 0.0, %v8669
        %v8671 = vpop.f32.mrb[0].mxu0
        %v8672 = vpop.f32.mrb[0].mxu0
        %v8673 = vadd.f32 0.0, %v8672
        %v8674 = vpop.f32.mrb[0].mxu0
        %8675 = vmatprep.mubr.bf16.mxu0 0
        %8676 = vmatmul.mubr.bf16.gmra.mrb[0].mxu0 %v8423
        %v8677 = vpop.f32.mrb[0].mxu0
        %v8678 = vadd.f32 0.0, %v8677
        %v8679 = vpop.f32.mrb[0].mxu0
        %v8680 = vpop.f32.mrb[0].mxu0
        %v8681 = vadd.f32 0.0, %v8680
        %v8682 = vpop.f32.mrb[0].mxu0
        %8683 = vmatprep.mubr.bf16.mxu0 0
        %8684 = vmatmul.mubr.bf16.gmra.mrb[0].mxu0 %v8426
        %v8685 = vpop.f32.mrb[0].mxu0
        %v8686 = vadd.f32 0.0, %v8685
        %v8687 = vpop.f32.mrb[0].mxu0
        %v8688 = vpop.f32.mrb[0].mxu0
        %v8689 = vadd.f32 0.0, %v8688
        %v8690 = vpop.f32.mrb[0].mxu0
        %8691 = vmatprep.mubr.bf16.mxu0 0
        %8692 = vmatmul.mubr.bf16.gmra.mrb[0].mxu0 %v8429
        %v8693 = vpop.f32.mrb[0].mxu0
        %v8694 = vadd.f32 0.0, %v8693
        %v8695 = vpop.f32.mrb[0].mxu0
        %v8696 = vpop.f32.mrb[0].mxu0
        %v8697 = vadd.f32 0.0, %v8696
        %v8698 = vpop.f32.mrb[0].mxu0
        %8699 = vmatprep.mubr.bf16.mxu0 0
        %8700 = vmatmul.mubr.bf16.gmra.mrb[0].mxu0 %v8432
        %v8701 = vpop.f32.mrb[0].mxu0
        %v8702 = vadd.f32 0.0, %v8701
        %v8703 = vpop.f32.mrb[0].mxu0
        %v8704 = vpop.f32.mrb[0].mxu0
        %v8705 = vadd.f32 0.0, %v8704
        %v8706 = vpop.f32.mrb[0].mxu0
        %8707 = vmatprep.mubr.bf16.mxu0 0
        %8708 = vmatmul.mubr.bf16.gmra.mrb[0].mxu0 %v8435
        %v8709 = vpop.f32.mrb[0].mxu0
        %v8710 = vadd.f32 0.0, %v8709
        %v8711 = vpop.f32.mrb[0].mxu0
        %v8712 = vpop.f32.mrb[0].mxu0
        %v8713 = vadd.f32 0.0, %v8712
        %v8714 = vpop.f32.mrb[0].mxu0
        %8715 = vmatprep.mubr.bf16.mxu0 0
        %8716 = vmatmul.mubr.bf16.gmra.mrb[0].mxu0 %v8438
        %v8717 = vpop.f32.mrb[0].mxu0
        %v8718 = vadd.f32 0.0, %v8717
        %v8719 = vpop.f32.mrb[0].mxu0
        %v8720 = vpop.f32.mrb[0].mxu0
        %v8721 = vadd.f32 0.0, %v8720
        %v8722 = vpop.f32.mrb[0].mxu0
        %8723 = vmatprep.mubr.bf16.mxu0 0
        %8724 = vmatmul.mubr.bf16.gmra.mrb[0].mxu0 %v8441
        %v8725 = vpop.f32.mrb[0].mxu0
        %v8726 = vadd.f32 0.0, %v8725
        %v8727 = vpop.f32.mrb[0].mxu0
        %v8728 = vpop.f32.mrb[0].mxu0
        %v8729 = vadd.f32 0.0, %v8728
        %v8730 = vpop.f32.mrb[0].mxu0
        %8731 = vdwg.mxu0
        %v8732 = vadd.f32 %v8098, %v8478
        %v8733 = vadd.f32 %v8099, %v8481
        %v8734 = vadd.f32 %v8100, %v8486
        %v8735 = vadd.f32 %v8101, %v8489
        %v8736 = vadd.f32 %v8102, %v8494
        %v8737 = vadd.f32 %v8103, %v8497
        %v8738 = vadd.f32 %v8104, %v8502
        %v8739 = vadd.f32 %v8105, %v8505
        %v8740 = vadd.f32 %v8106, %v8510
        %v8741 = vadd.f32 %v8107, %v8513
        %v8742 = vadd.f32 %v8108, %v8518
        %v8743 = vadd.f32 %v8109, %v8521
        %v8744 = vadd.f32 %v8110, %v8526
        %v8745 = vadd.f32 %v8111, %v8529
        %v8746 = vadd.f32 %v8112, %v8534
        %v8747 = vadd.f32 %v8113, %v8537
        %v8748 = vadd.f32 %v8114, %v8542
        %v8749 = vadd.f32 %v8115, %v8545
        %v8750 = vadd.f32 %v8116, %v8550
        %v8751 = vadd.f32 %v8117, %v8553
        %v8752 = vadd.f32 %v8118, %v8558
        %v8753 = vadd.f32 %v8119, %v8561
        %v8754 = vadd.f32 %v8120, %v8566
        %v8755 = vadd.f32 %v8121, %v8569
        %v8756 = vadd.f32 %v8122, %v8574
        %v8757 = vadd.f32 %v8123, %v8577
        %v8758 = vadd.f32 %v8124, %v8582
        %v8759 = vadd.f32 %v8125, %v8585
        %v8760 = vadd.f32 %v8126, %v8590
        %v8761 = vadd.f32 %v8127, %v8593
        %v8762 = vadd.f32 %v8128, %v8598
        %v8763 = vadd.f32 %v8129, %v8601
        %v8764 = vadd.f32 %v8130, %v8606
        %v8765 = vadd.f32 %v8131, %v8609
        %v8766 = vadd.f32 %v8132, %v8614
        %v8767 = vadd.f32 %v8133, %v8617
        %v8768 = vadd.f32 %v8134, %v8622
        %v8769 = vadd.f32 %v8135, %v8625
        %v8770 = vadd.f32 %v8136, %v8630
        %v8771 = vadd.f32 %v8137, %v8633
        %v8772 = vadd.f32 %v8138, %v8638
        %v8773 = vadd.f32 %v8139, %v8641
        %v8774 = vadd.f32 %v8140, %v8646
        %v8775 = vadd.f32 %v8141, %v8649
        %v8776 = vadd.f32 %v8142, %v8654
        %v8777 = vadd.f32 %v8143, %v8657
        %v8778 = vadd.f32 %v8144, %v8662
        %v8779 = vadd.f32 %v8145, %v8665
        %v8780 = vadd.f32 %v8146, %v8670
        %v8781 = vadd.f32 %v8147, %v8673
        %v8782 = vadd.f32 %v8148, %v8678
        %v8783 = vadd.f32 %v8149, %v8681
        %v8784 = vadd.f32 %v8150, %v8686
        %v8785 = vadd.f32 %v8151, %v8689
        %v8786 = vadd.f32 %v8152, %v8694
        %v8787 = vadd.f32 %v8153, %v8697
        %v8788 = vadd.f32 %v8154, %v8702
        %v8789 = vadd.f32 %v8155, %v8705
        %v8790 = vadd.f32 %v8156, %v8710
        %v8791 = vadd.f32 %v8157, %v8713
        %v8792 = vadd.f32 %v8158, %v8718
        %v8793 = vadd.f32 %v8159, %v8721
        %v8794 = vadd.f32 %v8160, %v8726
        %v8795 = vadd.f32 %v8161, %v8729
        %8796 = vst [vmem:[#allocation3] sm:$0xff] %v8732
        %8797 = vst [vmem:[#allocation3 + $0x8] sm:$0xff] %v8733
        %8798 = vst [vmem:[#allocation3 + $0x10] sm:$0xff] %v8734
        %8799 = vst [vmem:[#allocation3 + $0x18] sm:$0xff] %v8735
        %8800 = vst [vmem:[#allocation3 + $0x20] sm:$0xff] %v8736
        %8801 = vst [vmem:[#allocation3 + $0x28] sm:$0xff] %v8737
        %8802 = vst [vmem:[#allocation3 + $0x30] sm:$0xff] %v8738
        %8803 = vst [vmem:[#allocation3 + $0x38] sm:$0xff] %v8739
        %8804 = vst [vmem:[#allocation3 + $0x40] sm:$0xff] %v8740
        %8805 = vst [vmem:[#allocation3 + $0x48] sm:$0xff] %v8741
        %8806 = vst [vmem:[#allocation3 + $0x50] sm:$0xff] %v8742
        %8807 = vst [vmem:[#allocation3 + $0x58] sm:$0xff] %v8743
        %8808 = vst [vmem:[#allocation3 + $0x60] sm:$0xff] %v8744
        %8809 = vst [vmem:[#allocation3 + $0x68] sm:$0xff] %v8745
        %8810 = vst [vmem:[#allocation3 + $0x70] sm:$0xff] %v8746
        %8811 = vst [vmem:[#allocation3 + $0x78] sm:$0xff] %v8747
        %8812 = vst [vmem:[#allocation3 + $0x80] sm:$0xff] %v8748
        %8813 = vst [vmem:[#allocation3 + $0x88] sm:$0xff] %v8749
        %8814 = vst [vmem:[#allocation3 + $0x90] sm:$0xff] %v8750
        %8815 = vst [vmem:[#allocation3 + $0x98] sm:$0xff] %v8751
        %8816 = vst [vmem:[#allocation3 + $0xa0] sm:$0xff] %v8752
        %8817 = vst [vmem:[#allocation3 + $0xa8] sm:$0xff] %v8753
        %8818 = vst [vmem:[#allocation3 + $0xb0] sm:$0xff] %v8754
        %8819 = vst [vmem:[#allocation3 + $0xb8] sm:$0xff] %v8755
        %8820 = vst [vmem:[#allocation3 + $0xc0] sm:$0xff] %v8756
        %8821 = vst [vmem:[#allocation3 + $0xc8] sm:$0xff] %v8757
        %8822 = vst [vmem:[#allocation3 + $0xd0] sm:$0xff] %v8758
        %8823 = vst [vmem:[#allocation3 + $0xd8] sm:$0xff] %v8759
        %8824 = vst [vmem:[#allocation3 + $0xe0] sm:$0xff] %v8760
        %8825 = vst [vmem:[#allocation3 + $0xe8] sm:$0xff] %v8761
        %8826 = vst [vmem:[#allocation3 + $0xf0] sm:$0xff] %v8762
        %8827 = vst [vmem:[#allocation3 + $0xf8] sm:$0xff] %v8763
        %8828 = vst [vmem:[#allocation3 + $0x100] sm:$0xff] %v8764
        %8829 = vst [vmem:[#allocation3 + $0x108] sm:$0xff] %v8765
        %8830 = vst [vmem:[#allocation3 + $0x110] sm:$0xff] %v8766
        %8831 = vst [vmem:[#allocation3 + $0x118] sm:$0xff] %v8767
        %8832 = vst [vmem:[#allocation3 + $0x120] sm:$0xff] %v8768
        %8833 = vst [vmem:[#allocation3 + $0x128] sm:$0xff] %v8769
        %8834 = vst [vmem:[#allocation3 + $0x130] sm:$0xff] %v8770
        %8835 = vst [vmem:[#allocation3 + $0x138] sm:$0xff] %v8771
        %8836 = vst [vmem:[#allocation3 + $0x140] sm:$0xff] %v8772
        %8837 = vst [vmem:[#allocation3 + $0x148] sm:$0xff] %v8773
        %8838 = vst [vmem:[#allocation3 + $0x150] sm:$0xff] %v8774
        %8839 = vst [vmem:[#allocation3 + $0x158] sm:$0xff] %v8775
        %8840 = vst [vmem:[#allocation3 + $0x160] sm:$0xff] %v8776
        %8841 = vst [vmem:[#allocation3 + $0x168] sm:$0xff] %v8777
        %8842 = vst [vmem:[#allocation3 + $0x170] sm:$0xff] %v8778
        %8843 = vst [vmem:[#allocation3 + $0x178] sm:$0xff] %v8779
        %8844 = vst [vmem:[#allocation3 + $0x180] sm:$0xff] %v8780
        %8845 = vst [vmem:[#allocation3 + $0x188] sm:$0xff] %v8781
        %8846 = vst [vmem:[#allocation3 + $0x190] sm:$0xff] %v8782
        %8847 = vst [vmem:[#allocation3 + $0x198] sm:$0xff] %v8783
        %8848 = vst [vmem:[#allocation3 + $0x1a0] sm:$0xff] %v8784
        %8849 = vst [vmem:[#allocation3 + $0x1a8] sm:$0xff] %v8785
        %8850 = vst [vmem:[#allocation3 + $0x1b0] sm:$0xff] %v8786
        %8851 = vst [vmem:[#allocation3 + $0x1b8] sm:$0xff] %v8787
        %8852 = vst [vmem:[#allocation3 + $0x1c0] sm:$0xff] %v8788
        %8853 = vst [vmem:[#allocation3 + $0x1c8] sm:$0xff] %v8789
        %8854 = vst [vmem:[#allocation3 + $0x1d0] sm:$0xff] %v8790
        %8855 = vst [vmem:[#allocation3 + $0x1d8] sm:$0xff] %v8791
        %8856 = vst [vmem:[#allocation3 + $0x1e0] sm:$0xff] %v8792
        %8857 = vst [vmem:[#allocation3 + $0x1e8] sm:$0xff] %v8793
        %8858 = vst [vmem:[#allocation3 + $0x1f0] sm:$0xff] %v8794
        %8859 = vst [vmem:[#allocation3 + $0x1f8] sm:$0xff] %v8795
        %s8860 = scalar_lea.vmem [#allocation2], 88
        %v8861 = vld [vmem:[%s8860] sm:$0xf]
        %v8862 = vld [vmem:[%s8860 + $0x4] sm:$0xf]
        %v8863 = vld [vmem:[%s8860 + $0x8] sm:$0xf]
        %v8864 = vld [vmem:[%s8860 + $0xc] sm:$0xf]
        %v8865 = vld [vmem:[%s8860 + $0x10] sm:$0xf]
        %v8866 = vld [vmem:[%s8860 + $0x14] sm:$0xf]
        %v8867 = vld [vmem:[%s8860 + $0x18] sm:$0xf]
        %v8868 = vld [vmem:[%s8860 + $0x1c] sm:$0xf]
        %v8869 = vld [vmem:[%s8860 + $0x28] sm:$0xf]
        %v8870 = vld [vmem:[%s8860 + $0x2c] sm:$0xf]
        %v8871 = vld [vmem:[%s8860 + $0x30] sm:$0xf]
        %v8872 = vld [vmem:[%s8860 + $0x34] sm:$0xf]
        %v8873 = vld [vmem:[%s8860 + $0x38] sm:$0xf]
        %v8874 = vld [vmem:[%s8860 + $0x3c] sm:$0xf]
        %v8875 = vld [vmem:[%s8860 + $0x40] sm:$0xf]
        %v8876 = vld [vmem:[%s8860 + $0x44] sm:$0xf]
        %v8877 = vld [vmem:[%s8860 + $0x50] sm:$0xf]
        %v8878 = vld [vmem:[%s8860 + $0x54] sm:$0xf]
        %v8879 = vld [vmem:[%s8860 + $0x58] sm:$0xf]
        %v8880 = vld [vmem:[%s8860 + $0x5c] sm:$0xf]
        %v8881 = vld [vmem:[%s8860 + $0x60] sm:$0xf]
        %v8882 = vld [vmem:[%s8860 + $0x64] sm:$0xf]
        %v8883 = vld [vmem:[%s8860 + $0x68] sm:$0xf]
        %v8884 = vld [vmem:[%s8860 + $0x6c] sm:$0xf]
        %v8885 = vld [vmem:[%s8860 + $0x78] sm:$0xf]
        %v8886 = vld [vmem:[%s8860 + $0x7c] sm:$0xf]
        %v8887 = vld [vmem:[%s8860 + $0x80] sm:$0xf]
        %v8888 = vld [vmem:[%s8860 + $0x84] sm:$0xf]
        %v8889 = vld [vmem:[%s8860 + $0x88] sm:$0xf]
        %v8890 = vld [vmem:[%s8860 + $0x8c] sm:$0xf]
        %v8891 = vld [vmem:[%s8860 + $0x90] sm:$0xf]
        %v8892 = vld [vmem:[%s8860 + $0x94] sm:$0xf]
        %v8893 = vld [vmem:[%s8860 + $0xa0] sm:$0xf]
        %v8894 = vld [vmem:[%s8860 + $0xa4] sm:$0xf]
        %v8895 = vld [vmem:[%s8860 + $0xa8] sm:$0xf]
        %v8896 = vld [vmem:[%s8860 + $0xac] sm:$0xf]
        %v8897 = vld [vmem:[%s8860 + $0xb0] sm:$0xf]
        %v8898 = vld [vmem:[%s8860 + $0xb4] sm:$0xf]
        %v8899 = vld [vmem:[%s8860 + $0xb8] sm:$0xf]
        %v8900 = vld [vmem:[%s8860 + $0xbc] sm:$0xf]
        %v8901 = vld [vmem:[%s8860 + $0xc8] sm:$0xf]
        %v8902 = vld [vmem:[%s8860 + $0xcc] sm:$0xf]
        %v8903 = vld [vmem:[%s8860 + $0xd0] sm:$0xf]
        %v8904 = vld [vmem:[%s8860 + $0xd4] sm:$0xf]
        %v8905 = vld [vmem:[%s8860 + $0xd8] sm:$0xf]
        %v8906 = vld [vmem:[%s8860 + $0xdc] sm:$0xf]
        %v8907 = vld [vmem:[%s8860 + $0xe0] sm:$0xf]
        %v8908 = vld [vmem:[%s8860 + $0xe4] sm:$0xf]
        %v8909 = vld [vmem:[%s8860 + $0xf0] sm:$0xf]
        %v8910 = vld [vmem:[%s8860 + $0xf4] sm:$0xf]
        %v8911 = vld [vmem:[%s8860 + $0xf8] sm:$0xf]
        %v8912 = vld [vmem:[%s8860 + $0xfc] sm:$0xf]
        %v8913 = vld [vmem:[%s8860 + $0x100] sm:$0xf]
        %v8914 = vld [vmem:[%s8860 + $0x104] sm:$0xf]
        %v8915 = vld [vmem:[%s8860 + $0x108] sm:$0xf]
        %v8916 = vld [vmem:[%s8860 + $0x10c] sm:$0xf]
        %v8917 = vld [vmem:[%s8860 + $0x118] sm:$0xf]
        %v8918 = vld [vmem:[%s8860 + $0x11c] sm:$0xf]
        %v8919 = vld [vmem:[%s8860 + $0x120] sm:$0xf]
        %v8920 = vld [vmem:[%s8860 + $0x124] sm:$0xf]
        %v8921 = vld [vmem:[%s8860 + $0x128] sm:$0xf]
        %v8922 = vld [vmem:[%s8860 + $0x12c] sm:$0xf]
        %v8923 = vld [vmem:[%s8860 + $0x130] sm:$0xf]
        %v8924 = vld [vmem:[%s8860 + $0x134] sm:$0xf]
        %v8925 = vld [vmem:[#allocation3] sm:$0xff]
        %v8926 = vld [vmem:[#allocation3 + $0x8] sm:$0xff]
        %v8927 = vld [vmem:[#allocation3 + $0x10] sm:$0xff]
        %v8928 = vld [vmem:[#allocation3 + $0x18] sm:$0xff]
        %v8929 = vld [vmem:[#allocation3 + $0x20] sm:$0xff]
        %v8930 = vld [vmem:[#allocation3 + $0x28] sm:$0xff]
        %v8931 = vld [vmem:[#allocation3 + $0x30] sm:$0xff]
        %v8932 = vld [vmem:[#allocation3 + $0x38] sm:$0xff]
        %v8933 = vld [vmem:[#allocation3 + $0x40] sm:$0xff]
        %v8934 = vld [vmem:[#allocation3 + $0x48] sm:$0xff]
        %v8935 = vld [vmem:[#allocation3 + $0x50] sm:$0xff]
        %v8936 = vld [vmem:[#allocation3 + $0x58] sm:$0xff]
        %v8937 = vld [vmem:[#allocation3 + $0x60] sm:$0xff]
        %v8938 = vld [vmem:[#allocation3 + $0x68] sm:$0xff]
        %v8939 = vld [vmem:[#allocation3 + $0x70] sm:$0xff]
        %v8940 = vld [vmem:[#allocation3 + $0x78] sm:$0xff]
        %v8941 = vld [vmem:[#allocation3 + $0x80] sm:$0xff]
        %v8942 = vld [vmem:[#allocation3 + $0x88] sm:$0xff]
        %v8943 = vld [vmem:[#allocation3 + $0x90] sm:$0xff]
        %v8944 = vld [vmem:[#allocation3 + $0x98] sm:$0xff]
        %v8945 = vld [vmem:[#allocation3 + $0xa0] sm:$0xff]
        %v8946 = vld [vmem:[#allocation3 + $0xa8] sm:$0xff]
        %v8947 = vld [vmem:[#allocation3 + $0xb0] sm:$0xff]
        %v8948 = vld [vmem:[#allocation3 + $0xb8] sm:$0xff]
        %v8949 = vld [vmem:[#allocation3 + $0xc0] sm:$0xff]
        %v8950 = vld [vmem:[#allocation3 + $0xc8] sm:$0xff]
        %v8951 = vld [vmem:[#allocation3 + $0xd0] sm:$0xff]
        %v8952 = vld [vmem:[#allocation3 + $0xd8] sm:$0xff]
        %v8953 = vld [vmem:[#allocation3 + $0xe0] sm:$0xff]
        %v8954 = vld [vmem:[#allocation3 + $0xe8] sm:$0xff]
        %v8955 = vld [vmem:[#allocation3 + $0xf0] sm:$0xff]
        %v8956 = vld [vmem:[#allocation3 + $0xf8] sm:$0xff]
        %v8957 = vld [vmem:[#allocation3 + $0x100] sm:$0xff]
        %v8958 = vld [vmem:[#allocation3 + $0x108] sm:$0xff]
        %v8959 = vld [vmem:[#allocation3 + $0x110] sm:$0xff]
        %v8960 = vld [vmem:[#allocation3 + $0x118] sm:$0xff]
        %v8961 = vld [vmem:[#allocation3 + $0x120] sm:$0xff]
        %v8962 = vld [vmem:[#allocation3 + $0x128] sm:$0xff]
        %v8963 = vld [vmem:[#allocation3 + $0x130] sm:$0xff]
        %v8964 = vld [vmem:[#allocation3 + $0x138] sm:$0xff]
        %v8965 = vld [vmem:[#allocation3 + $0x140] sm:$0xff]
        %v8966 = vld [vmem:[#allocation3 + $0x148] sm:$0xff]
        %v8967 = vld [vmem:[#allocation3 + $0x150] sm:$0xff]
        %v8968 = vld [vmem:[#allocation3 + $0x158] sm:$0xff]
        %v8969 = vld [vmem:[#allocation3 + $0x160] sm:$0xff]
        %v8970 = vld [vmem:[#allocation3 + $0x168] sm:$0xff]
        %v8971 = vld [vmem:[#allocation3 + $0x170] sm:$0xff]
        %v8972 = vld [vmem:[#allocation3 + $0x178] sm:$0xff]
        %v8973 = vld [vmem:[#allocation3 + $0x180] sm:$0xff]
        %v8974 = vld [vmem:[#allocation3 + $0x188] sm:$0xff]
        %v8975 = vld [vmem:[#allocation3 + $0x190] sm:$0xff]
        %v8976 = vld [vmem:[#allocation3 + $0x198] sm:$0xff]
        %v8977 = vld [vmem:[#allocation3 + $0x1a0] sm:$0xff]
        %v8978 = vld [vmem:[#allocation3 + $0x1a8] sm:$0xff]
        %v8979 = vld [vmem:[#allocation3 + $0x1b0] sm:$0xff]
        %v8980 = vld [vmem:[#allocation3 + $0x1b8] sm:$0xff]
        %v8981 = vld [vmem:[#allocation3 + $0x1c0] sm:$0xff]
        %v8982 = vld [vmem:[#allocation3 + $0x1c8] sm:$0xff]
        %v8983 = vld [vmem:[#allocation3 + $0x1d0] sm:$0xff]
        %v8984 = vld [vmem:[#allocation3 + $0x1d8] sm:$0xff]
        %v8985 = vld [vmem:[#allocation3 + $0x1e0] sm:$0xff]
        %v8986 = vld [vmem:[#allocation3 + $0x1e8] sm:$0xff]
        %v8987 = vld [vmem:[#allocation3 + $0x1f0] sm:$0xff]
        %v8988 = vld [vmem:[#allocation3 + $0x1f8] sm:$0xff]
        %s8989 = scalar_lea.vmem [#allocation7], 192
        %v8990 = vld [vmem:[%s8989] sm:$0xf]
        %v8991 = vld [vmem:[%s8989 + $0x4] sm:$0xf]
        %v8992 = vld [vmem:[%s8989 + $0x8] sm:$0xf]
        %v8993 = vld [vmem:[%s8989 + $0xc] sm:$0xf]
        %v8994 = vld [vmem:[%s8989 + $0x10] sm:$0xf]
        %v8995 = vld [vmem:[%s8989 + $0x14] sm:$0xf]
        %v9060 = vunpack.c.l.b16 %v8861
        %v9061 = vunpack.c.l.b16 %v8862
        %v9062 = vunpack.c.l.b16 %v8863
        %v9063 = vunpack.c.l.b16 %v8864
        %v9064 = vunpack.c.l.b16 %v8865
        %v9065 = vunpack.c.l.b16 %v8866
        %v9066 = vunpack.c.l.b16 %v8867
        %v9067 = vunpack.c.l.b16 %v8868
        %v9068 = vunpack.c.l.b16 %v8869
        %v9069 = vunpack.c.l.b16 %v8870
        %v9070 = vunpack.c.l.b16 %v8871
        %v9071 = vunpack.c.l.b16 %v8872
        %v9072 = vunpack.c.l.b16 %v8873
        %v9073 = vunpack.c.l.b16 %v8874
        %v9074 = vunpack.c.l.b16 %v8875
        %v9075 = vunpack.c.l.b16 %v8876
        %v9076 = vunpack.c.l.b16 %v8877
        %v9077 = vunpack.c.l.b16 %v8878
        %v9078 = vunpack.c.l.b16 %v8879
        %v9079 = vunpack.c.l.b16 %v8880
        %v9080 = vunpack.c.l.b16 %v8881
        %v9081 = vunpack.c.l.b16 %v8882
        %v9082 = vunpack.c.l.b16 %v8883
        %v9083 = vunpack.c.l.b16 %v8884
        %v9084 = vunpack.c.l.b16 %v8885
        %v9085 = vunpack.c.l.b16 %v8886
        %v9086 = vunpack.c.l.b16 %v8887
        %v9087 = vunpack.c.l.b16 %v8888
        %v9088 = vunpack.c.l.b16 %v8889
        %v9089 = vunpack.c.l.b16 %v8890
        %v9090 = vunpack.c.l.b16 %v8891
        %v9091 = vunpack.c.l.b16 %v8892
        %v9092 = vunpack.c.l.b16 %v8893
        %v9093 = vunpack.c.l.b16 %v8894
        %v9094 = vunpack.c.l.b16 %v8895
        %v9095 = vunpack.c.l.b16 %v8896
        %v9096 = vunpack.c.l.b16 %v8897
        %v9097 = vunpack.c.l.b16 %v8898
        %v9098 = vunpack.c.l.b16 %v8899
        %v9099 = vunpack.c.l.b16 %v8900
        %v9100 = vunpack.c.l.b16 %v8901
        %v9101 = vunpack.c.l.b16 %v8902
        %v9102 = vunpack.c.l.b16 %v8903
        %v9103 = vunpack.c.l.b16 %v8904
        %v9104 = vunpack.c.l.b16 %v8905
        %v9105 = vunpack.c.l.b16 %v8906
        %v9106 = vunpack.c.l.b16 %v8907
        %v9107 = vunpack.c.l.b16 %v8908
        %v9108 = vunpack.c.l.b16 %v8909
        %v9109 = vunpack.c.l.b16 %v8910
        %v9110 = vunpack.c.l.b16 %v8911
        %v9111 = vunpack.c.l.b16 %v8912
        %v9112 = vunpack.c.l.b16 %v8913
        %v9113 = vunpack.c.l.b16 %v8914
        %v9114 = vunpack.c.l.b16 %v8915
        %v9115 = vunpack.c.l.b16 %v8916
        %v9116 = vunpack.c.l.b16 %v8917
        %v9117 = vunpack.c.l.b16 %v8918
        %v9118 = vunpack.c.l.b16 %v8919
        %v9119 = vunpack.c.l.b16 %v8920
        %v9120 = vunpack.c.l.b16 %v8921
        %v9121 = vunpack.c.l.b16 %v8922
        %v9122 = vunpack.c.l.b16 %v8923
        %v9123 = vunpack.c.l.b16 %v8924
        %v9124 = vpack.c.b16 %v9061, %v9060
        %v9125 = vpack.c.b16 %v9063, %v9062
        %v9126 = vpack.c.b16 %v9065, %v9064
        %v9127 = vpack.c.b16 %v9067, %v9066
        %v9128 = vpack.c.b16 %v9069, %v9068
        %v9129 = vpack.c.b16 %v9071, %v9070
        %v9130 = vpack.c.b16 %v9073, %v9072
        %v9131 = vpack.c.b16 %v9075, %v9074
        %v9132 = vpack.c.b16 %v9077, %v9076
        %v9133 = vpack.c.b16 %v9079, %v9078
        %v9134 = vpack.c.b16 %v9081, %v9080
        %v9135 = vpack.c.b16 %v9083, %v9082
        %v9136 = vpack.c.b16 %v9085, %v9084
        %v9137 = vpack.c.b16 %v9087, %v9086
        %v9138 = vpack.c.b16 %v9089, %v9088
        %v9139 = vpack.c.b16 %v9091, %v9090
        %v9140 = vpack.c.b16 %v9093, %v9092
        %v9141 = vpack.c.b16 %v9095, %v9094
        %v9142 = vpack.c.b16 %v9097, %v9096
        %v9143 = vpack.c.b16 %v9099, %v9098
        %v9144 = vpack.c.b16 %v9101, %v9100
        %v9145 = vpack.c.b16 %v9103, %v9102
        %v9146 = vpack.c.b16 %v9105, %v9104
        %v9147 = vpack.c.b16 %v9107, %v9106
        %v9148 = vpack.c.b16 %v9109, %v9108
        %v9149 = vpack.c.b16 %v9111, %v9110
        %v9150 = vpack.c.b16 %v9113, %v9112
        %v9151 = vpack.c.b16 %v9115, %v9114
        %v9152 = vpack.c.b16 %v9117, %v9116
        %v9153 = vpack.c.b16 %v9119, %v9118
        %v9154 = vpack.c.b16 %v9121, %v9120
        %v9155 = vpack.c.b16 %v9123, %v9122
        %v9162 = vunpack.c.l.b16 %v8990
        %v9163 = vunpack.c.l.b16 %v8991
        %v9164 = vunpack.c.l.b16 %v8992
        %v9165 = vunpack.c.l.b16 %v8993
        %v9166 = vunpack.c.l.b16 %v8994
        %v9167 = vunpack.c.l.b16 %v8995
        %v9168 = vpack.c.b16 %v9163, %v9162
        %v9169 = vpack.c.b16 %v9165, %v9164
        %v9170 = vpack.c.b16 %v9167, %v9166
        %v9175 = vsel %vm2558, %v9124, 0
        %v9178 = vsel %vm2558, %v9125, 0
        %v9181 = vsel %vm2558, %v9126, 0
        %v9184 = vsel %vm2558, %v9127, 0
        %v9187 = vsel %vm2558, %v9128, 0
        %v9190 = vsel %vm2558, %v9129, 0
        %v9193 = vsel %vm2558, %v9130, 0
        %v9196 = vsel %vm2558, %v9131, 0
        %v9199 = vsel %vm2558, %v9132, 0
        %v9202 = vsel %vm2558, %v9133, 0
        %v9205 = vsel %vm2558, %v9134, 0
        %v9208 = vsel %vm2558, %v9135, 0
        %v9211 = vsel %vm2558, %v9136, 0
        %v9214 = vsel %vm2558, %v9137, 0
        %v9217 = vsel %vm2558, %v9138, 0
        %v9220 = vsel %vm2558, %v9139, 0
        %v9223 = vsel %vm2558, %v9140, 0
        %v9226 = vsel %vm2558, %v9141, 0
        %v9229 = vsel %vm2558, %v9142, 0
        %v9232 = vsel %vm2558, %v9143, 0
        %v9235 = vsel %vm2558, %v9144, 0
        %v9238 = vsel %vm2558, %v9145, 0
        %v9241 = vsel %vm2558, %v9146, 0
        %v9244 = vsel %vm2558, %v9147, 0
        %v9247 = vsel %vm2558, %v9148, 0
        %v9250 = vsel %vm2558, %v9149, 0
        %v9253 = vsel %vm2558, %v9150, 0
        %v9256 = vsel %vm2558, %v9151, 0
        %v9259 = vsel %vm2558, %v9152, 0
        %v9262 = vsel %vm2558, %v9153, 0
        %v9265 = vsel %vm2558, %v9154, 0
        %v9268 = vsel %vm2558, %v9155, 0
        %9270 = vmatprep.subr.bf16.mxu0 0
        %9271 = vmatpush1.bf16.msra.mxu0 %v9168
        %9272 = vmatprep.subr.bf16.mxu0 0
        %9273 = vmatpush1.bf16.msra.mxu0 %v9169
        %9274 = vmatprep.subr.bf16.mxu0 0
        %9275 = vmatpush1.bf16.msra.mxu0 %v9170
        %9276 = vmatprep.subr.bf16.mxu0 0
        %9277 = vmatpush1.bf16.msra.mxu0 0
        %9278 = vmatprep.subr.bf16.mxu0 0
        %9279 = vmatpush1.bf16.msra.mxu0 0
        %9280 = vmatprep.subr.bf16.mxu0 0
        %9281 = vmatpush1.bf16.msra.mxu0 0
        %9282 = vmatprep.subr.bf16.mxu0 0
        %9283 = vmatpush1.bf16.msra.mxu0 0
        %9284 = vmatprep.subr.bf16.mxu0 0
        %9285 = vmatpush1.bf16.msra.mxu0 0
        %9286 = vmatprep.subr.bf16.mxu0 0
        %9287 = vmatpush1.bf16.msra.mxu0 0
        %9288 = vmatprep.subr.bf16.mxu0 0
        %9289 = vmatpush1.bf16.msra.mxu0 0
        %9290 = vmatprep.subr.bf16.mxu0 0
        %9291 = vmatpush1.bf16.msra.mxu0 0
        %9292 = vmatprep.subr.bf16.mxu0 0
        %9293 = vmatpush1.bf16.msra.mxu0 0
        %9294 = vmatprep.subr.bf16.mxu0 0
        %9295 = vmatpush1.bf16.msra.mxu0 0
        %9296 = vmatprep.subr.bf16.mxu0 0
        %9297 = vmatpush1.bf16.msra.mxu0 0
        %9298 = vmatprep.subr.bf16.mxu0 0
        %9299 = vmatpush1.bf16.msra.mxu0 0
        %9300 = vmatprep.subr.bf16.mxu0 0
        %9301 = vmatpush1.bf16.msra.mxu0 0
        %9302 = vmatprep.mubr.bf16.mxu0 0
        %9303 = vmatmul.mubr.bf16.gmra.mrb[0].mxu0 %v9175
        %v9304 = vpop.f32.mrb[0].mxu0
        %v9305 = vadd.f32 0.0, %v9304
        %v9306 = vpop.f32.mrb[0].mxu0
        %v9307 = vpop.f32.mrb[0].mxu0
        %v9308 = vadd.f32 0.0, %v9307
        %v9309 = vpop.f32.mrb[0].mxu0
        %9310 = vmatprep.mubr.bf16.mxu0 0
        %9311 = vmatmul.mubr.bf16.gmra.mrb[0].mxu0 %v9178
        %v9312 = vpop.f32.mrb[0].mxu0
        %v9313 = vadd.f32 0.0, %v9312
        %v9314 = vpop.f32.mrb[0].mxu0
        %v9315 = vpop.f32.mrb[0].mxu0
        %v9316 = vadd.f32 0.0, %v9315
        %v9317 = vpop.f32.mrb[0].mxu0
        %9318 = vmatprep.mubr.bf16.mxu0 0
        %9319 = vmatmul.mubr.bf16.gmra.mrb[0].mxu0 %v9181
        %v9320 = vpop.f32.mrb[0].mxu0
        %v9321 = vadd.f32 0.0, %v9320
        %v9322 = vpop.f32.mrb[0].mxu0
        %v9323 = vpop.f32.mrb[0].mxu0
        %v9324 = vadd.f32 0.0, %v9323
        %v9325 = vpop.f32.mrb[0].mxu0
        %9326 = vmatprep.mubr.bf16.mxu0 0
        %9327 = vmatmul.mubr.bf16.gmra.mrb[0].mxu0 %v9184
        %v9328 = vpop.f32.mrb[0].mxu0
        %v9329 = vadd.f32 0.0, %v9328
        %v9330 = vpop.f32.mrb[0].mxu0
        %v9331 = vpop.f32.mrb[0].mxu0
        %v9332 = vadd.f32 0.0, %v9331
        %v9333 = vpop.f32.mrb[0].mxu0
        %9334 = vmatprep.mubr.bf16.mxu0 0
        %9335 = vmatmul.mubr.bf16.gmra.mrb[0].mxu0 %v9187
        %v9336 = vpop.f32.mrb[0].mxu0
        %v9337 = vadd.f32 0.0, %v9336
        %v9338 = vpop.f32.mrb[0].mxu0
        %v9339 = vpop.f32.mrb[0].mxu0
        %v9340 = vadd.f32 0.0, %v9339
        %v9341 = vpop.f32.mrb[0].mxu0
        %9342 = vmatprep.mubr.bf16.mxu0 0
        %9343 = vmatmul.mubr.bf16.gmra.mrb[0].mxu0 %v9190
        %v9344 = vpop.f32.mrb[0].mxu0
        %v9345 = vadd.f32 0.0, %v9344
        %v9346 = vpop.f32.mrb[0].mxu0
        %v9347 = vpop.f32.mrb[0].mxu0
        %v9348 = vadd.f32 0.0, %v9347
        %v9349 = vpop.f32.mrb[0].mxu0
        %9350 = vmatprep.mubr.bf16.mxu0 0
        %9351 = vmatmul.mubr.bf16.gmra.mrb[0].mxu0 %v9193
        %v9352 = vpop.f32.mrb[0].mxu0
        %v9353 = vadd.f32 0.0, %v9352
        %v9354 = vpop.f32.mrb[0].mxu0
        %v9355 = vpop.f32.mrb[0].mxu0
        %v9356 = vadd.f32 0.0, %v9355
        %v9357 = vpop.f32.mrb[0].mxu0
        %9358 = vmatprep.mubr.bf16.mxu0 0
        %9359 = vmatmul.mubr.bf16.gmra.mrb[0].mxu0 %v9196
        %v9360 = vpop.f32.mrb[0].mxu0
        %v9361 = vadd.f32 0.0, %v9360
        %v9362 = vpop.f32.mrb[0].mxu0
        %v9363 = vpop.f32.mrb[0].mxu0
        %v9364 = vadd.f32 0.0, %v9363
        %v9365 = vpop.f32.mrb[0].mxu0
        %9366 = vmatprep.mubr.bf16.mxu0 0
        %9367 = vmatmul.mubr.bf16.gmra.mrb[0].mxu0 %v9199
        %v9368 = vpop.f32.mrb[0].mxu0
        %v9369 = vadd.f32 0.0, %v9368
        %v9370 = vpop.f32.mrb[0].mxu0
        %v9371 = vpop.f32.mrb[0].mxu0
        %v9372 = vadd.f32 0.0, %v9371
        %v9373 = vpop.f32.mrb[0].mxu0
        %9374 = vmatprep.mubr.bf16.mxu0 0
        %9375 = vmatmul.mubr.bf16.gmra.mrb[0].mxu0 %v9202
        %v9376 = vpop.f32.mrb[0].mxu0
        %v9377 = vadd.f32 0.0, %v9376
        %v9378 = vpop.f32.mrb[0].mxu0
        %v9379 = vpop.f32.mrb[0].mxu0
        %v9380 = vadd.f32 0.0, %v9379
        %v9381 = vpop.f32.mrb[0].mxu0
        %9382 = vmatprep.mubr.bf16.mxu0 0
        %9383 = vmatmul.mubr.bf16.gmra.mrb[0].mxu0 %v9205
        %v9384 = vpop.f32.mrb[0].mxu0
        %v9385 = vadd.f32 0.0, %v9384
        %v9386 = vpop.f32.mrb[0].mxu0
        %v9387 = vpop.f32.mrb[0].mxu0
        %v9388 = vadd.f32 0.0, %v9387
        %v9389 = vpop.f32.mrb[0].mxu0
        %9390 = vmatprep.mubr.bf16.mxu0 0
        %9391 = vmatmul.mubr.bf16.gmra.mrb[0].mxu0 %v9208
        %v9392 = vpop.f32.mrb[0].mxu0
        %v9393 = vadd.f32 0.0, %v9392
        %v9394 = vpop.f32.mrb[0].mxu0
        %v9395 = vpop.f32.mrb[0].mxu0
        %v9396 = vadd.f32 0.0, %v9395
        %v9397 = vpop.f32.mrb[0].mxu0
        %9398 = vmatprep.mubr.bf16.mxu0 0
        %9399 = vmatmul.mubr.bf16.gmra.mrb[0].mxu0 %v9211
        %v9400 = vpop.f32.mrb[0].mxu0
        %v9401 = vadd.f32 0.0, %v9400
        %v9402 = vpop.f32.mrb[0].mxu0
        %v9403 = vpop.f32.mrb[0].mxu0
        %v9404 = vadd.f32 0.0, %v9403
        %v9405 = vpop.f32.mrb[0].mxu0
        %9406 = vmatprep.mubr.bf16.mxu0 0
        %9407 = vmatmul.mubr.bf16.gmra.mrb[0].mxu0 %v9214
        %v9408 = vpop.f32.mrb[0].mxu0
        %v9409 = vadd.f32 0.0, %v9408
        %v9410 = vpop.f32.mrb[0].mxu0
        %v9411 = vpop.f32.mrb[0].mxu0
        %v9412 = vadd.f32 0.0, %v9411
        %v9413 = vpop.f32.mrb[0].mxu0
        %9414 = vmatprep.mubr.bf16.mxu0 0
        %9415 = vmatmul.mubr.bf16.gmra.mrb[0].mxu0 %v9217
        %v9416 = vpop.f32.mrb[0].mxu0
        %v9417 = vadd.f32 0.0, %v9416
        %v9418 = vpop.f32.mrb[0].mxu0
        %v9419 = vpop.f32.mrb[0].mxu0
        %v9420 = vadd.f32 0.0, %v9419
        %v9421 = vpop.f32.mrb[0].mxu0
        %9422 = vmatprep.mubr.bf16.mxu0 0
        %9423 = vmatmul.mubr.bf16.gmra.mrb[0].mxu0 %v9220
        %v9424 = vpop.f32.mrb[0].mxu0
        %v9425 = vadd.f32 0.0, %v9424
        %v9426 = vpop.f32.mrb[0].mxu0
        %v9427 = vpop.f32.mrb[0].mxu0
        %v9428 = vadd.f32 0.0, %v9427
        %v9429 = vpop.f32.mrb[0].mxu0
        %9430 = vmatprep.mubr.bf16.mxu0 0
        %9431 = vmatmul.mubr.bf16.gmra.mrb[0].mxu0 %v9223
        %v9432 = vpop.f32.mrb[0].mxu0
        %v9433 = vadd.f32 0.0, %v9432
        %v9434 = vpop.f32.mrb[0].mxu0
        %v9435 = vpop.f32.mrb[0].mxu0
        %v9436 = vadd.f32 0.0, %v9435
        %v9437 = vpop.f32.mrb[0].mxu0
        %9438 = vmatprep.mubr.bf16.mxu0 0
        %9439 = vmatmul.mubr.bf16.gmra.mrb[0].mxu0 %v9226
        %v9440 = vpop.f32.mrb[0].mxu0
        %v9441 = vadd.f32 0.0, %v9440
        %v9442 = vpop.f32.mrb[0].mxu0
        %v9443 = vpop.f32.mrb[0].mxu0
        %v9444 = vadd.f32 0.0, %v9443
        %v9445 = vpop.f32.mrb[0].mxu0
        %9446 = vmatprep.mubr.bf16.mxu0 0
        %9447 = vmatmul.mubr.bf16.gmra.mrb[0].mxu0 %v9229
        %v9448 = vpop.f32.mrb[0].mxu0
        %v9449 = vadd.f32 0.0, %v9448
        %v9450 = vpop.f32.mrb[0].mxu0
        %v9451 = vpop.f32.mrb[0].mxu0
        %v9452 = vadd.f32 0.0, %v9451
        %v9453 = vpop.f32.mrb[0].mxu0
        %9454 = vmatprep.mubr.bf16.mxu0 0
        %9455 = vmatmul.mubr.bf16.gmra.mrb[0].mxu0 %v9232
        %v9456 = vpop.f32.mrb[0].mxu0
        %v9457 = vadd.f32 0.0, %v9456
        %v9458 = vpop.f32.mrb[0].mxu0
        %v9459 = vpop.f32.mrb[0].mxu0
        %v9460 = vadd.f32 0.0, %v9459
        %v9461 = vpop.f32.mrb[0].mxu0
        %9462 = vmatprep.mubr.bf16.mxu0 0
        %9463 = vmatmul.mubr.bf16.gmra.mrb[0].mxu0 %v9235
        %v9464 = vpop.f32.mrb[0].mxu0
        %v9465 = vadd.f32 0.0, %v9464
        %v9466 = vpop.f32.mrb[0].mxu0
        %v9467 = vpop.f32.mrb[0].mxu0
        %v9468 = vadd.f32 0.0, %v9467
        %v9469 = vpop.f32.mrb[0].mxu0
        %9470 = vmatprep.mubr.bf16.mxu0 0
        %9471 = vmatmul.mubr.bf16.gmra.mrb[0].mxu0 %v9238
        %v9472 = vpop.f32.mrb[0].mxu0
        %v9473 = vadd.f32 0.0, %v9472
        %v9474 = vpop.f32.mrb[0].mxu0
        %v9475 = vpop.f32.mrb[0].mxu0
        %v9476 = vadd.f32 0.0, %v9475
        %v9477 = vpop.f32.mrb[0].mxu0
        %9478 = vmatprep.mubr.bf16.mxu0 0
        %9479 = vmatmul.mubr.bf16.gmra.mrb[0].mxu0 %v9241
        %v9480 = vpop.f32.mrb[0].mxu0
        %v9481 = vadd.f32 0.0, %v9480
        %v9482 = vpop.f32.mrb[0].mxu0
        %v9483 = vpop.f32.mrb[0].mxu0
        %v9484 = vadd.f32 0.0, %v9483
        %v9485 = vpop.f32.mrb[0].mxu0
        %9486 = vmatprep.mubr.bf16.mxu0 0
        %9487 = vmatmul.mubr.bf16.gmra.mrb[0].mxu0 %v9244
        %v9488 = vpop.f32.mrb[0].mxu0
        %v9489 = vadd.f32 0.0, %v9488
        %v9490 = vpop.f32.mrb[0].mxu0
        %v9491 = vpop.f32.mrb[0].mxu0
        %v9492 = vadd.f32 0.0, %v9491
        %v9493 = vpop.f32.mrb[0].mxu0
        %9494 = vmatprep.mubr.bf16.mxu0 0
        %9495 = vmatmul.mubr.bf16.gmra.mrb[0].mxu0 %v9247
        %v9496 = vpop.f32.mrb[0].mxu0
        %v9497 = vadd.f32 0.0, %v9496
        %v9498 = vpop.f32.mrb[0].mxu0
        %v9499 = vpop.f32.mrb[0].mxu0
        %v9500 = vadd.f32 0.0, %v9499
        %v9501 = vpop.f32.mrb[0].mxu0
        %9502 = vmatprep.mubr.bf16.mxu0 0
        %9503 = vmatmul.mubr.bf16.gmra.mrb[0].mxu0 %v9250
        %v9504 = vpop.f32.mrb[0].mxu0
        %v9505 = vadd.f32 0.0, %v9504
        %v9506 = vpop.f32.mrb[0].mxu0
        %v9507 = vpop.f32.mrb[0].mxu0
        %v9508 = vadd.f32 0.0, %v9507
        %v9509 = vpop.f32.mrb[0].mxu0
        %9510 = vmatprep.mubr.bf16.mxu0 0
        %9511 = vmatmul.mubr.bf16.gmra.mrb[0].mxu0 %v9253
        %v9512 = vpop.f32.mrb[0].mxu0
        %v9513 = vadd.f32 0.0, %v9512
        %v9514 = vpop.f32.mrb[0].mxu0
        %v9515 = vpop.f32.mrb[0].mxu0
        %v9516 = vadd.f32 0.0, %v9515
        %v9517 = vpop.f32.mrb[0].mxu0
        %9518 = vmatprep.mubr.bf16.mxu0 0
        %9519 = vmatmul.mubr.bf16.gmra.mrb[0].mxu0 %v9256
        %v9520 = vpop.f32.mrb[0].mxu0
        %v9521 = vadd.f32 0.0, %v9520
        %v9522 = vpop.f32.mrb[0].mxu0
        %v9523 = vpop.f32.mrb[0].mxu0
        %v9524 = vadd.f32 0.0, %v9523
        %v9525 = vpop.f32.mrb[0].mxu0
        %9526 = vmatprep.mubr.bf16.mxu0 0
        %9527 = vmatmul.mubr.bf16.gmra.mrb[0].mxu0 %v9259
        %v9528 = vpop.f32.mrb[0].mxu0
        %v9529 = vadd.f32 0.0, %v9528
        %v9530 = vpop.f32.mrb[0].mxu0
        %v9531 = vpop.f32.mrb[0].mxu0
        %v9532 = vadd.f32 0.0, %v9531
        %v9533 = vpop.f32.mrb[0].mxu0
        %9534 = vmatprep.mubr.bf16.mxu0 0
        %9535 = vmatmul.mubr.bf16.gmra.mrb[0].mxu0 %v9262
        %v9536 = vpop.f32.mrb[0].mxu0
        %v9537 = vadd.f32 0.0, %v9536
        %v9538 = vpop.f32.mrb[0].mxu0
        %v9539 = vpop.f32.mrb[0].mxu0
        %v9540 = vadd.f32 0.0, %v9539
        %v9541 = vpop.f32.mrb[0].mxu0
        %9542 = vmatprep.mubr.bf16.mxu0 0
        %9543 = vmatmul.mubr.bf16.gmra.mrb[0].mxu0 %v9265
        %v9544 = vpop.f32.mrb[0].mxu0
        %v9545 = vadd.f32 0.0, %v9544
        %v9546 = vpop.f32.mrb[0].mxu0
        %v9547 = vpop.f32.mrb[0].mxu0
        %v9548 = vadd.f32 0.0, %v9547
        %v9549 = vpop.f32.mrb[0].mxu0
        %9550 = vmatprep.mubr.bf16.mxu0 0
        %9551 = vmatmul.mubr.bf16.gmra.mrb[0].mxu0 %v9268
        %v9552 = vpop.f32.mrb[0].mxu0
        %v9553 = vadd.f32 0.0, %v9552
        %v9554 = vpop.f32.mrb[0].mxu0
        %v9555 = vpop.f32.mrb[0].mxu0
        %v9556 = vadd.f32 0.0, %v9555
        %v9557 = vpop.f32.mrb[0].mxu0
        %9558 = vdwg.mxu0
        %v9559 = vadd.f32 %v8925, %v9305
        %v9560 = vadd.f32 %v8926, %v9308
        %v9561 = vadd.f32 %v8927, %v9313
        %v9562 = vadd.f32 %v8928, %v9316
        %v9563 = vadd.f32 %v8929, %v9321
        %v9564 = vadd.f32 %v8930, %v9324
        %v9565 = vadd.f32 %v8931, %v9329
        %v9566 = vadd.f32 %v8932, %v9332
        %v9567 = vadd.f32 %v8933, %v9337
        %v9568 = vadd.f32 %v8934, %v9340
        %v9569 = vadd.f32 %v8935, %v9345
        %v9570 = vadd.f32 %v8936, %v9348
        %v9571 = vadd.f32 %v8937, %v9353
        %v9572 = vadd.f32 %v8938, %v9356
        %v9573 = vadd.f32 %v8939, %v9361
        %v9574 = vadd.f32 %v8940, %v9364
        %v9575 = vadd.f32 %v8941, %v9369
        %v9576 = vadd.f32 %v8942, %v9372
        %v9577 = vadd.f32 %v8943, %v9377
        %v9578 = vadd.f32 %v8944, %v9380
        %v9579 = vadd.f32 %v8945, %v9385
        %v9580 = vadd.f32 %v8946, %v9388
        %v9581 = vadd.f32 %v8947, %v9393
        %v9582 = vadd.f32 %v8948, %v9396
        %v9583 = vadd.f32 %v8949, %v9401
        %v9584 = vadd.f32 %v8950, %v9404
        %v9585 = vadd.f32 %v8951, %v9409
        %v9586 = vadd.f32 %v8952, %v9412
        %v9587 = vadd.f32 %v8953, %v9417
        %v9588 = vadd.f32 %v8954, %v9420
        %v9589 = vadd.f32 %v8955, %v9425
        %v9590 = vadd.f32 %v8956, %v9428
        %v9591 = vadd.f32 %v8957, %v9433
        %v9592 = vadd.f32 %v8958, %v9436
        %v9593 = vadd.f32 %v8959, %v9441
        %v9594 = vadd.f32 %v8960, %v9444
        %v9595 = vadd.f32 %v8961, %v9449
        %v9596 = vadd.f32 %v8962, %v9452
        %v9597 = vadd.f32 %v8963, %v9457
        %v9598 = vadd.f32 %v8964, %v9460
        %v9599 = vadd.f32 %v8965, %v9465
        %v9600 = vadd.f32 %v8966, %v9468
        %v9601 = vadd.f32 %v8967, %v9473
        %v9602 = vadd.f32 %v8968, %v9476
        %v9603 = vadd.f32 %v8969, %v9481
        %v9604 = vadd.f32 %v8970, %v9484
        %v9605 = vadd.f32 %v8971, %v9489
        %v9606 = vadd.f32 %v8972, %v9492
        %v9607 = vadd.f32 %v8973, %v9497
        %v9608 = vadd.f32 %v8974, %v9500
        %v9609 = vadd.f32 %v8975, %v9505
        %v9610 = vadd.f32 %v8976, %v9508
        %v9611 = vadd.f32 %v8977, %v9513
        %v9612 = vadd.f32 %v8978, %v9516
        %v9613 = vadd.f32 %v8979, %v9521
        %v9614 = vadd.f32 %v8980, %v9524
        %v9615 = vadd.f32 %v8981, %v9529
        %v9616 = vadd.f32 %v8982, %v9532
        %v9617 = vadd.f32 %v8983, %v9537
        %v9618 = vadd.f32 %v8984, %v9540
        %v9619 = vadd.f32 %v8985, %v9545
        %v9620 = vadd.f32 %v8986, %v9548
        %v9621 = vadd.f32 %v8987, %v9553
        %v9622 = vadd.f32 %v8988, %v9556
        %9623 = vst [vmem:[#allocation3] sm:$0xff] %v9559
        %9624 = vst [vmem:[#allocation3 + $0x8] sm:$0xff] %v9560
        %9625 = vst [vmem:[#allocation3 + $0x10] sm:$0xff] %v9561
        %9626 = vst [vmem:[#allocation3 + $0x18] sm:$0xff] %v9562
        %9627 = vst [vmem:[#allocation3 + $0x20] sm:$0xff] %v9563
        %9628 = vst [vmem:[#allocation3 + $0x28] sm:$0xff] %v9564
        %9629 = vst [vmem:[#allocation3 + $0x30] sm:$0xff] %v9565
        %9630 = vst [vmem:[#allocation3 + $0x38] sm:$0xff] %v9566
        %9631 = vst [vmem:[#allocation3 + $0x40] sm:$0xff] %v9567
        %9632 = vst [vmem:[#allocation3 + $0x48] sm:$0xff] %v9568
        %9633 = vst [vmem:[#allocation3 + $0x50] sm:$0xff] %v9569
        %9634 = vst [vmem:[#allocation3 + $0x58] sm:$0xff] %v9570
        %9635 = vst [vmem:[#allocation3 + $0x60] sm:$0xff] %v9571
        %9636 = vst [vmem:[#allocation3 + $0x68] sm:$0xff] %v9572
        %9637 = vst [vmem:[#allocation3 + $0x70] sm:$0xff] %v9573
        %9638 = vst [vmem:[#allocation3 + $0x78] sm:$0xff] %v9574
        %9639 = vst [vmem:[#allocation3 + $0x80] sm:$0xff] %v9575
        %9640 = vst [vmem:[#allocation3 + $0x88] sm:$0xff] %v9576
        %9641 = vst [vmem:[#allocation3 + $0x90] sm:$0xff] %v9577
        %9642 = vst [vmem:[#allocation3 + $0x98] sm:$0xff] %v9578
        %9643 = vst [vmem:[#allocation3 + $0xa0] sm:$0xff] %v9579
        %9644 = vst [vmem:[#allocation3 + $0xa8] sm:$0xff] %v9580
        %9645 = vst [vmem:[#allocation3 + $0xb0] sm:$0xff] %v9581
        %9646 = vst [vmem:[#allocation3 + $0xb8] sm:$0xff] %v9582
        %9647 = vst [vmem:[#allocation3 + $0xc0] sm:$0xff] %v9583
        %9648 = vst [vmem:[#allocation3 + $0xc8] sm:$0xff] %v9584
        %9649 = vst [vmem:[#allocation3 + $0xd0] sm:$0xff] %v9585
        %9650 = vst [vmem:[#allocation3 + $0xd8] sm:$0xff] %v9586
        %9651 = vst [vmem:[#allocation3 + $0xe0] sm:$0xff] %v9587
        %9652 = vst [vmem:[#allocation3 + $0xe8] sm:$0xff] %v9588
        %9653 = vst [vmem:[#allocation3 + $0xf0] sm:$0xff] %v9589
        %9654 = vst [vmem:[#allocation3 + $0xf8] sm:$0xff] %v9590
        %9655 = vst [vmem:[#allocation3 + $0x100] sm:$0xff] %v9591
        %9656 = vst [vmem:[#allocation3 + $0x108] sm:$0xff] %v9592
        %9657 = vst [vmem:[#allocation3 + $0x110] sm:$0xff] %v9593
        %9658 = vst [vmem:[#allocation3 + $0x118] sm:$0xff] %v9594
        %9659 = vst [vmem:[#allocation3 + $0x120] sm:$0xff] %v9595
        %9660 = vst [vmem:[#allocation3 + $0x128] sm:$0xff] %v9596
        %9661 = vst [vmem:[#allocation3 + $0x130] sm:$0xff] %v9597
        %9662 = vst [vmem:[#allocation3 + $0x138] sm:$0xff] %v9598
        %9663 = vst [vmem:[#allocation3 + $0x140] sm:$0xff] %v9599
        %9664 = vst [vmem:[#allocation3 + $0x148] sm:$0xff] %v9600
        %9665 = vst [vmem:[#allocation3 + $0x150] sm:$0xff] %v9601
        %9666 = vst [vmem:[#allocation3 + $0x158] sm:$0xff] %v9602
        %9667 = vst [vmem:[#allocation3 + $0x160] sm:$0xff] %v9603
        %9668 = vst [vmem:[#allocation3 + $0x168] sm:$0xff] %v9604
        %9669 = vst [vmem:[#allocation3 + $0x170] sm:$0xff] %v9605
        %9670 = vst [vmem:[#allocation3 + $0x178] sm:$0xff] %v9606
        %9671 = vst [vmem:[#allocation3 + $0x180] sm:$0xff] %v9607
        %9672 = vst [vmem:[#allocation3 + $0x188] sm:$0xff] %v9608
        %9673 = vst [vmem:[#allocation3 + $0x190] sm:$0xff] %v9609
        %9674 = vst [vmem:[#allocation3 + $0x198] sm:$0xff] %v9610
        %9675 = vst [vmem:[#allocation3 + $0x1a0] sm:$0xff] %v9611
        %9676 = vst [vmem:[#allocation3 + $0x1a8] sm:$0xff] %v9612
        %9677 = vst [vmem:[#allocation3 + $0x1b0] sm:$0xff] %v9613
        %9678 = vst [vmem:[#allocation3 + $0x1b8] sm:$0xff] %v9614
        %9679 = vst [vmem:[#allocation3 + $0x1c0] sm:$0xff] %v9615
        %9680 = vst [vmem:[#allocation3 + $0x1c8] sm:$0xff] %v9616
        %9681 = vst [vmem:[#allocation3 + $0x1d0] sm:$0xff] %v9617
        %9682 = vst [vmem:[#allocation3 + $0x1d8] sm:$0xff] %v9618
        %9683 = vst [vmem:[#allocation3 + $0x1e0] sm:$0xff] %v9619
        %9684 = vst [vmem:[#allocation3 + $0x1e8] sm:$0xff] %v9620
        %9685 = vst [vmem:[#allocation3 + $0x1f0] sm:$0xff] %v9621
        %9686 = vst [vmem:[#allocation3 + $0x1f8] sm:$0xff] %v9622
        %v9687 = vld [vmem:[#allocation3] sm:$0xff]
        %v9688 = vld [vmem:[#allocation3 + $0x8] sm:$0xff]
        %v9689 = vld [vmem:[#allocation3 + $0x10] sm:$0xff]
        %v9690 = vld [vmem:[#allocation3 + $0x18] sm:$0xff]
        %v9691 = vld [vmem:[#allocation3 + $0x20] sm:$0xff]
        %v9692 = vld [vmem:[#allocation3 + $0x28] sm:$0xff]
        %v9693 = vld [vmem:[#allocation3 + $0x30] sm:$0xff]
        %v9694 = vld [vmem:[#allocation3 + $0x38] sm:$0xff]
        %v9695 = vld [vmem:[#allocation3 + $0x40] sm:$0xff]
        %v9696 = vld [vmem:[#allocation3 + $0x48] sm:$0xff]
        %v9697 = vld [vmem:[#allocation3 + $0x50] sm:$0xff]
        %v9698 = vld [vmem:[#allocation3 + $0x58] sm:$0xff]
        %v9699 = vld [vmem:[#allocation3 + $0x60] sm:$0xff]
        %v9700 = vld [vmem:[#allocation3 + $0x68] sm:$0xff]
        %v9701 = vld [vmem:[#allocation3 + $0x70] sm:$0xff]
        %v9702 = vld [vmem:[#allocation3 + $0x78] sm:$0xff]
        %v9703 = vld [vmem:[#allocation3 + $0x80] sm:$0xff]
        %v9704 = vld [vmem:[#allocation3 + $0x88] sm:$0xff]
        %v9705 = vld [vmem:[#allocation3 + $0x90] sm:$0xff]
        %v9706 = vld [vmem:[#allocation3 + $0x98] sm:$0xff]
        %v9707 = vld [vmem:[#allocation3 + $0xa0] sm:$0xff]
        %v9708 = vld [vmem:[#allocation3 + $0xa8] sm:$0xff]
        %v9709 = vld [vmem:[#allocation3 + $0xb0] sm:$0xff]
        %v9710 = vld [vmem:[#allocation3 + $0xb8] sm:$0xff]
        %v9711 = vld [vmem:[#allocation3 + $0xc0] sm:$0xff]
        %v9712 = vld [vmem:[#allocation3 + $0xc8] sm:$0xff]
        %v9713 = vld [vmem:[#allocation3 + $0xd0] sm:$0xff]
        %v9714 = vld [vmem:[#allocation3 + $0xd8] sm:$0xff]
        %v9715 = vld [vmem:[#allocation3 + $0xe0] sm:$0xff]
        %v9716 = vld [vmem:[#allocation3 + $0xe8] sm:$0xff]
        %v9717 = vld [vmem:[#allocation3 + $0xf0] sm:$0xff]
        %v9718 = vld [vmem:[#allocation3 + $0xf8] sm:$0xff]
        %v9719 = vld [vmem:[#allocation3 + $0x100] sm:$0xff]
        %v9720 = vld [vmem:[#allocation3 + $0x108] sm:$0xff]
        %v9721 = vld [vmem:[#allocation3 + $0x110] sm:$0xff]
        %v9722 = vld [vmem:[#allocation3 + $0x118] sm:$0xff]
        %v9723 = vld [vmem:[#allocation3 + $0x120] sm:$0xff]
        %v9724 = vld [vmem:[#allocation3 + $0x128] sm:$0xff]
        %v9725 = vld [vmem:[#allocation3 + $0x130] sm:$0xff]
        %v9726 = vld [vmem:[#allocation3 + $0x138] sm:$0xff]
        %v9727 = vld [vmem:[#allocation3 + $0x140] sm:$0xff]
        %v9728 = vld [vmem:[#allocation3 + $0x148] sm:$0xff]
        %v9729 = vld [vmem:[#allocation3 + $0x150] sm:$0xff]
        %v9730 = vld [vmem:[#allocation3 + $0x158] sm:$0xff]
        %v9731 = vld [vmem:[#allocation3 + $0x160] sm:$0xff]
        %v9732 = vld [vmem:[#allocation3 + $0x168] sm:$0xff]
        %v9733 = vld [vmem:[#allocation3 + $0x170] sm:$0xff]
        %v9734 = vld [vmem:[#allocation3 + $0x178] sm:$0xff]
        %v9735 = vld [vmem:[#allocation3 + $0x180] sm:$0xff]
        %v9736 = vld [vmem:[#allocation3 + $0x188] sm:$0xff]
        %v9737 = vld [vmem:[#allocation3 + $0x190] sm:$0xff]
        %v9738 = vld [vmem:[#allocation3 + $0x198] sm:$0xff]
        %v9739 = vld [vmem:[#allocation3 + $0x1a0] sm:$0xff]
        %v9740 = vld [vmem:[#allocation3 + $0x1a8] sm:$0xff]
        %v9741 = vld [vmem:[#allocation3 + $0x1b0] sm:$0xff]
        %v9742 = vld [vmem:[#allocation3 + $0x1b8] sm:$0xff]
        %v9743 = vld [vmem:[#allocation3 + $0x1c0] sm:$0xff]
        %v9744 = vld [vmem:[#allocation3 + $0x1c8] sm:$0xff]
        %v9745 = vld [vmem:[#allocation3 + $0x1d0] sm:$0xff]
        %v9746 = vld [vmem:[#allocation3 + $0x1d8] sm:$0xff]
        %v9747 = vld [vmem:[#allocation3 + $0x1e0] sm:$0xff]
        %v9748 = vld [vmem:[#allocation3 + $0x1e8] sm:$0xff]
        %v9749 = vld [vmem:[#allocation3 + $0x1f0] sm:$0xff]
        %v9750 = vld [vmem:[#allocation3 + $0x1f8] sm:$0xff]
        %v9751 = vpack.c.bf16 %v9687, %v9687
        %v9752 = vpack.c.bf16 %v9688, %v9688
        %v9753 = vpack.c.bf16 %v9689, %v9689
        %v9754 = vpack.c.bf16 %v9690, %v9690
        %v9755 = vpack.c.bf16 %v9691, %v9691
        %v9756 = vpack.c.bf16 %v9692, %v9692
        %v9757 = vpack.c.bf16 %v9693, %v9693
        %v9758 = vpack.c.bf16 %v9694, %v9694
        %v9759 = vpack.c.bf16 %v9695, %v9695
        %v9760 = vpack.c.bf16 %v9696, %v9696
        %v9761 = vpack.c.bf16 %v9697, %v9697
        %v9762 = vpack.c.bf16 %v9698, %v9698
        %v9763 = vpack.c.bf16 %v9699, %v9699
        %v9764 = vpack.c.bf16 %v9700, %v9700
        %v9765 = vpack.c.bf16 %v9701, %v9701
        %v9766 = vpack.c.bf16 %v9702, %v9702
        %v9767 = vpack.c.bf16 %v9703, %v9703
        %v9768 = vpack.c.bf16 %v9704, %v9704
        %v9769 = vpack.c.bf16 %v9705, %v9705
        %v9770 = vpack.c.bf16 %v9706, %v9706
        %v9771 = vpack.c.bf16 %v9707, %v9707
        %v9772 = vpack.c.bf16 %v9708, %v9708
        %v9773 = vpack.c.bf16 %v9709, %v9709
        %v9774 = vpack.c.bf16 %v9710, %v9710
        %v9775 = vpack.c.bf16 %v9711, %v9711
        %v9776 = vpack.c.bf16 %v9712, %v9712
        %v9777 = vpack.c.bf16 %v9713, %v9713
        %v9778 = vpack.c.bf16 %v9714, %v9714
        %v9779 = vpack.c.bf16 %v9715, %v9715
        %v9780 = vpack.c.bf16 %v9716, %v9716
        %v9781 = vpack.c.bf16 %v9717, %v9717
        %v9782 = vpack.c.bf16 %v9718, %v9718
        %v9783 = vpack.c.bf16 %v9719, %v9719
        %v9784 = vpack.c.bf16 %v9720, %v9720
        %v9785 = vpack.c.bf16 %v9721, %v9721
        %v9786 = vpack.c.bf16 %v9722, %v9722
        %v9787 = vpack.c.bf16 %v9723, %v9723
        %v9788 = vpack.c.bf16 %v9724, %v9724
        %v9789 = vpack.c.bf16 %v9725, %v9725
        %v9790 = vpack.c.bf16 %v9726, %v9726
        %v9791 = vpack.c.bf16 %v9727, %v9727
        %v9792 = vpack.c.bf16 %v9728, %v9728
        %v9793 = vpack.c.bf16 %v9729, %v9729
        %v9794 = vpack.c.bf16 %v9730, %v9730
        %v9795 = vpack.c.bf16 %v9731, %v9731
        %v9796 = vpack.c.bf16 %v9732, %v9732
        %v9797 = vpack.c.bf16 %v9733, %v9733
        %v9798 = vpack.c.bf16 %v9734, %v9734
        %v9799 = vpack.c.bf16 %v9735, %v9735
        %v9800 = vpack.c.bf16 %v9736, %v9736
        %v9801 = vpack.c.bf16 %v9737, %v9737
        %v9802 = vpack.c.bf16 %v9738, %v9738
        %v9803 = vpack.c.bf16 %v9739, %v9739
        %v9804 = vpack.c.bf16 %v9740, %v9740
        %v9805 = vpack.c.bf16 %v9741, %v9741
        %v9806 = vpack.c.bf16 %v9742, %v9742
        %v9807 = vpack.c.bf16 %v9743, %v9743
        %v9808 = vpack.c.bf16 %v9744, %v9744
        %v9809 = vpack.c.bf16 %v9745, %v9745
        %v9810 = vpack.c.bf16 %v9746, %v9746
        %v9811 = vpack.c.bf16 %v9747, %v9747
        %v9812 = vpack.c.bf16 %v9748, %v9748
        %v9813 = vpack.c.bf16 %v9749, %v9749
        %v9814 = vpack.c.bf16 %v9750, %v9750
        %9815 = vst [vmem:[%s207] sm:$0xf] %v9751
        %9816 = vst [vmem:[%s207 + $0x4] sm:$0xf] %v9752
        %9817 = vst [vmem:[%s207 + $0x8] sm:$0xf] %v9753
        %9818 = vst [vmem:[%s207 + $0xc] sm:$0xf] %v9754
        %9819 = vst [vmem:[%s207 + $0x10] sm:$0xf] %v9755
        %9820 = vst [vmem:[%s207 + $0x14] sm:$0xf] %v9756
        %9821 = vst [vmem:[%s207 + $0x18] sm:$0xf] %v9757
        %9822 = vst [vmem:[%s207 + $0x1c] sm:$0xf] %v9758
        %9823 = vst [vmem:[%s207 + $0x20] sm:$0xf] %v9759
        %9824 = vst [vmem:[%s207 + $0x24] sm:$0xf] %v9760
        %9825 = vst [vmem:[%s207 + $0x28] sm:$0xf] %v9761
        %9826 = vst [vmem:[%s207 + $0x2c] sm:$0xf] %v9762
        %9827 = vst [vmem:[%s207 + $0x30] sm:$0xf] %v9763
        %9828 = vst [vmem:[%s207 + $0x34] sm:$0xf] %v9764
        %9829 = vst [vmem:[%s207 + $0x38] sm:$0xf] %v9765
        %9830 = vst [vmem:[%s207 + $0x3c] sm:$0xf] %v9766
        %9831 = vst [vmem:[%s207 + $0x40] sm:$0xf] %v9767
        %9832 = vst [vmem:[%s207 + $0x44] sm:$0xf] %v9768
        %9833 = vst [vmem:[%s207 + $0x48] sm:$0xf] %v9769
        %9834 = vst [vmem:[%s207 + $0x4c] sm:$0xf] %v9770
        %9835 = vst [vmem:[%s207 + $0x50] sm:$0xf] %v9771
        %9836 = vst [vmem:[%s207 + $0x54] sm:$0xf] %v9772
        %9837 = vst [vmem:[%s207 + $0x58] sm:$0xf] %v9773
        %9838 = vst [vmem:[%s207 + $0x5c] sm:$0xf] %v9774
        %9839 = vst [vmem:[%s207 + $0x60] sm:$0xf] %v9775
        %9840 = vst [vmem:[%s207 + $0x64] sm:$0xf] %v9776
        %9841 = vst [vmem:[%s207 + $0x68] sm:$0xf] %v9777
        %9842 = vst [vmem:[%s207 + $0x6c] sm:$0xf] %v9778
        %9843 = vst [vmem:[%s207 + $0x70] sm:$0xf] %v9779
        %9844 = vst [vmem:[%s207 + $0x74] sm:$0xf] %v9780
        %9845 = vst [vmem:[%s207 + $0x78] sm:$0xf] %v9781
        %9846 = vst [vmem:[%s207 + $0x7c] sm:$0xf] %v9782
        %9847 = vst [vmem:[%s207 + $0x80] sm:$0xf] %v9783
        %9848 = vst [vmem:[%s207 + $0x84] sm:$0xf] %v9784
        %9849 = vst [vmem:[%s207 + $0x88] sm:$0xf] %v9785
        %9850 = vst [vmem:[%s207 + $0x8c] sm:$0xf] %v9786
        %9851 = vst [vmem:[%s207 + $0x90] sm:$0xf] %v9787
        %9852 = vst [vmem:[%s207 + $0x94] sm:$0xf] %v9788
        %9853 = vst [vmem:[%s207 + $0x98] sm:$0xf] %v9789
        %9854 = vst [vmem:[%s207 + $0x9c] sm:$0xf] %v9790
        %9855 = vst [vmem:[%s207 + $0xa0] sm:$0xf] %v9791
        %9856 = vst [vmem:[%s207 + $0xa4] sm:$0xf] %v9792
        %9857 = vst [vmem:[%s207 + $0xa8] sm:$0xf] %v9793
        %9858 = vst [vmem:[%s207 + $0xac] sm:$0xf] %v9794
        %9859 = vst [vmem:[%s207 + $0xb0] sm:$0xf] %v9795
        %9860 = vst [vmem:[%s207 + $0xb4] sm:$0xf] %v9796
        %9861 = vst [vmem:[%s207 + $0xb8] sm:$0xf] %v9797
        %9862 = vst [vmem:[%s207 + $0xbc] sm:$0xf] %v9798
        %9863 = vst [vmem:[%s207 + $0xc0] sm:$0xf] %v9799
        %9864 = vst [vmem:[%s207 + $0xc4] sm:$0xf] %v9800
        %9865 = vst [vmem:[%s207 + $0xc8] sm:$0xf] %v9801
        %9866 = vst [vmem:[%s207 + $0xcc] sm:$0xf] %v9802
        %9867 = vst [vmem:[%s207 + $0xd0] sm:$0xf] %v9803
        %9868 = vst [vmem:[%s207 + $0xd4] sm:$0xf] %v9804
        %9869 = vst [vmem:[%s207 + $0xd8] sm:$0xf] %v9805
        %9870 = vst [vmem:[%s207 + $0xdc] sm:$0xf] %v9806
        %9871 = vst [vmem:[%s207 + $0xe0] sm:$0xf] %v9807
        %9872 = vst [vmem:[%s207 + $0xe4] sm:$0xf] %v9808
        %9873 = vst [vmem:[%s207 + $0xe8] sm:$0xf] %v9809
        %9874 = vst [vmem:[%s207 + $0xec] sm:$0xf] %v9810
        %9875 = vst [vmem:[%s207 + $0xf0] sm:$0xf] %v9811
        %9876 = vst [vmem:[%s207 + $0xf4] sm:$0xf] %v9812
        %9877 = vst [vmem:[%s207 + $0xf8] sm:$0xf] %v9813
        %9878 = vst [vmem:[%s207 + $0xfc] sm:$0xf] %v9814
        %v9879 = vadd.f32 %v9687, %v9688
        %v9880 = vadd.f32 %v9879, %v9689
        %v9881 = vadd.f32 %v9880, %v9690
        %v9882 = vadd.f32 %v9881, %v9691
        %v9883 = vadd.f32 %v9882, %v9692
        %v9884 = vadd.f32 %v9883, %v9693
        %v9885 = vadd.f32 %v9884, %v9694
        %v9886 = vadd.f32 %v9885, %v9695
        %v9887 = vadd.f32 %v9886, %v9696
        %v9888 = vadd.f32 %v9887, %v9697
        %v9889 = vadd.f32 %v9888, %v9698
        %v9890 = vadd.f32 %v9889, %v9699
        %v9891 = vadd.f32 %v9890, %v9700
        %v9892 = vadd.f32 %v9891, %v9701
        %v9893 = vadd.f32 %v9892, %v9702
        %v9894 = vadd.f32 %v9893, %v9703
        %v9895 = vadd.f32 %v9894, %v9704
        %v9896 = vadd.f32 %v9895, %v9705
        %v9897 = vadd.f32 %v9896, %v9706
        %v9898 = vadd.f32 %v9897, %v9707
        %v9899 = vadd.f32 %v9898, %v9708
        %v9900 = vadd.f32 %v9899, %v9709
        %v9901 = vadd.f32 %v9900, %v9710
        %v9902 = vadd.f32 %v9901, %v9711
        %v9903 = vadd.f32 %v9902, %v9712
        %v9904 = vadd.f32 %v9903, %v9713
        %v9905 = vadd.f32 %v9904, %v9714
        %v9906 = vadd.f32 %v9905, %v9715
        %v9907 = vadd.f32 %v9906, %v9716
        %v9908 = vadd.f32 %v9907, %v9717
        %v9909 = vadd.f32 %v9908, %v9718
        %v9910 = vadd.f32 %v9909, %v9719
        %v9911 = vadd.f32 %v9910, %v9720
        %v9912 = vadd.f32 %v9911, %v9721
        %v9913 = vadd.f32 %v9912, %v9722
        %v9914 = vadd.f32 %v9913, %v9723
        %v9915 = vadd.f32 %v9914, %v9724
        %v9916 = vadd.f32 %v9915, %v9725
        %v9917 = vadd.f32 %v9916, %v9726
        %v9918 = vadd.f32 %v9917, %v9727
        %v9919 = vadd.f32 %v9918, %v9728
        %v9920 = vadd.f32 %v9919, %v9729
        %v9921 = vadd.f32 %v9920, %v9730
        %v9922 = vadd.f32 %v9921, %v9731
        %v9923 = vadd.f32 %v9922, %v9732
        %v9924 = vadd.f32 %v9923, %v9733
        %v9925 = vadd.f32 %v9924, %v9734
        %v9926 = vadd.f32 %v9925, %v9735
        %v9927 = vadd.f32 %v9926, %v9736
        %v9928 = vadd.f32 %v9927, %v9737
        %v9929 = vadd.f32 %v9928, %v9738
        %v9930 = vadd.f32 %v9929, %v9739
        %v9931 = vadd.f32 %v9930, %v9740
        %v9932 = vadd.f32 %v9931, %v9741
        %v9933 = vadd.f32 %v9932, %v9742
        %v9934 = vadd.f32 %v9933, %v9743
        %v9935 = vadd.f32 %v9934, %v9744
        %v9936 = vadd.f32 %v9935, %v9745
        %v9937 = vadd.f32 %v9936, %v9746
        %v9938 = vadd.f32 %v9937, %v9747
        %v9939 = vadd.f32 %v9938, %v9748
        %v9940 = vadd.f32 %v9939, %v9749
        %v9941 = vadd.f32 %v9940, %v9750
        %v9942 = vrot.slane %v9941, 4
        %v9943 = vadd.f32 %v9941, %v9942
        %v9944 = vrot.slane %v9943, 2
        %v9945 = vadd.f32 %v9943, %v9944
        %v9946 = vrot.slane %v9945, 1
        %v9947 = vadd.f32 %v9945, %v9946
        %v9948 = vmul.f32 %v9947, 0.001953125
        %v9949 = vsub.f32 %v9687, %v9948
        %v9950 = vsub.f32 %v9688, %v9948
        %v9951 = vsub.f32 %v9689, %v9948
        %v9952 = vsub.f32 %v9690, %v9948
        %v9953 = vsub.f32 %v9691, %v9948
        %v9954 = vsub.f32 %v9692, %v9948
        %v9955 = vsub.f32 %v9693, %v9948
        %v9956 = vsub.f32 %v9694, %v9948
        %v9957 = vsub.f32 %v9695, %v9948
        %v9958 = vsub.f32 %v9696, %v9948
        %v9959 = vsub.f32 %v9697, %v9948
        %v9960 = vsub.f32 %v9698, %v9948
        %v9961 = vsub.f32 %v9699, %v9948
        %v9962 = vsub.f32 %v9700, %v9948
        %v9963 = vsub.f32 %v9701, %v9948
        %v9964 = vsub.f32 %v9702, %v9948
        %v9965 = vsub.f32 %v9703, %v9948
        %v9966 = vsub.f32 %v9704, %v9948
        %v9967 = vsub.f32 %v9705, %v9948
        %v9968 = vsub.f32 %v9706, %v9948
        %v9969 = vsub.f32 %v9707, %v9948
        %v9970 = vsub.f32 %v9708, %v9948
        %v9971 = vsub.f32 %v9709, %v9948
        %v9972 = vsub.f32 %v9710, %v9948
        %v9973 = vsub.f32 %v9711, %v9948
        %v9974 = vsub.f32 %v9712, %v9948
        %v9975 = vsub.f32 %v9713, %v9948
        %v9976 = vsub.f32 %v9714, %v9948
        %v9977 = vsub.f32 %v9715, %v9948
        %v9978 = vsub.f32 %v9716, %v9948
        %v9979 = vsub.f32 %v9717, %v9948
        %v9980 = vsub.f32 %v9718, %v9948
        %v9981 = vsub.f32 %v9719, %v9948
        %v9982 = vsub.f32 %v9720, %v9948
        %v9983 = vsub.f32 %v9721, %v9948
        %v9984 = vsub.f32 %v9722, %v9948
        %v9985 = vsub.f32 %v9723, %v9948
        %v9986 = vsub.f32 %v9724, %v9948
        %v9987 = vsub.f32 %v9725, %v9948
        %v9988 = vsub.f32 %v9726, %v9948
        %v9989 = vsub.f32 %v9727, %v9948
        %v9990 = vsub.f32 %v9728, %v9948
        %v9991 = vsub.f32 %v9729, %v9948
        %v9992 = vsub.f32 %v9730, %v9948
        %v9993 = vsub.f32 %v9731, %v9948
        %v9994 = vsub.f32 %v9732, %v9948
        %v9995 = vsub.f32 %v9733, %v9948
        %v9996 = vsub.f32 %v9734, %v9948
        %v9997 = vsub.f32 %v9735, %v9948
        %v9998 = vsub.f32 %v9736, %v9948
        %v9999 = vsub.f32 %v9737, %v9948
        %v10000 = vsub.f32 %v9738, %v9948
        %v10001 = vsub.f32 %v9739, %v9948
        %v10002 = vsub.f32 %v9740, %v9948
        %v10003 = vsub.f32 %v9741, %v9948
        %v10004 = vsub.f32 %v9742, %v9948
        %v10005 = vsub.f32 %v9743, %v9948
        %v10006 = vsub.f32 %v9744, %v9948
        %v10007 = vsub.f32 %v9745, %v9948
        %v10008 = vsub.f32 %v9746, %v9948
        %v10009 = vsub.f32 %v9747, %v9948
        %v10010 = vsub.f32 %v9748, %v9948
        %v10011 = vsub.f32 %v9749, %v9948
        %v10012 = vsub.f32 %v9750, %v9948
        %v10013 = vmul.f32 %v9949, %v9949
        %v10014 = vmul.f32 %v9950, %v9950
        %v10015 = vmul.f32 %v9951, %v9951
        %v10016 = vmul.f32 %v9952, %v9952
        %v10017 = vmul.f32 %v9953, %v9953
        %v10018 = vmul.f32 %v9954, %v9954
        %v10019 = vmul.f32 %v9955, %v9955
        %v10020 = vmul.f32 %v9956, %v9956
        %v10021 = vmul.f32 %v9957, %v9957
        %v10022 = vmul.f32 %v9958, %v9958
        %v10023 = vmul.f32 %v9959, %v9959
        %v10024 = vmul.f32 %v9960, %v9960
        %v10025 = vmul.f32 %v9961, %v9961
        %v10026 = vmul.f32 %v9962, %v9962
        %v10027 = vmul.f32 %v9963, %v9963
        %v10028 = vmul.f32 %v9964, %v9964
        %v10029 = vmul.f32 %v9965, %v9965
        %v10030 = vmul.f32 %v9966, %v9966
        %v10031 = vmul.f32 %v9967, %v9967
        %v10032 = vmul.f32 %v9968, %v9968
        %v10033 = vmul.f32 %v9969, %v9969
        %v10034 = vmul.f32 %v9970, %v9970
        %v10035 = vmul.f32 %v9971, %v9971
        %v10036 = vmul.f32 %v9972, %v9972
        %v10037 = vmul.f32 %v9973, %v9973
        %v10038 = vmul.f32 %v9974, %v9974
        %v10039 = vmul.f32 %v9975, %v9975
        %v10040 = vmul.f32 %v9976, %v9976
        %v10041 = vmul.f32 %v9977, %v9977
        %v10042 = vmul.f32 %v9978, %v9978
        %v10043 = vmul.f32 %v9979, %v9979
        %v10044 = vmul.f32 %v9980, %v9980
        %v10045 = vmul.f32 %v9981, %v9981
        %v10046 = vmul.f32 %v9982, %v9982
        %v10047 = vmul.f32 %v9983, %v9983
        %v10048 = vmul.f32 %v9984, %v9984
        %v10049 = vmul.f32 %v9985, %v9985
        %v10050 = vmul.f32 %v9986, %v9986
        %v10051 = vmul.f32 %v9987, %v9987
        %v10052 = vmul.f32 %v9988, %v9988
        %v10053 = vmul.f32 %v9989, %v9989
        %v10054 = vmul.f32 %v9990, %v9990
        %v10055 = vmul.f32 %v9991, %v9991
        %v10056 = vmul.f32 %v9992, %v9992
        %v10057 = vmul.f32 %v9993, %v9993
        %v10058 = vmul.f32 %v9994, %v9994
        %v10059 = vmul.f32 %v9995, %v9995
        %v10060 = vmul.f32 %v9996, %v9996
        %v10061 = vmul.f32 %v9997, %v9997
        %v10062 = vmul.f32 %v9998, %v9998
        %v10063 = vmul.f32 %v9999, %v9999
        %v10064 = vmul.f32 %v10000, %v10000
        %v10065 = vmul.f32 %v10001, %v10001
        %v10066 = vmul.f32 %v10002, %v10002
        %v10067 = vmul.f32 %v10003, %v10003
        %v10068 = vmul.f32 %v10004, %v10004
        %v10069 = vmul.f32 %v10005, %v10005
        %v10070 = vmul.f32 %v10006, %v10006
        %v10071 = vmul.f32 %v10007, %v10007
        %v10072 = vmul.f32 %v10008, %v10008
        %v10073 = vmul.f32 %v10009, %v10009
        %v10074 = vmul.f32 %v10010, %v10010
        %v10075 = vmul.f32 %v10011, %v10011
        %v10076 = vmul.f32 %v10012, %v10012
        %v10077 = vadd.f32 %v10013, %v10014
        %v10078 = vadd.f32 %v10077, %v10015
        %v10079 = vadd.f32 %v10078, %v10016
        %v10080 = vadd.f32 %v10079, %v10017
        %v10081 = vadd.f32 %v10080, %v10018
        %v10082 = vadd.f32 %v10081, %v10019
        %v10083 = vadd.f32 %v10082, %v10020
        %v10084 = vadd.f32 %v10083, %v10021
        %v10085 = vadd.f32 %v10084, %v10022
        %v10086 = vadd.f32 %v10085, %v10023
        %v10087 = vadd.f32 %v10086, %v10024
        %v10088 = vadd.f32 %v10087, %v10025
        %v10089 = vadd.f32 %v10088, %v10026
        %v10090 = vadd.f32 %v10089, %v10027
        %v10091 = vadd.f32 %v10090, %v10028
        %v10092 = vadd.f32 %v10091, %v10029
        %v10093 = vadd.f32 %v10092, %v10030
        %v10094 = vadd.f32 %v10093, %v10031
        %v10095 = vadd.f32 %v10094, %v10032
        %v10096 = vadd.f32 %v10095, %v10033
        %v10097 = vadd.f32 %v10096, %v10034
        %v10098 = vadd.f32 %v10097, %v10035
        %v10099 = vadd.f32 %v10098, %v10036
        %v10100 = vadd.f32 %v10099, %v10037
        %v10101 = vadd.f32 %v10100, %v10038
        %v10102 = vadd.f32 %v10101, %v10039
        %v10103 = vadd.f32 %v10102, %v10040
        %v10104 = vadd.f32 %v10103, %v10041
        %v10105 = vadd.f32 %v10104, %v10042
        %v10106 = vadd.f32 %v10105, %v10043
        %v10107 = vadd.f32 %v10106, %v10044
        %v10108 = vadd.f32 %v10107, %v10045
        %v10109 = vadd.f32 %v10108, %v10046
        %v10110 = vadd.f32 %v10109, %v10047
        %v10111 = vadd.f32 %v10110, %v10048
        %v10112 = vadd.f32 %v10111, %v10049
        %v10113 = vadd.f32 %v10112, %v10050
        %v10114 = vadd.f32 %v10113, %v10051
        %v10115 = vadd.f32 %v10114, %v10052
        %v10116 = vadd.f32 %v10115, %v10053
        %v10117 = vadd.f32 %v10116, %v10054
        %v10118 = vadd.f32 %v10117, %v10055
        %v10119 = vadd.f32 %v10118, %v10056
        %v10120 = vadd.f32 %v10119, %v10057
        %v10121 = vadd.f32 %v10120, %v10058
        %v10122 = vadd.f32 %v10121, %v10059
        %v10123 = vadd.f32 %v10122, %v10060
        %v10124 = vadd.f32 %v10123, %v10061
        %v10125 = vadd.f32 %v10124, %v10062
        %v10126 = vadd.f32 %v10125, %v10063
        %v10127 = vadd.f32 %v10126, %v10064
        %v10128 = vadd.f32 %v10127, %v10065
        %v10129 = vadd.f32 %v10128, %v10066
        %v10130 = vadd.f32 %v10129, %v10067
        %v10131 = vadd.f32 %v10130, %v10068
        %v10132 = vadd.f32 %v10131, %v10069
        %v10133 = vadd.f32 %v10132, %v10070
        %v10134 = vadd.f32 %v10133, %v10071
        %v10135 = vadd.f32 %v10134, %v10072
        %v10136 = vadd.f32 %v10135, %v10073
        %v10137 = vadd.f32 %v10136, %v10074
        %v10138 = vadd.f32 %v10137, %v10075
        %v10139 = vadd.f32 %v10138, %v10076
        %v10140 = vrot.slane %v10139, 4
        %v10141 = vadd.f32 %v10139, %v10140
        %v10142 = vrot.slane %v10141, 2
        %v10143 = vadd.f32 %v10141, %v10142
        %v10144 = vrot.slane %v10143, 1
        %v10145 = vadd.f32 %v10143, %v10144
        %vm10146 = vcmask 1040384
        %v10147 = vsel %vm10146, %v9948, %v10145
        %10148 = vst [vmem:[%s214] sm:$0x3] %v10147
        %s10149 = sand.u32 %s80, 1
        %s10150 = scalar_lea.sflag [#allocation6], %s10149
        %s10151 = sand.u32 %s80, 1
        %s10152 = smul.addr %s10151, 256
        %s10153 = scalar_lea.vmem [#allocation9], %s10152
        %s10154 = sand.u32 %s106, 1
        %s10155 = scalar_lea.sflag [#allocation11], %s10154
        %s10156 = sand.u32 %s106, 1
        %s10157 = smul.addr %s10156, 2
        %s10158 = scalar_lea.vmem [#allocation10], %s10157
        // Predicated region
        $region37: #{tpu_custom_call.1} parent=27 // pred_check
          %p10159 = pneg %p90
        $region38: #{tpu_custom_call.1} parent=27 // pred_check_branch
          %10161 = sbr.rel (%p10159) target = $region40
        $region39: #{tpu_custom_call.1} parent=27 // pred_region
          %s10163 = ssub.s32 4096, 4096
          %10164 = vsyncadd %s10150, %s10163
          %s10165 = smul.addr %s25, 64
          %s10166 = smul.addr %s10165, 64
          %s10167 = scalar_lea.hbm %s2, %s10166
          %s10168 = sshll.u32 %s10153, 4
          %s10169 = int_to_ptr.vmem [resolvable:$true] %s10168
          %10174 = dma.vmem_to_hbm [thread:$0]  %s10169, 4096, %s10167, %s10150, 64, 64, 4
        $region40: #{tpu_custom_call.1} parent=27 // pred_fallthru
          _
        // Predicated region
        $region41: #{tpu_custom_call.1} parent=27 // pred_check
          %p10175 = pneg %p116
        $region42: #{tpu_custom_call.1} parent=27 // pred_check_branch
          %10177 = sbr.rel (%p10175) target = $region44
        $region43: #{tpu_custom_call.1} parent=27 // pred_region
          %s10179 = ssub.s32 32, 32
          %10180 = vsyncadd %s10155, %s10179
          %s10181 = smul.addr %s25, 32
          %s10182 = scalar_lea.hbm %s3, %s10181
          %s10184 = sshll.u32 %s10158, 4
          %s10185 = int_to_ptr.vmem [resolvable:$true] %s10184
          %10187 = dma.vmem_to_hbm [thread:$0]  %s10185, 32, %s10182, %s10155
        $region44: #{tpu_custom_call.1} parent=27 // pred_fallthru
          _
      $region28: #{tpu_custom_call.1} parent=5 // pred_fallthru
        _
      %p10188 = scmp.le.s32.totalorder 2, %s20
      // Predicated region
      $region45: #{tpu_custom_call.1} parent=5 // pred_check
        %p10189 = pneg %p10188
      $region46: #{tpu_custom_call.1} parent=5 // pred_check_branch
        %10191 = sbr.rel (%p10189) target = $region48
      $region47: #{tpu_custom_call.1} parent=5 // pred_region
        %s10192 = ssub.s32 %s20, 2
        // Predicated region
        $region49: #{tpu_custom_call.1} parent=47 // pred_check
          %p10193 = pneg %p96
        $region50: #{tpu_custom_call.1} parent=47 // pred_check_branch
          %10195 = sbr.rel (%p10193) target = $region52
        $region51: #{tpu_custom_call.1} parent=47 // pred_region
          %s10196 = sand.u32 %s81, 1
          %s10197 = scalar_lea.sflag [#allocation6], %s10196
          %s10198 = sand.u32 %s81, 1
          %s10199 = smul.addr %s10198, 256
          %s10200 = scalar_lea.vmem [#allocation9], %s10199
          %10201 = dma.done %s10197, 4096
        $region52: #{tpu_custom_call.1} parent=47 // pred_fallthru
          _
        // Predicated region
        $region53: #{tpu_custom_call.1} parent=47 // pred_check
          %p10202 = pneg %p122
        $region54: #{tpu_custom_call.1} parent=47 // pred_check_branch
          %10204 = sbr.rel (%p10202) target = $region56
        $region55: #{tpu_custom_call.1} parent=47 // pred_region
          %s10205 = sand.u32 %s107, 1
          %s10206 = scalar_lea.sflag [#allocation11], %s10205
          %s10207 = sand.u32 %s107, 1
          %s10208 = smul.addr %s10207, 2
          %s10209 = scalar_lea.vmem [#allocation10], %s10208
          %10210 = dma.done %s10206, 32
        $region56: #{tpu_custom_call.1} parent=47 // pred_fallthru
          _
      $region48: #{tpu_custom_call.1} parent=5 // pred_fallthru
        _
    $region6: #{tpu_custom_call.1} parent=1 // loop_footer
      %s24 = sadd.s32 1, %s20
    $region7: #{tpu_custom_call.1} parent=1 // loop_footer_branch
      %19 = sbr.rel target = $region3
    $region8: #{tpu_custom_call.1} parent=1 // loop_exit
      _
    %10211 = vsyncpa [#allocation5], 1
    %s10212 = scalar_lea.sflag [#allocation5], 1
    %10213 = vsyncpa %s10212, 1
    %10214 = vsyncpa [#allocation8], 1
    %10215 = vsyncpa [#allocation6], 1
    %s10216 = scalar_lea.sflag [#allocation6], 1
    %10217 = vsyncpa %s10216, 1
    %10218 = vsyncpa [#allocation11], 1
    %s10219 = scalar_lea.sflag [#allocation11], 1
    %10220 = vsyncpa %s10219, 1

</llo_original>
